<compile_context>
chip_gen: v7x
topology: tpu7x:2x2x1
jax: 0.10.0
libtpu: 0.0.40
codegen_flags: <defaults>
</compile_context>

<pallas_src>
import numpy as np

import jax
import jax.numpy as jnp
from jax.experimental import pallas as pl
from jax.experimental.pallas import tpu as pltpu


# ----------------------------------------------------------------------------
# Pallas batched GEMM kernel:  out[g] = x[g] @ w[g] + b[g]
#   x: (G, M, K) bf16, w: (G, K, N) bf16, b: (G, N) f32 -> (G, M, N) f32
# ----------------------------------------------------------------------------
def _mm_kernel_single(x_ref, w_ref, b_ref, o_ref):
    # Full-K single pass: no accumulator scratch, straight write.
    o_ref[0] = (
        jnp.dot(x_ref[0], w_ref[0], preferred_element_type=jnp.float32) + b_ref[0]
    )


def _mm_kernel_multi(x_ref, w_ref, b_ref, o_ref, acc_ref):
    @pl.when(pl.program_id(3) == 0)
    def _():
        acc_ref[...] = jnp.zeros_like(acc_ref)

    acc_ref[...] += jnp.dot(x_ref[0], w_ref[0], preferred_element_type=jnp.float32)

    @pl.when(pl.program_id(3) == pl.num_programs(3) - 1)
    def _():
        o_ref[0] = acc_ref[...] + b_ref[0]


def _round_up(x, m):
    return (x + m - 1) // m * m


def _largest_divisor(n, candidates):
    for c in candidates:
        if n % c == 0:
            return c
    return candidates[-1]


def pallas_batched_matmul_bias(x, w, b):
    """x: (G, M, K), w: (G, K, N), b: (G, N) -> (G, M, N) float32."""
    G, M, K = x.shape
    N = w.shape[2]

    Mp = _round_up(max(M, 16), 16)        # bf16 sublane tile is (16, 128)
    Kp = _round_up(K, 128)
    Np = _round_up(N, 128)

    # Tile sizes: exact divisors of the padded dims (no dead whole-tile pad).
    # tm capped at 256 so large-M layers give >=2 parallel M tiles.
    tm = _largest_divisor(Mp, (256, 128, 64, 32, 16))
    tn = _largest_divisor(Np, (512, 256, 128))
    tk = Kp if Kp <= 2048 else _largest_divisor(Kp, (2048, 1024, 512, 256, 128))

    xp = jnp.pad(x.astype(jnp.bfloat16), ((0, 0), (0, Mp - M), (0, Kp - K)))
    wp = jnp.pad(w.astype(jnp.bfloat16), ((0, 0), (0, Kp - K), (0, Np - N)))
    bp = jnp.pad(b.astype(jnp.float32), ((0, 0), (0, Np - N))).reshape(G, 1, Np)

    nm, nn, nk = Mp // tm, Np // tn, Kp // tk

    if nk == 1:
        out = pl.pallas_call(
            _mm_kernel_single,
            out_shape=jax.ShapeDtypeStruct((G, Mp, Np), jnp.float32),
            grid_spec=pltpu.PrefetchScalarGridSpec(
                num_scalar_prefetch=0,
                grid=(G, nm, nn),
                in_specs=[
                    pl.BlockSpec((1, tm, Kp), lambda g, i, j: (g, i, 0)),
                    pl.BlockSpec((1, Kp, tn), lambda g, i, j: (g, 0, j)),
                    pl.BlockSpec((1, 1, tn), lambda g, i, j: (g, 0, j)),
                ],
                out_specs=pl.BlockSpec((1, tm, tn), lambda g, i, j: (g, i, j)),
            ),
            compiler_params=pltpu.CompilerParams(
                dimension_semantics=("parallel", "parallel", "parallel")
            ),
        )(xp, wp, bp)
    else:
        out = pl.pallas_call(
            _mm_kernel_multi,
            out_shape=jax.ShapeDtypeStruct((G, Mp, Np), jnp.float32),
            grid_spec=pltpu.PrefetchScalarGridSpec(
                num_scalar_prefetch=0,
                grid=(G, nm, nn, nk),
                in_specs=[
                    pl.BlockSpec((1, tm, tk), lambda g, i, j, k: (g, i, k)),
                    pl.BlockSpec((1, tk, tn), lambda g, i, j, k: (g, k, j)),
                    pl.BlockSpec((1, 1, tn), lambda g, i, j, k: (g, 0, j)),
                ],
                out_specs=pl.BlockSpec((1, tm, tn), lambda g, i, j, k: (g, i, j)),
                scratch_shapes=[pltpu.VMEM((tm, tn), jnp.float32)],
            ),
            compiler_params=pltpu.CompilerParams(
                dimension_semantics=("parallel", "parallel", "parallel", "arbitrary")
            ),
        )(xp, wp, bp)

    return out[:, :M, :N]


# ----------------------------------------------------------------------------
# Weight packing (done once, outside the forward pass)
# ----------------------------------------------------------------------------
def _conv_weight_matrix(w):
    """nn.Conv2d weight (Cout, Cin, kH, kW) -> (kH*kW*Cin, Cout) GEMM matrix."""
    Cout, Cin, kH, kW = w.shape
    return jnp.transpose(w, (2, 3, 1, 0)).reshape(kH * kW * Cin, Cout)


def _convT_subpixel_matrix(w):
    """nn.ConvTranspose2d(4,2,1) weight (Cin, Cout, 4, 4) -> (9*Cin, 4*Cout).

    Row index = ((dq+1)*3 + (dr+1))*Cin + ci over the 3x3 stride-1 window of
    the input; column index = (pq*2+pr)*Cout + co over the 4 output parity
    phases.  out[2q+pq, 2r+pr, co] = sum_{dq,dr,ci} x[q+dq, r+dr, ci] *
    w[ci, co, pq+1-2dq, pr+1-2dr]  (taps with kernel index outside [0,3] are 0).
    """
    wn = np.asarray(w, dtype=np.float32)
    Cin, Cout = wn.shape[0], wn.shape[1]
    m = np.zeros((3, 3, Cin, 4, Cout), np.float32)
    for pq in range(2):
        for pr in range(2):
            for dq in (-1, 0, 1):
                kq = pq + 1 - 2 * dq
                if not (0 <= kq <= 3):
                    continue
                for dr in (-1, 0, 1):
                    kr = pr + 1 - 2 * dr
                    if not (0 <= kr <= 3):
                        continue
                    m[dq + 1, dr + 1, :, pq * 2 + pr, :] = wn[:, :, kq, kr]
    return jnp.asarray(m.reshape(9 * Cin, 4 * Cout))


def _prep_up_pair(w1, b1, w2, b2):
    """Pack the two up-conv weights of a level as one batched GEMM operand."""
    C1, C2 = int(w1.shape[1]), int(w2.shape[1])
    Cmax = max(C1, C2)

    def pad_co(w, C):
        return jnp.pad(w, ((0, 0), (0, Cmax - C), (0, 0), (0, 0))) if C < Cmax else w

    def pad_b(b, C):
        return jnp.pad(b, (0, Cmax - C)) if C < Cmax else b

    m1 = _convT_subpixel_matrix(pad_co(w1, C1))
    m2 = _convT_subpixel_matrix(pad_co(w2, C2))
    wm = jnp.stack([m1, m2]).astype(jnp.bfloat16)        # (2, 9*Cin, 4*Cmax)
    bm = jnp.stack([jnp.tile(pad_b(b1, C1).astype(jnp.float32), 4),
                    jnp.tile(pad_b(b2, C2).astype(jnp.float32), 4)])  # (2, 4*Cmax)
    return wm, bm, C1, C2, Cmax


# ----------------------------------------------------------------------------
# NHWC conv / transposed-conv wrappers around the Pallas GEMM
# ----------------------------------------------------------------------------
def _patches_s2k4(x):
    """im2col for Conv2d(k=4, s=2, p=1) in NHWC: (B,H,W,C) -> (B*Ho*Wo, 16*C)."""
    B, H, W, C = x.shape
    Ho, Wo = H // 2, W // 2
    xp = jnp.pad(x, ((0, 0), (1, 1), (1, 1), (0, 0)))
    cols = [xp[:, ki:ki + 2 * Ho:2, kj:kj + 2 * Wo:2, :]
            for ki in range(4) for kj in range(4)]
    patches = jnp.concatenate(cols, axis=-1)             # (B, Ho, Wo, 16*C)
    return patches.reshape(B * Ho * Wo, 16 * C), Ho, Wo


def _patches3x3(x):
    """im2col for a stride-1 3x3 window with pad 1: (B,H,W,C) -> (B*H*W, 9*C)."""
    B, H, W, C = x.shape
    xp = jnp.pad(x, ((0, 0), (1, 1), (1, 1), (0, 0)))
    cols = [xp[:, dq:dq + H, dr:dr + W, :] for dq in range(3) for dr in range(3)]
    return jnp.concatenate(cols, axis=-1).reshape(B * H * W, 9 * C)


def down_conv(x, wm, b, act):
    """nn.Conv2d(Cin, Cout, 4, 2, 1) with optional fused preceding activation."""
    B = x.shape[0]
    Cout = wm.shape[-1]
    if act == "leaky":
        x = jnp.where(x >= 0.0, x, 0.2 * x)   # LeakyReLU(0.2) once, pre-im2col
    # Cast to bf16 on the 1x activation so the 16x im2col buffer is built bf16.
    patches, Ho, Wo = _patches_s2k4(x.astype(jnp.bfloat16))
    out = pallas_batched_matmul_bias(patches[None], wm[None], b[None])
    return out[0].reshape(B, Ho, Wo, Cout)


def conv_transpose_pair(x1, x2, wm, bm, C1, C2, Cmax):
    """Two ReLU + ConvTranspose2d(4,2,1) branches as ONE batched Pallas GEMM."""
    B, H, W, _ = x1.shape
    p1 = _patches3x3(jax.nn.relu(x1).astype(jnp.bfloat16))
    if x2 is x1:
        p2 = p1                                          # innermost: shared input
    else:
        p2 = _patches3x3(jax.nn.relu(x2).astype(jnp.bfloat16))
    patches = jnp.stack([p1, p2])                        # (2, B*H*W, 9*Cin)
    out = pallas_batched_matmul_bias(patches, wm, bm)    # (2, B*H*W, 4*Cmax)
    # depth-to-space: phase-major columns -> (2, B, 2H, 2W, Cmax)
    out = out.reshape(2, B, H, W, 2, 2, Cmax).transpose(0, 1, 2, 4, 3, 5, 6)
    out = out.reshape(2, B, 2 * H, 2 * W, Cmax)
    return out[0, ..., :C1], out[1, ..., :C2]


def batchnorm(x, gamma, beta, eps=1e-5):
    """nn.BatchNorm2d forward, training mode (batch stats), NHWC, fused affine."""
    mean = x.mean(axis=(0, 1, 2))
    var = jnp.square(x - mean).mean(axis=(0, 1, 2))
    inv = gamma * jax.lax.rsqrt(var + eps)
    return x * inv + (beta - mean * inv)


# ----------------------------------------------------------------------------
# Parameter init (PyTorch layouts) + one-time packing into GEMM layouts
# ----------------------------------------------------------------------------
def _w(key, shape, scale=0.05):
    return scale * jax.random.normal(key, shape, dtype=jnp.float32)


def init_block(key, outer_nc, inner_nc, sub=None, outermost=False, innermost=False):
    keys = jax.random.split(key, 16)
    p = {"kind": "outermost" if outermost else ("innermost" if innermost else "middle")}
    # downconv: Conv2d(outer_nc, inner_nc, 4, 2, 1)
    p["down_w"] = _w(keys[0], (inner_nc, outer_nc, 4, 4))
    p["down_b"] = _w(keys[1], (inner_nc,), 0.01)

    if outermost:
        p["up1_w"] = _w(keys[2], (inner_nc * 2, 1, 4, 4))
        p["up1_b"] = _w(keys[3], (1,), 0.01)
        p["up2_w"] = _w(keys[4], (inner_nc * 2, 3, 4, 4))
        p["up2_b"] = _w(keys[5], (3,), 0.01)
        p["sub"] = sub
    elif innermost:
        p["up1_w"] = _w(keys[2], (inner_nc, outer_nc, 4, 4))
        p["up1_b"] = _w(keys[3], (outer_nc,), 0.01)
        p["up1_gamma"] = jnp.ones((outer_nc,), jnp.float32)
        p["up1_beta"] = jnp.zeros((outer_nc,), jnp.float32)
        p["up2_w"] = _w(keys[4], (inner_nc, outer_nc, 4, 4))
        p["up2_b"] = _w(keys[5], (outer_nc,), 0.01)
        p["up2_gamma"] = jnp.ones((outer_nc,), jnp.float32)
        p["up2_beta"] = jnp.zeros((outer_nc,), jnp.float32)
        half = inner_nc // 2
        # int_conv: Conv2d(inner_nc, inner_nc // 2, 3, 1, 1)  (original "/ 2")
        p["int_w"] = _w(keys[6], (half, inner_nc, 3, 3))
        p["int_b"] = _w(keys[7], (half,), 0.01)
        # fc: nn.Linear(256, 3); 256 == inner_nc//2 only at the original ngf=64,
        # generalized here to Linear(inner_nc//2, 3).
        p["fc_w"] = _w(keys[8], (3, half))
        p["fc_b"] = _w(keys[9], (3,), 0.01)
    else:
        p["down_gamma"] = jnp.ones((inner_nc,), jnp.float32)
        p["down_beta"] = jnp.zeros((inner_nc,), jnp.float32)
        p["up1_w"] = _w(keys[2], (inner_nc * 2, outer_nc, 4, 4))
        p["up1_b"] = _w(keys[3], (outer_nc,), 0.01)
        p["up1_gamma"] = jnp.ones((outer_nc,), jnp.float32)
        p["up1_beta"] = jnp.zeros((outer_nc,), jnp.float32)
        p["up2_w"] = _w(keys[4], (inner_nc * 2, outer_nc, 4, 4))
        p["up2_b"] = _w(keys[5], (outer_nc,), 0.01)
        p["up2_gamma"] = jnp.ones((outer_nc,), jnp.float32)
        p["up2_beta"] = jnp.zeros((outer_nc,), jnp.float32)
        p["sub"] = sub
    return p


def init_multi_unet_generator(key, input_nc, output_nc, num_downs, ngf):
    keys = jax.random.split(key, num_downs)
    block = init_block(keys[0], ngf * 8, ngf * 8, innermost=True)
    for i in range(num_downs - 5):
        block = init_block(keys[1 + i], ngf * 8, ngf * 8, sub=block)
    block = init_block(keys[num_downs - 4], ngf * 4, ngf * 8, sub=block)
    block = init_block(keys[num_downs - 3], ngf * 2, ngf * 4, sub=block)
    block = init_block(keys[num_downs - 2], ngf, ngf * 2, sub=block)
    block = init_block(keys[num_downs - 1], output_nc, ngf, sub=block, outermost=True)
    return block


def prepare_block(p):
    """Pack raw PyTorch-layout params into bf16 GEMM-ready matrices (once)."""
    kind = p["kind"]
    q = {"kind": kind}
    q["down_wm"] = _conv_weight_matrix(p["down_w"]).astype(jnp.bfloat16)
    q["down_b"] = p["down_b"].astype(jnp.float32)
    wm, bm, C1, C2, Cmax = _prep_up_pair(p["up1_w"], p["up1_b"], p["up2_w"], p["up2_b"])
    q.update(up_wm=wm, up_bm=bm, C1=C1, C2=C2, Cmax=Cmax)
    if kind == "outermost":
        q["sub"] = prepare_block(p["sub"])
    elif kind == "innermost":
        q["up1_gamma"], q["up1_beta"] = p["up1_gamma"], p["up1_beta"]
        q["up2_gamma"], q["up2_beta"] = p["up2_gamma"], p["up2_beta"]
        # 3x3 conv with pad=1 on a 1x1 (pooled) input only sees its center tap.
        q["int_wc"] = p["int_w"][:, :, 1, 1].T.astype(jnp.float32)  # (inner, half)
        q["int_b"] = p["int_b"].astype(jnp.float32)
        q["fc_w"] = p["fc_w"].astype(jnp.float32)
        q["fc_b"] = p["fc_b"].astype(jnp.float32)
    else:
        q["down_gamma"], q["down_beta"] = p["down_gamma"], p["down_beta"]
        q["up1_gamma"], q["up1_beta"] = p["up1_gamma"], p["up1_beta"]
        q["up2_gamma"], q["up2_beta"] = p["up2_gamma"], p["up2_beta"]
        q["sub"] = prepare_block(p["sub"])
    return q


# ----------------------------------------------------------------------------
# Forward pass (mirrors MultiUnetSkipConnectionBlock.forward), NHWC internally
# ----------------------------------------------------------------------------
def block_forward(p, x):
    kind = p["kind"]
    if kind == "outermost":
        # down = [downconv]
        d = down_conv(x, p["down_wm"], p["down_b"], act="none")
        y1, y2, cs = block_forward(p["sub"], d)
        # up_i = [ReLU, ConvTranspose2d]  (both branches in one batched GEMM)
        y1, y2 = conv_transpose_pair(y1, y2, p["up_wm"], p["up_bm"],
                                     p["C1"], p["C2"], p["Cmax"])
        return y1, y2, cs
    elif kind == "innermost":
        # down = [LeakyReLU(0.2), Conv2d]
        d = down_conv(x, p["down_wm"], p["down_b"], act="leaky")
        # int_conv = [AdaptiveAvgPool2d((1,1)), ReLU, Conv2d(3,1,1), ReLU]; fc
        pooled = jax.nn.relu(d.mean(axis=(1, 2)))                # (B, inner_nc)
        cs = jax.nn.relu(pooled @ p["int_wc"] + p["int_b"])      # (B, inner_nc//2)
        cs = cs @ p["fc_w"].T + p["fc_b"]                        # (B, 3)
        # up_i = [ReLU, ConvTranspose2d, BatchNorm2d]; both branches share `d`
        y1, y2 = conv_transpose_pair(d, d, p["up_wm"], p["up_bm"],
                                     p["C1"], p["C2"], p["Cmax"])
        y1 = batchnorm(y1, p["up1_gamma"], p["up1_beta"])
        y2 = batchnorm(y2, p["up2_gamma"], p["up2_beta"])
        y1 = jnp.concatenate([y1, x], axis=-1)
        y2 = jnp.concatenate([y2, x], axis=-1)
        return y1, y2, cs
    else:
        # down = [LeakyReLU(0.2), Conv2d, BatchNorm2d]
        d = down_conv(x, p["down_wm"], p["down_b"], act="leaky")
        d = batchnorm(d, p["down_gamma"], p["down_beta"])
        y1, y2, cs = block_forward(p["sub"], d)
        y1, y2 = conv_transpose_pair(y1, y2, p["up_wm"], p["up_bm"],
                                     p["C1"], p["C2"], p["Cmax"])
        y1 = batchnorm(y1, p["up1_gamma"], p["up1_beta"])
        y2 = batchnorm(y2, p["up2_gamma"], p["up2_beta"])
        y1 = jnp.concatenate([y1, x], axis=-1)
        y2 = jnp.concatenate([y2, x], axis=-1)
        return y1, y2, cs


def multi_unet_generator_forward(params, x_nchw):
    x = jnp.transpose(x_nchw, (0, 2, 3, 1))          # NCHW -> NHWC (once)
    y1, y2, cs = block_forward(params, x)
    return (jnp.transpose(y1, (0, 3, 1, 2)),
            jnp.transpose(y2, (0, 3, 1, 2)), cs)     # back to NCHW (once)


# ----------------------------------------------------------------------------
# Demo
# ----------------------------------------------------------------------------
if __name__ == "__main__":
    key = jax.random.PRNGKey(0)
    k_param, k_x = jax.random.split(key)

    # Small config: ngf=8, num_downs=5 -> needs spatial >= 32.  The outermost
    # downconv consumes outer_nc == output_nc channels (as written in the
    # PyTorch module), so the generator input has output_nc=3 channels.
    input_nc, output_nc, num_downs, ngf = 3, 3, 5, 8
    raw_params = init_multi_unet_generator(k_param, input_nc, output_nc, num_downs, ngf)
    params = prepare_block(raw_params)

    x = jax.random.normal(k_x, (2, 3, 32, 32), dtype=jnp.float32)

    fwd = jax.jit(lambda xin: multi_unet_generator_forward(params, xin))
    y1, y2, color_s = fwd(x)
    jax.block_until_ready((y1, y2, color_s))

    assert y1.shape == (2, 1, 32, 32), y1.shape
    assert y2.shape == (2, 3, 32, 32), y2.shape
    assert color_s.shape == (2, 3), color_s.shape
    assert bool(jnp.all(jnp.isfinite(y1)))
    assert bool(jnp.all(jnp.isfinite(y2)))
    assert bool(jnp.all(jnp.isfinite(color_s)))
    print("KERNEL_OK")
</pallas_src>

<mosaic_0001>
module attributes {stable_mosaic.version = 11 : i64} {
  func.func @_mm_kernel_single(%arg0: i32, %arg1: i32, %arg2: i32, %arg3: memref<1x256x128xbf16, #tpu.memory_space<vmem>>, %arg4: memref<1x128x128xbf16, #tpu.memory_space<vmem>>, %arg5: memref<1x1x128xf32, #tpu.memory_space<vmem>>, %arg6: memref<1x256x128xf32, #tpu.memory_space<vmem>>) attributes {dimension_semantics = [#tpu.dimension_semantics<parallel>, #tpu.dimension_semantics<parallel>, #tpu.dimension_semantics<parallel>], iteration_bounds = array<i64: 1, 2, 1>, scalar_prefetch = 0 : i64, scratch_operands = 0 : i64, tpu.core_type = #tpu.core_type<tc>, window_params = [{transform_indices = @transform_0, window_bounds = array<i64: 1, 256, 128>}, {transform_indices = @transform_1, window_bounds = array<i64: 1, 128, 128>}, {transform_indices = @transform_2, window_bounds = array<i64: 1, 1, 128>}, {transform_indices = @transform_3, window_bounds = array<i64: 1, 256, 128>}]} {
    %c0 = arith.constant 0 : index
    %c0_0 = arith.constant 0 : index
    %c0_1 = arith.constant 0 : index
    %0 = vector.load %arg3[%c0, %c0_0, %c0_1] : memref<1x256x128xbf16, #tpu.memory_space<vmem>>, vector<1x256x128xbf16>
    %1 = vector.shape_cast %0 : vector<1x256x128xbf16> to vector<256x128xbf16>
    %c0_2 = arith.constant 0 : index
    %c0_3 = arith.constant 0 : index
    %c0_4 = arith.constant 0 : index
    %2 = vector.load %arg4[%c0_2, %c0_3, %c0_4] : memref<1x128x128xbf16, #tpu.memory_space<vmem>>, vector<1x128x128xbf16>
    %3 = vector.shape_cast %2 : vector<1x128x128xbf16> to vector<128x128xbf16>
    %cst = arith.constant dense<0.000000e+00> : vector<256x128xf32>
    %4 = tpu.matmul %1, %3, %cst {dimension_numbers = #tpu.dot_dimension_numbers<[1], [0], [0], [1], [0, 0, 1, 1], [], []>} : vector<256x128xbf16>, vector<128x128xbf16>, vector<256x128xf32> -> vector<256x128xf32>
    %c0_5 = arith.constant 0 : index
    %c0_6 = arith.constant 0 : index
    %c0_7 = arith.constant 0 : index
    %5 = vector.load %arg5[%c0_5, %c0_6, %c0_7] : memref<1x1x128xf32, #tpu.memory_space<vmem>>, vector<1x1x128xf32>
    %6 = vector.shape_cast %5 : vector<1x1x128xf32> to vector<1x128xf32>
    %7 = vector.broadcast %6 : vector<1x128xf32> to vector<256x128xf32>
    %8 = arith.addf %4, %7 : vector<256x128xf32>
    %c0_8 = arith.constant 0 : index
    %c0_9 = arith.constant 0 : index
    %c0_10 = arith.constant 0 : index
    %9 = vector.load %arg6[%c0_8, %c0_9, %c0_10] : memref<1x256x128xf32, #tpu.memory_space<vmem>>, vector<1x256x128xf32>
    %10 = vector.shape_cast %9 : vector<1x256x128xf32> to vector<256x128xf32>
    %11 = vector.shape_cast %8 : vector<256x128xf32> to vector<1x256x128xf32>
    tpu.vector_store %arg6[%c0_8, %c0_9, %c0_10], %11 {strides = array<i32>} : memref<1x256x128xf32, #tpu.memory_space<vmem>>, vector<1x256x128xf32>,
    return
  }
  func.func @transform_0(%arg0: i32, %arg1: i32, %arg2: i32) -> (i32, i32, i32) {
    %c0_i32 = arith.constant 0 : i32
    %c0_i32_0 = arith.constant 0 : i32
    return %arg0, %arg1, %c0_i32 : i32, i32, i32
  }
  func.func @transform_1(%arg0: i32, %arg1: i32, %arg2: i32) -> (i32, i32, i32) {
    %c0_i32 = arith.constant 0 : i32
    %c0_i32_0 = arith.constant 0 : i32
    return %arg0, %c0_i32, %arg2 : i32, i32, i32
  }
  func.func @transform_2(%arg0: i32, %arg1: i32, %arg2: i32) -> (i32, i32, i32) {
    %c0_i32 = arith.constant 0 : i32
    %c0_i32_0 = arith.constant 0 : i32
    return %arg0, %c0_i32, %arg2 : i32, i32, i32
  }
  func.func @transform_3(%arg0: i32, %arg1: i32, %arg2: i32) -> (i32, i32, i32) {
    %c0_i32 = arith.constant 0 : i32
    return %arg0, %arg1, %arg2 : i32, i32, i32
  }
}

module attributes {stable_mosaic.version = 11 : i64} {
  func.func @_mm_kernel_single(%arg0: i32, %arg1: i32, %arg2: i32, %arg3: memref<1x128x128xbf16, #tpu.memory_space<vmem>>, %arg4: memref<1x128x128xbf16, #tpu.memory_space<vmem>>, %arg5: memref<1x1x128xf32, #tpu.memory_space<vmem>>, %arg6: memref<1x128x128xf32, #tpu.memory_space<vmem>>) attributes {dimension_semantics = [#tpu.dimension_semantics<parallel>, #tpu.dimension_semantics<parallel>, #tpu.dimension_semantics<parallel>], iteration_bounds = array<i64: 1, 1, 1>, scalar_prefetch = 0 : i64, scratch_operands = 0 : i64, tpu.core_type = #tpu.core_type<tc>, window_params = [{transform_indices = @transform_0, window_bounds = array<i64: 1, 128, 128>}, {transform_indices = @transform_1, window_bounds = array<i64: 1, 128, 128>}, {transform_indices = @transform_2, window_bounds = array<i64: 1, 1, 128>}, {transform_indices = @transform_3, window_bounds = array<i64: 1, 128, 128>}]} {
    %c0 = arith.constant 0 : index
    %c0_0 = arith.constant 0 : index
    %c0_1 = arith.constant 0 : index
    %0 = vector.load %arg3[%c0, %c0_0, %c0_1] : memref<1x128x128xbf16, #tpu.memory_space<vmem>>, vector<1x128x128xbf16>
    %1 = vector.shape_cast %0 : vector<1x128x128xbf16> to vector<128x128xbf16>
    %c0_2 = arith.constant 0 : index
    %c0_3 = arith.constant 0 : index
    %c0_4 = arith.constant 0 : index
    %2 = vector.load %arg4[%c0_2, %c0_3, %c0_4] : memref<1x128x128xbf16, #tpu.memory_space<vmem>>, vector<1x128x128xbf16>
    %3 = vector.shape_cast %2 : vector<1x128x128xbf16> to vector<128x128xbf16>
    %cst = arith.constant dense<0.000000e+00> : vector<128x128xf32>
    %4 = tpu.matmul %1, %3, %cst {dimension_numbers = #tpu.dot_dimension_numbers<[1], [0], [0], [1], [0, 0, 1, 1], [], []>} : vector<128x128xbf16>, vector<128x128xbf16>, vector<128x128xf32> -> vector<128x128xf32>
    %c0_5 = arith.constant 0 : index
    %c0_6 = arith.constant 0 : index
    %c0_7 = arith.constant 0 : index
    %5 = vector.load %arg5[%c0_5, %c0_6, %c0_7] : memref<1x1x128xf32, #tpu.memory_space<vmem>>, vector<1x1x128xf32>
    %6 = vector.shape_cast %5 : vector<1x1x128xf32> to vector<1x128xf32>
    %7 = vector.broadcast %6 : vector<1x128xf32> to vector<128x128xf32>
    %8 = arith.addf %4, %7 : vector<128x128xf32>
    %c0_8 = arith.constant 0 : index
    %c0_9 = arith.constant 0 : index
    %c0_10 = arith.constant 0 : index
    %9 = vector.load %arg6[%c0_8, %c0_9, %c0_10] : memref<1x128x128xf32, #tpu.memory_space<vmem>>, vector<1x128x128xf32>
    %10 = vector.shape_cast %9 : vector<1x128x128xf32> to vector<128x128xf32>
    %11 = vector.shape_cast %8 : vector<128x128xf32> to vector<1x128x128xf32>
    tpu.vector_store %arg6[%c0_8, %c0_9, %c0_10], %11 {strides = array<i32>} : memref<1x128x128xf32, #tpu.memory_space<vmem>>, vector<1x128x128xf32>,
    return
  }
  func.func @transform_0(%arg0: i32, %arg1: i32, %arg2: i32) -> (i32, i32, i32) {
    %c0_i32 = arith.constant 0 : i32
    %c0_i32_0 = arith.constant 0 : i32
    return %arg0, %arg1, %c0_i32 : i32, i32, i32
  }
  func.func @transform_1(%arg0: i32, %arg1: i32, %arg2: i32) -> (i32, i32, i32) {
    %c0_i32 = arith.constant 0 : i32
    %c0_i32_0 = arith.constant 0 : i32
    return %arg0, %c0_i32, %arg2 : i32, i32, i32
  }
  func.func @transform_2(%arg0: i32, %arg1: i32, %arg2: i32) -> (i32, i32, i32) {
    %c0_i32 = arith.constant 0 : i32
    %c0_i32_0 = arith.constant 0 : i32
    return %arg0, %c0_i32, %arg2 : i32, i32, i32
  }
  func.func @transform_3(%arg0: i32, %arg1: i32, %arg2: i32) -> (i32, i32, i32) {
    %c0_i32 = arith.constant 0 : i32
    return %arg0, %arg1, %arg2 : i32, i32, i32
  }
}

module attributes {stable_mosaic.version = 11 : i64} {
  func.func @_mm_kernel_single(%arg0: i32, %arg1: i32, %arg2: i32, %arg3: memref<1x32x256xbf16, #tpu.memory_space<vmem>>, %arg4: memref<1x256x128xbf16, #tpu.memory_space<vmem>>, %arg5: memref<1x1x128xf32, #tpu.memory_space<vmem>>, %arg6: memref<1x32x128xf32, #tpu.memory_space<vmem>>) attributes {dimension_semantics = [#tpu.dimension_semantics<parallel>, #tpu.dimension_semantics<parallel>, #tpu.dimension_semantics<parallel>], iteration_bounds = array<i64: 1, 1, 1>, scalar_prefetch = 0 : i64, scratch_operands = 0 : i64, tpu.core_type = #tpu.core_type<tc>, window_params = [{transform_indices = @transform_0, window_bounds = array<i64: 1, 32, 256>}, {transform_indices = @transform_1, window_bounds = array<i64: 1, 256, 128>}, {transform_indices = @transform_2, window_bounds = array<i64: 1, 1, 128>}, {transform_indices = @transform_3, window_bounds = array<i64: 1, 32, 128>}]} {
    %c0 = arith.constant 0 : index
    %c0_0 = arith.constant 0 : index
    %c0_1 = arith.constant 0 : index
    %0 = vector.load %arg3[%c0, %c0_0, %c0_1] : memref<1x32x256xbf16, #tpu.memory_space<vmem>>, vector<1x32x256xbf16>
    %1 = vector.shape_cast %0 : vector<1x32x256xbf16> to vector<32x256xbf16>
    %c0_2 = arith.constant 0 : index
    %c0_3 = arith.constant 0 : index
    %c0_4 = arith.constant 0 : index
    %2 = vector.load %arg4[%c0_2, %c0_3, %c0_4] : memref<1x256x128xbf16, #tpu.memory_space<vmem>>, vector<1x256x128xbf16>
    %3 = vector.shape_cast %2 : vector<1x256x128xbf16> to vector<256x128xbf16>
    %cst = arith.constant dense<0.000000e+00> : vector<32x128xf32>
    %4 = tpu.matmul %1, %3, %cst {dimension_numbers = #tpu.dot_dimension_numbers<[1], [0], [0], [1], [0, 0, 1, 1], [], []>} : vector<32x256xbf16>, vector<256x128xbf16>, vector<32x128xf32> -> vector<32x128xf32>
    %c0_5 = arith.constant 0 : index
    %c0_6 = arith.constant 0 : index
    %c0_7 = arith.constant 0 : index
    %5 = vector.load %arg5[%c0_5, %c0_6, %c0_7] : memref<1x1x128xf32, #tpu.memory_space<vmem>>, vector<1x1x128xf32>
    %6 = vector.shape_cast %5 : vector<1x1x128xf32> to vector<1x128xf32>
    %7 = vector.broadcast %6 : vector<1x128xf32> to vector<32x128xf32>
    %8 = arith.addf %4, %7 : vector<32x128xf32>
    %c0_8 = arith.constant 0 : index
    %c0_9 = arith.constant 0 : index
    %c0_10 = arith.constant 0 : index
    %9 = vector.load %arg6[%c0_8, %c0_9, %c0_10] : memref<1x32x128xf32, #tpu.memory_space<vmem>>, vector<1x32x128xf32>
    %10 = vector.shape_cast %9 : vector<1x32x128xf32> to vector<32x128xf32>
    %11 = vector.shape_cast %8 : vector<32x128xf32> to vector<1x32x128xf32>
    tpu.vector_store %arg6[%c0_8, %c0_9, %c0_10], %11 {strides = array<i32>} : memref<1x32x128xf32, #tpu.memory_space<vmem>>, vector<1x32x128xf32>,
    return
  }
  func.func @transform_0(%arg0: i32, %arg1: i32, %arg2: i32) -> (i32, i32, i32) {
    %c0_i32 = arith.constant 0 : i32
    %c0_i32_0 = arith.constant 0 : i32
    return %arg0, %arg1, %c0_i32 : i32, i32, i32
  }
  func.func @transform_1(%arg0: i32, %arg1: i32, %arg2: i32) -> (i32, i32, i32) {
    %c0_i32 = arith.constant 0 : i32
    %c0_i32_0 = arith.constant 0 : i32
    return %arg0, %c0_i32, %arg2 : i32, i32, i32
  }
  func.func @transform_2(%arg0: i32, %arg1: i32, %arg2: i32) -> (i32, i32, i32) {
    %c0_i32 = arith.constant 0 : i32
    %c0_i32_0 = arith.constant 0 : i32
    return %arg0, %c0_i32, %arg2 : i32, i32, i32
  }
  func.func @transform_3(%arg0: i32, %arg1: i32, %arg2: i32) -> (i32, i32, i32) {
    %c0_i32 = arith.constant 0 : i32
    return %arg0, %arg1, %arg2 : i32, i32, i32
  }
}

module attributes {stable_mosaic.version = 11 : i64} {
  func.func @_mm_kernel_single(%arg0: i32, %arg1: i32, %arg2: i32, %arg3: memref<1x16x512xbf16, #tpu.memory_space<vmem>>, %arg4: memref<1x512x128xbf16, #tpu.memory_space<vmem>>, %arg5: memref<1x1x128xf32, #tpu.memory_space<vmem>>, %arg6: memref<1x16x128xf32, #tpu.memory_space<vmem>>) attributes {dimension_semantics = [#tpu.dimension_semantics<parallel>, #tpu.dimension_semantics<parallel>, #tpu.dimension_semantics<parallel>], iteration_bounds = array<i64: 1, 1, 1>, scalar_prefetch = 0 : i64, scratch_operands = 0 : i64, tpu.core_type = #tpu.core_type<tc>, window_params = [{transform_indices = @transform_0, window_bounds = array<i64: 1, 16, 512>}, {transform_indices = @transform_1, window_bounds = array<i64: 1, 512, 128>}, {transform_indices = @transform_2, window_bounds = array<i64: 1, 1, 128>}, {transform_indices = @transform_3, window_bounds = array<i64: 1, 16, 128>}]} {
    %c0 = arith.constant 0 : index
    %c0_0 = arith.constant 0 : index
    %c0_1 = arith.constant 0 : index
    %0 = vector.load %arg3[%c0, %c0_0, %c0_1] : memref<1x16x512xbf16, #tpu.memory_space<vmem>>, vector<1x16x512xbf16>
    %1 = vector.shape_cast %0 : vector<1x16x512xbf16> to vector<16x512xbf16>
    %c0_2 = arith.constant 0 : index
    %c0_3 = arith.constant 0 : index
    %c0_4 = arith.constant 0 : index
    %2 = vector.load %arg4[%c0_2, %c0_3, %c0_4] : memref<1x512x128xbf16, #tpu.memory_space<vmem>>, vector<1x512x128xbf16>
    %3 = vector.shape_cast %2 : vector<1x512x128xbf16> to vector<512x128xbf16>
    %cst = arith.constant dense<0.000000e+00> : vector<16x128xf32>
    %4 = tpu.matmul %1, %3, %cst {dimension_numbers = #tpu.dot_dimension_numbers<[1], [0], [0], [1], [0, 0, 1, 1], [], []>} : vector<16x512xbf16>, vector<512x128xbf16>, vector<16x128xf32> -> vector<16x128xf32>
    %c0_5 = arith.constant 0 : index
    %c0_6 = arith.constant 0 : index
    %c0_7 = arith.constant 0 : index
    %5 = vector.load %arg5[%c0_5, %c0_6, %c0_7] : memref<1x1x128xf32, #tpu.memory_space<vmem>>, vector<1x1x128xf32>
    %6 = vector.shape_cast %5 : vector<1x1x128xf32> to vector<1x128xf32>
    %7 = vector.broadcast %6 : vector<1x128xf32> to vector<16x128xf32>
    %8 = arith.addf %4, %7 : vector<16x128xf32>
    %c0_8 = arith.constant 0 : index
    %c0_9 = arith.constant 0 : index
    %c0_10 = arith.constant 0 : index
    %9 = vector.load %arg6[%c0_8, %c0_9, %c0_10] : memref<1x16x128xf32, #tpu.memory_space<vmem>>, vector<1x16x128xf32>
    %10 = vector.shape_cast %9 : vector<1x16x128xf32> to vector<16x128xf32>
    %11 = vector.shape_cast %8 : vector<16x128xf32> to vector<1x16x128xf32>
    tpu.vector_store %arg6[%c0_8, %c0_9, %c0_10], %11 {strides = array<i32>} : memref<1x16x128xf32, #tpu.memory_space<vmem>>, vector<1x16x128xf32>,
    return
  }
  func.func @transform_0(%arg0: i32, %arg1: i32, %arg2: i32) -> (i32, i32, i32) {
    %c0_i32 = arith.constant 0 : i32
    %c0_i32_0 = arith.constant 0 : i32
    return %arg0, %arg1, %c0_i32 : i32, i32, i32
  }
  func.func @transform_1(%arg0: i32, %arg1: i32, %arg2: i32) -> (i32, i32, i32) {
    %c0_i32 = arith.constant 0 : i32
    %c0_i32_0 = arith.constant 0 : i32
    return %arg0, %c0_i32, %arg2 : i32, i32, i32
  }
  func.func @transform_2(%arg0: i32, %arg1: i32, %arg2: i32) -> (i32, i32, i32) {
    %c0_i32 = arith.constant 0 : i32
    %c0_i32_0 = arith.constant 0 : i32
    return %arg0, %c0_i32, %arg2 : i32, i32, i32
  }
  func.func @transform_3(%arg0: i32, %arg1: i32, %arg2: i32) -> (i32, i32, i32) {
    %c0_i32 = arith.constant 0 : i32
    return %arg0, %arg1, %arg2 : i32, i32, i32
  }
}

module attributes {stable_mosaic.version = 11 : i64} {
  func.func @_mm_kernel_single(%arg0: i32, %arg1: i32, %arg2: i32, %arg3: memref<1x16x1024xbf16, #tpu.memory_space<vmem>>, %arg4: memref<1x1024x128xbf16, #tpu.memory_space<vmem>>, %arg5: memref<1x1x128xf32, #tpu.memory_space<vmem>>, %arg6: memref<1x16x128xf32, #tpu.memory_space<vmem>>) attributes {dimension_semantics = [#tpu.dimension_semantics<parallel>, #tpu.dimension_semantics<parallel>, #tpu.dimension_semantics<parallel>], iteration_bounds = array<i64: 1, 1, 1>, scalar_prefetch = 0 : i64, scratch_operands = 0 : i64, tpu.core_type = #tpu.core_type<tc>, window_params = [{transform_indices = @transform_0, window_bounds = array<i64: 1, 16, 1024>}, {transform_indices = @transform_1, window_bounds = array<i64: 1, 1024, 128>}, {transform_indices = @transform_2, window_bounds = array<i64: 1, 1, 128>}, {transform_indices = @transform_3, window_bounds = array<i64: 1, 16, 128>}]} {
    %c0 = arith.constant 0 : index
    %c0_0 = arith.constant 0 : index
    %c0_1 = arith.constant 0 : index
    %0 = vector.load %arg3[%c0, %c0_0, %c0_1] : memref<1x16x1024xbf16, #tpu.memory_space<vmem>>, vector<1x16x1024xbf16>
    %1 = vector.shape_cast %0 : vector<1x16x1024xbf16> to vector<16x1024xbf16>
    %c0_2 = arith.constant 0 : index
    %c0_3 = arith.constant 0 : index
    %c0_4 = arith.constant 0 : index
    %2 = vector.load %arg4[%c0_2, %c0_3, %c0_4] : memref<1x1024x128xbf16, #tpu.memory_space<vmem>>, vector<1x1024x128xbf16>
    %3 = vector.shape_cast %2 : vector<1x1024x128xbf16> to vector<1024x128xbf16>
    %cst = arith.constant dense<0.000000e+00> : vector<16x128xf32>
    %4 = tpu.matmul %1, %3, %cst {dimension_numbers = #tpu.dot_dimension_numbers<[1], [0], [0], [1], [0, 0, 1, 1], [], []>} : vector<16x1024xbf16>, vector<1024x128xbf16>, vector<16x128xf32> -> vector<16x128xf32>
    %c0_5 = arith.constant 0 : index
    %c0_6 = arith.constant 0 : index
    %c0_7 = arith.constant 0 : index
    %5 = vector.load %arg5[%c0_5, %c0_6, %c0_7] : memref<1x1x128xf32, #tpu.memory_space<vmem>>, vector<1x1x128xf32>
    %6 = vector.shape_cast %5 : vector<1x1x128xf32> to vector<1x128xf32>
    %7 = vector.broadcast %6 : vector<1x128xf32> to vector<16x128xf32>
    %8 = arith.addf %4, %7 : vector<16x128xf32>
    %c0_8 = arith.constant 0 : index
    %c0_9 = arith.constant 0 : index
    %c0_10 = arith.constant 0 : index
    %9 = vector.load %arg6[%c0_8, %c0_9, %c0_10] : memref<1x16x128xf32, #tpu.memory_space<vmem>>, vector<1x16x128xf32>
    %10 = vector.shape_cast %9 : vector<1x16x128xf32> to vector<16x128xf32>
    %11 = vector.shape_cast %8 : vector<16x128xf32> to vector<1x16x128xf32>
    tpu.vector_store %arg6[%c0_8, %c0_9, %c0_10], %11 {strides = array<i32>} : memref<1x16x128xf32, #tpu.memory_space<vmem>>, vector<1x16x128xf32>,
    return
  }
  func.func @transform_0(%arg0: i32, %arg1: i32, %arg2: i32) -> (i32, i32, i32) {
    %c0_i32 = arith.constant 0 : i32
    %c0_i32_0 = arith.constant 0 : i32
    return %arg0, %arg1, %c0_i32 : i32, i32, i32
  }
  func.func @transform_1(%arg0: i32, %arg1: i32, %arg2: i32) -> (i32, i32, i32) {
    %c0_i32 = arith.constant 0 : i32
    %c0_i32_0 = arith.constant 0 : i32
    return %arg0, %c0_i32, %arg2 : i32, i32, i32
  }
  func.func @transform_2(%arg0: i32, %arg1: i32, %arg2: i32) -> (i32, i32, i32) {
    %c0_i32 = arith.constant 0 : i32
    %c0_i32_0 = arith.constant 0 : i32
    return %arg0, %c0_i32, %arg2 : i32, i32, i32
  }
  func.func @transform_3(%arg0: i32, %arg1: i32, %arg2: i32) -> (i32, i32, i32) {
    %c0_i32 = arith.constant 0 : i32
    return %arg0, %arg1, %arg2 : i32, i32, i32
  }
}

module attributes {stable_mosaic.version = 11 : i64} {
  func.func @_mm_kernel_single(%arg0: i32, %arg1: i32, %arg2: i32, %arg3: memref<1x16x640xbf16, #tpu.memory_space<vmem>>, %arg4: memref<1x640x256xbf16, #tpu.memory_space<vmem>>, %arg5: memref<1x1x256xf32, #tpu.memory_space<vmem>>, %arg6: memref<1x16x256xf32, #tpu.memory_space<vmem>>) attributes {dimension_semantics = [#tpu.dimension_semantics<parallel>, #tpu.dimension_semantics<parallel>, #tpu.dimension_semantics<parallel>], iteration_bounds = array<i64: 2, 1, 1>, scalar_prefetch = 0 : i64, scratch_operands = 0 : i64, tpu.core_type = #tpu.core_type<tc>, window_params = [{transform_indices = @transform_0, window_bounds = array<i64: 1, 16, 640>}, {transform_indices = @transform_1, window_bounds = array<i64: 1, 640, 256>}, {transform_indices = @transform_2, window_bounds = array<i64: 1, 1, 256>}, {transform_indices = @transform_3, window_bounds = array<i64: 1, 16, 256>}]} {
    %c0 = arith.constant 0 : index
    %c0_0 = arith.constant 0 : index
    %c0_1 = arith.constant 0 : index
    %0 = vector.load %arg3[%c0, %c0_0, %c0_1] : memref<1x16x640xbf16, #tpu.memory_space<vmem>>, vector<1x16x640xbf16>
    %1 = vector.shape_cast %0 : vector<1x16x640xbf16> to vector<16x640xbf16>
    %c0_2 = arith.constant 0 : index
    %c0_3 = arith.constant 0 : index
    %c0_4 = arith.constant 0 : index
    %2 = vector.load %arg4[%c0_2, %c0_3, %c0_4] : memref<1x640x256xbf16, #tpu.memory_space<vmem>>, vector<1x640x256xbf16>
    %3 = vector.shape_cast %2 : vector<1x640x256xbf16> to vector<640x256xbf16>
    %cst = arith.constant dense<0.000000e+00> : vector<16x256xf32>
    %4 = tpu.matmul %1, %3, %cst {dimension_numbers = #tpu.dot_dimension_numbers<[1], [0], [0], [1], [0, 0, 1, 1], [], []>} : vector<16x640xbf16>, vector<640x256xbf16>, vector<16x256xf32> -> vector<16x256xf32>
    %c0_5 = arith.constant 0 : index
    %c0_6 = arith.constant 0 : index
    %c0_7 = arith.constant 0 : index
    %5 = vector.load %arg5[%c0_5, %c0_6, %c0_7] : memref<1x1x256xf32, #tpu.memory_space<vmem>>, vector<1x1x256xf32>
    %6 = vector.shape_cast %5 : vector<1x1x256xf32> to vector<1x256xf32>
    %7 = vector.broadcast %6 : vector<1x256xf32> to vector<16x256xf32>
    %8 = arith.addf %4, %7 : vector<16x256xf32>
    %c0_8 = arith.constant 0 : index
    %c0_9 = arith.constant 0 : index
    %c0_10 = arith.constant 0 : index
    %9 = vector.load %arg6[%c0_8, %c0_9, %c0_10] : memref<1x16x256xf32, #tpu.memory_space<vmem>>, vector<1x16x256xf32>
    %10 = vector.shape_cast %9 : vector<1x16x256xf32> to vector<16x256xf32>
    %11 = vector.shape_cast %8 : vector<16x256xf32> to vector<1x16x256xf32>
    tpu.vector_store %arg6[%c0_8, %c0_9, %c0_10], %11 {strides = array<i32>} : memref<1x16x256xf32, #tpu.memory_space<vmem>>, vector<1x16x256xf32>,
    return
  }
  func.func @transform_0(%arg0: i32, %arg1: i32, %arg2: i32) -> (i32, i32, i32) {
    %c0_i32 = arith.constant 0 : i32
    %c0_i32_0 = arith.constant 0 : i32
    return %arg0, %arg1, %c0_i32 : i32, i32, i32
  }
  func.func @transform_1(%arg0: i32, %arg1: i32, %arg2: i32) -> (i32, i32, i32) {
    %c0_i32 = arith.constant 0 : i32
    %c0_i32_0 = arith.constant 0 : i32
    return %arg0, %c0_i32, %arg2 : i32, i32, i32
  }
  func.func @transform_2(%arg0: i32, %arg1: i32, %arg2: i32) -> (i32, i32, i32) {
    %c0_i32 = arith.constant 0 : i32
    %c0_i32_0 = arith.constant 0 : i32
    return %arg0, %c0_i32, %arg2 : i32, i32, i32
  }
  func.func @transform_3(%arg0: i32, %arg1: i32, %arg2: i32) -> (i32, i32, i32) {
    %c0_i32 = arith.constant 0 : i32
    return %arg0, %arg1, %arg2 : i32, i32, i32
  }
}

module attributes {stable_mosaic.version = 11 : i64} {
  func.func @_mm_kernel_single(%arg0: i32, %arg1: i32, %arg2: i32, %arg3: memref<1x16x1152xbf16, #tpu.memory_space<vmem>>, %arg4: memref<1x1152x128xbf16, #tpu.memory_space<vmem>>, %arg5: memref<1x1x128xf32, #tpu.memory_space<vmem>>, %arg6: memref<1x16x128xf32, #tpu.memory_space<vmem>>) attributes {dimension_semantics = [#tpu.dimension_semantics<parallel>, #tpu.dimension_semantics<parallel>, #tpu.dimension_semantics<parallel>], iteration_bounds = array<i64: 2, 1, 1>, scalar_prefetch = 0 : i64, scratch_operands = 0 : i64, tpu.core_type = #tpu.core_type<tc>, window_params = [{transform_indices = @transform_0, window_bounds = array<i64: 1, 16, 1152>}, {transform_indices = @transform_1, window_bounds = array<i64: 1, 1152, 128>}, {transform_indices = @transform_2, window_bounds = array<i64: 1, 1, 128>}, {transform_indices = @transform_3, window_bounds = array<i64: 1, 16, 128>}]} {
    %c0 = arith.constant 0 : index
    %c0_0 = arith.constant 0 : index
    %c0_1 = arith.constant 0 : index
    %0 = vector.load %arg3[%c0, %c0_0, %c0_1] : memref<1x16x1152xbf16, #tpu.memory_space<vmem>>, vector<1x16x1152xbf16>
    %1 = vector.shape_cast %0 : vector<1x16x1152xbf16> to vector<16x1152xbf16>
    %c0_2 = arith.constant 0 : index
    %c0_3 = arith.constant 0 : index
    %c0_4 = arith.constant 0 : index
    %2 = vector.load %arg4[%c0_2, %c0_3, %c0_4] : memref<1x1152x128xbf16, #tpu.memory_space<vmem>>, vector<1x1152x128xbf16>
    %3 = vector.shape_cast %2 : vector<1x1152x128xbf16> to vector<1152x128xbf16>
    %cst = arith.constant dense<0.000000e+00> : vector<16x128xf32>
    %4 = tpu.matmul %1, %3, %cst {dimension_numbers = #tpu.dot_dimension_numbers<[1], [0], [0], [1], [0, 0, 1, 1], [], []>} : vector<16x1152xbf16>, vector<1152x128xbf16>, vector<16x128xf32> -> vector<16x128xf32>
    %c0_5 = arith.constant 0 : index
    %c0_6 = arith.constant 0 : index
    %c0_7 = arith.constant 0 : index
    %5 = vector.load %arg5[%c0_5, %c0_6, %c0_7] : memref<1x1x128xf32, #tpu.memory_space<vmem>>, vector<1x1x128xf32>
    %6 = vector.shape_cast %5 : vector<1x1x128xf32> to vector<1x128xf32>
    %7 = vector.broadcast %6 : vector<1x128xf32> to vector<16x128xf32>
    %8 = arith.addf %4, %7 : vector<16x128xf32>
    %c0_8 = arith.constant 0 : index
    %c0_9 = arith.constant 0 : index
    %c0_10 = arith.constant 0 : index
    %9 = vector.load %arg6[%c0_8, %c0_9, %c0_10] : memref<1x16x128xf32, #tpu.memory_space<vmem>>, vector<1x16x128xf32>
    %10 = vector.shape_cast %9 : vector<1x16x128xf32> to vector<16x128xf32>
    %11 = vector.shape_cast %8 : vector<16x128xf32> to vector<1x16x128xf32>
    tpu.vector_store %arg6[%c0_8, %c0_9, %c0_10], %11 {strides = array<i32>} : memref<1x16x128xf32, #tpu.memory_space<vmem>>, vector<1x16x128xf32>,
    return
  }
  func.func @transform_0(%arg0: i32, %arg1: i32, %arg2: i32) -> (i32, i32, i32) {
    %c0_i32 = arith.constant 0 : i32
    %c0_i32_0 = arith.constant 0 : i32
    return %arg0, %arg1, %c0_i32 : i32, i32, i32
  }
  func.func @transform_1(%arg0: i32, %arg1: i32, %arg2: i32) -> (i32, i32, i32) {
    %c0_i32 = arith.constant 0 : i32
    %c0_i32_0 = arith.constant 0 : i32
    return %arg0, %c0_i32, %arg2 : i32, i32, i32
  }
  func.func @transform_2(%arg0: i32, %arg1: i32, %arg2: i32) -> (i32, i32, i32) {
    %c0_i32 = arith.constant 0 : i32
    %c0_i32_0 = arith.constant 0 : i32
    return %arg0, %c0_i32, %arg2 : i32, i32, i32
  }
  func.func @transform_3(%arg0: i32, %arg1: i32, %arg2: i32) -> (i32, i32, i32) {
    %c0_i32 = arith.constant 0 : i32
    return %arg0, %arg1, %arg2 : i32, i32, i32
  }
}

module attributes {stable_mosaic.version = 11 : i64} {
  func.func @_mm_kernel_single(%arg0: i32, %arg1: i32, %arg2: i32, %arg3: memref<1x32x640xbf16, #tpu.memory_space<vmem>>, %arg4: memref<1x640x128xbf16, #tpu.memory_space<vmem>>, %arg5: memref<1x1x128xf32, #tpu.memory_space<vmem>>, %arg6: memref<1x32x128xf32, #tpu.memory_space<vmem>>) attributes {dimension_semantics = [#tpu.dimension_semantics<parallel>, #tpu.dimension_semantics<parallel>, #tpu.dimension_semantics<parallel>], iteration_bounds = array<i64: 2, 1, 1>, scalar_prefetch = 0 : i64, scratch_operands = 0 : i64, tpu.core_type = #tpu.core_type<tc>, window_params = [{transform_indices = @transform_0, window_bounds = array<i64: 1, 32, 640>}, {transform_indices = @transform_1, window_bounds = array<i64: 1, 640, 128>}, {transform_indices = @transform_2, window_bounds = array<i64: 1, 1, 128>}, {transform_indices = @transform_3, window_bounds = array<i64: 1, 32, 128>}]} {
    %c0 = arith.constant 0 : index
    %c0_0 = arith.constant 0 : index
    %c0_1 = arith.constant 0 : index
    %0 = vector.load %arg3[%c0, %c0_0, %c0_1] : memref<1x32x640xbf16, #tpu.memory_space<vmem>>, vector<1x32x640xbf16>
    %1 = vector.shape_cast %0 : vector<1x32x640xbf16> to vector<32x640xbf16>
    %c0_2 = arith.constant 0 : index
    %c0_3 = arith.constant 0 : index
    %c0_4 = arith.constant 0 : index
    %2 = vector.load %arg4[%c0_2, %c0_3, %c0_4] : memref<1x640x128xbf16, #tpu.memory_space<vmem>>, vector<1x640x128xbf16>
    %3 = vector.shape_cast %2 : vector<1x640x128xbf16> to vector<640x128xbf16>
    %cst = arith.constant dense<0.000000e+00> : vector<32x128xf32>
    %4 = tpu.matmul %1, %3, %cst {dimension_numbers = #tpu.dot_dimension_numbers<[1], [0], [0], [1], [0, 0, 1, 1], [], []>} : vector<32x640xbf16>, vector<640x128xbf16>, vector<32x128xf32> -> vector<32x128xf32>
    %c0_5 = arith.constant 0 : index
    %c0_6 = arith.constant 0 : index
    %c0_7 = arith.constant 0 : index
    %5 = vector.load %arg5[%c0_5, %c0_6, %c0_7] : memref<1x1x128xf32, #tpu.memory_space<vmem>>, vector<1x1x128xf32>
    %6 = vector.shape_cast %5 : vector<1x1x128xf32> to vector<1x128xf32>
    %7 = vector.broadcast %6 : vector<1x128xf32> to vector<32x128xf32>
    %8 = arith.addf %4, %7 : vector<32x128xf32>
    %c0_8 = arith.constant 0 : index
    %c0_9 = arith.constant 0 : index
    %c0_10 = arith.constant 0 : index
    %9 = vector.load %arg6[%c0_8, %c0_9, %c0_10] : memref<1x32x128xf32, #tpu.memory_space<vmem>>, vector<1x32x128xf32>
    %10 = vector.shape_cast %9 : vector<1x32x128xf32> to vector<32x128xf32>
    %11 = vector.shape_cast %8 : vector<32x128xf32> to vector<1x32x128xf32>
    tpu.vector_store %arg6[%c0_8, %c0_9, %c0_10], %11 {strides = array<i32>} : memref<1x32x128xf32, #tpu.memory_space<vmem>>, vector<1x32x128xf32>,
    return
  }
  func.func @transform_0(%arg0: i32, %arg1: i32, %arg2: i32) -> (i32, i32, i32) {
    %c0_i32 = arith.constant 0 : i32
    %c0_i32_0 = arith.constant 0 : i32
    return %arg0, %arg1, %c0_i32 : i32, i32, i32
  }
  func.func @transform_1(%arg0: i32, %arg1: i32, %arg2: i32) -> (i32, i32, i32) {
    %c0_i32 = arith.constant 0 : i32
    %c0_i32_0 = arith.constant 0 : i32
    return %arg0, %c0_i32, %arg2 : i32, i32, i32
  }
  func.func @transform_2(%arg0: i32, %arg1: i32, %arg2: i32) -> (i32, i32, i32) {
    %c0_i32 = arith.constant 0 : i32
    %c0_i32_0 = arith.constant 0 : i32
    return %arg0, %c0_i32, %arg2 : i32, i32, i32
  }
  func.func @transform_3(%arg0: i32, %arg1: i32, %arg2: i32) -> (i32, i32, i32) {
    %c0_i32 = arith.constant 0 : i32
    return %arg0, %arg1, %arg2 : i32, i32, i32
  }
}

module attributes {stable_mosaic.version = 11 : i64} {
  func.func @_mm_kernel_single(%arg0: i32, %arg1: i32, %arg2: i32, %arg3: memref<1x128x384xbf16, #tpu.memory_space<vmem>>, %arg4: memref<1x384x128xbf16, #tpu.memory_space<vmem>>, %arg5: memref<1x1x128xf32, #tpu.memory_space<vmem>>, %arg6: memref<1x128x128xf32, #tpu.memory_space<vmem>>) attributes {dimension_semantics = [#tpu.dimension_semantics<parallel>, #tpu.dimension_semantics<parallel>, #tpu.dimension_semantics<parallel>], iteration_bounds = array<i64: 2, 1, 1>, scalar_prefetch = 0 : i64, scratch_operands = 0 : i64, tpu.core_type = #tpu.core_type<tc>, window_params = [{transform_indices = @transform_0, window_bounds = array<i64: 1, 128, 384>}, {transform_indices = @transform_1, window_bounds = array<i64: 1, 384, 128>}, {transform_indices = @transform_2, window_bounds = array<i64: 1, 1, 128>}, {transform_indices = @transform_3, window_bounds = array<i64: 1, 128, 128>}]} {
    %c0 = arith.constant 0 : index
    %c0_0 = arith.constant 0 : index
    %c0_1 = arith.constant 0 : index
    %0 = vector.load %arg3[%c0, %c0_0, %c0_1] : memref<1x128x384xbf16, #tpu.memory_space<vmem>>, vector<1x128x384xbf16>
    %1 = vector.shape_cast %0 : vector<1x128x384xbf16> to vector<128x384xbf16>
    %c0_2 = arith.constant 0 : index
    %c0_3 = arith.constant 0 : index
    %c0_4 = arith.constant 0 : index
    %2 = vector.load %arg4[%c0_2, %c0_3, %c0_4] : memref<1x384x128xbf16, #tpu.memory_space<vmem>>, vector<1x384x128xbf16>
    %3 = vector.shape_cast %2 : vector<1x384x128xbf16> to vector<384x128xbf16>
    %cst = arith.constant dense<0.000000e+00> : vector<128x128xf32>
    %4 = tpu.matmul %1, %3, %cst {dimension_numbers = #tpu.dot_dimension_numbers<[1], [0], [0], [1], [0, 0, 1, 1], [], []>} : vector<128x384xbf16>, vector<384x128xbf16>, vector<128x128xf32> -> vector<128x128xf32>
    %c0_5 = arith.constant 0 : index
    %c0_6 = arith.constant 0 : index
    %c0_7 = arith.constant 0 : index
    %5 = vector.load %arg5[%c0_5, %c0_6, %c0_7] : memref<1x1x128xf32, #tpu.memory_space<vmem>>, vector<1x1x128xf32>
    %6 = vector.shape_cast %5 : vector<1x1x128xf32> to vector<1x128xf32>
    %7 = vector.broadcast %6 : vector<1x128xf32> to vector<128x128xf32>
    %8 = arith.addf %4, %7 : vector<128x128xf32>
    %c0_8 = arith.constant 0 : index
    %c0_9 = arith.constant 0 : index
    %c0_10 = arith.constant 0 : index
    %9 = vector.load %arg6[%c0_8, %c0_9, %c0_10] : memref<1x128x128xf32, #tpu.memory_space<vmem>>, vector<1x128x128xf32>
    %10 = vector.shape_cast %9 : vector<1x128x128xf32> to vector<128x128xf32>
    %11 = vector.shape_cast %8 : vector<128x128xf32> to vector<1x128x128xf32>
    tpu.vector_store %arg6[%c0_8, %c0_9, %c0_10], %11 {strides = array<i32>} : memref<1x128x128xf32, #tpu.memory_space<vmem>>, vector<1x128x128xf32>,
    return
  }
  func.func @transform_0(%arg0: i32, %arg1: i32, %arg2: i32) -> (i32, i32, i32) {
    %c0_i32 = arith.constant 0 : i32
    %c0_i32_0 = arith.constant 0 : i32
    return %arg0, %arg1, %c0_i32 : i32, i32, i32
  }
  func.func @transform_1(%arg0: i32, %arg1: i32, %arg2: i32) -> (i32, i32, i32) {
    %c0_i32 = arith.constant 0 : i32
    %c0_i32_0 = arith.constant 0 : i32
    return %arg0, %c0_i32, %arg2 : i32, i32, i32
  }
  func.func @transform_2(%arg0: i32, %arg1: i32, %arg2: i32) -> (i32, i32, i32) {
    %c0_i32 = arith.constant 0 : i32
    %c0_i32_0 = arith.constant 0 : i32
    return %arg0, %c0_i32, %arg2 : i32, i32, i32
  }
  func.func @transform_3(%arg0: i32, %arg1: i32, %arg2: i32) -> (i32, i32, i32) {
    %c0_i32 = arith.constant 0 : i32
    return %arg0, %arg1, %arg2 : i32, i32, i32
  }
}

module attributes {stable_mosaic.version = 11 : i64} {
  func.func @_mm_kernel_single(%arg0: i32, %arg1: i32, %arg2: i32, %arg3: memref<1x256x256xbf16, #tpu.memory_space<vmem>>, %arg4: memref<1x256x128xbf16, #tpu.memory_space<vmem>>, %arg5: memref<1x1x128xf32, #tpu.memory_space<vmem>>, %arg6: memref<1x256x128xf32, #tpu.memory_space<vmem>>) attributes {dimension_semantics = [#tpu.dimension_semantics<parallel>, #tpu.dimension_semantics<parallel>, #tpu.dimension_semantics<parallel>], iteration_bounds = array<i64: 2, 2, 1>, scalar_prefetch = 0 : i64, scratch_operands = 0 : i64, tpu.core_type = #tpu.core_type<tc>, window_params = [{transform_indices = @transform_0, window_bounds = array<i64: 1, 256, 256>}, {transform_indices = @transform_1, window_bounds = array<i64: 1, 256, 128>}, {transform_indices = @transform_2, window_bounds = array<i64: 1, 1, 128>}, {transform_indices = @transform_3, window_bounds = array<i64: 1, 256, 128>}]} {
    %c0 = arith.constant 0 : index
    %c0_0 = arith.constant 0 : index
    %c0_1 = arith.constant 0 : index
    %0 = vector.load %arg3[%c0, %c0_0, %c0_1] : memref<1x256x256xbf16, #tpu.memory_space<vmem>>, vector<1x256x256xbf16>
    %1 = vector.shape_cast %0 : vector<1x256x256xbf16> to vector<256x256xbf16>
    %c0_2 = arith.constant 0 : index
    %c0_3 = arith.constant 0 : index
    %c0_4 = arith.constant 0 : index
    %2 = vector.load %arg4[%c0_2, %c0_3, %c0_4] : memref<1x256x128xbf16, #tpu.memory_space<vmem>>, vector<1x256x128xbf16>
    %3 = vector.shape_cast %2 : vector<1x256x128xbf16> to vector<256x128xbf16>
    %cst = arith.constant dense<0.000000e+00> : vector<256x128xf32>
    %4 = tpu.matmul %1, %3, %cst {dimension_numbers = #tpu.dot_dimension_numbers<[1], [0], [0], [1], [0, 0, 1, 1], [], []>} : vector<256x256xbf16>, vector<256x128xbf16>, vector<256x128xf32> -> vector<256x128xf32>
    %c0_5 = arith.constant 0 : index
    %c0_6 = arith.constant 0 : index
    %c0_7 = arith.constant 0 : index
    %5 = vector.load %arg5[%c0_5, %c0_6, %c0_7] : memref<1x1x128xf32, #tpu.memory_space<vmem>>, vector<1x1x128xf32>
    %6 = vector.shape_cast %5 : vector<1x1x128xf32> to vector<1x128xf32>
    %7 = vector.broadcast %6 : vector<1x128xf32> to vector<256x128xf32>
    %8 = arith.addf %4, %7 : vector<256x128xf32>
    %c0_8 = arith.constant 0 : index
    %c0_9 = arith.constant 0 : index
    %c0_10 = arith.constant 0 : index
    %9 = vector.load %arg6[%c0_8, %c0_9, %c0_10] : memref<1x256x128xf32, #tpu.memory_space<vmem>>, vector<1x256x128xf32>
    %10 = vector.shape_cast %9 : vector<1x256x128xf32> to vector<256x128xf32>
    %11 = vector.shape_cast %8 : vector<256x128xf32> to vector<1x256x128xf32>
    tpu.vector_store %arg6[%c0_8, %c0_9, %c0_10], %11 {strides = array<i32>} : memref<1x256x128xf32, #tpu.memory_space<vmem>>, vector<1x256x128xf32>,
    return
  }
  func.func @transform_0(%arg0: i32, %arg1: i32, %arg2: i32) -> (i32, i32, i32) {
    %c0_i32 = arith.constant 0 : i32
    %c0_i32_0 = arith.constant 0 : i32
    return %arg0, %arg1, %c0_i32 : i32, i32, i32
  }
  func.func @transform_1(%arg0: i32, %arg1: i32, %arg2: i32) -> (i32, i32, i32) {
    %c0_i32 = arith.constant 0 : i32
    %c0_i32_0 = arith.constant 0 : i32
    return %arg0, %c0_i32, %arg2 : i32, i32, i32
  }
  func.func @transform_2(%arg0: i32, %arg1: i32, %arg2: i32) -> (i32, i32, i32) {
    %c0_i32 = arith.constant 0 : i32
    %c0_i32_0 = arith.constant 0 : i32
    return %arg0, %c0_i32, %arg2 : i32, i32, i32
  }
  func.func @transform_3(%arg0: i32, %arg1: i32, %arg2: i32) -> (i32, i32, i32) {
    %c0_i32 = arith.constant 0 : i32
    return %arg0, %arg1, %arg2 : i32, i32, i32
  }
}

</mosaic_0001>

<llo_original>
// kernel: _lambda_.10
$region0: #{_lambda_.10}
  #allocation0 [shape = 'u32[]', space=smem, size = 0x4, offset = 0x4, fixed_abs, tag = 'smem constant byte address 0x4 - core index']
  #allocation1 [shape = 'u32[144,128]{1,0:T(1,128)}', space=vmem, size = 0x12000, scoped, tag = 'internal scratch']
  %s0 = inlined_call_operand.vmem [shape: bf16[1,512,128], index: 0, kind: input, shape index: {}]
  %s1 = inlined_call_operand.vmem [shape: bf16[1,128,128], index: 1, kind: input, shape index: {}]
  %s2 = inlined_call_operand.vmem [shape: f32[1,1,128], index: 2, kind: input, shape index: {}]
  %s3 = inlined_call_operand.vmem [shape: f32[1,512,128], index: 3, kind: output, shape index: {}]
  %s4 = sld [smem:[#allocation0]]
  $region45: #{_lambda_.10} parent=0
    _
  %s6 = ssub.s32 1, %s4
  %s7 = scalar_select 0, %s6, %s4
  loop: start=0, step=1, limit=4
  $region2: #{_lambda_.10} parent=0 // loop_pre_header
    _
  $region3: #{_lambda_.10} parent=0 // loop_header
    %s9 = sphi 0, %s13
    %p10 = scmp.ge.s32.totalorder %s9, 4
    %s16 = sphi 0, %s35
    %s17 = sphi 0, %s31
    %s18 = sphi 0, %s27
    %s19 = sphi 0, %s16
    %s20 = sphi 0, %s17
    %s21 = sphi 0, %s18
    %s22 = sphi 0, %s19
    %s23 = sphi 0, %s20
    %s24 = sphi 0, %s21
    %s40 = sphi 0, %s42
    %s43 = sphi 0, %s40
    %s44 = sphi 0, %s43
    %s60 = sphi 0, %s44
    %s68 = sphi 0, %s70
    %s71 = sphi 0, %s68
    %s72 = sphi 0, %s71
    %s88 = sphi 0, %s72
    %s96 = sphi 0, %s98
    %s99 = sphi 0, %s96
    %s100 = sphi 0, %s99
    %s116 = sphi 0, %s100
    %s126 = sphi 0, %s128
    %s129 = sphi 0, %s126
    %s130 = sphi 0, %s129
    %s146 = sphi 0, %s130
  $region4: #{_lambda_.10} parent=0 // loop_header_branch
    %12 = sbr.rel (%p10) target = $region8
  $region5: #{_lambda_.10} parent=0 // loop_body
    %s14 = ssub.s32 %s9, 1
    %s15 = ssub.s32 %s9, 2
    %s25 = sadd.s32 1, %s18
    %p26 = scmp.ge.s32.totalorder %s25, 1
    %s27 = scalar_select %p26, 0, %s25
    %s28 = sadd.s32 1, %s17
    %s29 = scalar_select %p26, %s28, %s17
    %p30 = scmp.ge.s32.totalorder %s29, 2
    %s31 = scalar_select %p30, 0, %s29
    %s32 = sadd.s32 1, %s16
    %s33 = scalar_select %p30, %s32, %s16
    %p34 = scmp.ge.s32.totalorder %s33, 1
    %s35 = scalar_select %p34, 0, %s33
    %s36 = ssub.s32 %s16, %s35
    %s37 = ssub.s32 %s17, %s31
    %s38 = sor.u32 %s36, %s37
    %p39 = scmp.eq.s32.totalorder %s38, 0
    %s41 = sadd.s32 %s40, 1
    %s42 = scalar_select %p39, %s40, %s41
    %p45 = pneg %p39
    %p46 = scmp.eq.s32.totalorder %s9, 1
    %p47 = por %p45, %p46
    %p48 = scmp.ne.s32.totalorder %s40, %s43
    %p49 = scmp.eq.s32.totalorder %s9, 0
    %p50 = por %p48, %p49
    %p51 = scmp.ne.s32.totalorder %s40, %s43
    %p52 = scmp.eq.s32.totalorder %s14, 1
    %p53 = por %p51, %p52
    %p54 = scmp.ne.s32.totalorder %s43, %s44
    %p55 = scmp.eq.s32.totalorder %s14, 0
    %p56 = por %p54, %p55
    %p57 = scmp.ne.s32.totalorder %s43, %s44
    %p58 = scmp.eq.s32.totalorder %s15, 1
    %p59 = por %p57, %p58
    %p61 = scmp.ne.s32.totalorder %s44, %s60
    %p62 = scmp.eq.s32.totalorder %s15, 0
    %p63 = por %p61, %p62
    %s64 = ssub.s32 %s16, %s35
    %s65 = ssub.s32 %s18, %s27
    %s66 = sor.u32 %s64, %s65
    %p67 = scmp.eq.s32.totalorder %s66, 0
    %s69 = sadd.s32 %s68, 1
    %s70 = scalar_select %p67, %s68, %s69
    %p73 = pneg %p67
    %p74 = scmp.eq.s32.totalorder %s9, 1
    %p75 = por %p73, %p74
    %p76 = scmp.ne.s32.totalorder %s68, %s71
    %p77 = scmp.eq.s32.totalorder %s9, 0
    %p78 = por %p76, %p77
    %p79 = scmp.ne.s32.totalorder %s68, %s71
    %p80 = scmp.eq.s32.totalorder %s14, 1
    %p81 = por %p79, %p80
    %p82 = scmp.ne.s32.totalorder %s71, %s72
    %p83 = scmp.eq.s32.totalorder %s14, 0
    %p84 = por %p82, %p83
    %p85 = scmp.ne.s32.totalorder %s71, %s72
    %p86 = scmp.eq.s32.totalorder %s15, 1
    %p87 = por %p85, %p86
    %p89 = scmp.ne.s32.totalorder %s72, %s88
    %p90 = scmp.eq.s32.totalorder %s15, 0
    %p91 = por %p89, %p90
    %s92 = ssub.s32 %s16, %s35
    %s93 = ssub.s32 %s18, %s27
    %s94 = sor.u32 %s92, %s93
    %p95 = scmp.eq.s32.totalorder %s94, 0
    %s97 = sadd.s32 %s96, 1
    %s98 = scalar_select %p95, %s96, %s97
    %p101 = pneg %p95
    %p102 = scmp.eq.s32.totalorder %s9, 1
    %p103 = por %p101, %p102
    %p104 = scmp.ne.s32.totalorder %s96, %s99
    %p105 = scmp.eq.s32.totalorder %s9, 0
    %p106 = por %p104, %p105
    %p107 = scmp.ne.s32.totalorder %s96, %s99
    %p108 = scmp.eq.s32.totalorder %s14, 1
    %p109 = por %p107, %p108
    %p110 = scmp.ne.s32.totalorder %s99, %s100
    %p111 = scmp.eq.s32.totalorder %s14, 0
    %p112 = por %p110, %p111
    %p113 = scmp.ne.s32.totalorder %s99, %s100
    %p114 = scmp.eq.s32.totalorder %s15, 1
    %p115 = por %p113, %p114
    %p117 = scmp.ne.s32.totalorder %s100, %s116
    %p118 = scmp.eq.s32.totalorder %s15, 0
    %p119 = por %p117, %p118
    %s120 = ssub.s32 %s16, %s35
    %s121 = ssub.s32 %s17, %s31
    %s122 = sor.u32 %s120, %s121
    %s123 = ssub.s32 %s18, %s27
    %s124 = sor.u32 %s122, %s123
    %p125 = scmp.eq.s32.totalorder %s124, 0
    %s127 = sadd.s32 %s126, 1
    %s128 = scalar_select %p125, %s126, %s127
    %p131 = pneg %p125
    %p132 = scmp.eq.s32.totalorder %s9, 1
    %p133 = por %p131, %p132
    %p134 = scmp.ne.s32.totalorder %s126, %s129
    %p135 = scmp.eq.s32.totalorder %s9, 0
    %p136 = por %p134, %p135
    %p137 = scmp.ne.s32.totalorder %s126, %s129
    %p138 = scmp.eq.s32.totalorder %s14, 1
    %p139 = por %p137, %p138
    %p140 = scmp.ne.s32.totalorder %s129, %s130
    %p141 = scmp.eq.s32.totalorder %s14, 0
    %p142 = por %p140, %p141
    %p143 = scmp.ne.s32.totalorder %s129, %s130
    %p144 = scmp.eq.s32.totalorder %s15, 1
    %p145 = por %p143, %p144
    %p147 = scmp.ne.s32.totalorder %s130, %s146
    %p148 = scmp.eq.s32.totalorder %s15, 0
    %p149 = por %p147, %p148
    %p150 = scmp.le.s32.totalorder 1, %s9
    %p151 = scmp.lt.s32.totalorder %s9, 3
    %p152 = pnand %p150, %p151
    %p153 = pneg %p152
    // Predicated region
    $region9: #{_lambda_.10} parent=5 // pred_check
      _
    $region10: #{_lambda_.10} parent=5 // pred_check_branch
      %155 = sbr.rel (%p152) target = $region12
    $region11: #{_lambda_.10} parent=5 // pred_region
      %s156 = ssub.s32 %s9, 1
      // Predicated region
      $region13: #{_lambda_.10} parent=11 // pred_check
        %p157 = pneg %p84
      $region14: #{_lambda_.10} parent=11 // pred_check_branch
        %159 = sbr.rel (%p157) target = $region16
      $region15: #{_lambda_.10} parent=11 // pred_region
        %p160 = scmp.lt.s32.totalorder %s19, 0
        %s161 = scalar_select %p160, %s19, 0
        %p162 = scmp.lt.s32.totalorder %s21, 0
        %s163 = scalar_select %p162, %s21, 0
        %s164 = smul.addr %s161, 16
        %s165 = sadd.s32 %s163, %s164
        %s166 = smul.addr %s165, 4
        %s167 = scalar_lea.vmem %s1, %s166
      $region16: #{_lambda_.10} parent=11 // pred_fallthru
        _
      // Predicated region
      $region17: #{_lambda_.10} parent=11 // pred_check
        %p168 = pneg %p112
      $region18: #{_lambda_.10} parent=11 // pred_check_branch
        %170 = sbr.rel (%p168) target = $region20
      $region19: #{_lambda_.10} parent=11 // pred_region
        %p171 = scmp.lt.s32.totalorder %s19, 0
        %s172 = scalar_select %p171, %s19, 0
        %p173 = scmp.lt.s32.totalorder %s21, 0
        %s174 = scalar_select %p173, %s21, 0
        %s175 = sadd.s32 %s174, %s172
        %s176 = scalar_lea.vmem %s2, %s175
      $region20: #{_lambda_.10} parent=11 // pred_fallthru
        _
    $region12: #{_lambda_.10} parent=5 // pred_fallthru
      _
    %p177 = scmp.lt.s32.totalorder %s9, 2
    // Predicated region
    $region21: #{_lambda_.10} parent=5 // pred_check
      %p178 = pneg %p177
    $region22: #{_lambda_.10} parent=5 // pred_check_branch
      %180 = sbr.rel (%p178) target = $region24
    $region23: #{_lambda_.10} parent=5 // pred_region
      // Predicated region
      $region25: #{_lambda_.10} parent=23 // pred_check
        %p181 = pneg %p50
      $region26: #{_lambda_.10} parent=23 // pred_check_branch
        %183 = sbr.rel (%p181) target = $region28
      $region27: #{_lambda_.10} parent=23 // pred_region
        %s184 = smul.u32 32, %s17
        %p185 = scmp.lt.s32.totalorder %s16, 0
        %s186 = scalar_select %p185, %s16, 0
        %p187 = scmp.lt.s32.totalorder %s184, 63
        %s188 = scalar_select %p187, %s184, 63
        %s189 = smul.addr %s186, 64
        %s190 = sadd.s32 %s188, %s189
        %s191 = smul.addr %s190, 4
        %s192 = scalar_lea.vmem %s0, %s191
        %s193 = smul.u32 32, %s17
      $region28: #{_lambda_.10} parent=23 // pred_fallthru
        _
    $region24: #{_lambda_.10} parent=5 // pred_fallthru
      _
    %p194 = scmp.le.s32.totalorder 1, %s9
    %p195 = scmp.lt.s32.totalorder %s9, 3
    %p196 = pnand %p194, %p195
    %p197 = pneg %p196
    // Predicated region
    $region29: #{_lambda_.10} parent=5 // pred_check
      _
    $region30: #{_lambda_.10} parent=5 // pred_check_branch
      %199 = sbr.rel (%p196) target = $region32
    $region31: #{_lambda_.10} parent=5 // pred_region
      %s200 = ssub.s32 %s9, 1
      %s201 = smul.u32 32, %s20
      %p202 = scmp.lt.s32.totalorder %s19, 0
      %s203 = scalar_select %p202, %s19, 0
      %p204 = scmp.lt.s32.totalorder %s201, 63
      %s205 = scalar_select %p204, %s201, 63
      %s206 = smul.addr %s203, 64
      %s207 = sadd.s32 %s205, %s206
      %s208 = smul.addr %s207, 4
      %s209 = scalar_lea.vmem %s0, %s208
      %p210 = pneg %p56
      %p211 = pneg %p53
      %p212 = scmp.lt.s32.totalorder %s19, 0
      %s213 = scalar_select %p212, %s19, 0
      %p214 = scmp.lt.s32.totalorder %s21, 0
      %s215 = scalar_select %p214, %s21, 0
      %s216 = smul.addr %s213, 16
      %s217 = sadd.s32 %s215, %s216
      %s218 = smul.addr %s217, 4
      %s219 = scalar_lea.vmem %s1, %s218
      %p220 = pneg %p84
      %p221 = pneg %p81
      %p222 = scmp.lt.s32.totalorder %s19, 0
      %s223 = scalar_select %p222, %s19, 0
      %p224 = scmp.lt.s32.totalorder %s21, 0
      %s225 = scalar_select %p224, %s21, 0
      %s226 = sadd.s32 %s225, %s223
      %s227 = scalar_lea.vmem %s2, %s226
      %p228 = pneg %p112
      %p229 = pneg %p109
      %p230 = pneg %p142
      %p231 = pneg %p139
      %s232 = smul.u32 32, %s20
      %p233 = scmp.lt.s32.totalorder %s19, 0
      %s234 = scalar_select %p233, %s19, 0
      %p235 = scmp.lt.s32.totalorder %s232, 63
      %s236 = scalar_select %p235, %s232, 63
      %p237 = scmp.lt.s32.totalorder %s21, 0
      %s238 = scalar_select %p237, %s21, 0
      %s239 = sadd.s32 %s238, %s236
      %s240 = smul.addr %s234, 64
      %s241 = sadd.s32 %s239, %s240
      %s242 = smul.addr %s241, 8
      %s243 = scalar_lea.vmem %s3, %s242
      %s244 = smul.u32 32, %s20
      %p245 = scmp.lt.s32.totalorder %s19, 0
      %s246 = scalar_select %p245, %s19, 0
      %p247 = scmp.lt.s32.totalorder %s244, 63
      %s248 = scalar_select %p247, %s244, 63
      %s249 = smul.addr %s246, 64
      %s250 = sadd.s32 %s248, %s249
      %s251 = smul.addr %s250, 4
      %s252 = scalar_lea.vmem %s0, %s251
      %s253 = smul.u32 32, %s20
      %p254 = scmp.lt.s32.totalorder %s19, 0
      %s255 = scalar_select %p254, %s19, 0
      %p256 = scmp.lt.s32.totalorder %s21, 0
      %s257 = scalar_select %p256, %s21, 0
      %s258 = smul.addr %s255, 16
      %s259 = sadd.s32 %s257, %s258
      %s260 = smul.addr %s259, 4
      %s261 = scalar_lea.vmem %s1, %s260
      %p262 = scmp.lt.s32.totalorder %s19, 0
      %s263 = scalar_select %p262, %s19, 0
      %p264 = scmp.lt.s32.totalorder %s21, 0
      %s265 = scalar_select %p264, %s21, 0
      %s266 = sadd.s32 %s265, %s263
      %s267 = scalar_lea.vmem %s2, %s266
      %s268 = smul.u32 32, %s20
      %p269 = scmp.lt.s32.totalorder %s19, 0
      %s270 = scalar_select %p269, %s19, 0
      %p271 = scmp.lt.s32.totalorder %s268, 63
      %s272 = scalar_select %p271, %s268, 63
      %p273 = scmp.lt.s32.totalorder %s21, 0
      %s274 = scalar_select %p273, %s21, 0
      %s275 = sadd.s32 %s274, %s272
      %s276 = smul.addr %s270, 64
      %s277 = sadd.s32 %s275, %s276
      %s278 = smul.addr %s277, 8
      %s279 = scalar_lea.vmem %s3, %s278
      %s280 = smul.u32 32, %s20
      %v282 = vld [vmem:[%s252] sm:$0xf]
      %v283 = vld [vmem:[%s252 + $0x4] sm:$0xf]
      %v284 = vld [vmem:[%s252 + $0x8] sm:$0xf]
      %v285 = vld [vmem:[%s252 + $0xc] sm:$0xf]
      %v286 = vld [vmem:[%s252 + $0x10] sm:$0xf]
      %v287 = vld [vmem:[%s252 + $0x14] sm:$0xf]
      %v288 = vld [vmem:[%s252 + $0x18] sm:$0xf]
      %v289 = vld [vmem:[%s252 + $0x1c] sm:$0xf]
      %v290 = vld [vmem:[%s252 + $0x20] sm:$0xf]
      %v291 = vld [vmem:[%s252 + $0x24] sm:$0xf]
      %v292 = vld [vmem:[%s252 + $0x28] sm:$0xf]
      %v293 = vld [vmem:[%s252 + $0x2c] sm:$0xf]
      %v294 = vld [vmem:[%s252 + $0x30] sm:$0xf]
      %v295 = vld [vmem:[%s252 + $0x34] sm:$0xf]
      %v296 = vld [vmem:[%s252 + $0x38] sm:$0xf]
      %v297 = vld [vmem:[%s252 + $0x3c] sm:$0xf]
      %v298 = vld [vmem:[%s252 + $0x40] sm:$0xf]
      %v299 = vld [vmem:[%s252 + $0x44] sm:$0xf]
      %v300 = vld [vmem:[%s252 + $0x48] sm:$0xf]
      %v301 = vld [vmem:[%s252 + $0x4c] sm:$0xf]
      %v302 = vld [vmem:[%s252 + $0x50] sm:$0xf]
      %v303 = vld [vmem:[%s252 + $0x54] sm:$0xf]
      %v304 = vld [vmem:[%s252 + $0x58] sm:$0xf]
      %v305 = vld [vmem:[%s252 + $0x5c] sm:$0xf]
      %v306 = vld [vmem:[%s252 + $0x60] sm:$0xf]
      %v307 = vld [vmem:[%s252 + $0x64] sm:$0xf]
      %v308 = vld [vmem:[%s252 + $0x68] sm:$0xf]
      %v309 = vld [vmem:[%s252 + $0x6c] sm:$0xf]
      %v310 = vld [vmem:[%s252 + $0x70] sm:$0xf]
      %v311 = vld [vmem:[%s252 + $0x74] sm:$0xf]
      %v312 = vld [vmem:[%s252 + $0x78] sm:$0xf]
      %v313 = vld [vmem:[%s252 + $0x7c] sm:$0xf]
      %v314 = vld [vmem:[%s261] sm:$0xf]
      %v315 = vld [vmem:[%s261 + $0x4] sm:$0xf]
      %v316 = vld [vmem:[%s261 + $0x8] sm:$0xf]
      %v317 = vld [vmem:[%s261 + $0xc] sm:$0xf]
      %v318 = vld [vmem:[%s261 + $0x10] sm:$0xf]
      %v319 = vld [vmem:[%s261 + $0x14] sm:$0xf]
      %v320 = vld [vmem:[%s261 + $0x18] sm:$0xf]
      %v321 = vld [vmem:[%s261 + $0x1c] sm:$0xf]
      %v322 = vld [vmem:[%s261 + $0x20] sm:$0xf]
      %v323 = vld [vmem:[%s261 + $0x24] sm:$0xf]
      %v324 = vld [vmem:[%s261 + $0x28] sm:$0xf]
      %v325 = vld [vmem:[%s261 + $0x2c] sm:$0xf]
      %v326 = vld [vmem:[%s261 + $0x30] sm:$0xf]
      %v327 = vld [vmem:[%s261 + $0x34] sm:$0xf]
      %v328 = vld [vmem:[%s261 + $0x38] sm:$0xf]
      %v329 = vld [vmem:[%s261 + $0x3c] sm:$0xf]
      %v330 = vld [vmem:[%s267] sm:$0x1]
      %v332 = vlaneseq
      %v333 = vshrl.u32 %v332, 7
      %v334 = vsub.s32 0, %v333
      %v335 = vrot.slane %v330, %v334
      %v369 = vunpack.c.l.b16 %v282
      %v370 = vunpack.c.l.b16 %v283
      %v371 = vunpack.c.l.b16 %v284
      %v372 = vunpack.c.l.b16 %v285
      %v373 = vunpack.c.l.b16 %v286
      %v374 = vunpack.c.l.b16 %v287
      %v375 = vunpack.c.l.b16 %v288
      %v376 = vunpack.c.l.b16 %v289
      %v377 = vunpack.c.l.b16 %v290
      %v378 = vunpack.c.l.b16 %v291
      %v379 = vunpack.c.l.b16 %v292
      %v380 = vunpack.c.l.b16 %v293
      %v381 = vunpack.c.l.b16 %v294
      %v382 = vunpack.c.l.b16 %v295
      %v383 = vunpack.c.l.b16 %v296
      %v384 = vunpack.c.l.b16 %v297
      %v385 = vunpack.c.l.b16 %v298
      %v386 = vunpack.c.l.b16 %v299
      %v387 = vunpack.c.l.b16 %v300
      %v388 = vunpack.c.l.b16 %v301
      %v389 = vunpack.c.l.b16 %v302
      %v390 = vunpack.c.l.b16 %v303
      %v391 = vunpack.c.l.b16 %v304
      %v392 = vunpack.c.l.b16 %v305
      %v393 = vunpack.c.l.b16 %v306
      %v394 = vunpack.c.l.b16 %v307
      %v395 = vunpack.c.l.b16 %v308
      %v396 = vunpack.c.l.b16 %v309
      %v397 = vunpack.c.l.b16 %v310
      %v398 = vunpack.c.l.b16 %v311
      %v399 = vunpack.c.l.b16 %v312
      %v400 = vunpack.c.l.b16 %v313
      %v401 = vpack.c.b16 %v370, %v369
      %v402 = vpack.c.b16 %v372, %v371
      %v403 = vpack.c.b16 %v374, %v373
      %v404 = vpack.c.b16 %v376, %v375
      %v405 = vpack.c.b16 %v378, %v377
      %v406 = vpack.c.b16 %v380, %v379
      %v407 = vpack.c.b16 %v382, %v381
      %v408 = vpack.c.b16 %v384, %v383
      %v409 = vpack.c.b16 %v386, %v385
      %v410 = vpack.c.b16 %v388, %v387
      %v411 = vpack.c.b16 %v390, %v389
      %v412 = vpack.c.b16 %v392, %v391
      %v413 = vpack.c.b16 %v394, %v393
      %v414 = vpack.c.b16 %v396, %v395
      %v415 = vpack.c.b16 %v398, %v397
      %v416 = vpack.c.b16 %v400, %v399
      %v449 = vunpack.c.l.b16 %v314
      %v450 = vunpack.c.l.b16 %v315
      %v451 = vunpack.c.l.b16 %v316
      %v452 = vunpack.c.l.b16 %v317
      %v453 = vunpack.c.l.b16 %v318
      %v454 = vunpack.c.l.b16 %v319
      %v455 = vunpack.c.l.b16 %v320
      %v456 = vunpack.c.l.b16 %v321
      %v457 = vunpack.c.l.b16 %v322
      %v458 = vunpack.c.l.b16 %v323
      %v459 = vunpack.c.l.b16 %v324
      %v460 = vunpack.c.l.b16 %v325
      %v461 = vunpack.c.l.b16 %v326
      %v462 = vunpack.c.l.b16 %v327
      %v463 = vunpack.c.l.b16 %v328
      %v464 = vunpack.c.l.b16 %v329
      %v465 = vpack.c.b16 %v450, %v449
      %v466 = vpack.c.b16 %v452, %v451
      %v467 = vpack.c.b16 %v454, %v453
      %v468 = vpack.c.b16 %v456, %v455
      %v469 = vpack.c.b16 %v458, %v457
      %v470 = vpack.c.b16 %v460, %v459
      %v471 = vpack.c.b16 %v462, %v461
      %v472 = vpack.c.b16 %v464, %v463
      %481 = vmatprep.subr.bf16.mxu0 0
      %482 = vmatpush1.bf16.msra.mxu0 %v465
      %483 = vmatprep.subr.bf16.mxu0 0
      %484 = vmatpush1.bf16.msra.mxu0 %v466
      %485 = vmatprep.subr.bf16.mxu0 0
      %486 = vmatpush1.bf16.msra.mxu0 %v467
      %487 = vmatprep.subr.bf16.mxu0 0
      %488 = vmatpush1.bf16.msra.mxu0 %v468
      %489 = vmatprep.subr.bf16.mxu0 0
      %490 = vmatpush1.bf16.msra.mxu0 %v469
      %491 = vmatprep.subr.bf16.mxu0 0
      %492 = vmatpush1.bf16.msra.mxu0 %v470
      %493 = vmatprep.subr.bf16.mxu0 0
      %494 = vmatpush1.bf16.msra.mxu0 %v471
      %495 = vmatprep.subr.bf16.mxu0 0
      %496 = vmatpush1.bf16.msra.mxu0 %v472
      %497 = vmatprep.subr.bf16.mxu0 0
      %498 = vmatpush1.bf16.msra.mxu0 0
      %499 = vmatprep.subr.bf16.mxu0 0
      %500 = vmatpush1.bf16.msra.mxu0 0
      %501 = vmatprep.subr.bf16.mxu0 0
      %502 = vmatpush1.bf16.msra.mxu0 0
      %503 = vmatprep.subr.bf16.mxu0 0
      %504 = vmatpush1.bf16.msra.mxu0 0
      %505 = vmatprep.subr.bf16.mxu0 0
      %506 = vmatpush1.bf16.msra.mxu0 0
      %507 = vmatprep.subr.bf16.mxu0 0
      %508 = vmatpush1.bf16.msra.mxu0 0
      %509 = vmatprep.subr.bf16.mxu0 0
      %510 = vmatpush1.bf16.msra.mxu0 0
      %511 = vmatprep.subr.bf16.mxu0 0
      %512 = vmatpush1.bf16.msra.mxu0 0
      %513 = vmatprep.mubr.bf16.mxu0 0
      %514 = vmatmul.mubr.bf16.gmra.mrb[0].mxu0 %v401
      %v515 = vpop.f32.mrb[0].mxu0
      %v516 = vadd.f32 %v335, %v515
      %v517 = vpop.f32.mrb[0].mxu0
      %v518 = vpop.f32.mrb[0].mxu0
      %v519 = vadd.f32 %v335, %v518
      %v520 = vpop.f32.mrb[0].mxu0
      %521 = vmatprep.mubr.bf16.mxu0 0
      %522 = vmatmul.mubr.bf16.gmra.mrb[0].mxu0 %v402
      %v523 = vpop.f32.mrb[0].mxu0
      %v524 = vadd.f32 %v335, %v523
      %v525 = vpop.f32.mrb[0].mxu0
      %v526 = vpop.f32.mrb[0].mxu0
      %v527 = vadd.f32 %v335, %v526
      %v528 = vpop.f32.mrb[0].mxu0
      %529 = vmatprep.mubr.bf16.mxu0 0
      %530 = vmatmul.mubr.bf16.gmra.mrb[0].mxu0 %v403
      %v531 = vpop.f32.mrb[0].mxu0
      %v532 = vadd.f32 %v335, %v531
      %v533 = vpop.f32.mrb[0].mxu0
      %v534 = vpop.f32.mrb[0].mxu0
      %v535 = vadd.f32 %v335, %v534
      %v536 = vpop.f32.mrb[0].mxu0
      %537 = vmatprep.mubr.bf16.mxu0 0
      %538 = vmatmul.mubr.bf16.gmra.mrb[0].mxu0 %v404
      %v539 = vpop.f32.mrb[0].mxu0
      %v540 = vadd.f32 %v335, %v539
      %v541 = vpop.f32.mrb[0].mxu0
      %v542 = vpop.f32.mrb[0].mxu0
      %v543 = vadd.f32 %v335, %v542
      %v544 = vpop.f32.mrb[0].mxu0
      %545 = vmatprep.mubr.bf16.mxu0 0
      %546 = vmatmul.mubr.bf16.gmra.mrb[0].mxu0 %v405
      %v547 = vpop.f32.mrb[0].mxu0
      %v548 = vadd.f32 %v335, %v547
      %v549 = vpop.f32.mrb[0].mxu0
      %v550 = vpop.f32.mrb[0].mxu0
      %v551 = vadd.f32 %v335, %v550
      %v552 = vpop.f32.mrb[0].mxu0
      %553 = vmatprep.mubr.bf16.mxu0 0
      %554 = vmatmul.mubr.bf16.gmra.mrb[0].mxu0 %v406
      %v555 = vpop.f32.mrb[0].mxu0
      %v556 = vadd.f32 %v335, %v555
      %v557 = vpop.f32.mrb[0].mxu0
      %v558 = vpop.f32.mrb[0].mxu0
      %v559 = vadd.f32 %v335, %v558
      %v560 = vpop.f32.mrb[0].mxu0
      %561 = vmatprep.mubr.bf16.mxu0 0
      %562 = vmatmul.mubr.bf16.gmra.mrb[0].mxu0 %v407
      %v563 = vpop.f32.mrb[0].mxu0
      %v564 = vadd.f32 %v335, %v563
      %v565 = vpop.f32.mrb[0].mxu0
      %v566 = vpop.f32.mrb[0].mxu0
      %v567 = vadd.f32 %v335, %v566
      %v568 = vpop.f32.mrb[0].mxu0
      %569 = vmatprep.mubr.bf16.mxu0 0
      %570 = vmatmul.mubr.bf16.gmra.mrb[0].mxu0 %v408
      %v571 = vpop.f32.mrb[0].mxu0
      %v572 = vadd.f32 %v335, %v571
      %v573 = vpop.f32.mrb[0].mxu0
      %v574 = vpop.f32.mrb[0].mxu0
      %v575 = vadd.f32 %v335, %v574
      %v576 = vpop.f32.mrb[0].mxu0
      %577 = vmatprep.mubr.bf16.mxu0 0
      %578 = vmatmul.mubr.bf16.gmra.mrb[0].mxu0 %v409
      %v579 = vpop.f32.mrb[0].mxu0
      %v580 = vadd.f32 %v335, %v579
      %v581 = vpop.f32.mrb[0].mxu0
      %v582 = vpop.f32.mrb[0].mxu0
      %v583 = vadd.f32 %v335, %v582
      %v584 = vpop.f32.mrb[0].mxu0
      %585 = vmatprep.mubr.bf16.mxu0 0
      %586 = vmatmul.mubr.bf16.gmra.mrb[0].mxu0 %v410
      %v587 = vpop.f32.mrb[0].mxu0
      %v588 = vadd.f32 %v335, %v587
      %v589 = vpop.f32.mrb[0].mxu0
      %v590 = vpop.f32.mrb[0].mxu0
      %v591 = vadd.f32 %v335, %v590
      %v592 = vpop.f32.mrb[0].mxu0
      %593 = vmatprep.mubr.bf16.mxu0 0
      %594 = vmatmul.mubr.bf16.gmra.mrb[0].mxu0 %v411
      %v595 = vpop.f32.mrb[0].mxu0
      %v596 = vadd.f32 %v335, %v595
      %v597 = vpop.f32.mrb[0].mxu0
      %v598 = vpop.f32.mrb[0].mxu0
      %v599 = vadd.f32 %v335, %v598
      %v600 = vpop.f32.mrb[0].mxu0
      %601 = vmatprep.mubr.bf16.mxu0 0
      %602 = vmatmul.mubr.bf16.gmra.mrb[0].mxu0 %v412
      %v603 = vpop.f32.mrb[0].mxu0
      %v604 = vadd.f32 %v335, %v603
      %v605 = vpop.f32.mrb[0].mxu0
      %v606 = vpop.f32.mrb[0].mxu0
      %v607 = vadd.f32 %v335, %v606
      %v608 = vpop.f32.mrb[0].mxu0
      %609 = vmatprep.mubr.bf16.mxu0 0
      %610 = vmatmul.mubr.bf16.gmra.mrb[0].mxu0 %v413
      %v611 = vpop.f32.mrb[0].mxu0
      %v612 = vadd.f32 %v335, %v611
      %v613 = vpop.f32.mrb[0].mxu0
      %v614 = vpop.f32.mrb[0].mxu0
      %v615 = vadd.f32 %v335, %v614
      %v616 = vpop.f32.mrb[0].mxu0
      %617 = vmatprep.mubr.bf16.mxu0 0
      %618 = vmatmul.mubr.bf16.gmra.mrb[0].mxu0 %v414
      %v619 = vpop.f32.mrb[0].mxu0
      %v620 = vadd.f32 %v335, %v619
      %v621 = vpop.f32.mrb[0].mxu0
      %v622 = vpop.f32.mrb[0].mxu0
      %v623 = vadd.f32 %v335, %v622
      %v624 = vpop.f32.mrb[0].mxu0
      %625 = vmatprep.mubr.bf16.mxu0 0
      %626 = vmatmul.mubr.bf16.gmra.mrb[0].mxu0 %v415
      %v627 = vpop.f32.mrb[0].mxu0
      %v628 = vadd.f32 %v335, %v627
      %v629 = vpop.f32.mrb[0].mxu0
      %v630 = vpop.f32.mrb[0].mxu0
      %v631 = vadd.f32 %v335, %v630
      %v632 = vpop.f32.mrb[0].mxu0
      %633 = vmatprep.mubr.bf16.mxu0 0
      %634 = vmatmul.mubr.bf16.gmra.mrb[0].mxu0 %v416
      %v635 = vpop.f32.mrb[0].mxu0
      %v636 = vadd.f32 %v335, %v635
      %v637 = vpop.f32.mrb[0].mxu0
      %v638 = vpop.f32.mrb[0].mxu0
      %v639 = vadd.f32 %v335, %v638
      %v640 = vpop.f32.mrb[0].mxu0
      %641 = vdwg.mxu0
      %642 = vst [vmem:[%s279] sm:$0xff] %v516
      %643 = vst [vmem:[%s279 + $0x8] sm:$0xff] %v519
      %644 = vst [vmem:[%s279 + $0x10] sm:$0xff] %v524
      %645 = vst [vmem:[%s279 + $0x18] sm:$0xff] %v527
      %646 = vst [vmem:[%s279 + $0x20] sm:$0xff] %v532
      %647 = vst [vmem:[%s279 + $0x28] sm:$0xff] %v535
      %648 = vst [vmem:[%s279 + $0x30] sm:$0xff] %v540
      %649 = vst [vmem:[%s279 + $0x38] sm:$0xff] %v543
      %650 = vst [vmem:[%s279 + $0x40] sm:$0xff] %v548
      %651 = vst [vmem:[%s279 + $0x48] sm:$0xff] %v551
      %652 = vst [vmem:[%s279 + $0x50] sm:$0xff] %v556
      %653 = vst [vmem:[%s279 + $0x58] sm:$0xff] %v559
      %654 = vst [vmem:[%s279 + $0x60] sm:$0xff] %v564
      %655 = vst [vmem:[%s279 + $0x68] sm:$0xff] %v567
      %656 = vst [vmem:[%s279 + $0x70] sm:$0xff] %v572
      %657 = vst [vmem:[%s279 + $0x78] sm:$0xff] %v575
      %658 = vst [vmem:[%s279 + $0x80] sm:$0xff] %v580
      %659 = vst [vmem:[%s279 + $0x88] sm:$0xff] %v583
      %660 = vst [vmem:[%s279 + $0x90] sm:$0xff] %v588
      %661 = vst [vmem:[%s279 + $0x98] sm:$0xff] %v591
      %662 = vst [vmem:[%s279 + $0xa0] sm:$0xff] %v596
      %663 = vst [vmem:[%s279 + $0xa8] sm:$0xff] %v599
      %664 = vst [vmem:[%s279 + $0xb0] sm:$0xff] %v604
      %665 = vst [vmem:[%s279 + $0xb8] sm:$0xff] %v607
      %666 = vst [vmem:[%s279 + $0xc0] sm:$0xff] %v612
      %667 = vst [vmem:[%s279 + $0xc8] sm:$0xff] %v615
      %668 = vst [vmem:[%s279 + $0xd0] sm:$0xff] %v620
      %669 = vst [vmem:[%s279 + $0xd8] sm:$0xff] %v623
      %670 = vst [vmem:[%s279 + $0xe0] sm:$0xff] %v628
      %671 = vst [vmem:[%s279 + $0xe8] sm:$0xff] %v631
      %672 = vst [vmem:[%s279 + $0xf0] sm:$0xff] %v636
      %673 = vst [vmem:[%s279 + $0xf8] sm:$0xff] %v639
      %s674 = smul.u32 32, %s20
      %p675 = scmp.lt.s32.totalorder %s19, 0
      %s676 = scalar_select %p675, %s19, 0
      %p677 = scmp.lt.s32.totalorder %s674, 63
      %s678 = scalar_select %p677, %s674, 63
      %p679 = scmp.lt.s32.totalorder %s21, 0
      %s680 = scalar_select %p679, %s21, 0
      %s681 = sadd.s32 %s680, %s678
      %s682 = smul.addr %s676, 64
      %s683 = sadd.s32 %s681, %s682
      %s684 = smul.addr %s683, 8
      %s685 = scalar_lea.vmem %s3, %s684
      // Predicated region
      $region33: #{_lambda_.10} parent=31 // pred_check
        %p686 = pneg %p139
      $region34: #{_lambda_.10} parent=31 // pred_check_branch
        %688 = sbr.rel (%p686) target = $region36
      $region35: #{_lambda_.10} parent=31 // pred_region
        %s689 = smul.u32 32, %s20
      $region36: #{_lambda_.10} parent=31 // pred_fallthru
        _
    $region32: #{_lambda_.10} parent=5 // pred_fallthru
      _
    %p690 = scmp.le.s32.totalorder 2, %s9
    // Predicated region
    $region37: #{_lambda_.10} parent=5 // pred_check
      %p691 = pneg %p690
    $region38: #{_lambda_.10} parent=5 // pred_check_branch
      %693 = sbr.rel (%p691) target = $region40
    $region39: #{_lambda_.10} parent=5 // pred_region
      %s694 = ssub.s32 %s9, 2
      // Predicated region
      $region41: #{_lambda_.10} parent=39 // pred_check
        %p695 = pneg %p145
      $region42: #{_lambda_.10} parent=39 // pred_check_branch
        %697 = sbr.rel (%p695) target = $region44
      $region43: #{_lambda_.10} parent=39 // pred_region
        %s698 = smul.u32 32, %s23
        %p699 = scmp.lt.s32.totalorder %s22, 0
        %s700 = scalar_select %p699, %s22, 0
        %p701 = scmp.lt.s32.totalorder %s698, 63
        %s702 = scalar_select %p701, %s698, 63
        %p703 = scmp.lt.s32.totalorder %s24, 0
        %s704 = scalar_select %p703, %s24, 0
        %s705 = sadd.s32 %s704, %s702
        %s706 = smul.addr %s700, 64
        %s707 = sadd.s32 %s705, %s706
        %s708 = smul.addr %s707, 8
        %s709 = scalar_lea.vmem %s3, %s708
      $region44: #{_lambda_.10} parent=39 // pred_fallthru
        _
    $region40: #{_lambda_.10} parent=5 // pred_fallthru
      _
  $region6: #{_lambda_.10} parent=0 // loop_footer
    %s13 = sadd.s32 1, %s9
  $region7: #{_lambda_.10} parent=0 // loop_footer_branch
    %8 = sbr.rel target = $region3
  $region8: #{_lambda_.10} parent=0 // loop_exit
    _

// kernel: _lambda_.11
$region0: #{_lambda_.11}
  #allocation0 [shape = 'u32[]', space=smem, size = 0x4, offset = 0x4, fixed_abs, tag = 'smem constant byte address 0x4 - core index']
  #allocation1 [shape = 'u32[144,128]{1,0:T(1,128)}', space=vmem, size = 0x12000, scoped, tag = 'internal scratch']
  %s0 = inlined_call_operand.vmem [shape: bf16[1,128,128], index: 0, kind: input, shape index: {}]
  %s1 = inlined_call_operand.vmem [shape: bf16[1,128,128], index: 1, kind: input, shape index: {}]
  %s2 = inlined_call_operand.vmem [shape: f32[1,1,128], index: 2, kind: input, shape index: {}]
  %s3 = inlined_call_operand.vmem [shape: f32[1,128,128], index: 3, kind: output, shape index: {}]
  %s4 = sld [smem:[#allocation0]]
  $region22: #{_lambda_.11} parent=0
    _
  %s6 = ssub.s32 1, %s4
  %s7 = scalar_select 0, %s6, %s4
  // Predicated region
  $region2: #{_lambda_.11} parent=0 // pred_check
    _
  $region3: #{_lambda_.11} parent=0 // pred_check_branch
    %9 = sbr.rel (0) target = $region5
  $region4: #{_lambda_.11} parent=0 // pred_region
    _
  $region5: #{_lambda_.11} parent=0 // pred_fallthru
    _
  // Predicated region
  $region6: #{_lambda_.11} parent=0 // pred_check
    _
  $region7: #{_lambda_.11} parent=0 // pred_check_branch
    %11 = sbr.rel (0) target = $region9
  $region8: #{_lambda_.11} parent=0 // pred_region
    _
  $region9: #{_lambda_.11} parent=0 // pred_fallthru
    _
  // Predicated region
  $region10: #{_lambda_.11} parent=0 // pred_check
    _
  $region11: #{_lambda_.11} parent=0 // pred_check_branch
    %13 = sbr.rel (0) target = $region13
  $region12: #{_lambda_.11} parent=0 // pred_region
    _
  $region13: #{_lambda_.11} parent=0 // pred_fallthru
    _
  %v15 = vld [vmem:[%s0] sm:$0xf]
  %v16 = vld [vmem:[%s0 + $0x4] sm:$0xf]
  %v17 = vld [vmem:[%s0 + $0x8] sm:$0xf]
  %v18 = vld [vmem:[%s0 + $0xc] sm:$0xf]
  %v19 = vld [vmem:[%s0 + $0x10] sm:$0xf]
  %v20 = vld [vmem:[%s0 + $0x14] sm:$0xf]
  %v21 = vld [vmem:[%s0 + $0x18] sm:$0xf]
  %v22 = vld [vmem:[%s0 + $0x1c] sm:$0xf]
  %v23 = vld [vmem:[%s0 + $0x20] sm:$0xf]
  %v24 = vld [vmem:[%s0 + $0x24] sm:$0xf]
  %v25 = vld [vmem:[%s0 + $0x28] sm:$0xf]
  %v26 = vld [vmem:[%s0 + $0x2c] sm:$0xf]
  %v27 = vld [vmem:[%s0 + $0x30] sm:$0xf]
  %v28 = vld [vmem:[%s0 + $0x34] sm:$0xf]
  %v29 = vld [vmem:[%s0 + $0x38] sm:$0xf]
  %v30 = vld [vmem:[%s0 + $0x3c] sm:$0xf]
  %v31 = vld [vmem:[%s1] sm:$0xf]
  %v32 = vld [vmem:[%s1 + $0x4] sm:$0xf]
  %v33 = vld [vmem:[%s1 + $0x8] sm:$0xf]
  %v34 = vld [vmem:[%s1 + $0xc] sm:$0xf]
  %v35 = vld [vmem:[%s1 + $0x10] sm:$0xf]
  %v36 = vld [vmem:[%s1 + $0x14] sm:$0xf]
  %v37 = vld [vmem:[%s1 + $0x18] sm:$0xf]
  %v38 = vld [vmem:[%s1 + $0x1c] sm:$0xf]
  %v39 = vld [vmem:[%s1 + $0x20] sm:$0xf]
  %v40 = vld [vmem:[%s1 + $0x24] sm:$0xf]
  %v41 = vld [vmem:[%s1 + $0x28] sm:$0xf]
  %v42 = vld [vmem:[%s1 + $0x2c] sm:$0xf]
  %v43 = vld [vmem:[%s1 + $0x30] sm:$0xf]
  %v44 = vld [vmem:[%s1 + $0x34] sm:$0xf]
  %v45 = vld [vmem:[%s1 + $0x38] sm:$0xf]
  %v46 = vld [vmem:[%s1 + $0x3c] sm:$0xf]
  %v47 = vld [vmem:[%s2] sm:$0x1]
  %v49 = vlaneseq
  %v50 = vshrl.u32 %v49, 7
  %v51 = vsub.s32 0, %v50
  %v52 = vrot.slane %v47, %v51
  %v70 = vunpack.c.l.b16 %v15
  %v71 = vunpack.c.l.b16 %v16
  %v72 = vunpack.c.l.b16 %v17
  %v73 = vunpack.c.l.b16 %v18
  %v74 = vunpack.c.l.b16 %v19
  %v75 = vunpack.c.l.b16 %v20
  %v76 = vunpack.c.l.b16 %v21
  %v77 = vunpack.c.l.b16 %v22
  %v78 = vunpack.c.l.b16 %v23
  %v79 = vunpack.c.l.b16 %v24
  %v80 = vunpack.c.l.b16 %v25
  %v81 = vunpack.c.l.b16 %v26
  %v82 = vunpack.c.l.b16 %v27
  %v83 = vunpack.c.l.b16 %v28
  %v84 = vunpack.c.l.b16 %v29
  %v85 = vunpack.c.l.b16 %v30
  %v86 = vpack.c.b16 %v71, %v70
  %v87 = vpack.c.b16 %v73, %v72
  %v88 = vpack.c.b16 %v75, %v74
  %v89 = vpack.c.b16 %v77, %v76
  %v90 = vpack.c.b16 %v79, %v78
  %v91 = vpack.c.b16 %v81, %v80
  %v92 = vpack.c.b16 %v83, %v82
  %v93 = vpack.c.b16 %v85, %v84
  %v118 = vunpack.c.l.b16 %v31
  %v119 = vunpack.c.l.b16 %v32
  %v120 = vunpack.c.l.b16 %v33
  %v121 = vunpack.c.l.b16 %v34
  %v122 = vunpack.c.l.b16 %v35
  %v123 = vunpack.c.l.b16 %v36
  %v124 = vunpack.c.l.b16 %v37
  %v125 = vunpack.c.l.b16 %v38
  %v126 = vunpack.c.l.b16 %v39
  %v127 = vunpack.c.l.b16 %v40
  %v128 = vunpack.c.l.b16 %v41
  %v129 = vunpack.c.l.b16 %v42
  %v130 = vunpack.c.l.b16 %v43
  %v131 = vunpack.c.l.b16 %v44
  %v132 = vunpack.c.l.b16 %v45
  %v133 = vunpack.c.l.b16 %v46
  %v134 = vpack.c.b16 %v119, %v118
  %v135 = vpack.c.b16 %v121, %v120
  %v136 = vpack.c.b16 %v123, %v122
  %v137 = vpack.c.b16 %v125, %v124
  %v138 = vpack.c.b16 %v127, %v126
  %v139 = vpack.c.b16 %v129, %v128
  %v140 = vpack.c.b16 %v131, %v130
  %v141 = vpack.c.b16 %v133, %v132
  %150 = vmatprep.subr.bf16.mxu0 0
  %151 = vmatpush1.bf16.msra.mxu0 %v134
  %152 = vmatprep.subr.bf16.mxu0 0
  %153 = vmatpush1.bf16.msra.mxu0 %v135
  %154 = vmatprep.subr.bf16.mxu0 0
  %155 = vmatpush1.bf16.msra.mxu0 %v136
  %156 = vmatprep.subr.bf16.mxu0 0
  %157 = vmatpush1.bf16.msra.mxu0 %v137
  %158 = vmatprep.subr.bf16.mxu0 0
  %159 = vmatpush1.bf16.msra.mxu0 %v138
  %160 = vmatprep.subr.bf16.mxu0 0
  %161 = vmatpush1.bf16.msra.mxu0 %v139
  %162 = vmatprep.subr.bf16.mxu0 0
  %163 = vmatpush1.bf16.msra.mxu0 %v140
  %164 = vmatprep.subr.bf16.mxu0 0
  %165 = vmatpush1.bf16.msra.mxu0 %v141
  %166 = vmatprep.subr.bf16.mxu0 0
  %167 = vmatpush1.bf16.msra.mxu0 0
  %168 = vmatprep.subr.bf16.mxu0 0
  %169 = vmatpush1.bf16.msra.mxu0 0
  %170 = vmatprep.subr.bf16.mxu0 0
  %171 = vmatpush1.bf16.msra.mxu0 0
  %172 = vmatprep.subr.bf16.mxu0 0
  %173 = vmatpush1.bf16.msra.mxu0 0
  %174 = vmatprep.subr.bf16.mxu0 0
  %175 = vmatpush1.bf16.msra.mxu0 0
  %176 = vmatprep.subr.bf16.mxu0 0
  %177 = vmatpush1.bf16.msra.mxu0 0
  %178 = vmatprep.subr.bf16.mxu0 0
  %179 = vmatpush1.bf16.msra.mxu0 0
  %180 = vmatprep.subr.bf16.mxu0 0
  %181 = vmatpush1.bf16.msra.mxu0 0
  %182 = vmatprep.mubr.bf16.mxu0 0
  %183 = vmatmul.mubr.bf16.gmra.mrb[0].mxu0 %v86
  %v184 = vpop.f32.mrb[0].mxu0
  %v185 = vadd.f32 %v52, %v184
  %v186 = vpop.f32.mrb[0].mxu0
  %v187 = vpop.f32.mrb[0].mxu0
  %v188 = vadd.f32 %v52, %v187
  %v189 = vpop.f32.mrb[0].mxu0
  %190 = vmatprep.mubr.bf16.mxu0 0
  %191 = vmatmul.mubr.bf16.gmra.mrb[0].mxu0 %v87
  %v192 = vpop.f32.mrb[0].mxu0
  %v193 = vadd.f32 %v52, %v192
  %v194 = vpop.f32.mrb[0].mxu0
  %v195 = vpop.f32.mrb[0].mxu0
  %v196 = vadd.f32 %v52, %v195
  %v197 = vpop.f32.mrb[0].mxu0
  %198 = vmatprep.mubr.bf16.mxu0 0
  %199 = vmatmul.mubr.bf16.gmra.mrb[0].mxu0 %v88
  %v200 = vpop.f32.mrb[0].mxu0
  %v201 = vadd.f32 %v52, %v200
  %v202 = vpop.f32.mrb[0].mxu0
  %v203 = vpop.f32.mrb[0].mxu0
  %v204 = vadd.f32 %v52, %v203
  %v205 = vpop.f32.mrb[0].mxu0
  %206 = vmatprep.mubr.bf16.mxu0 0
  %207 = vmatmul.mubr.bf16.gmra.mrb[0].mxu0 %v89
  %v208 = vpop.f32.mrb[0].mxu0
  %v209 = vadd.f32 %v52, %v208
  %v210 = vpop.f32.mrb[0].mxu0
  %v211 = vpop.f32.mrb[0].mxu0
  %v212 = vadd.f32 %v52, %v211
  %v213 = vpop.f32.mrb[0].mxu0
  %214 = vmatprep.mubr.bf16.mxu0 0
  %215 = vmatmul.mubr.bf16.gmra.mrb[0].mxu0 %v90
  %v216 = vpop.f32.mrb[0].mxu0
  %v217 = vadd.f32 %v52, %v216
  %v218 = vpop.f32.mrb[0].mxu0
  %v219 = vpop.f32.mrb[0].mxu0
  %v220 = vadd.f32 %v52, %v219
  %v221 = vpop.f32.mrb[0].mxu0
  %222 = vmatprep.mubr.bf16.mxu0 0
  %223 = vmatmul.mubr.bf16.gmra.mrb[0].mxu0 %v91
  %v224 = vpop.f32.mrb[0].mxu0
  %v225 = vadd.f32 %v52, %v224
  %v226 = vpop.f32.mrb[0].mxu0
  %v227 = vpop.f32.mrb[0].mxu0
  %v228 = vadd.f32 %v52, %v227
  %v229 = vpop.f32.mrb[0].mxu0
  %230 = vmatprep.mubr.bf16.mxu0 0
  %231 = vmatmul.mubr.bf16.gmra.mrb[0].mxu0 %v92
  %v232 = vpop.f32.mrb[0].mxu0
  %v233 = vadd.f32 %v52, %v232
  %v234 = vpop.f32.mrb[0].mxu0
  %v235 = vpop.f32.mrb[0].mxu0
  %v236 = vadd.f32 %v52, %v235
  %v237 = vpop.f32.mrb[0].mxu0
  %238 = vmatprep.mubr.bf16.mxu0 0
  %239 = vmatmul.mubr.bf16.gmra.mrb[0].mxu0 %v93
  %v240 = vpop.f32.mrb[0].mxu0
  %v241 = vadd.f32 %v52, %v240
  %v242 = vpop.f32.mrb[0].mxu0
  %v243 = vpop.f32.mrb[0].mxu0
  %v244 = vadd.f32 %v52, %v243
  %v245 = vpop.f32.mrb[0].mxu0
  %246 = vdwg.mxu0
  %247 = vst [vmem:[%s3] sm:$0xff] %v185
  %248 = vst [vmem:[%s3 + $0x8] sm:$0xff] %v188
  %249 = vst [vmem:[%s3 + $0x10] sm:$0xff] %v193
  %250 = vst [vmem:[%s3 + $0x18] sm:$0xff] %v196
  %251 = vst [vmem:[%s3 + $0x20] sm:$0xff] %v201
  %252 = vst [vmem:[%s3 + $0x28] sm:$0xff] %v204
  %253 = vst [vmem:[%s3 + $0x30] sm:$0xff] %v209
  %254 = vst [vmem:[%s3 + $0x38] sm:$0xff] %v212
  %255 = vst [vmem:[%s3 + $0x40] sm:$0xff] %v217
  %256 = vst [vmem:[%s3 + $0x48] sm:$0xff] %v220
  %257 = vst [vmem:[%s3 + $0x50] sm:$0xff] %v225
  %258 = vst [vmem:[%s3 + $0x58] sm:$0xff] %v228
  %259 = vst [vmem:[%s3 + $0x60] sm:$0xff] %v233
  %260 = vst [vmem:[%s3 + $0x68] sm:$0xff] %v236
  %261 = vst [vmem:[%s3 + $0x70] sm:$0xff] %v241
  %262 = vst [vmem:[%s3 + $0x78] sm:$0xff] %v244
  // Predicated region
  $region14: #{_lambda_.11} parent=0 // pred_check
    _
  $region15: #{_lambda_.11} parent=0 // pred_check_branch
    %264 = sbr.rel (0) target = $region17
  $region16: #{_lambda_.11} parent=0 // pred_region
    _
  $region17: #{_lambda_.11} parent=0 // pred_fallthru
    _
  // Predicated region
  $region18: #{_lambda_.11} parent=0 // pred_check
    _
  $region19: #{_lambda_.11} parent=0 // pred_check_branch
    %266 = sbr.rel (0) target = $region21
  $region20: #{_lambda_.11} parent=0 // pred_region
    _
  $region21: #{_lambda_.11} parent=0 // pred_fallthru
    _

// kernel: _lambda_.12
$region0: #{_lambda_.12}
  #allocation0 [shape = 'u32[]', space=smem, size = 0x4, offset = 0x4, fixed_abs, tag = 'smem constant byte address 0x4 - core index']
  #allocation1 [shape = 'u32[144,128]{1,0:T(1,128)}', space=vmem, size = 0x12000, scoped, tag = 'internal scratch']
  %s0 = inlined_call_operand.vmem [shape: bf16[1,32,256], index: 0, kind: input, shape index: {}]
  %s1 = inlined_call_operand.vmem [shape: bf16[1,256,128], index: 1, kind: input, shape index: {}]
  %s2 = inlined_call_operand.vmem [shape: f32[1,1,128], index: 2, kind: input, shape index: {}]
  %s3 = inlined_call_operand.vmem [shape: f32[1,32,128], index: 3, kind: output, shape index: {}]
  %s4 = sld [smem:[#allocation0]]
  $region22: #{_lambda_.12} parent=0
    _
  %s6 = ssub.s32 1, %s4
  %s7 = scalar_select 0, %s6, %s4
  // Predicated region
  $region2: #{_lambda_.12} parent=0 // pred_check
    _
  $region3: #{_lambda_.12} parent=0 // pred_check_branch
    %9 = sbr.rel (0) target = $region5
  $region4: #{_lambda_.12} parent=0 // pred_region
    _
  $region5: #{_lambda_.12} parent=0 // pred_fallthru
    _
  // Predicated region
  $region6: #{_lambda_.12} parent=0 // pred_check
    _
  $region7: #{_lambda_.12} parent=0 // pred_check_branch
    %11 = sbr.rel (0) target = $region9
  $region8: #{_lambda_.12} parent=0 // pred_region
    _
  $region9: #{_lambda_.12} parent=0 // pred_fallthru
    _
  // Predicated region
  $region10: #{_lambda_.12} parent=0 // pred_check
    _
  $region11: #{_lambda_.12} parent=0 // pred_check_branch
    %13 = sbr.rel (0) target = $region13
  $region12: #{_lambda_.12} parent=0 // pred_region
    _
  $region13: #{_lambda_.12} parent=0 // pred_fallthru
    _
  %v15 = vld [vmem:[%s0] sm:$0xff]
  %v16 = vld [vmem:[%s0 + $0x8] sm:$0xff]
  %v17 = vld [vmem:[%s0 + $0x10] sm:$0xff]
  %v18 = vld [vmem:[%s0 + $0x18] sm:$0xff]
  %v19 = vld [vmem:[%s1] sm:$0xf]
  %v20 = vld [vmem:[%s1 + $0x4] sm:$0xf]
  %v21 = vld [vmem:[%s1 + $0x8] sm:$0xf]
  %v22 = vld [vmem:[%s1 + $0xc] sm:$0xf]
  %v23 = vld [vmem:[%s1 + $0x10] sm:$0xf]
  %v24 = vld [vmem:[%s1 + $0x14] sm:$0xf]
  %v25 = vld [vmem:[%s1 + $0x18] sm:$0xf]
  %v26 = vld [vmem:[%s1 + $0x1c] sm:$0xf]
  %v27 = vld [vmem:[%s1 + $0x20] sm:$0xf]
  %v28 = vld [vmem:[%s1 + $0x24] sm:$0xf]
  %v29 = vld [vmem:[%s1 + $0x28] sm:$0xf]
  %v30 = vld [vmem:[%s1 + $0x2c] sm:$0xf]
  %v31 = vld [vmem:[%s1 + $0x30] sm:$0xf]
  %v32 = vld [vmem:[%s1 + $0x34] sm:$0xf]
  %v33 = vld [vmem:[%s1 + $0x38] sm:$0xf]
  %v34 = vld [vmem:[%s1 + $0x3c] sm:$0xf]
  %v35 = vld [vmem:[%s1 + $0x40] sm:$0xf]
  %v36 = vld [vmem:[%s1 + $0x44] sm:$0xf]
  %v37 = vld [vmem:[%s1 + $0x48] sm:$0xf]
  %v38 = vld [vmem:[%s1 + $0x4c] sm:$0xf]
  %v39 = vld [vmem:[%s1 + $0x50] sm:$0xf]
  %v40 = vld [vmem:[%s1 + $0x54] sm:$0xf]
  %v41 = vld [vmem:[%s1 + $0x58] sm:$0xf]
  %v42 = vld [vmem:[%s1 + $0x5c] sm:$0xf]
  %v43 = vld [vmem:[%s1 + $0x60] sm:$0xf]
  %v44 = vld [vmem:[%s1 + $0x64] sm:$0xf]
  %v45 = vld [vmem:[%s1 + $0x68] sm:$0xf]
  %v46 = vld [vmem:[%s1 + $0x6c] sm:$0xf]
  %v47 = vld [vmem:[%s1 + $0x70] sm:$0xf]
  %v48 = vld [vmem:[%s1 + $0x74] sm:$0xf]
  %v49 = vld [vmem:[%s1 + $0x78] sm:$0xf]
  %v50 = vld [vmem:[%s1 + $0x7c] sm:$0xf]
  %v51 = vld [vmem:[%s2] sm:$0x1]
  %v53 = vlaneseq
  %v54 = vshrl.u32 %v53, 7
  %v55 = vsub.s32 0, %v54
  %v56 = vrot.slane %v51, %v55
  %v62 = vunpack.c.l.b16 %v15
  %v63 = vunpack.c.h.b16 %v15
  %v64 = vunpack.c.l.b16 %v16
  %v65 = vunpack.c.h.b16 %v16
  %v66 = vunpack.c.l.b16 %v17
  %v67 = vunpack.c.h.b16 %v17
  %v68 = vunpack.c.l.b16 %v18
  %v69 = vunpack.c.h.b16 %v18
  %v70 = vpack.c.b16 %v64, %v62
  %v71 = vpack.c.b16 %v65, %v63
  %v72 = vpack.c.b16 %v68, %v66
  %v73 = vpack.c.b16 %v69, %v67
  %v110 = vunpack.c.l.b16 %v19
  %v111 = vunpack.c.l.b16 %v20
  %v112 = vunpack.c.l.b16 %v21
  %v113 = vunpack.c.l.b16 %v22
  %v114 = vunpack.c.l.b16 %v23
  %v115 = vunpack.c.l.b16 %v24
  %v116 = vunpack.c.l.b16 %v25
  %v117 = vunpack.c.l.b16 %v26
  %v118 = vunpack.c.l.b16 %v27
  %v119 = vunpack.c.l.b16 %v28
  %v120 = vunpack.c.l.b16 %v29
  %v121 = vunpack.c.l.b16 %v30
  %v122 = vunpack.c.l.b16 %v31
  %v123 = vunpack.c.l.b16 %v32
  %v124 = vunpack.c.l.b16 %v33
  %v125 = vunpack.c.l.b16 %v34
  %v126 = vunpack.c.l.b16 %v35
  %v127 = vunpack.c.l.b16 %v36
  %v128 = vunpack.c.l.b16 %v37
  %v129 = vunpack.c.l.b16 %v38
  %v130 = vunpack.c.l.b16 %v39
  %v131 = vunpack.c.l.b16 %v40
  %v132 = vunpack.c.l.b16 %v41
  %v133 = vunpack.c.l.b16 %v42
  %v134 = vunpack.c.l.b16 %v43
  %v135 = vunpack.c.l.b16 %v44
  %v136 = vunpack.c.l.b16 %v45
  %v137 = vunpack.c.l.b16 %v46
  %v138 = vunpack.c.l.b16 %v47
  %v139 = vunpack.c.l.b16 %v48
  %v140 = vunpack.c.l.b16 %v49
  %v141 = vunpack.c.l.b16 %v50
  %v142 = vpack.c.b16 %v111, %v110
  %v143 = vpack.c.b16 %v113, %v112
  %v144 = vpack.c.b16 %v115, %v114
  %v145 = vpack.c.b16 %v117, %v116
  %v146 = vpack.c.b16 %v119, %v118
  %v147 = vpack.c.b16 %v121, %v120
  %v148 = vpack.c.b16 %v123, %v122
  %v149 = vpack.c.b16 %v125, %v124
  %v150 = vpack.c.b16 %v127, %v126
  %v151 = vpack.c.b16 %v129, %v128
  %v152 = vpack.c.b16 %v131, %v130
  %v153 = vpack.c.b16 %v133, %v132
  %v154 = vpack.c.b16 %v135, %v134
  %v155 = vpack.c.b16 %v137, %v136
  %v156 = vpack.c.b16 %v139, %v138
  %v157 = vpack.c.b16 %v141, %v140
  %174 = vmatprep.subr.bf16.mxu0 0
  %175 = vmatpush1.bf16.msra.mxu0 %v142
  %176 = vmatprep.subr.bf16.mxu0 0
  %177 = vmatpush1.bf16.msra.mxu0 %v143
  %178 = vmatprep.subr.bf16.mxu0 0
  %179 = vmatpush1.bf16.msra.mxu0 %v144
  %180 = vmatprep.subr.bf16.mxu0 0
  %181 = vmatpush1.bf16.msra.mxu0 %v145
  %182 = vmatprep.subr.bf16.mxu0 0
  %183 = vmatpush1.bf16.msra.mxu0 %v146
  %184 = vmatprep.subr.bf16.mxu0 0
  %185 = vmatpush1.bf16.msra.mxu0 %v147
  %186 = vmatprep.subr.bf16.mxu0 0
  %187 = vmatpush1.bf16.msra.mxu0 %v148
  %188 = vmatprep.subr.bf16.mxu0 0
  %189 = vmatpush1.bf16.msra.mxu0 %v149
  %190 = vmatprep.subr.bf16.mxu0 0
  %191 = vmatpush1.bf16.msra.mxu0 %v150
  %192 = vmatprep.subr.bf16.mxu0 0
  %193 = vmatpush1.bf16.msra.mxu0 %v151
  %194 = vmatprep.subr.bf16.mxu0 0
  %195 = vmatpush1.bf16.msra.mxu0 %v152
  %196 = vmatprep.subr.bf16.mxu0 0
  %197 = vmatpush1.bf16.msra.mxu0 %v153
  %198 = vmatprep.subr.bf16.mxu0 0
  %199 = vmatpush1.bf16.msra.mxu0 %v154
  %200 = vmatprep.subr.bf16.mxu0 0
  %201 = vmatpush1.bf16.msra.mxu0 %v155
  %202 = vmatprep.subr.bf16.mxu0 0
  %203 = vmatpush1.bf16.msra.mxu0 %v156
  %204 = vmatprep.subr.bf16.mxu0 0
  %205 = vmatpush1.bf16.msra.mxu0 %v157
  %206 = vmatprep.mubr.bf16.mxu0 %v71
  %207 = vmatmul.mubr.bf16.gmra.mrb[0].mxu0 %v70
  %v208 = vpop.f32.mrb[0].mxu0
  %v209 = vadd.f32 %v56, %v208
  %v210 = vpop.f32.mrb[0].mxu0
  %v211 = vpop.f32.mrb[0].mxu0
  %v212 = vadd.f32 %v56, %v211
  %v213 = vpop.f32.mrb[0].mxu0
  %214 = vmatprep.mubr.bf16.mxu0 %v73
  %215 = vmatmul.mubr.bf16.gmra.mrb[0].mxu0 %v72
  %v216 = vpop.f32.mrb[0].mxu0
  %v217 = vadd.f32 %v56, %v216
  %v218 = vpop.f32.mrb[0].mxu0
  %v219 = vpop.f32.mrb[0].mxu0
  %v220 = vadd.f32 %v56, %v219
  %v221 = vpop.f32.mrb[0].mxu0
  %222 = vdwg.mxu0
  %223 = vst [vmem:[%s3] sm:$0xff] %v209
  %224 = vst [vmem:[%s3 + $0x8] sm:$0xff] %v212
  %225 = vst [vmem:[%s3 + $0x10] sm:$0xff] %v217
  %226 = vst [vmem:[%s3 + $0x18] sm:$0xff] %v220
  // Predicated region
  $region14: #{_lambda_.12} parent=0 // pred_check
    _
  $region15: #{_lambda_.12} parent=0 // pred_check_branch
    %228 = sbr.rel (0) target = $region17
  $region16: #{_lambda_.12} parent=0 // pred_region
    _
  $region17: #{_lambda_.12} parent=0 // pred_fallthru
    _
  // Predicated region
  $region18: #{_lambda_.12} parent=0 // pred_check
    _
  $region19: #{_lambda_.12} parent=0 // pred_check_branch
    %230 = sbr.rel (0) target = $region21
  $region20: #{_lambda_.12} parent=0 // pred_region
    _
  $region21: #{_lambda_.12} parent=0 // pred_fallthru
    _

// kernel: _lambda_.13
$region0: #{_lambda_.13}
  #allocation0 [shape = 'u32[]', space=smem, size = 0x4, offset = 0x4, fixed_abs, tag = 'smem constant byte address 0x4 - core index']
  #allocation1 [shape = 'u32[144,128]{1,0:T(1,128)}', space=vmem, size = 0x12000, scoped, tag = 'internal scratch']
  %s0 = inlined_call_operand.vmem [shape: bf16[1,16,512], index: 0, kind: input, shape index: {}]
  %s1 = inlined_call_operand.vmem [shape: bf16[1,512,128], index: 1, kind: input, shape index: {}]
  %s2 = inlined_call_operand.vmem [shape: f32[1,1,128], index: 2, kind: input, shape index: {}]
  %s3 = inlined_call_operand.vmem [shape: f32[1,16,128], index: 3, kind: output, shape index: {}]
  %s4 = sld [smem:[#allocation0]]
  $region22: #{_lambda_.13} parent=0
    _
  %s6 = ssub.s32 1, %s4
  %s7 = scalar_select 0, %s6, %s4
  // Predicated region
  $region2: #{_lambda_.13} parent=0 // pred_check
    _
  $region3: #{_lambda_.13} parent=0 // pred_check_branch
    %9 = sbr.rel (0) target = $region5
  $region4: #{_lambda_.13} parent=0 // pred_region
    _
  $region5: #{_lambda_.13} parent=0 // pred_fallthru
    _
  // Predicated region
  $region6: #{_lambda_.13} parent=0 // pred_check
    _
  $region7: #{_lambda_.13} parent=0 // pred_check_branch
    %11 = sbr.rel (0) target = $region9
  $region8: #{_lambda_.13} parent=0 // pred_region
    _
  $region9: #{_lambda_.13} parent=0 // pred_fallthru
    _
  // Predicated region
  $region10: #{_lambda_.13} parent=0 // pred_check
    _
  $region11: #{_lambda_.13} parent=0 // pred_check_branch
    %13 = sbr.rel (0) target = $region13
  $region12: #{_lambda_.13} parent=0 // pred_region
    _
  $region13: #{_lambda_.13} parent=0 // pred_fallthru
    _
  %v15 = vld [vmem:[%s0] sm:$0xff]
  %v16 = vld [vmem:[%s0 + $0x8] sm:$0xff]
  %v17 = vld [vmem:[%s0 + $0x10] sm:$0xff]
  %v18 = vld [vmem:[%s0 + $0x18] sm:$0xff]
  %v19 = vld [vmem:[%s1] sm:$0xf]
  %v20 = vld [vmem:[%s1 + $0x4] sm:$0xf]
  %v21 = vld [vmem:[%s1 + $0x8] sm:$0xf]
  %v22 = vld [vmem:[%s1 + $0xc] sm:$0xf]
  %v23 = vld [vmem:[%s1 + $0x10] sm:$0xf]
  %v24 = vld [vmem:[%s1 + $0x14] sm:$0xf]
  %v25 = vld [vmem:[%s1 + $0x18] sm:$0xf]
  %v26 = vld [vmem:[%s1 + $0x1c] sm:$0xf]
  %v27 = vld [vmem:[%s1 + $0x20] sm:$0xf]
  %v28 = vld [vmem:[%s1 + $0x24] sm:$0xf]
  %v29 = vld [vmem:[%s1 + $0x28] sm:$0xf]
  %v30 = vld [vmem:[%s1 + $0x2c] sm:$0xf]
  %v31 = vld [vmem:[%s1 + $0x30] sm:$0xf]
  %v32 = vld [vmem:[%s1 + $0x34] sm:$0xf]
  %v33 = vld [vmem:[%s1 + $0x38] sm:$0xf]
  %v34 = vld [vmem:[%s1 + $0x3c] sm:$0xf]
  %v35 = vld [vmem:[%s1 + $0x40] sm:$0xf]
  %v36 = vld [vmem:[%s1 + $0x44] sm:$0xf]
  %v37 = vld [vmem:[%s1 + $0x48] sm:$0xf]
  %v38 = vld [vmem:[%s1 + $0x4c] sm:$0xf]
  %v39 = vld [vmem:[%s1 + $0x50] sm:$0xf]
  %v40 = vld [vmem:[%s1 + $0x54] sm:$0xf]
  %v41 = vld [vmem:[%s1 + $0x58] sm:$0xf]
  %v42 = vld [vmem:[%s1 + $0x5c] sm:$0xf]
  %v43 = vld [vmem:[%s1 + $0x60] sm:$0xf]
  %v44 = vld [vmem:[%s1 + $0x64] sm:$0xf]
  %v45 = vld [vmem:[%s1 + $0x68] sm:$0xf]
  %v46 = vld [vmem:[%s1 + $0x6c] sm:$0xf]
  %v47 = vld [vmem:[%s1 + $0x70] sm:$0xf]
  %v48 = vld [vmem:[%s1 + $0x74] sm:$0xf]
  %v49 = vld [vmem:[%s1 + $0x78] sm:$0xf]
  %v50 = vld [vmem:[%s1 + $0x7c] sm:$0xf]
  %v51 = vld [vmem:[%s1 + $0x80] sm:$0xf]
  %v52 = vld [vmem:[%s1 + $0x84] sm:$0xf]
  %v53 = vld [vmem:[%s1 + $0x88] sm:$0xf]
  %v54 = vld [vmem:[%s1 + $0x8c] sm:$0xf]
  %v55 = vld [vmem:[%s1 + $0x90] sm:$0xf]
  %v56 = vld [vmem:[%s1 + $0x94] sm:$0xf]
  %v57 = vld [vmem:[%s1 + $0x98] sm:$0xf]
  %v58 = vld [vmem:[%s1 + $0x9c] sm:$0xf]
  %v59 = vld [vmem:[%s1 + $0xa0] sm:$0xf]
  %v60 = vld [vmem:[%s1 + $0xa4] sm:$0xf]
  %v61 = vld [vmem:[%s1 + $0xa8] sm:$0xf]
  %v62 = vld [vmem:[%s1 + $0xac] sm:$0xf]
  %v63 = vld [vmem:[%s1 + $0xb0] sm:$0xf]
  %v64 = vld [vmem:[%s1 + $0xb4] sm:$0xf]
  %v65 = vld [vmem:[%s1 + $0xb8] sm:$0xf]
  %v66 = vld [vmem:[%s1 + $0xbc] sm:$0xf]
  %v67 = vld [vmem:[%s1 + $0xc0] sm:$0xf]
  %v68 = vld [vmem:[%s1 + $0xc4] sm:$0xf]
  %v69 = vld [vmem:[%s1 + $0xc8] sm:$0xf]
  %v70 = vld [vmem:[%s1 + $0xcc] sm:$0xf]
  %v71 = vld [vmem:[%s1 + $0xd0] sm:$0xf]
  %v72 = vld [vmem:[%s1 + $0xd4] sm:$0xf]
  %v73 = vld [vmem:[%s1 + $0xd8] sm:$0xf]
  %v74 = vld [vmem:[%s1 + $0xdc] sm:$0xf]
  %v75 = vld [vmem:[%s1 + $0xe0] sm:$0xf]
  %v76 = vld [vmem:[%s1 + $0xe4] sm:$0xf]
  %v77 = vld [vmem:[%s1 + $0xe8] sm:$0xf]
  %v78 = vld [vmem:[%s1 + $0xec] sm:$0xf]
  %v79 = vld [vmem:[%s1 + $0xf0] sm:$0xf]
  %v80 = vld [vmem:[%s1 + $0xf4] sm:$0xf]
  %v81 = vld [vmem:[%s1 + $0xf8] sm:$0xf]
  %v82 = vld [vmem:[%s1 + $0xfc] sm:$0xf]
  %v83 = vld [vmem:[%s2] sm:$0x1]
  %v85 = vlaneseq
  %v86 = vshrl.u32 %v85, 7
  %v87 = vsub.s32 0, %v86
  %v88 = vrot.slane %v83, %v87
  %v94 = vunpack.c.l.b16 %v15
  %v95 = vunpack.c.h.b16 %v15
  %v96 = vunpack.c.l.b16 %v16
  %v97 = vunpack.c.h.b16 %v16
  %v98 = vunpack.c.l.b16 %v17
  %v99 = vunpack.c.h.b16 %v17
  %v100 = vunpack.c.l.b16 %v18
  %v101 = vunpack.c.h.b16 %v18
  %v102 = vpack.c.b16 %v98, %v94
  %v103 = vpack.c.b16 %v99, %v95
  %v104 = vpack.c.b16 %v100, %v96
  %v105 = vpack.c.b16 %v101, %v97
  %v174 = vunpack.c.l.b16 %v19
  %v175 = vunpack.c.l.b16 %v20
  %v176 = vunpack.c.l.b16 %v21
  %v177 = vunpack.c.l.b16 %v22
  %v178 = vunpack.c.l.b16 %v23
  %v179 = vunpack.c.l.b16 %v24
  %v180 = vunpack.c.l.b16 %v25
  %v181 = vunpack.c.l.b16 %v26
  %v182 = vunpack.c.l.b16 %v27
  %v183 = vunpack.c.l.b16 %v28
  %v184 = vunpack.c.l.b16 %v29
  %v185 = vunpack.c.l.b16 %v30
  %v186 = vunpack.c.l.b16 %v31
  %v187 = vunpack.c.l.b16 %v32
  %v188 = vunpack.c.l.b16 %v33
  %v189 = vunpack.c.l.b16 %v34
  %v190 = vunpack.c.l.b16 %v35
  %v191 = vunpack.c.l.b16 %v36
  %v192 = vunpack.c.l.b16 %v37
  %v193 = vunpack.c.l.b16 %v38
  %v194 = vunpack.c.l.b16 %v39
  %v195 = vunpack.c.l.b16 %v40
  %v196 = vunpack.c.l.b16 %v41
  %v197 = vunpack.c.l.b16 %v42
  %v198 = vunpack.c.l.b16 %v43
  %v199 = vunpack.c.l.b16 %v44
  %v200 = vunpack.c.l.b16 %v45
  %v201 = vunpack.c.l.b16 %v46
  %v202 = vunpack.c.l.b16 %v47
  %v203 = vunpack.c.l.b16 %v48
  %v204 = vunpack.c.l.b16 %v49
  %v205 = vunpack.c.l.b16 %v50
  %v206 = vunpack.c.l.b16 %v51
  %v207 = vunpack.c.l.b16 %v52
  %v208 = vunpack.c.l.b16 %v53
  %v209 = vunpack.c.l.b16 %v54
  %v210 = vunpack.c.l.b16 %v55
  %v211 = vunpack.c.l.b16 %v56
  %v212 = vunpack.c.l.b16 %v57
  %v213 = vunpack.c.l.b16 %v58
  %v214 = vunpack.c.l.b16 %v59
  %v215 = vunpack.c.l.b16 %v60
  %v216 = vunpack.c.l.b16 %v61
  %v217 = vunpack.c.l.b16 %v62
  %v218 = vunpack.c.l.b16 %v63
  %v219 = vunpack.c.l.b16 %v64
  %v220 = vunpack.c.l.b16 %v65
  %v221 = vunpack.c.l.b16 %v66
  %v222 = vunpack.c.l.b16 %v67
  %v223 = vunpack.c.l.b16 %v68
  %v224 = vunpack.c.l.b16 %v69
  %v225 = vunpack.c.l.b16 %v70
  %v226 = vunpack.c.l.b16 %v71
  %v227 = vunpack.c.l.b16 %v72
  %v228 = vunpack.c.l.b16 %v73
  %v229 = vunpack.c.l.b16 %v74
  %v230 = vunpack.c.l.b16 %v75
  %v231 = vunpack.c.l.b16 %v76
  %v232 = vunpack.c.l.b16 %v77
  %v233 = vunpack.c.l.b16 %v78
  %v234 = vunpack.c.l.b16 %v79
  %v235 = vunpack.c.l.b16 %v80
  %v236 = vunpack.c.l.b16 %v81
  %v237 = vunpack.c.l.b16 %v82
  %v238 = vpack.c.b16 %v175, %v174
  %v239 = vpack.c.b16 %v177, %v176
  %v240 = vpack.c.b16 %v179, %v178
  %v241 = vpack.c.b16 %v181, %v180
  %v242 = vpack.c.b16 %v183, %v182
  %v243 = vpack.c.b16 %v185, %v184
  %v244 = vpack.c.b16 %v187, %v186
  %v245 = vpack.c.b16 %v189, %v188
  %v246 = vpack.c.b16 %v191, %v190
  %v247 = vpack.c.b16 %v193, %v192
  %v248 = vpack.c.b16 %v195, %v194
  %v249 = vpack.c.b16 %v197, %v196
  %v250 = vpack.c.b16 %v199, %v198
  %v251 = vpack.c.b16 %v201, %v200
  %v252 = vpack.c.b16 %v203, %v202
  %v253 = vpack.c.b16 %v205, %v204
  %v254 = vpack.c.b16 %v207, %v206
  %v255 = vpack.c.b16 %v209, %v208
  %v256 = vpack.c.b16 %v211, %v210
  %v257 = vpack.c.b16 %v213, %v212
  %v258 = vpack.c.b16 %v215, %v214
  %v259 = vpack.c.b16 %v217, %v216
  %v260 = vpack.c.b16 %v219, %v218
  %v261 = vpack.c.b16 %v221, %v220
  %v262 = vpack.c.b16 %v223, %v222
  %v263 = vpack.c.b16 %v225, %v224
  %v264 = vpack.c.b16 %v227, %v226
  %v265 = vpack.c.b16 %v229, %v228
  %v266 = vpack.c.b16 %v231, %v230
  %v267 = vpack.c.b16 %v233, %v232
  %v268 = vpack.c.b16 %v235, %v234
  %v269 = vpack.c.b16 %v237, %v236
  %302 = vmatprep.subr.bf16.mxu0 0
  %303 = vmatpush1.bf16.msra.mxu0 %v238
  %304 = vmatprep.subr.bf16.mxu0 0
  %305 = vmatpush1.bf16.msra.mxu0 %v239
  %306 = vmatprep.subr.bf16.mxu0 0
  %307 = vmatpush1.bf16.msra.mxu0 %v240
  %308 = vmatprep.subr.bf16.mxu0 0
  %309 = vmatpush1.bf16.msra.mxu0 %v241
  %310 = vmatprep.subr.bf16.mxu0 0
  %311 = vmatpush1.bf16.msra.mxu0 %v242
  %312 = vmatprep.subr.bf16.mxu0 0
  %313 = vmatpush1.bf16.msra.mxu0 %v243
  %314 = vmatprep.subr.bf16.mxu0 0
  %315 = vmatpush1.bf16.msra.mxu0 %v244
  %316 = vmatprep.subr.bf16.mxu0 0
  %317 = vmatpush1.bf16.msra.mxu0 %v245
  %318 = vmatprep.subr.bf16.mxu0 0
  %319 = vmatpush1.bf16.msra.mxu0 %v246
  %320 = vmatprep.subr.bf16.mxu0 0
  %321 = vmatpush1.bf16.msra.mxu0 %v247
  %322 = vmatprep.subr.bf16.mxu0 0
  %323 = vmatpush1.bf16.msra.mxu0 %v248
  %324 = vmatprep.subr.bf16.mxu0 0
  %325 = vmatpush1.bf16.msra.mxu0 %v249
  %326 = vmatprep.subr.bf16.mxu0 0
  %327 = vmatpush1.bf16.msra.mxu0 %v250
  %328 = vmatprep.subr.bf16.mxu0 0
  %329 = vmatpush1.bf16.msra.mxu0 %v251
  %330 = vmatprep.subr.bf16.mxu0 0
  %331 = vmatpush1.bf16.msra.mxu0 %v252
  %332 = vmatprep.subr.bf16.mxu0 0
  %333 = vmatpush1.bf16.msra.mxu0 %v253
  %334 = vmatprep.mubr.bf16.mxu0 %v103
  %335 = vmatmul.mubr.bf16.gmra.mrb[0].mxu0 %v102
  %v336 = vpop.f32.mrb[0].mxu0
  %v337 = vadd.f32 %v88, %v336
  %v338 = vpop.f32.mrb[0].mxu0
  %v339 = vpop.f32.mrb[0].mxu0
  %v340 = vadd.f32 %v88, %v339
  %v341 = vpop.f32.mrb[0].mxu0
  %342 = vdwg.mxu0
  %343 = vmatprep.subr.bf16.mxu0 0
  %344 = vmatpush1.bf16.msra.mxu0 %v254
  %345 = vmatprep.subr.bf16.mxu0 0
  %346 = vmatpush1.bf16.msra.mxu0 %v255
  %347 = vmatprep.subr.bf16.mxu0 0
  %348 = vmatpush1.bf16.msra.mxu0 %v256
  %349 = vmatprep.subr.bf16.mxu0 0
  %350 = vmatpush1.bf16.msra.mxu0 %v257
  %351 = vmatprep.subr.bf16.mxu0 0
  %352 = vmatpush1.bf16.msra.mxu0 %v258
  %353 = vmatprep.subr.bf16.mxu0 0
  %354 = vmatpush1.bf16.msra.mxu0 %v259
  %355 = vmatprep.subr.bf16.mxu0 0
  %356 = vmatpush1.bf16.msra.mxu0 %v260
  %357 = vmatprep.subr.bf16.mxu0 0
  %358 = vmatpush1.bf16.msra.mxu0 %v261
  %359 = vmatprep.subr.bf16.mxu0 0
  %360 = vmatpush1.bf16.msra.mxu0 %v262
  %361 = vmatprep.subr.bf16.mxu0 0
  %362 = vmatpush1.bf16.msra.mxu0 %v263
  %363 = vmatprep.subr.bf16.mxu0 0
  %364 = vmatpush1.bf16.msra.mxu0 %v264
  %365 = vmatprep.subr.bf16.mxu0 0
  %366 = vmatpush1.bf16.msra.mxu0 %v265
  %367 = vmatprep.subr.bf16.mxu0 0
  %368 = vmatpush1.bf16.msra.mxu0 %v266
  %369 = vmatprep.subr.bf16.mxu0 0
  %370 = vmatpush1.bf16.msra.mxu0 %v267
  %371 = vmatprep.subr.bf16.mxu0 0
  %372 = vmatpush1.bf16.msra.mxu0 %v268
  %373 = vmatprep.subr.bf16.mxu0 0
  %374 = vmatpush1.bf16.msra.mxu0 %v269
  %375 = vmatprep.mubr.bf16.mxu0 %v105
  %376 = vmatmul.mubr.bf16.gmra.mrb[0].mxu0 %v104
  %v377 = vpop.f32.mrb[0].mxu0
  %v378 = vadd.f32 %v337, %v377
  %v379 = vpop.f32.mrb[0].mxu0
  %v380 = vpop.f32.mrb[0].mxu0
  %v381 = vadd.f32 %v340, %v380
  %v382 = vpop.f32.mrb[0].mxu0
  %383 = vdwg.mxu0
  %384 = vst [vmem:[%s3] sm:$0xff] %v378
  %385 = vst [vmem:[%s3 + $0x8] sm:$0xff] %v381
  // Predicated region
  $region14: #{_lambda_.13} parent=0 // pred_check
    _
  $region15: #{_lambda_.13} parent=0 // pred_check_branch
    %387 = sbr.rel (0) target = $region17
  $region16: #{_lambda_.13} parent=0 // pred_region
    _
  $region17: #{_lambda_.13} parent=0 // pred_fallthru
    _
  // Predicated region
  $region18: #{_lambda_.13} parent=0 // pred_check
    _
  $region19: #{_lambda_.13} parent=0 // pred_check_branch
    %389 = sbr.rel (0) target = $region21
  $region20: #{_lambda_.13} parent=0 // pred_region
    _
  $region21: #{_lambda_.13} parent=0 // pred_fallthru
    _

// kernel: _lambda_.14
$region0: #{_lambda_.14}
  #allocation0 [shape = 'u32[]', space=smem, size = 0x4, offset = 0x4, fixed_abs, tag = 'smem constant byte address 0x4 - core index']
  #allocation1 [shape = 'u32[144,128]{1,0:T(1,128)}', space=vmem, size = 0x12000, scoped, tag = 'internal scratch']
  %s0 = inlined_call_operand.vmem [shape: bf16[1,16,1024], index: 0, kind: input, shape index: {}]
  %s1 = inlined_call_operand.vmem [shape: bf16[1,1024,128], index: 1, kind: input, shape index: {}]
  %s2 = inlined_call_operand.vmem [shape: f32[1,1,128], index: 2, kind: input, shape index: {}]
  %s3 = inlined_call_operand.vmem [shape: f32[1,16,128], index: 3, kind: output, shape index: {}]
  %s4 = sld [smem:[#allocation0]]
  $region22: #{_lambda_.14} parent=0
    _
  %s6 = ssub.s32 1, %s4
  %s7 = scalar_select 0, %s6, %s4
  // Predicated region
  $region2: #{_lambda_.14} parent=0 // pred_check
    _
  $region3: #{_lambda_.14} parent=0 // pred_check_branch
    %9 = sbr.rel (0) target = $region5
  $region4: #{_lambda_.14} parent=0 // pred_region
    _
  $region5: #{_lambda_.14} parent=0 // pred_fallthru
    _
  // Predicated region
  $region6: #{_lambda_.14} parent=0 // pred_check
    _
  $region7: #{_lambda_.14} parent=0 // pred_check_branch
    %11 = sbr.rel (0) target = $region9
  $region8: #{_lambda_.14} parent=0 // pred_region
    _
  $region9: #{_lambda_.14} parent=0 // pred_fallthru
    _
  // Predicated region
  $region10: #{_lambda_.14} parent=0 // pred_check
    _
  $region11: #{_lambda_.14} parent=0 // pred_check_branch
    %13 = sbr.rel (0) target = $region13
  $region12: #{_lambda_.14} parent=0 // pred_region
    _
  $region13: #{_lambda_.14} parent=0 // pred_fallthru
    _
  %v15 = vld [vmem:[%s0] sm:$0xff]
  %v16 = vld [vmem:[%s0 + $0x8] sm:$0xff]
  %v17 = vld [vmem:[%s0 + $0x10] sm:$0xff]
  %v18 = vld [vmem:[%s0 + $0x18] sm:$0xff]
  %v19 = vld [vmem:[%s0 + $0x20] sm:$0xff]
  %v20 = vld [vmem:[%s0 + $0x28] sm:$0xff]
  %v21 = vld [vmem:[%s0 + $0x30] sm:$0xff]
  %v22 = vld [vmem:[%s0 + $0x38] sm:$0xff]
  %v23 = vld [vmem:[%s1] sm:$0xf]
  %v24 = vld [vmem:[%s1 + $0x4] sm:$0xf]
  %v25 = vld [vmem:[%s1 + $0x8] sm:$0xf]
  %v26 = vld [vmem:[%s1 + $0xc] sm:$0xf]
  %v27 = vld [vmem:[%s1 + $0x10] sm:$0xf]
  %v28 = vld [vmem:[%s1 + $0x14] sm:$0xf]
  %v29 = vld [vmem:[%s1 + $0x18] sm:$0xf]
  %v30 = vld [vmem:[%s1 + $0x1c] sm:$0xf]
  %v31 = vld [vmem:[%s1 + $0x20] sm:$0xf]
  %v32 = vld [vmem:[%s1 + $0x24] sm:$0xf]
  %v33 = vld [vmem:[%s1 + $0x28] sm:$0xf]
  %v34 = vld [vmem:[%s1 + $0x2c] sm:$0xf]
  %v35 = vld [vmem:[%s1 + $0x30] sm:$0xf]
  %v36 = vld [vmem:[%s1 + $0x34] sm:$0xf]
  %v37 = vld [vmem:[%s1 + $0x38] sm:$0xf]
  %v38 = vld [vmem:[%s1 + $0x3c] sm:$0xf]
  %v39 = vld [vmem:[%s1 + $0x40] sm:$0xf]
  %v40 = vld [vmem:[%s1 + $0x44] sm:$0xf]
  %v41 = vld [vmem:[%s1 + $0x48] sm:$0xf]
  %v42 = vld [vmem:[%s1 + $0x4c] sm:$0xf]
  %v43 = vld [vmem:[%s1 + $0x50] sm:$0xf]
  %v44 = vld [vmem:[%s1 + $0x54] sm:$0xf]
  %v45 = vld [vmem:[%s1 + $0x58] sm:$0xf]
  %v46 = vld [vmem:[%s1 + $0x5c] sm:$0xf]
  %v47 = vld [vmem:[%s1 + $0x60] sm:$0xf]
  %v48 = vld [vmem:[%s1 + $0x64] sm:$0xf]
  %v49 = vld [vmem:[%s1 + $0x68] sm:$0xf]
  %v50 = vld [vmem:[%s1 + $0x6c] sm:$0xf]
  %v51 = vld [vmem:[%s1 + $0x70] sm:$0xf]
  %v52 = vld [vmem:[%s1 + $0x74] sm:$0xf]
  %v53 = vld [vmem:[%s1 + $0x78] sm:$0xf]
  %v54 = vld [vmem:[%s1 + $0x7c] sm:$0xf]
  %v55 = vld [vmem:[%s1 + $0x80] sm:$0xf]
  %v56 = vld [vmem:[%s1 + $0x84] sm:$0xf]
  %v57 = vld [vmem:[%s1 + $0x88] sm:$0xf]
  %v58 = vld [vmem:[%s1 + $0x8c] sm:$0xf]
  %v59 = vld [vmem:[%s1 + $0x90] sm:$0xf]
  %v60 = vld [vmem:[%s1 + $0x94] sm:$0xf]
  %v61 = vld [vmem:[%s1 + $0x98] sm:$0xf]
  %v62 = vld [vmem:[%s1 + $0x9c] sm:$0xf]
  %v63 = vld [vmem:[%s1 + $0xa0] sm:$0xf]
  %v64 = vld [vmem:[%s1 + $0xa4] sm:$0xf]
  %v65 = vld [vmem:[%s1 + $0xa8] sm:$0xf]
  %v66 = vld [vmem:[%s1 + $0xac] sm:$0xf]
  %v67 = vld [vmem:[%s1 + $0xb0] sm:$0xf]
  %v68 = vld [vmem:[%s1 + $0xb4] sm:$0xf]
  %v69 = vld [vmem:[%s1 + $0xb8] sm:$0xf]
  %v70 = vld [vmem:[%s1 + $0xbc] sm:$0xf]
  %v71 = vld [vmem:[%s1 + $0xc0] sm:$0xf]
  %v72 = vld [vmem:[%s1 + $0xc4] sm:$0xf]
  %v73 = vld [vmem:[%s1 + $0xc8] sm:$0xf]
  %v74 = vld [vmem:[%s1 + $0xcc] sm:$0xf]
  %v75 = vld [vmem:[%s1 + $0xd0] sm:$0xf]
  %v76 = vld [vmem:[%s1 + $0xd4] sm:$0xf]
  %v77 = vld [vmem:[%s1 + $0xd8] sm:$0xf]
  %v78 = vld [vmem:[%s1 + $0xdc] sm:$0xf]
  %v79 = vld [vmem:[%s1 + $0xe0] sm:$0xf]
  %v80 = vld [vmem:[%s1 + $0xe4] sm:$0xf]
  %v81 = vld [vmem:[%s1 + $0xe8] sm:$0xf]
  %v82 = vld [vmem:[%s1 + $0xec] sm:$0xf]
  %v83 = vld [vmem:[%s1 + $0xf0] sm:$0xf]
  %v84 = vld [vmem:[%s1 + $0xf4] sm:$0xf]
  %v85 = vld [vmem:[%s1 + $0xf8] sm:$0xf]
  %v86 = vld [vmem:[%s1 + $0xfc] sm:$0xf]
  %v87 = vld [vmem:[%s1 + $0x100] sm:$0xf]
  %v88 = vld [vmem:[%s1 + $0x104] sm:$0xf]
  %v89 = vld [vmem:[%s1 + $0x108] sm:$0xf]
  %v90 = vld [vmem:[%s1 + $0x10c] sm:$0xf]
  %v91 = vld [vmem:[%s1 + $0x110] sm:$0xf]
  %v92 = vld [vmem:[%s1 + $0x114] sm:$0xf]
  %v93 = vld [vmem:[%s1 + $0x118] sm:$0xf]
  %v94 = vld [vmem:[%s1 + $0x11c] sm:$0xf]
  %v95 = vld [vmem:[%s1 + $0x120] sm:$0xf]
  %v96 = vld [vmem:[%s1 + $0x124] sm:$0xf]
  %v97 = vld [vmem:[%s1 + $0x128] sm:$0xf]
  %v98 = vld [vmem:[%s1 + $0x12c] sm:$0xf]
  %v99 = vld [vmem:[%s1 + $0x130] sm:$0xf]
  %v100 = vld [vmem:[%s1 + $0x134] sm:$0xf]
  %v101 = vld [vmem:[%s1 + $0x138] sm:$0xf]
  %v102 = vld [vmem:[%s1 + $0x13c] sm:$0xf]
  %v103 = vld [vmem:[%s1 + $0x140] sm:$0xf]
  %v104 = vld [vmem:[%s1 + $0x144] sm:$0xf]
  %v105 = vld [vmem:[%s1 + $0x148] sm:$0xf]
  %v106 = vld [vmem:[%s1 + $0x14c] sm:$0xf]
  %v107 = vld [vmem:[%s1 + $0x150] sm:$0xf]
  %v108 = vld [vmem:[%s1 + $0x154] sm:$0xf]
  %v109 = vld [vmem:[%s1 + $0x158] sm:$0xf]
  %v110 = vld [vmem:[%s1 + $0x15c] sm:$0xf]
  %v111 = vld [vmem:[%s1 + $0x160] sm:$0xf]
  %v112 = vld [vmem:[%s1 + $0x164] sm:$0xf]
  %v113 = vld [vmem:[%s1 + $0x168] sm:$0xf]
  %v114 = vld [vmem:[%s1 + $0x16c] sm:$0xf]
  %v115 = vld [vmem:[%s1 + $0x170] sm:$0xf]
  %v116 = vld [vmem:[%s1 + $0x174] sm:$0xf]
  %v117 = vld [vmem:[%s1 + $0x178] sm:$0xf]
  %v118 = vld [vmem:[%s1 + $0x17c] sm:$0xf]
  %v119 = vld [vmem:[%s1 + $0x180] sm:$0xf]
  %v120 = vld [vmem:[%s1 + $0x184] sm:$0xf]
  %v121 = vld [vmem:[%s1 + $0x188] sm:$0xf]
  %v122 = vld [vmem:[%s1 + $0x18c] sm:$0xf]
  %v123 = vld [vmem:[%s1 + $0x190] sm:$0xf]
  %v124 = vld [vmem:[%s1 + $0x194] sm:$0xf]
  %v125 = vld [vmem:[%s1 + $0x198] sm:$0xf]
  %v126 = vld [vmem:[%s1 + $0x19c] sm:$0xf]
  %v127 = vld [vmem:[%s1 + $0x1a0] sm:$0xf]
  %v128 = vld [vmem:[%s1 + $0x1a4] sm:$0xf]
  %v129 = vld [vmem:[%s1 + $0x1a8] sm:$0xf]
  %v130 = vld [vmem:[%s1 + $0x1ac] sm:$0xf]
  %v131 = vld [vmem:[%s1 + $0x1b0] sm:$0xf]
  %v132 = vld [vmem:[%s1 + $0x1b4] sm:$0xf]
  %v133 = vld [vmem:[%s1 + $0x1b8] sm:$0xf]
  %v134 = vld [vmem:[%s1 + $0x1bc] sm:$0xf]
  %v135 = vld [vmem:[%s1 + $0x1c0] sm:$0xf]
  %v136 = vld [vmem:[%s1 + $0x1c4] sm:$0xf]
  %v137 = vld [vmem:[%s1 + $0x1c8] sm:$0xf]
  %v138 = vld [vmem:[%s1 + $0x1cc] sm:$0xf]
  %v139 = vld [vmem:[%s1 + $0x1d0] sm:$0xf]
  %v140 = vld [vmem:[%s1 + $0x1d4] sm:$0xf]
  %v141 = vld [vmem:[%s1 + $0x1d8] sm:$0xf]
  %v142 = vld [vmem:[%s1 + $0x1dc] sm:$0xf]
  %v143 = vld [vmem:[%s1 + $0x1e0] sm:$0xf]
  %v144 = vld [vmem:[%s1 + $0x1e4] sm:$0xf]
  %v145 = vld [vmem:[%s1 + $0x1e8] sm:$0xf]
  %v146 = vld [vmem:[%s1 + $0x1ec] sm:$0xf]
  %v147 = vld [vmem:[%s1 + $0x1f0] sm:$0xf]
  %v148 = vld [vmem:[%s1 + $0x1f4] sm:$0xf]
  %v149 = vld [vmem:[%s1 + $0x1f8] sm:$0xf]
  %v150 = vld [vmem:[%s1 + $0x1fc] sm:$0xf]
  %v151 = vld [vmem:[%s2] sm:$0x1]
  %v153 = vlaneseq
  %v154 = vshrl.u32 %v153, 7
  %v155 = vsub.s32 0, %v154
  %v156 = vrot.slane %v151, %v155
  %v166 = vunpack.c.l.b16 %v15
  %v167 = vunpack.c.h.b16 %v15
  %v168 = vunpack.c.l.b16 %v16
  %v169 = vunpack.c.h.b16 %v16
  %v170 = vunpack.c.l.b16 %v17
  %v171 = vunpack.c.h.b16 %v17
  %v172 = vunpack.c.l.b16 %v18
  %v173 = vunpack.c.h.b16 %v18
  %v174 = vunpack.c.l.b16 %v19
  %v175 = vunpack.c.h.b16 %v19
  %v176 = vunpack.c.l.b16 %v20
  %v177 = vunpack.c.h.b16 %v20
  %v178 = vunpack.c.l.b16 %v21
  %v179 = vunpack.c.h.b16 %v21
  %v180 = vunpack.c.l.b16 %v22
  %v181 = vunpack.c.h.b16 %v22
  %v182 = vpack.c.b16 %v174, %v166
  %v183 = vpack.c.b16 %v175, %v167
  %v184 = vpack.c.b16 %v176, %v168
  %v185 = vpack.c.b16 %v177, %v169
  %v186 = vpack.c.b16 %v178, %v170
  %v187 = vpack.c.b16 %v179, %v171
  %v188 = vpack.c.b16 %v180, %v172
  %v189 = vpack.c.b16 %v181, %v173
  %v326 = vunpack.c.l.b16 %v23
  %v327 = vunpack.c.l.b16 %v24
  %v328 = vunpack.c.l.b16 %v25
  %v329 = vunpack.c.l.b16 %v26
  %v330 = vunpack.c.l.b16 %v27
  %v331 = vunpack.c.l.b16 %v28
  %v332 = vunpack.c.l.b16 %v29
  %v333 = vunpack.c.l.b16 %v30
  %v334 = vunpack.c.l.b16 %v31
  %v335 = vunpack.c.l.b16 %v32
  %v336 = vunpack.c.l.b16 %v33
  %v337 = vunpack.c.l.b16 %v34
  %v338 = vunpack.c.l.b16 %v35
  %v339 = vunpack.c.l.b16 %v36
  %v340 = vunpack.c.l.b16 %v37
  %v341 = vunpack.c.l.b16 %v38
  %v342 = vunpack.c.l.b16 %v39
  %v343 = vunpack.c.l.b16 %v40
  %v344 = vunpack.c.l.b16 %v41
  %v345 = vunpack.c.l.b16 %v42
  %v346 = vunpack.c.l.b16 %v43
  %v347 = vunpack.c.l.b16 %v44
  %v348 = vunpack.c.l.b16 %v45
  %v349 = vunpack.c.l.b16 %v46
  %v350 = vunpack.c.l.b16 %v47
  %v351 = vunpack.c.l.b16 %v48
  %v352 = vunpack.c.l.b16 %v49
  %v353 = vunpack.c.l.b16 %v50
  %v354 = vunpack.c.l.b16 %v51
  %v355 = vunpack.c.l.b16 %v52
  %v356 = vunpack.c.l.b16 %v53
  %v357 = vunpack.c.l.b16 %v54
  %v358 = vunpack.c.l.b16 %v55
  %v359 = vunpack.c.l.b16 %v56
  %v360 = vunpack.c.l.b16 %v57
  %v361 = vunpack.c.l.b16 %v58
  %v362 = vunpack.c.l.b16 %v59
  %v363 = vunpack.c.l.b16 %v60
  %v364 = vunpack.c.l.b16 %v61
  %v365 = vunpack.c.l.b16 %v62
  %v366 = vunpack.c.l.b16 %v63
  %v367 = vunpack.c.l.b16 %v64
  %v368 = vunpack.c.l.b16 %v65
  %v369 = vunpack.c.l.b16 %v66
  %v370 = vunpack.c.l.b16 %v67
  %v371 = vunpack.c.l.b16 %v68
  %v372 = vunpack.c.l.b16 %v69
  %v373 = vunpack.c.l.b16 %v70
  %v374 = vunpack.c.l.b16 %v71
  %v375 = vunpack.c.l.b16 %v72
  %v376 = vunpack.c.l.b16 %v73
  %v377 = vunpack.c.l.b16 %v74
  %v378 = vunpack.c.l.b16 %v75
  %v379 = vunpack.c.l.b16 %v76
  %v380 = vunpack.c.l.b16 %v77
  %v381 = vunpack.c.l.b16 %v78
  %v382 = vunpack.c.l.b16 %v79
  %v383 = vunpack.c.l.b16 %v80
  %v384 = vunpack.c.l.b16 %v81
  %v385 = vunpack.c.l.b16 %v82
  %v386 = vunpack.c.l.b16 %v83
  %v387 = vunpack.c.l.b16 %v84
  %v388 = vunpack.c.l.b16 %v85
  %v389 = vunpack.c.l.b16 %v86
  %v390 = vunpack.c.l.b16 %v87
  %v391 = vunpack.c.l.b16 %v88
  %v392 = vunpack.c.l.b16 %v89
  %v393 = vunpack.c.l.b16 %v90
  %v394 = vunpack.c.l.b16 %v91
  %v395 = vunpack.c.l.b16 %v92
  %v396 = vunpack.c.l.b16 %v93
  %v397 = vunpack.c.l.b16 %v94
  %v398 = vunpack.c.l.b16 %v95
  %v399 = vunpack.c.l.b16 %v96
  %v400 = vunpack.c.l.b16 %v97
  %v401 = vunpack.c.l.b16 %v98
  %v402 = vunpack.c.l.b16 %v99
  %v403 = vunpack.c.l.b16 %v100
  %v404 = vunpack.c.l.b16 %v101
  %v405 = vunpack.c.l.b16 %v102
  %v406 = vunpack.c.l.b16 %v103
  %v407 = vunpack.c.l.b16 %v104
  %v408 = vunpack.c.l.b16 %v105
  %v409 = vunpack.c.l.b16 %v106
  %v410 = vunpack.c.l.b16 %v107
  %v411 = vunpack.c.l.b16 %v108
  %v412 = vunpack.c.l.b16 %v109
  %v413 = vunpack.c.l.b16 %v110
  %v414 = vunpack.c.l.b16 %v111
  %v415 = vunpack.c.l.b16 %v112
  %v416 = vunpack.c.l.b16 %v113
  %v417 = vunpack.c.l.b16 %v114
  %v418 = vunpack.c.l.b16 %v115
  %v419 = vunpack.c.l.b16 %v116
  %v420 = vunpack.c.l.b16 %v117
  %v421 = vunpack.c.l.b16 %v118
  %v422 = vunpack.c.l.b16 %v119
  %v423 = vunpack.c.l.b16 %v120
  %v424 = vunpack.c.l.b16 %v121
  %v425 = vunpack.c.l.b16 %v122
  %v426 = vunpack.c.l.b16 %v123
  %v427 = vunpack.c.l.b16 %v124
  %v428 = vunpack.c.l.b16 %v125
  %v429 = vunpack.c.l.b16 %v126
  %v430 = vunpack.c.l.b16 %v127
  %v431 = vunpack.c.l.b16 %v128
  %v432 = vunpack.c.l.b16 %v129
  %v433 = vunpack.c.l.b16 %v130
  %v434 = vunpack.c.l.b16 %v131
  %v435 = vunpack.c.l.b16 %v132
  %v436 = vunpack.c.l.b16 %v133
  %v437 = vunpack.c.l.b16 %v134
  %v438 = vunpack.c.l.b16 %v135
  %v439 = vunpack.c.l.b16 %v136
  %v440 = vunpack.c.l.b16 %v137
  %v441 = vunpack.c.l.b16 %v138
  %v442 = vunpack.c.l.b16 %v139
  %v443 = vunpack.c.l.b16 %v140
  %v444 = vunpack.c.l.b16 %v141
  %v445 = vunpack.c.l.b16 %v142
  %v446 = vunpack.c.l.b16 %v143
  %v447 = vunpack.c.l.b16 %v144
  %v448 = vunpack.c.l.b16 %v145
  %v449 = vunpack.c.l.b16 %v146
  %v450 = vunpack.c.l.b16 %v147
  %v451 = vunpack.c.l.b16 %v148
  %v452 = vunpack.c.l.b16 %v149
  %v453 = vunpack.c.l.b16 %v150
  %v454 = vpack.c.b16 %v327, %v326
  %v455 = vpack.c.b16 %v329, %v328
  %v456 = vpack.c.b16 %v331, %v330
  %v457 = vpack.c.b16 %v333, %v332
  %v458 = vpack.c.b16 %v335, %v334
  %v459 = vpack.c.b16 %v337, %v336
  %v460 = vpack.c.b16 %v339, %v338
  %v461 = vpack.c.b16 %v341, %v340
  %v462 = vpack.c.b16 %v343, %v342
  %v463 = vpack.c.b16 %v345, %v344
  %v464 = vpack.c.b16 %v347, %v346
  %v465 = vpack.c.b16 %v349, %v348
  %v466 = vpack.c.b16 %v351, %v350
  %v467 = vpack.c.b16 %v353, %v352
  %v468 = vpack.c.b16 %v355, %v354
  %v469 = vpack.c.b16 %v357, %v356
  %v470 = vpack.c.b16 %v359, %v358
  %v471 = vpack.c.b16 %v361, %v360
  %v472 = vpack.c.b16 %v363, %v362
  %v473 = vpack.c.b16 %v365, %v364
  %v474 = vpack.c.b16 %v367, %v366
  %v475 = vpack.c.b16 %v369, %v368
  %v476 = vpack.c.b16 %v371, %v370
  %v477 = vpack.c.b16 %v373, %v372
  %v478 = vpack.c.b16 %v375, %v374
  %v479 = vpack.c.b16 %v377, %v376
  %v480 = vpack.c.b16 %v379, %v378
  %v481 = vpack.c.b16 %v381, %v380
  %v482 = vpack.c.b16 %v383, %v382
  %v483 = vpack.c.b16 %v385, %v384
  %v484 = vpack.c.b16 %v387, %v386
  %v485 = vpack.c.b16 %v389, %v388
  %v486 = vpack.c.b16 %v391, %v390
  %v487 = vpack.c.b16 %v393, %v392
  %v488 = vpack.c.b16 %v395, %v394
  %v489 = vpack.c.b16 %v397, %v396
  %v490 = vpack.c.b16 %v399, %v398
  %v491 = vpack.c.b16 %v401, %v400
  %v492 = vpack.c.b16 %v403, %v402
  %v493 = vpack.c.b16 %v405, %v404
  %v494 = vpack.c.b16 %v407, %v406
  %v495 = vpack.c.b16 %v409, %v408
  %v496 = vpack.c.b16 %v411, %v410
  %v497 = vpack.c.b16 %v413, %v412
  %v498 = vpack.c.b16 %v415, %v414
  %v499 = vpack.c.b16 %v417, %v416
  %v500 = vpack.c.b16 %v419, %v418
  %v501 = vpack.c.b16 %v421, %v420
  %v502 = vpack.c.b16 %v423, %v422
  %v503 = vpack.c.b16 %v425, %v424
  %v504 = vpack.c.b16 %v427, %v426
  %v505 = vpack.c.b16 %v429, %v428
  %v506 = vpack.c.b16 %v431, %v430
  %v507 = vpack.c.b16 %v433, %v432
  %v508 = vpack.c.b16 %v435, %v434
  %v509 = vpack.c.b16 %v437, %v436
  %v510 = vpack.c.b16 %v439, %v438
  %v511 = vpack.c.b16 %v441, %v440
  %v512 = vpack.c.b16 %v443, %v442
  %v513 = vpack.c.b16 %v445, %v444
  %v514 = vpack.c.b16 %v447, %v446
  %v515 = vpack.c.b16 %v449, %v448
  %v516 = vpack.c.b16 %v451, %v450
  %v517 = vpack.c.b16 %v453, %v452
  %582 = vmatprep.subr.bf16.mxu0 0
  %583 = vmatpush1.bf16.msra.mxu0 %v454
  %584 = vmatprep.subr.bf16.mxu0 0
  %585 = vmatpush1.bf16.msra.mxu0 %v455
  %586 = vmatprep.subr.bf16.mxu0 0
  %587 = vmatpush1.bf16.msra.mxu0 %v456
  %588 = vmatprep.subr.bf16.mxu0 0
  %589 = vmatpush1.bf16.msra.mxu0 %v457
  %590 = vmatprep.subr.bf16.mxu0 0
  %591 = vmatpush1.bf16.msra.mxu0 %v458
  %592 = vmatprep.subr.bf16.mxu0 0
  %593 = vmatpush1.bf16.msra.mxu0 %v459
  %594 = vmatprep.subr.bf16.mxu0 0
  %595 = vmatpush1.bf16.msra.mxu0 %v460
  %596 = vmatprep.subr.bf16.mxu0 0
  %597 = vmatpush1.bf16.msra.mxu0 %v461
  %598 = vmatprep.subr.bf16.mxu0 0
  %599 = vmatpush1.bf16.msra.mxu0 %v462
  %600 = vmatprep.subr.bf16.mxu0 0
  %601 = vmatpush1.bf16.msra.mxu0 %v463
  %602 = vmatprep.subr.bf16.mxu0 0
  %603 = vmatpush1.bf16.msra.mxu0 %v464
  %604 = vmatprep.subr.bf16.mxu0 0
  %605 = vmatpush1.bf16.msra.mxu0 %v465
  %606 = vmatprep.subr.bf16.mxu0 0
  %607 = vmatpush1.bf16.msra.mxu0 %v466
  %608 = vmatprep.subr.bf16.mxu0 0
  %609 = vmatpush1.bf16.msra.mxu0 %v467
  %610 = vmatprep.subr.bf16.mxu0 0
  %611 = vmatpush1.bf16.msra.mxu0 %v468
  %612 = vmatprep.subr.bf16.mxu0 0
  %613 = vmatpush1.bf16.msra.mxu0 %v469
  %614 = vmatprep.mubr.bf16.mxu0 %v183
  %615 = vmatmul.mubr.bf16.gmra.mrb[0].mxu0 %v182
  %v616 = vpop.f32.mrb[0].mxu0
  %v617 = vadd.f32 %v156, %v616
  %v618 = vpop.f32.mrb[0].mxu0
  %v619 = vpop.f32.mrb[0].mxu0
  %v620 = vadd.f32 %v156, %v619
  %v621 = vpop.f32.mrb[0].mxu0
  %622 = vdwg.mxu0
  %623 = vmatprep.subr.bf16.mxu0 0
  %624 = vmatpush1.bf16.msra.mxu0 %v470
  %625 = vmatprep.subr.bf16.mxu0 0
  %626 = vmatpush1.bf16.msra.mxu0 %v471
  %627 = vmatprep.subr.bf16.mxu0 0
  %628 = vmatpush1.bf16.msra.mxu0 %v472
  %629 = vmatprep.subr.bf16.mxu0 0
  %630 = vmatpush1.bf16.msra.mxu0 %v473
  %631 = vmatprep.subr.bf16.mxu0 0
  %632 = vmatpush1.bf16.msra.mxu0 %v474
  %633 = vmatprep.subr.bf16.mxu0 0
  %634 = vmatpush1.bf16.msra.mxu0 %v475
  %635 = vmatprep.subr.bf16.mxu0 0
  %636 = vmatpush1.bf16.msra.mxu0 %v476
  %637 = vmatprep.subr.bf16.mxu0 0
  %638 = vmatpush1.bf16.msra.mxu0 %v477
  %639 = vmatprep.subr.bf16.mxu0 0
  %640 = vmatpush1.bf16.msra.mxu0 %v478
  %641 = vmatprep.subr.bf16.mxu0 0
  %642 = vmatpush1.bf16.msra.mxu0 %v479
  %643 = vmatprep.subr.bf16.mxu0 0
  %644 = vmatpush1.bf16.msra.mxu0 %v480
  %645 = vmatprep.subr.bf16.mxu0 0
  %646 = vmatpush1.bf16.msra.mxu0 %v481
  %647 = vmatprep.subr.bf16.mxu0 0
  %648 = vmatpush1.bf16.msra.mxu0 %v482
  %649 = vmatprep.subr.bf16.mxu0 0
  %650 = vmatpush1.bf16.msra.mxu0 %v483
  %651 = vmatprep.subr.bf16.mxu0 0
  %652 = vmatpush1.bf16.msra.mxu0 %v484
  %653 = vmatprep.subr.bf16.mxu0 0
  %654 = vmatpush1.bf16.msra.mxu0 %v485
  %655 = vmatprep.mubr.bf16.mxu0 %v185
  %656 = vmatmul.mubr.bf16.gmra.mrb[0].mxu0 %v184
  %v657 = vpop.f32.mrb[0].mxu0
  %v658 = vadd.f32 %v617, %v657
  %v659 = vpop.f32.mrb[0].mxu0
  %v660 = vpop.f32.mrb[0].mxu0
  %v661 = vadd.f32 %v620, %v660
  %v662 = vpop.f32.mrb[0].mxu0
  %663 = vdwg.mxu0
  %664 = vmatprep.subr.bf16.mxu0 0
  %665 = vmatpush1.bf16.msra.mxu0 %v486
  %666 = vmatprep.subr.bf16.mxu0 0
  %667 = vmatpush1.bf16.msra.mxu0 %v487
  %668 = vmatprep.subr.bf16.mxu0 0
  %669 = vmatpush1.bf16.msra.mxu0 %v488
  %670 = vmatprep.subr.bf16.mxu0 0
  %671 = vmatpush1.bf16.msra.mxu0 %v489
  %672 = vmatprep.subr.bf16.mxu0 0
  %673 = vmatpush1.bf16.msra.mxu0 %v490
  %674 = vmatprep.subr.bf16.mxu0 0
  %675 = vmatpush1.bf16.msra.mxu0 %v491
  %676 = vmatprep.subr.bf16.mxu0 0
  %677 = vmatpush1.bf16.msra.mxu0 %v492
  %678 = vmatprep.subr.bf16.mxu0 0
  %679 = vmatpush1.bf16.msra.mxu0 %v493
  %680 = vmatprep.subr.bf16.mxu0 0
  %681 = vmatpush1.bf16.msra.mxu0 %v494
  %682 = vmatprep.subr.bf16.mxu0 0
  %683 = vmatpush1.bf16.msra.mxu0 %v495
  %684 = vmatprep.subr.bf16.mxu0 0
  %685 = vmatpush1.bf16.msra.mxu0 %v496
  %686 = vmatprep.subr.bf16.mxu0 0
  %687 = vmatpush1.bf16.msra.mxu0 %v497
  %688 = vmatprep.subr.bf16.mxu0 0
  %689 = vmatpush1.bf16.msra.mxu0 %v498
  %690 = vmatprep.subr.bf16.mxu0 0
  %691 = vmatpush1.bf16.msra.mxu0 %v499
  %692 = vmatprep.subr.bf16.mxu0 0
  %693 = vmatpush1.bf16.msra.mxu0 %v500
  %694 = vmatprep.subr.bf16.mxu0 0
  %695 = vmatpush1.bf16.msra.mxu0 %v501
  %696 = vmatprep.mubr.bf16.mxu0 %v187
  %697 = vmatmul.mubr.bf16.gmra.mrb[0].mxu0 %v186
  %v698 = vpop.f32.mrb[0].mxu0
  %v699 = vadd.f32 %v658, %v698
  %v700 = vpop.f32.mrb[0].mxu0
  %v701 = vpop.f32.mrb[0].mxu0
  %v702 = vadd.f32 %v661, %v701
  %v703 = vpop.f32.mrb[0].mxu0
  %704 = vdwg.mxu0
  %705 = vmatprep.subr.bf16.mxu0 0
  %706 = vmatpush1.bf16.msra.mxu0 %v502
  %707 = vmatprep.subr.bf16.mxu0 0
  %708 = vmatpush1.bf16.msra.mxu0 %v503
  %709 = vmatprep.subr.bf16.mxu0 0
  %710 = vmatpush1.bf16.msra.mxu0 %v504
  %711 = vmatprep.subr.bf16.mxu0 0
  %712 = vmatpush1.bf16.msra.mxu0 %v505
  %713 = vmatprep.subr.bf16.mxu0 0
  %714 = vmatpush1.bf16.msra.mxu0 %v506
  %715 = vmatprep.subr.bf16.mxu0 0
  %716 = vmatpush1.bf16.msra.mxu0 %v507
  %717 = vmatprep.subr.bf16.mxu0 0
  %718 = vmatpush1.bf16.msra.mxu0 %v508
  %719 = vmatprep.subr.bf16.mxu0 0
  %720 = vmatpush1.bf16.msra.mxu0 %v509
  %721 = vmatprep.subr.bf16.mxu0 0
  %722 = vmatpush1.bf16.msra.mxu0 %v510
  %723 = vmatprep.subr.bf16.mxu0 0
  %724 = vmatpush1.bf16.msra.mxu0 %v511
  %725 = vmatprep.subr.bf16.mxu0 0
  %726 = vmatpush1.bf16.msra.mxu0 %v512
  %727 = vmatprep.subr.bf16.mxu0 0
  %728 = vmatpush1.bf16.msra.mxu0 %v513
  %729 = vmatprep.subr.bf16.mxu0 0
  %730 = vmatpush1.bf16.msra.mxu0 %v514
  %731 = vmatprep.subr.bf16.mxu0 0
  %732 = vmatpush1.bf16.msra.mxu0 %v515
  %733 = vmatprep.subr.bf16.mxu0 0
  %734 = vmatpush1.bf16.msra.mxu0 %v516
  %735 = vmatprep.subr.bf16.mxu0 0
  %736 = vmatpush1.bf16.msra.mxu0 %v517
  %737 = vmatprep.mubr.bf16.mxu0 %v189
  %738 = vmatmul.mubr.bf16.gmra.mrb[0].mxu0 %v188
  %v739 = vpop.f32.mrb[0].mxu0
  %v740 = vadd.f32 %v699, %v739
  %v741 = vpop.f32.mrb[0].mxu0
  %v742 = vpop.f32.mrb[0].mxu0
  %v743 = vadd.f32 %v702, %v742
  %v744 = vpop.f32.mrb[0].mxu0
  %745 = vdwg.mxu0
  %746 = vst [vmem:[%s3] sm:$0xff] %v740
  %747 = vst [vmem:[%s3 + $0x8] sm:$0xff] %v743
  // Predicated region
  $region14: #{_lambda_.14} parent=0 // pred_check
    _
  $region15: #{_lambda_.14} parent=0 // pred_check_branch
    %749 = sbr.rel (0) target = $region17
  $region16: #{_lambda_.14} parent=0 // pred_region
    _
  $region17: #{_lambda_.14} parent=0 // pred_fallthru
    _
  // Predicated region
  $region18: #{_lambda_.14} parent=0 // pred_check
    _
  $region19: #{_lambda_.14} parent=0 // pred_check_branch
    %751 = sbr.rel (0) target = $region21
  $region20: #{_lambda_.14} parent=0 // pred_region
    _
  $region21: #{_lambda_.14} parent=0 // pred_fallthru
    _

// kernel: squeeze.20
$region0: #{squeeze.20}
  %s0 = inlined_call_operand.vmem [shape: f32[1,2,256], index: 0, kind: input, shape index: {}]
  %s1 = inlined_call_operand.vmem [shape: f32[2,2,2,64], index: 1, kind: output, shape index: {}]
  $region1: #{squeeze.20} parent=0
    #allocation0 [shape = 'u8[16384]{0}', space=vmem, size = 0x4000, scoped, tag = 'scoped mem for output reshape']
    #allocation1 [shape = 'u8[8192]{0}', space=vmem, size = 0x2000, scoped, tag = 'scoped mem for input reshape']
    %s3 = sshllo.u32 0, 2
    %s4 = scalar_lea.vmem %s0, 2
    %v5 = vld [vmem:[%s4] sm:%s3]
    %s6 = scalar_lea.vmem [#allocation1], 8
    %7 = vst [vmem:[%s6] sm:%s3] %v5
    %v8 = vld [vmem:[%s0] sm:%s3]
    %9 = vst [vmem:[#allocation1] sm:%s3] %v8
    %v10 = vld [vmem:[#allocation1] sm:$0x3]
    %vm11 = vcmask 523264
    %12 = vst.msk [vmem:[#allocation0] ss:$16 sm:$0x3] %vm11, %v10
    %s13 = scalar_lea.vmem [#allocation1], 8
    %v14 = vld [vmem:[%s13] sm:$0x3]
    %vm15 = vcmask 523264
    %s16 = scalar_lea.vmem [#allocation0], 8
    %17 = vst.msk [vmem:[%s16] ss:$16 sm:$0x3] %vm15, %v14
    %v18 = vld.sshfl [vmem:[#allocation1] sm:$0xff pattern:$0x99999180]
    %19 = vrot.lane.b32.xlu0 %v18, 64
    %v20 = vpop.permute.xlu0 %19
    %vm21 = vcmask 523264
    %s22 = scalar_lea.vmem [#allocation0], 1
    %23 = vst.msk [vmem:[%s22] ss:$8 sm:$0xf] %vm21, %v20
    %s25 = sshllo.u32 0, 2
    %v27 = vld [vmem:[#allocation0] sm:%s25]
    %s28 = sshllo.u32 0, 2
    %29 = vst [vmem:[%s1] sm:%s28] %v27
    %s30 = scalar_lea.vmem [#allocation0], 8
    %v31 = vld [vmem:[%s30] sm:%s25]
    %s32 = sshllo.u32 0, 2
    %s33 = scalar_lea.vmem %s1, 2
    %34 = vst [vmem:[%s33] sm:%s32] %v31
    %s35 = scalar_lea.vmem [#allocation0], 16
    %v36 = vld [vmem:[%s35] sm:%s25]
    %s37 = sshllo.u32 0, 2
    %s38 = smul.addr 2, 2
    %s39 = scalar_lea.vmem %s1, %s38
    %40 = vst [vmem:[%s39] sm:%s37] %v36
    %s41 = scalar_lea.vmem [#allocation0], 24
    %v42 = vld [vmem:[%s41] sm:%s25]
    %s43 = sshllo.u32 0, 2
    %s44 = smul.addr 2, 3
    %s45 = scalar_lea.vmem %s1, %s44
    %46 = vst [vmem:[%s45] sm:%s43] %v42

// kernel: _lambda_.15
$region0: #{_lambda_.15}
  #allocation0 [shape = 'u32[]', space=smem, size = 0x4, offset = 0x4, fixed_abs, tag = 'smem constant byte address 0x4 - core index']
  #allocation1 [shape = 'u32[144,128]{1,0:T(1,128)}', space=vmem, size = 0x12000, scoped, tag = 'internal scratch']
  %s0 = inlined_call_operand.vmem [shape: bf16[2,16,640], index: 0, kind: input, shape index: {}]
  %s1 = inlined_call_operand.vmem [shape: bf16[2,640,256], index: 1, kind: input, shape index: {}]
  %s2 = inlined_call_operand.vmem [shape: f32[2,1,256], index: 2, kind: input, shape index: {}]
  %s3 = inlined_call_operand.vmem [shape: f32[2,16,256], index: 3, kind: output, shape index: {}]
  %s4 = sld [smem:[#allocation0]]
  $region45: #{_lambda_.15} parent=0
    _
  %s6 = ssub.s32 1, %s4
  %s7 = scalar_select 0, %s6, %s4
  loop: start=0, step=1, limit=4
  $region2: #{_lambda_.15} parent=0 // loop_pre_header
    _
  $region3: #{_lambda_.15} parent=0 // loop_header
    %s9 = sphi 0, %s13
    %p10 = scmp.ge.s32.totalorder %s9, 4
    %s16 = sphi 0, %s35
    %s17 = sphi 0, %s31
    %s18 = sphi 0, %s27
    %s19 = sphi 0, %s16
    %s20 = sphi 0, %s17
    %s21 = sphi 0, %s18
    %s22 = sphi 0, %s19
    %s23 = sphi 0, %s20
    %s24 = sphi 0, %s21
    %s40 = sphi 0, %s42
    %s43 = sphi 0, %s40
    %s44 = sphi 0, %s43
    %s60 = sphi 0, %s44
    %s68 = sphi 0, %s70
    %s71 = sphi 0, %s68
    %s72 = sphi 0, %s71
    %s88 = sphi 0, %s72
    %s96 = sphi 0, %s98
    %s99 = sphi 0, %s96
    %s100 = sphi 0, %s99
    %s116 = sphi 0, %s100
    %s126 = sphi 0, %s128
    %s129 = sphi 0, %s126
    %s130 = sphi 0, %s129
    %s146 = sphi 0, %s130
  $region4: #{_lambda_.15} parent=0 // loop_header_branch
    %12 = sbr.rel (%p10) target = $region8
  $region5: #{_lambda_.15} parent=0 // loop_body
    %s14 = ssub.s32 %s9, 1
    %s15 = ssub.s32 %s9, 2
    %s25 = sadd.s32 1, %s18
    %p26 = scmp.ge.s32.totalorder %s25, 1
    %s27 = scalar_select %p26, 0, %s25
    %s28 = sadd.s32 1, %s17
    %s29 = scalar_select %p26, %s28, %s17
    %p30 = scmp.ge.s32.totalorder %s29, 1
    %s31 = scalar_select %p30, 0, %s29
    %s32 = sadd.s32 1, %s16
    %s33 = scalar_select %p30, %s32, %s16
    %p34 = scmp.ge.s32.totalorder %s33, 2
    %s35 = scalar_select %p34, 0, %s33
    %s36 = ssub.s32 %s16, %s35
    %s37 = ssub.s32 %s17, %s31
    %s38 = sor.u32 %s36, %s37
    %p39 = scmp.eq.s32.totalorder %s38, 0
    %s41 = sadd.s32 %s40, 1
    %s42 = scalar_select %p39, %s40, %s41
    %p45 = pneg %p39
    %p46 = scmp.eq.s32.totalorder %s9, 1
    %p47 = por %p45, %p46
    %p48 = scmp.ne.s32.totalorder %s40, %s43
    %p49 = scmp.eq.s32.totalorder %s9, 0
    %p50 = por %p48, %p49
    %p51 = scmp.ne.s32.totalorder %s40, %s43
    %p52 = scmp.eq.s32.totalorder %s14, 1
    %p53 = por %p51, %p52
    %p54 = scmp.ne.s32.totalorder %s43, %s44
    %p55 = scmp.eq.s32.totalorder %s14, 0
    %p56 = por %p54, %p55
    %p57 = scmp.ne.s32.totalorder %s43, %s44
    %p58 = scmp.eq.s32.totalorder %s15, 1
    %p59 = por %p57, %p58
    %p61 = scmp.ne.s32.totalorder %s44, %s60
    %p62 = scmp.eq.s32.totalorder %s15, 0
    %p63 = por %p61, %p62
    %s64 = ssub.s32 %s16, %s35
    %s65 = ssub.s32 %s18, %s27
    %s66 = sor.u32 %s64, %s65
    %p67 = scmp.eq.s32.totalorder %s66, 0
    %s69 = sadd.s32 %s68, 1
    %s70 = scalar_select %p67, %s68, %s69
    %p73 = pneg %p67
    %p74 = scmp.eq.s32.totalorder %s9, 1
    %p75 = por %p73, %p74
    %p76 = scmp.ne.s32.totalorder %s68, %s71
    %p77 = scmp.eq.s32.totalorder %s9, 0
    %p78 = por %p76, %p77
    %p79 = scmp.ne.s32.totalorder %s68, %s71
    %p80 = scmp.eq.s32.totalorder %s14, 1
    %p81 = por %p79, %p80
    %p82 = scmp.ne.s32.totalorder %s71, %s72
    %p83 = scmp.eq.s32.totalorder %s14, 0
    %p84 = por %p82, %p83
    %p85 = scmp.ne.s32.totalorder %s71, %s72
    %p86 = scmp.eq.s32.totalorder %s15, 1
    %p87 = por %p85, %p86
    %p89 = scmp.ne.s32.totalorder %s72, %s88
    %p90 = scmp.eq.s32.totalorder %s15, 0
    %p91 = por %p89, %p90
    %s92 = ssub.s32 %s16, %s35
    %s93 = ssub.s32 %s18, %s27
    %s94 = sor.u32 %s92, %s93
    %p95 = scmp.eq.s32.totalorder %s94, 0
    %s97 = sadd.s32 %s96, 1
    %s98 = scalar_select %p95, %s96, %s97
    %p101 = pneg %p95
    %p102 = scmp.eq.s32.totalorder %s9, 1
    %p103 = por %p101, %p102
    %p104 = scmp.ne.s32.totalorder %s96, %s99
    %p105 = scmp.eq.s32.totalorder %s9, 0
    %p106 = por %p104, %p105
    %p107 = scmp.ne.s32.totalorder %s96, %s99
    %p108 = scmp.eq.s32.totalorder %s14, 1
    %p109 = por %p107, %p108
    %p110 = scmp.ne.s32.totalorder %s99, %s100
    %p111 = scmp.eq.s32.totalorder %s14, 0
    %p112 = por %p110, %p111
    %p113 = scmp.ne.s32.totalorder %s99, %s100
    %p114 = scmp.eq.s32.totalorder %s15, 1
    %p115 = por %p113, %p114
    %p117 = scmp.ne.s32.totalorder %s100, %s116
    %p118 = scmp.eq.s32.totalorder %s15, 0
    %p119 = por %p117, %p118
    %s120 = ssub.s32 %s16, %s35
    %s121 = ssub.s32 %s17, %s31
    %s122 = sor.u32 %s120, %s121
    %s123 = ssub.s32 %s18, %s27
    %s124 = sor.u32 %s122, %s123
    %p125 = scmp.eq.s32.totalorder %s124, 0
    %s127 = sadd.s32 %s126, 1
    %s128 = scalar_select %p125, %s126, %s127
    %p131 = pneg %p125
    %p132 = scmp.eq.s32.totalorder %s9, 1
    %p133 = por %p131, %p132
    %p134 = scmp.ne.s32.totalorder %s126, %s129
    %p135 = scmp.eq.s32.totalorder %s9, 0
    %p136 = por %p134, %p135
    %p137 = scmp.ne.s32.totalorder %s126, %s129
    %p138 = scmp.eq.s32.totalorder %s14, 1
    %p139 = por %p137, %p138
    %p140 = scmp.ne.s32.totalorder %s129, %s130
    %p141 = scmp.eq.s32.totalorder %s14, 0
    %p142 = por %p140, %p141
    %p143 = scmp.ne.s32.totalorder %s129, %s130
    %p144 = scmp.eq.s32.totalorder %s15, 1
    %p145 = por %p143, %p144
    %p147 = scmp.ne.s32.totalorder %s130, %s146
    %p148 = scmp.eq.s32.totalorder %s15, 0
    %p149 = por %p147, %p148
    %p150 = scmp.le.s32.totalorder 1, %s9
    %p151 = scmp.lt.s32.totalorder %s9, 3
    %p152 = pnand %p150, %p151
    %p153 = pneg %p152
    // Predicated region
    $region9: #{_lambda_.15} parent=5 // pred_check
      _
    $region10: #{_lambda_.15} parent=5 // pred_check_branch
      %155 = sbr.rel (%p152) target = $region12
    $region11: #{_lambda_.15} parent=5 // pred_region
      %s156 = ssub.s32 %s9, 1
    $region12: #{_lambda_.15} parent=5 // pred_fallthru
      _
    %p157 = scmp.lt.s32.totalorder %s9, 2
    // Predicated region
    $region13: #{_lambda_.15} parent=5 // pred_check
      %p158 = pneg %p157
    $region14: #{_lambda_.15} parent=5 // pred_check_branch
      %160 = sbr.rel (%p158) target = $region16
    $region15: #{_lambda_.15} parent=5 // pred_region
      // Predicated region
      $region17: #{_lambda_.15} parent=15 // pred_check
        %p161 = pneg %p50
      $region18: #{_lambda_.15} parent=15 // pred_check_branch
        %163 = sbr.rel (%p161) target = $region20
      $region19: #{_lambda_.15} parent=15 // pred_region
        %s164 = smul.u32 2, %s17
        %p165 = scmp.lt.s32.totalorder %s16, 1
        %s166 = scalar_select %p165, %s16, 1
        %p167 = scmp.lt.s32.totalorder %s164, 1
        %s168 = scalar_select %p167, %s164, 1
        %s169 = smul.addr %s168, 5
        %s170 = smul.addr %s166, 10
        %s171 = sadd.s32 %s169, %s170
        %s172 = smul.addr %s171, 4
        %s173 = scalar_lea.vmem %s0, %s172
        %s174 = smul.u32 2, %s17
      $region20: #{_lambda_.15} parent=15 // pred_fallthru
        _
      // Predicated region
      $region21: #{_lambda_.15} parent=15 // pred_check
        %p175 = pneg %p78
      $region22: #{_lambda_.15} parent=15 // pred_check_branch
        %177 = sbr.rel (%p175) target = $region24
      $region23: #{_lambda_.15} parent=15 // pred_region
        %s178 = smul.u32 2, %s18
        %p179 = scmp.lt.s32.totalorder %s16, 1
        %s180 = scalar_select %p179, %s16, 1
        %p181 = scmp.lt.s32.totalorder %s178, 1
        %s182 = scalar_select %p181, %s178, 1
        %s183 = smul.addr %s180, 160
        %s184 = sadd.s32 %s182, %s183
        %s185 = smul.addr %s184, 4
        %s186 = scalar_lea.vmem %s1, %s185
        %s187 = smul.u32 2, %s18
      $region24: #{_lambda_.15} parent=15 // pred_fallthru
        _
      // Predicated region
      $region25: #{_lambda_.15} parent=15 // pred_check
        %p188 = pneg %p106
      $region26: #{_lambda_.15} parent=15 // pred_check_branch
        %190 = sbr.rel (%p188) target = $region28
      $region27: #{_lambda_.15} parent=15 // pred_region
        %s191 = smul.u32 2, %s18
        %p192 = scmp.lt.s32.totalorder %s16, 1
        %s193 = scalar_select %p192, %s16, 1
        %p194 = scmp.lt.s32.totalorder %s191, 1
        %s195 = scalar_select %p194, %s191, 1
        %s196 = smul.addr %s193, 2
        %s197 = sadd.s32 %s195, %s196
        %s198 = scalar_lea.vmem %s2, %s197
        %s199 = smul.u32 2, %s18
      $region28: #{_lambda_.15} parent=15 // pred_fallthru
        _
    $region16: #{_lambda_.15} parent=5 // pred_fallthru
      _
    %p200 = scmp.le.s32.totalorder 1, %s9
    %p201 = scmp.lt.s32.totalorder %s9, 3
    %p202 = pnand %p200, %p201
    %p203 = pneg %p202
    // Predicated region
    $region29: #{_lambda_.15} parent=5 // pred_check
      _
    $region30: #{_lambda_.15} parent=5 // pred_check_branch
      %205 = sbr.rel (%p202) target = $region32
    $region31: #{_lambda_.15} parent=5 // pred_region
      %s206 = ssub.s32 %s9, 1
      %s207 = smul.u32 2, %s20
      %p208 = scmp.lt.s32.totalorder %s19, 1
      %s209 = scalar_select %p208, %s19, 1
      %p210 = scmp.lt.s32.totalorder %s207, 1
      %s211 = scalar_select %p210, %s207, 1
      %s212 = smul.addr %s211, 5
      %s213 = smul.addr %s209, 10
      %s214 = sadd.s32 %s212, %s213
      %s215 = smul.addr %s214, 4
      %s216 = scalar_lea.vmem %s0, %s215
      %p217 = pneg %p56
      %p218 = pneg %p53
      %s219 = smul.u32 2, %s21
      %p220 = scmp.lt.s32.totalorder %s19, 1
      %s221 = scalar_select %p220, %s19, 1
      %p222 = scmp.lt.s32.totalorder %s219, 1
      %s223 = scalar_select %p222, %s219, 1
      %s224 = smul.addr %s221, 160
      %s225 = sadd.s32 %s223, %s224
      %s226 = smul.addr %s225, 4
      %s227 = scalar_lea.vmem %s1, %s226
      %p228 = pneg %p84
      %p229 = pneg %p81
      %s230 = smul.u32 2, %s21
      %p231 = scmp.lt.s32.totalorder %s19, 1
      %s232 = scalar_select %p231, %s19, 1
      %p233 = scmp.lt.s32.totalorder %s230, 1
      %s234 = scalar_select %p233, %s230, 1
      %s235 = smul.addr %s232, 2
      %s236 = sadd.s32 %s234, %s235
      %s237 = scalar_lea.vmem %s2, %s236
      %p238 = pneg %p112
      %p239 = pneg %p109
      %p240 = pneg %p142
      %p241 = pneg %p139
      %s242 = smul.u32 2, %s20
      %s243 = smul.u32 2, %s21
      %p244 = scmp.lt.s32.totalorder %s19, 1
      %s245 = scalar_select %p244, %s19, 1
      %p246 = scmp.lt.s32.totalorder %s242, 1
      %s247 = scalar_select %p246, %s242, 1
      %p248 = scmp.lt.s32.totalorder %s243, 1
      %s249 = scalar_select %p248, %s243, 1
      %s250 = smul.addr %s247, 2
      %s251 = sadd.s32 %s249, %s250
      %s252 = smul.addr %s245, 4
      %s253 = sadd.s32 %s251, %s252
      %s254 = smul.addr %s253, 8
      %s255 = scalar_lea.vmem %s3, %s254
      %s256 = smul.u32 2, %s20
      %p257 = scmp.lt.s32.totalorder %s19, 1
      %s258 = scalar_select %p257, %s19, 1
      %p259 = scmp.lt.s32.totalorder %s256, 1
      %s260 = scalar_select %p259, %s256, 1
      %s261 = smul.addr %s260, 5
      %s262 = smul.addr %s258, 10
      %s263 = sadd.s32 %s261, %s262
      %s264 = smul.addr %s263, 4
      %s265 = scalar_lea.vmem %s0, %s264
      %s266 = smul.u32 2, %s20
      %s267 = smul.u32 2, %s21
      %p268 = scmp.lt.s32.totalorder %s19, 1
      %s269 = scalar_select %p268, %s19, 1
      %p270 = scmp.lt.s32.totalorder %s267, 1
      %s271 = scalar_select %p270, %s267, 1
      %s272 = smul.addr %s269, 160
      %s273 = sadd.s32 %s271, %s272
      %s274 = smul.addr %s273, 4
      %s275 = scalar_lea.vmem %s1, %s274
      %s276 = smul.u32 2, %s21
      %s277 = smul.u32 2, %s21
      %p278 = scmp.lt.s32.totalorder %s19, 1
      %s279 = scalar_select %p278, %s19, 1
      %p280 = scmp.lt.s32.totalorder %s277, 1
      %s281 = scalar_select %p280, %s277, 1
      %s282 = smul.addr %s279, 2
      %s283 = sadd.s32 %s281, %s282
      %s284 = scalar_lea.vmem %s2, %s283
      %s285 = smul.u32 2, %s21
      %s286 = smul.u32 2, %s20
      %s287 = smul.u32 2, %s21
      %p288 = scmp.lt.s32.totalorder %s19, 1
      %s289 = scalar_select %p288, %s19, 1
      %p290 = scmp.lt.s32.totalorder %s286, 1
      %s291 = scalar_select %p290, %s286, 1
      %p292 = scmp.lt.s32.totalorder %s287, 1
      %s293 = scalar_select %p292, %s287, 1
      %s294 = smul.addr %s291, 2
      %s295 = sadd.s32 %s293, %s294
      %s296 = smul.addr %s289, 4
      %s297 = sadd.s32 %s295, %s296
      %s298 = smul.addr %s297, 8
      %s299 = scalar_lea.vmem %s3, %s298
      %s300 = smul.u32 2, %s20
      %s301 = smul.u32 2, %s21
      %v303 = vld [vmem:[%s265] sm:$0xff]
      %v304 = vld [vmem:[%s265 + $0x8] sm:$0xff]
      %v305 = vld [vmem:[%s265 + $0x10] sm:$0xf]
      %v306 = vld [vmem:[%s265 + $0x14] sm:$0xff]
      %v307 = vld [vmem:[%s265 + $0x1c] sm:$0xff]
      %v308 = vld [vmem:[%s265 + $0x24] sm:$0xf]
      %v309 = vld [vmem:[%s275] sm:$0xff]
      %v310 = vld [vmem:[%s275 + $0x8] sm:$0xff]
      %v311 = vld [vmem:[%s275 + $0x10] sm:$0xff]
      %v312 = vld [vmem:[%s275 + $0x18] sm:$0xff]
      %v313 = vld [vmem:[%s275 + $0x20] sm:$0xff]
      %v314 = vld [vmem:[%s275 + $0x28] sm:$0xff]
      %v315 = vld [vmem:[%s275 + $0x30] sm:$0xff]
      %v316 = vld [vmem:[%s275 + $0x38] sm:$0xff]
      %v317 = vld [vmem:[%s275 + $0x40] sm:$0xff]
      %v318 = vld [vmem:[%s275 + $0x48] sm:$0xff]
      %v319 = vld [vmem:[%s275 + $0x50] sm:$0xff]
      %v320 = vld [vmem:[%s275 + $0x58] sm:$0xff]
      %v321 = vld [vmem:[%s275 + $0x60] sm:$0xff]
      %v322 = vld [vmem:[%s275 + $0x68] sm:$0xff]
      %v323 = vld [vmem:[%s275 + $0x70] sm:$0xff]
      %v324 = vld [vmem:[%s275 + $0x78] sm:$0xff]
      %v325 = vld [vmem:[%s275 + $0x80] sm:$0xff]
      %v326 = vld [vmem:[%s275 + $0x88] sm:$0xff]
      %v327 = vld [vmem:[%s275 + $0x90] sm:$0xff]
      %v328 = vld [vmem:[%s275 + $0x98] sm:$0xff]
      %v329 = vld [vmem:[%s275 + $0xa0] sm:$0xff]
      %v330 = vld [vmem:[%s275 + $0xa8] sm:$0xff]
      %v331 = vld [vmem:[%s275 + $0xb0] sm:$0xff]
      %v332 = vld [vmem:[%s275 + $0xb8] sm:$0xff]
      %v333 = vld [vmem:[%s275 + $0xc0] sm:$0xff]
      %v334 = vld [vmem:[%s275 + $0xc8] sm:$0xff]
      %v335 = vld [vmem:[%s275 + $0xd0] sm:$0xff]
      %v336 = vld [vmem:[%s275 + $0xd8] sm:$0xff]
      %v337 = vld [vmem:[%s275 + $0xe0] sm:$0xff]
      %v338 = vld [vmem:[%s275 + $0xe8] sm:$0xff]
      %v339 = vld [vmem:[%s275 + $0xf0] sm:$0xff]
      %v340 = vld [vmem:[%s275 + $0xf8] sm:$0xff]
      %v341 = vld [vmem:[%s275 + $0x100] sm:$0xff]
      %v342 = vld [vmem:[%s275 + $0x108] sm:$0xff]
      %v343 = vld [vmem:[%s275 + $0x110] sm:$0xff]
      %v344 = vld [vmem:[%s275 + $0x118] sm:$0xff]
      %v345 = vld [vmem:[%s275 + $0x120] sm:$0xff]
      %v346 = vld [vmem:[%s275 + $0x128] sm:$0xff]
      %v347 = vld [vmem:[%s275 + $0x130] sm:$0xff]
      %v348 = vld [vmem:[%s275 + $0x138] sm:$0xff]
      %v349 = vld [vmem:[%s275 + $0x140] sm:$0xff]
      %v350 = vld [vmem:[%s275 + $0x148] sm:$0xff]
      %v351 = vld [vmem:[%s275 + $0x150] sm:$0xff]
      %v352 = vld [vmem:[%s275 + $0x158] sm:$0xff]
      %v353 = vld [vmem:[%s275 + $0x160] sm:$0xff]
      %v354 = vld [vmem:[%s275 + $0x168] sm:$0xff]
      %v355 = vld [vmem:[%s275 + $0x170] sm:$0xff]
      %v356 = vld [vmem:[%s275 + $0x178] sm:$0xff]
      %v357 = vld [vmem:[%s275 + $0x180] sm:$0xff]
      %v358 = vld [vmem:[%s275 + $0x188] sm:$0xff]
      %v359 = vld [vmem:[%s275 + $0x190] sm:$0xff]
      %v360 = vld [vmem:[%s275 + $0x198] sm:$0xff]
      %v361 = vld [vmem:[%s275 + $0x1a0] sm:$0xff]
      %v362 = vld [vmem:[%s275 + $0x1a8] sm:$0xff]
      %v363 = vld [vmem:[%s275 + $0x1b0] sm:$0xff]
      %v364 = vld [vmem:[%s275 + $0x1b8] sm:$0xff]
      %v365 = vld [vmem:[%s275 + $0x1c0] sm:$0xff]
      %v366 = vld [vmem:[%s275 + $0x1c8] sm:$0xff]
      %v367 = vld [vmem:[%s275 + $0x1d0] sm:$0xff]
      %v368 = vld [vmem:[%s275 + $0x1d8] sm:$0xff]
      %v369 = vld [vmem:[%s275 + $0x1e0] sm:$0xff]
      %v370 = vld [vmem:[%s275 + $0x1e8] sm:$0xff]
      %v371 = vld [vmem:[%s275 + $0x1f0] sm:$0xff]
      %v372 = vld [vmem:[%s275 + $0x1f8] sm:$0xff]
      %v373 = vld [vmem:[%s275 + $0x200] sm:$0xff]
      %v374 = vld [vmem:[%s275 + $0x208] sm:$0xff]
      %v375 = vld [vmem:[%s275 + $0x210] sm:$0xff]
      %v376 = vld [vmem:[%s275 + $0x218] sm:$0xff]
      %v377 = vld [vmem:[%s275 + $0x220] sm:$0xff]
      %v378 = vld [vmem:[%s275 + $0x228] sm:$0xff]
      %v379 = vld [vmem:[%s275 + $0x230] sm:$0xff]
      %v380 = vld [vmem:[%s275 + $0x238] sm:$0xff]
      %v381 = vld [vmem:[%s275 + $0x240] sm:$0xff]
      %v382 = vld [vmem:[%s275 + $0x248] sm:$0xff]
      %v383 = vld [vmem:[%s275 + $0x250] sm:$0xff]
      %v384 = vld [vmem:[%s275 + $0x258] sm:$0xff]
      %v385 = vld [vmem:[%s275 + $0x260] sm:$0xff]
      %v386 = vld [vmem:[%s275 + $0x268] sm:$0xff]
      %v387 = vld [vmem:[%s275 + $0x270] sm:$0xff]
      %v388 = vld [vmem:[%s275 + $0x278] sm:$0xff]
      %v389 = vld [vmem:[%s284] sm:$0x3]
      %v391 = vlaneseq
      %v392 = vshrl.u32 %v391, 7
      %v393 = vsub.s32 0, %v392
      %v394 = vrot.slane %v389, %v393
      %v395 = vlaneseq
      %v396 = vshrl.u32 %v395, 7
      %v397 = vsub.s32 1, %v396
      %v398 = vrot.slane %v389, %v397
      %v407 = vunpack.c.l.b16 %v303
      %v408 = vunpack.c.h.b16 %v303
      %v409 = vunpack.c.l.b16 %v304
      %v410 = vunpack.c.h.b16 %v304
      %v411 = vunpack.c.l.b16 %v305
      %v412 = vunpack.c.l.b16 %v306
      %v413 = vunpack.c.h.b16 %v306
      %v414 = vunpack.c.l.b16 %v307
      %v415 = vunpack.c.h.b16 %v307
      %v416 = vunpack.c.l.b16 %v308
      %v417 = vpack.c.b16 %v412, %v407
      %v418 = vpack.c.b16 %v413, %v408
      %v419 = vpack.c.b16 %v414, %v409
      %v420 = vpack.c.b16 %v415, %v410
      %v421 = vpack.c.b16 %v416, %v411
      %v507 = vunpack.c.l.b16 %v309
      %v508 = vunpack.c.h.b16 %v309
      %v509 = vunpack.c.l.b16 %v310
      %v510 = vunpack.c.h.b16 %v310
      %v511 = vunpack.c.l.b16 %v311
      %v512 = vunpack.c.h.b16 %v311
      %v513 = vunpack.c.l.b16 %v312
      %v514 = vunpack.c.h.b16 %v312
      %v515 = vunpack.c.l.b16 %v313
      %v516 = vunpack.c.h.b16 %v313
      %v517 = vunpack.c.l.b16 %v314
      %v518 = vunpack.c.h.b16 %v314
      %v519 = vunpack.c.l.b16 %v315
      %v520 = vunpack.c.h.b16 %v315
      %v521 = vunpack.c.l.b16 %v316
      %v522 = vunpack.c.h.b16 %v316
      %v523 = vunpack.c.l.b16 %v317
      %v524 = vunpack.c.h.b16 %v317
      %v525 = vunpack.c.l.b16 %v318
      %v526 = vunpack.c.h.b16 %v318
      %v527 = vunpack.c.l.b16 %v319
      %v528 = vunpack.c.h.b16 %v319
      %v529 = vunpack.c.l.b16 %v320
      %v530 = vunpack.c.h.b16 %v320
      %v531 = vunpack.c.l.b16 %v321
      %v532 = vunpack.c.h.b16 %v321
      %v533 = vunpack.c.l.b16 %v322
      %v534 = vunpack.c.h.b16 %v322
      %v535 = vunpack.c.l.b16 %v323
      %v536 = vunpack.c.h.b16 %v323
      %v537 = vunpack.c.l.b16 %v324
      %v538 = vunpack.c.h.b16 %v324
      %v539 = vunpack.c.l.b16 %v325
      %v540 = vunpack.c.h.b16 %v325
      %v541 = vunpack.c.l.b16 %v326
      %v542 = vunpack.c.h.b16 %v326
      %v543 = vunpack.c.l.b16 %v327
      %v544 = vunpack.c.h.b16 %v327
      %v545 = vunpack.c.l.b16 %v328
      %v546 = vunpack.c.h.b16 %v328
      %v547 = vunpack.c.l.b16 %v329
      %v548 = vunpack.c.h.b16 %v329
      %v549 = vunpack.c.l.b16 %v330
      %v550 = vunpack.c.h.b16 %v330
      %v551 = vunpack.c.l.b16 %v331
      %v552 = vunpack.c.h.b16 %v331
      %v553 = vunpack.c.l.b16 %v332
      %v554 = vunpack.c.h.b16 %v332
      %v555 = vunpack.c.l.b16 %v333
      %v556 = vunpack.c.h.b16 %v333
      %v557 = vunpack.c.l.b16 %v334
      %v558 = vunpack.c.h.b16 %v334
      %v559 = vunpack.c.l.b16 %v335
      %v560 = vunpack.c.h.b16 %v335
      %v561 = vunpack.c.l.b16 %v336
      %v562 = vunpack.c.h.b16 %v336
      %v563 = vunpack.c.l.b16 %v337
      %v564 = vunpack.c.h.b16 %v337
      %v565 = vunpack.c.l.b16 %v338
      %v566 = vunpack.c.h.b16 %v338
      %v567 = vunpack.c.l.b16 %v339
      %v568 = vunpack.c.h.b16 %v339
      %v569 = vunpack.c.l.b16 %v340
      %v570 = vunpack.c.h.b16 %v340
      %v571 = vunpack.c.l.b16 %v341
      %v572 = vunpack.c.h.b16 %v341
      %v573 = vunpack.c.l.b16 %v342
      %v574 = vunpack.c.h.b16 %v342
      %v575 = vunpack.c.l.b16 %v343
      %v576 = vunpack.c.h.b16 %v343
      %v577 = vunpack.c.l.b16 %v344
      %v578 = vunpack.c.h.b16 %v344
      %v579 = vunpack.c.l.b16 %v345
      %v580 = vunpack.c.h.b16 %v345
      %v581 = vunpack.c.l.b16 %v346
      %v582 = vunpack.c.h.b16 %v346
      %v583 = vunpack.c.l.b16 %v347
      %v584 = vunpack.c.h.b16 %v347
      %v585 = vunpack.c.l.b16 %v348
      %v586 = vunpack.c.h.b16 %v348
      %v587 = vunpack.c.l.b16 %v349
      %v588 = vunpack.c.h.b16 %v349
      %v589 = vunpack.c.l.b16 %v350
      %v590 = vunpack.c.h.b16 %v350
      %v591 = vunpack.c.l.b16 %v351
      %v592 = vunpack.c.h.b16 %v351
      %v593 = vunpack.c.l.b16 %v352
      %v594 = vunpack.c.h.b16 %v352
      %v595 = vunpack.c.l.b16 %v353
      %v596 = vunpack.c.h.b16 %v353
      %v597 = vunpack.c.l.b16 %v354
      %v598 = vunpack.c.h.b16 %v354
      %v599 = vunpack.c.l.b16 %v355
      %v600 = vunpack.c.h.b16 %v355
      %v601 = vunpack.c.l.b16 %v356
      %v602 = vunpack.c.h.b16 %v356
      %v603 = vunpack.c.l.b16 %v357
      %v604 = vunpack.c.h.b16 %v357
      %v605 = vunpack.c.l.b16 %v358
      %v606 = vunpack.c.h.b16 %v358
      %v607 = vunpack.c.l.b16 %v359
      %v608 = vunpack.c.h.b16 %v359
      %v609 = vunpack.c.l.b16 %v360
      %v610 = vunpack.c.h.b16 %v360
      %v611 = vunpack.c.l.b16 %v361
      %v612 = vunpack.c.h.b16 %v361
      %v613 = vunpack.c.l.b16 %v362
      %v614 = vunpack.c.h.b16 %v362
      %v615 = vunpack.c.l.b16 %v363
      %v616 = vunpack.c.h.b16 %v363
      %v617 = vunpack.c.l.b16 %v364
      %v618 = vunpack.c.h.b16 %v364
      %v619 = vunpack.c.l.b16 %v365
      %v620 = vunpack.c.h.b16 %v365
      %v621 = vunpack.c.l.b16 %v366
      %v622 = vunpack.c.h.b16 %v366
      %v623 = vunpack.c.l.b16 %v367
      %v624 = vunpack.c.h.b16 %v367
      %v625 = vunpack.c.l.b16 %v368
      %v626 = vunpack.c.h.b16 %v368
      %v627 = vunpack.c.l.b16 %v369
      %v628 = vunpack.c.h.b16 %v369
      %v629 = vunpack.c.l.b16 %v370
      %v630 = vunpack.c.h.b16 %v370
      %v631 = vunpack.c.l.b16 %v371
      %v632 = vunpack.c.h.b16 %v371
      %v633 = vunpack.c.l.b16 %v372
      %v634 = vunpack.c.h.b16 %v372
      %v635 = vunpack.c.l.b16 %v373
      %v636 = vunpack.c.h.b16 %v373
      %v637 = vunpack.c.l.b16 %v374
      %v638 = vunpack.c.h.b16 %v374
      %v639 = vunpack.c.l.b16 %v375
      %v640 = vunpack.c.h.b16 %v375
      %v641 = vunpack.c.l.b16 %v376
      %v642 = vunpack.c.h.b16 %v376
      %v643 = vunpack.c.l.b16 %v377
      %v644 = vunpack.c.h.b16 %v377
      %v645 = vunpack.c.l.b16 %v378
      %v646 = vunpack.c.h.b16 %v378
      %v647 = vunpack.c.l.b16 %v379
      %v648 = vunpack.c.h.b16 %v379
      %v649 = vunpack.c.l.b16 %v380
      %v650 = vunpack.c.h.b16 %v380
      %v651 = vunpack.c.l.b16 %v381
      %v652 = vunpack.c.h.b16 %v381
      %v653 = vunpack.c.l.b16 %v382
      %v654 = vunpack.c.h.b16 %v382
      %v655 = vunpack.c.l.b16 %v383
      %v656 = vunpack.c.h.b16 %v383
      %v657 = vunpack.c.l.b16 %v384
      %v658 = vunpack.c.h.b16 %v384
      %v659 = vunpack.c.l.b16 %v385
      %v660 = vunpack.c.h.b16 %v385
      %v661 = vunpack.c.l.b16 %v386
      %v662 = vunpack.c.h.b16 %v386
      %v663 = vunpack.c.l.b16 %v387
      %v664 = vunpack.c.h.b16 %v387
      %v665 = vunpack.c.l.b16 %v388
      %v666 = vunpack.c.h.b16 %v388
      %v667 = vpack.c.b16 %v509, %v507
      %v668 = vpack.c.b16 %v510, %v508
      %v669 = vpack.c.b16 %v513, %v511
      %v670 = vpack.c.b16 %v514, %v512
      %v671 = vpack.c.b16 %v517, %v515
      %v672 = vpack.c.b16 %v518, %v516
      %v673 = vpack.c.b16 %v521, %v519
      %v674 = vpack.c.b16 %v522, %v520
      %v675 = vpack.c.b16 %v525, %v523
      %v676 = vpack.c.b16 %v526, %v524
      %v677 = vpack.c.b16 %v529, %v527
      %v678 = vpack.c.b16 %v530, %v528
      %v679 = vpack.c.b16 %v533, %v531
      %v680 = vpack.c.b16 %v534, %v532
      %v681 = vpack.c.b16 %v537, %v535
      %v682 = vpack.c.b16 %v538, %v536
      %v683 = vpack.c.b16 %v541, %v539
      %v684 = vpack.c.b16 %v542, %v540
      %v685 = vpack.c.b16 %v545, %v543
      %v686 = vpack.c.b16 %v546, %v544
      %v687 = vpack.c.b16 %v549, %v547
      %v688 = vpack.c.b16 %v550, %v548
      %v689 = vpack.c.b16 %v553, %v551
      %v690 = vpack.c.b16 %v554, %v552
      %v691 = vpack.c.b16 %v557, %v555
      %v692 = vpack.c.b16 %v558, %v556
      %v693 = vpack.c.b16 %v561, %v559
      %v694 = vpack.c.b16 %v562, %v560
      %v695 = vpack.c.b16 %v565, %v563
      %v696 = vpack.c.b16 %v566, %v564
      %v697 = vpack.c.b16 %v569, %v567
      %v698 = vpack.c.b16 %v570, %v568
      %v699 = vpack.c.b16 %v573, %v571
      %v700 = vpack.c.b16 %v574, %v572
      %v701 = vpack.c.b16 %v577, %v575
      %v702 = vpack.c.b16 %v578, %v576
      %v703 = vpack.c.b16 %v581, %v579
      %v704 = vpack.c.b16 %v582, %v580
      %v705 = vpack.c.b16 %v585, %v583
      %v706 = vpack.c.b16 %v586, %v584
      %v707 = vpack.c.b16 %v589, %v587
      %v708 = vpack.c.b16 %v590, %v588
      %v709 = vpack.c.b16 %v593, %v591
      %v710 = vpack.c.b16 %v594, %v592
      %v711 = vpack.c.b16 %v597, %v595
      %v712 = vpack.c.b16 %v598, %v596
      %v713 = vpack.c.b16 %v601, %v599
      %v714 = vpack.c.b16 %v602, %v600
      %v715 = vpack.c.b16 %v605, %v603
      %v716 = vpack.c.b16 %v606, %v604
      %v717 = vpack.c.b16 %v609, %v607
      %v718 = vpack.c.b16 %v610, %v608
      %v719 = vpack.c.b16 %v613, %v611
      %v720 = vpack.c.b16 %v614, %v612
      %v721 = vpack.c.b16 %v617, %v615
      %v722 = vpack.c.b16 %v618, %v616
      %v723 = vpack.c.b16 %v621, %v619
      %v724 = vpack.c.b16 %v622, %v620
      %v725 = vpack.c.b16 %v625, %v623
      %v726 = vpack.c.b16 %v626, %v624
      %v727 = vpack.c.b16 %v629, %v627
      %v728 = vpack.c.b16 %v630, %v628
      %v729 = vpack.c.b16 %v633, %v631
      %v730 = vpack.c.b16 %v634, %v632
      %v731 = vpack.c.b16 %v637, %v635
      %v732 = vpack.c.b16 %v638, %v636
      %v733 = vpack.c.b16 %v641, %v639
      %v734 = vpack.c.b16 %v642, %v640
      %v735 = vpack.c.b16 %v645, %v643
      %v736 = vpack.c.b16 %v646, %v644
      %v737 = vpack.c.b16 %v649, %v647
      %v738 = vpack.c.b16 %v650, %v648
      %v739 = vpack.c.b16 %v653, %v651
      %v740 = vpack.c.b16 %v654, %v652
      %v741 = vpack.c.b16 %v657, %v655
      %v742 = vpack.c.b16 %v658, %v656
      %v743 = vpack.c.b16 %v661, %v659
      %v744 = vpack.c.b16 %v662, %v660
      %v745 = vpack.c.b16 %v665, %v663
      %v746 = vpack.c.b16 %v666, %v664
      %827 = vmatprep.subr.bf16.mxu0 %v668
      %828 = vmatpush1.bf16.msra.mxu0 %v667
      %829 = vmatprep.subr.bf16.mxu0 %v670
      %830 = vmatpush1.bf16.msra.mxu0 %v669
      %831 = vmatprep.subr.bf16.mxu0 %v672
      %832 = vmatpush1.bf16.msra.mxu0 %v671
      %833 = vmatprep.subr.bf16.mxu0 %v674
      %834 = vmatpush1.bf16.msra.mxu0 %v673
      %835 = vmatprep.subr.bf16.mxu0 %v676
      %836 = vmatpush1.bf16.msra.mxu0 %v675
      %837 = vmatprep.subr.bf16.mxu0 %v678
      %838 = vmatpush1.bf16.msra.mxu0 %v677
      %839 = vmatprep.subr.bf16.mxu0 %v680
      %840 = vmatpush1.bf16.msra.mxu0 %v679
      %841 = vmatprep.subr.bf16.mxu0 %v682
      %842 = vmatpush1.bf16.msra.mxu0 %v681
      %843 = vmatprep.subr.bf16.mxu0 %v684
      %844 = vmatpush1.bf16.msra.mxu0 %v683
      %845 = vmatprep.subr.bf16.mxu0 %v686
      %846 = vmatpush1.bf16.msra.mxu0 %v685
      %847 = vmatprep.subr.bf16.mxu0 %v688
      %848 = vmatpush1.bf16.msra.mxu0 %v687
      %849 = vmatprep.subr.bf16.mxu0 %v690
      %850 = vmatpush1.bf16.msra.mxu0 %v689
      %851 = vmatprep.subr.bf16.mxu0 %v692
      %852 = vmatpush1.bf16.msra.mxu0 %v691
      %853 = vmatprep.subr.bf16.mxu0 %v694
      %854 = vmatpush1.bf16.msra.mxu0 %v693
      %855 = vmatprep.subr.bf16.mxu0 %v696
      %856 = vmatpush1.bf16.msra.mxu0 %v695
      %857 = vmatprep.subr.bf16.mxu0 %v698
      %858 = vmatpush1.bf16.msra.mxu0 %v697
      %859 = vmatprep.mubr.bf16.mxu0 %v418
      %860 = vmatmul.mubr.bf16.gmra.mrb[0].mxu0 %v417
      %v861 = vpop.f32.mrb[0].mxu0
      %v862 = vadd.f32 %v394, %v861
      %v863 = vpop.f32.mrb[0].mxu0
      %v864 = vadd.f32 %v398, %v863
      %v865 = vpop.f32.mrb[0].mxu0
      %v866 = vadd.f32 %v394, %v865
      %v867 = vpop.f32.mrb[0].mxu0
      %v868 = vadd.f32 %v398, %v867
      %869 = vdwg.mxu0
      %870 = vmatprep.subr.bf16.mxu0 %v700
      %871 = vmatpush1.bf16.msra.mxu0 %v699
      %872 = vmatprep.subr.bf16.mxu0 %v702
      %873 = vmatpush1.bf16.msra.mxu0 %v701
      %874 = vmatprep.subr.bf16.mxu0 %v704
      %875 = vmatpush1.bf16.msra.mxu0 %v703
      %876 = vmatprep.subr.bf16.mxu0 %v706
      %877 = vmatpush1.bf16.msra.mxu0 %v705
      %878 = vmatprep.subr.bf16.mxu0 %v708
      %879 = vmatpush1.bf16.msra.mxu0 %v707
      %880 = vmatprep.subr.bf16.mxu0 %v710
      %881 = vmatpush1.bf16.msra.mxu0 %v709
      %882 = vmatprep.subr.bf16.mxu0 %v712
      %883 = vmatpush1.bf16.msra.mxu0 %v711
      %884 = vmatprep.subr.bf16.mxu0 %v714
      %885 = vmatpush1.bf16.msra.mxu0 %v713
      %886 = vmatprep.subr.bf16.mxu0 %v716
      %887 = vmatpush1.bf16.msra.mxu0 %v715
      %888 = vmatprep.subr.bf16.mxu0 %v718
      %889 = vmatpush1.bf16.msra.mxu0 %v717
      %890 = vmatprep.subr.bf16.mxu0 %v720
      %891 = vmatpush1.bf16.msra.mxu0 %v719
      %892 = vmatprep.subr.bf16.mxu0 %v722
      %893 = vmatpush1.bf16.msra.mxu0 %v721
      %894 = vmatprep.subr.bf16.mxu0 %v724
      %895 = vmatpush1.bf16.msra.mxu0 %v723
      %896 = vmatprep.subr.bf16.mxu0 %v726
      %897 = vmatpush1.bf16.msra.mxu0 %v725
      %898 = vmatprep.subr.bf16.mxu0 %v728
      %899 = vmatpush1.bf16.msra.mxu0 %v727
      %900 = vmatprep.subr.bf16.mxu0 %v730
      %901 = vmatpush1.bf16.msra.mxu0 %v729
      %902 = vmatprep.mubr.bf16.mxu0 %v420
      %903 = vmatmul.mubr.bf16.gmra.mrb[0].mxu0 %v419
      %v904 = vpop.f32.mrb[0].mxu0
      %v905 = vadd.f32 %v862, %v904
      %v906 = vpop.f32.mrb[0].mxu0
      %v907 = vadd.f32 %v864, %v906
      %v908 = vpop.f32.mrb[0].mxu0
      %v909 = vadd.f32 %v866, %v908
      %v910 = vpop.f32.mrb[0].mxu0
      %v911 = vadd.f32 %v868, %v910
      %912 = vdwg.mxu0
      %913 = vmatprep.subr.bf16.mxu0 %v732
      %914 = vmatpush1.bf16.msra.mxu0 %v731
      %915 = vmatprep.subr.bf16.mxu0 %v734
      %916 = vmatpush1.bf16.msra.mxu0 %v733
      %917 = vmatprep.subr.bf16.mxu0 %v736
      %918 = vmatpush1.bf16.msra.mxu0 %v735
      %919 = vmatprep.subr.bf16.mxu0 %v738
      %920 = vmatpush1.bf16.msra.mxu0 %v737
      %921 = vmatprep.subr.bf16.mxu0 %v740
      %922 = vmatpush1.bf16.msra.mxu0 %v739
      %923 = vmatprep.subr.bf16.mxu0 %v742
      %924 = vmatpush1.bf16.msra.mxu0 %v741
      %925 = vmatprep.subr.bf16.mxu0 %v744
      %926 = vmatpush1.bf16.msra.mxu0 %v743
      %927 = vmatprep.subr.bf16.mxu0 %v746
      %928 = vmatpush1.bf16.msra.mxu0 %v745
      %929 = vmatprep.subr.bf16.mxu0 0
      %930 = vmatpush1.bf16.msra.mxu0 0
      %931 = vmatprep.subr.bf16.mxu0 0
      %932 = vmatpush1.bf16.msra.mxu0 0
      %933 = vmatprep.subr.bf16.mxu0 0
      %934 = vmatpush1.bf16.msra.mxu0 0
      %935 = vmatprep.subr.bf16.mxu0 0
      %936 = vmatpush1.bf16.msra.mxu0 0
      %937 = vmatprep.subr.bf16.mxu0 0
      %938 = vmatpush1.bf16.msra.mxu0 0
      %939 = vmatprep.subr.bf16.mxu0 0
      %940 = vmatpush1.bf16.msra.mxu0 0
      %941 = vmatprep.subr.bf16.mxu0 0
      %942 = vmatpush1.bf16.msra.mxu0 0
      %943 = vmatprep.subr.bf16.mxu0 0
      %944 = vmatpush1.bf16.msra.mxu0 0
      %945 = vmatprep.mubr.bf16.mxu0 0
      %946 = vmatmul.mubr.bf16.gmra.mrb[0].mxu0 %v421
      %v947 = vpop.f32.mrb[0].mxu0
      %v948 = vadd.f32 %v905, %v947
      %v949 = vpop.f32.mrb[0].mxu0
      %v950 = vadd.f32 %v907, %v949
      %v951 = vpop.f32.mrb[0].mxu0
      %v952 = vadd.f32 %v909, %v951
      %v953 = vpop.f32.mrb[0].mxu0
      %v954 = vadd.f32 %v911, %v953
      %955 = vdwg.mxu0
      %956 = vst [vmem:[%s299] sm:$0xff] %v948
      %957 = vst [vmem:[%s299 + $0x8] sm:$0xff] %v950
      %958 = vst [vmem:[%s299 + $0x10] sm:$0xff] %v952
      %959 = vst [vmem:[%s299 + $0x18] sm:$0xff] %v954
      %s960 = smul.u32 2, %s20
      %s961 = smul.u32 2, %s21
      %p962 = scmp.lt.s32.totalorder %s19, 1
      %s963 = scalar_select %p962, %s19, 1
      %p964 = scmp.lt.s32.totalorder %s960, 1
      %s965 = scalar_select %p964, %s960, 1
      %p966 = scmp.lt.s32.totalorder %s961, 1
      %s967 = scalar_select %p966, %s961, 1
      %s968 = smul.addr %s965, 2
      %s969 = sadd.s32 %s967, %s968
      %s970 = smul.addr %s963, 4
      %s971 = sadd.s32 %s969, %s970
      %s972 = smul.addr %s971, 8
      %s973 = scalar_lea.vmem %s3, %s972
      // Predicated region
      $region33: #{_lambda_.15} parent=31 // pred_check
        %p974 = pneg %p139
      $region34: #{_lambda_.15} parent=31 // pred_check_branch
        %976 = sbr.rel (%p974) target = $region36
      $region35: #{_lambda_.15} parent=31 // pred_region
        %s977 = smul.u32 2, %s20
        %s978 = smul.u32 2, %s21
      $region36: #{_lambda_.15} parent=31 // pred_fallthru
        _
    $region32: #{_lambda_.15} parent=5 // pred_fallthru
      _
    %p979 = scmp.le.s32.totalorder 2, %s9
    // Predicated region
    $region37: #{_lambda_.15} parent=5 // pred_check
      %p980 = pneg %p979
    $region38: #{_lambda_.15} parent=5 // pred_check_branch
      %982 = sbr.rel (%p980) target = $region40
    $region39: #{_lambda_.15} parent=5 // pred_region
      %s983 = ssub.s32 %s9, 2
      // Predicated region
      $region41: #{_lambda_.15} parent=39 // pred_check
        %p984 = pneg %p145
      $region42: #{_lambda_.15} parent=39 // pred_check_branch
        %986 = sbr.rel (%p984) target = $region44
      $region43: #{_lambda_.15} parent=39 // pred_region
        %s987 = smul.u32 2, %s23
        %s988 = smul.u32 2, %s24
        %p989 = scmp.lt.s32.totalorder %s22, 1
        %s990 = scalar_select %p989, %s22, 1
        %p991 = scmp.lt.s32.totalorder %s987, 1
        %s992 = scalar_select %p991, %s987, 1
        %p993 = scmp.lt.s32.totalorder %s988, 1
        %s994 = scalar_select %p993, %s988, 1
        %s995 = smul.addr %s992, 2
        %s996 = sadd.s32 %s994, %s995
        %s997 = smul.addr %s990, 4
        %s998 = sadd.s32 %s996, %s997
        %s999 = smul.addr %s998, 8
        %s1000 = scalar_lea.vmem %s3, %s999
      $region44: #{_lambda_.15} parent=39 // pred_fallthru
        _
    $region40: #{_lambda_.15} parent=5 // pred_fallthru
      _
  $region6: #{_lambda_.15} parent=0 // loop_footer
    %s13 = sadd.s32 1, %s9
  $region7: #{_lambda_.15} parent=0 // loop_footer_branch
    %8 = sbr.rel target = $region3
  $region8: #{_lambda_.15} parent=0 // loop_exit
    _

// kernel: _lambda_.16
$region0: #{_lambda_.16}
  #allocation0 [shape = 'u32[]', space=smem, size = 0x4, offset = 0x4, fixed_abs, tag = 'smem constant byte address 0x4 - core index']
  #allocation1 [shape = 'u32[144,128]{1,0:T(1,128)}', space=vmem, size = 0x12000, scoped, tag = 'internal scratch']
  %s0 = inlined_call_operand.vmem [shape: bf16[2,16,1152], index: 0, kind: input, shape index: {}]
  %s1 = inlined_call_operand.vmem [shape: bf16[2,1152,128], index: 1, kind: input, shape index: {}]
  %s2 = inlined_call_operand.vmem [shape: f32[2,1,128], index: 2, kind: input, shape index: {}]
  %s3 = inlined_call_operand.vmem [shape: f32[2,16,128], index: 3, kind: output, shape index: {}]
  %s4 = sld [smem:[#allocation0]]
  $region45: #{_lambda_.16} parent=0
    _
  %s6 = ssub.s32 1, %s4
  %s7 = scalar_select 0, %s6, %s4
  loop: start=0, step=1, limit=4
  $region2: #{_lambda_.16} parent=0 // loop_pre_header
    _
  $region3: #{_lambda_.16} parent=0 // loop_header
    %s9 = sphi 0, %s13
    %p10 = scmp.ge.s32.totalorder %s9, 4
    %s16 = sphi 0, %s35
    %s17 = sphi 0, %s31
    %s18 = sphi 0, %s27
    %s19 = sphi 0, %s16
    %s20 = sphi 0, %s17
    %s21 = sphi 0, %s18
    %s22 = sphi 0, %s19
    %s23 = sphi 0, %s20
    %s24 = sphi 0, %s21
    %s40 = sphi 0, %s42
    %s43 = sphi 0, %s40
    %s44 = sphi 0, %s43
    %s60 = sphi 0, %s44
    %s68 = sphi 0, %s70
    %s71 = sphi 0, %s68
    %s72 = sphi 0, %s71
    %s88 = sphi 0, %s72
    %s96 = sphi 0, %s98
    %s99 = sphi 0, %s96
    %s100 = sphi 0, %s99
    %s116 = sphi 0, %s100
    %s126 = sphi 0, %s128
    %s129 = sphi 0, %s126
    %s130 = sphi 0, %s129
    %s146 = sphi 0, %s130
  $region4: #{_lambda_.16} parent=0 // loop_header_branch
    %12 = sbr.rel (%p10) target = $region8
  $region5: #{_lambda_.16} parent=0 // loop_body
    %s14 = ssub.s32 %s9, 1
    %s15 = ssub.s32 %s9, 2
    %s25 = sadd.s32 1, %s18
    %p26 = scmp.ge.s32.totalorder %s25, 1
    %s27 = scalar_select %p26, 0, %s25
    %s28 = sadd.s32 1, %s17
    %s29 = scalar_select %p26, %s28, %s17
    %p30 = scmp.ge.s32.totalorder %s29, 1
    %s31 = scalar_select %p30, 0, %s29
    %s32 = sadd.s32 1, %s16
    %s33 = scalar_select %p30, %s32, %s16
    %p34 = scmp.ge.s32.totalorder %s33, 2
    %s35 = scalar_select %p34, 0, %s33
    %s36 = ssub.s32 %s16, %s35
    %s37 = ssub.s32 %s17, %s31
    %s38 = sor.u32 %s36, %s37
    %p39 = scmp.eq.s32.totalorder %s38, 0
    %s41 = sadd.s32 %s40, 1
    %s42 = scalar_select %p39, %s40, %s41
    %p45 = pneg %p39
    %p46 = scmp.eq.s32.totalorder %s9, 1
    %p47 = por %p45, %p46
    %p48 = scmp.ne.s32.totalorder %s40, %s43
    %p49 = scmp.eq.s32.totalorder %s9, 0
    %p50 = por %p48, %p49
    %p51 = scmp.ne.s32.totalorder %s40, %s43
    %p52 = scmp.eq.s32.totalorder %s14, 1
    %p53 = por %p51, %p52
    %p54 = scmp.ne.s32.totalorder %s43, %s44
    %p55 = scmp.eq.s32.totalorder %s14, 0
    %p56 = por %p54, %p55
    %p57 = scmp.ne.s32.totalorder %s43, %s44
    %p58 = scmp.eq.s32.totalorder %s15, 1
    %p59 = por %p57, %p58
    %p61 = scmp.ne.s32.totalorder %s44, %s60
    %p62 = scmp.eq.s32.totalorder %s15, 0
    %p63 = por %p61, %p62
    %s64 = ssub.s32 %s16, %s35
    %s65 = ssub.s32 %s18, %s27
    %s66 = sor.u32 %s64, %s65
    %p67 = scmp.eq.s32.totalorder %s66, 0
    %s69 = sadd.s32 %s68, 1
    %s70 = scalar_select %p67, %s68, %s69
    %p73 = pneg %p67
    %p74 = scmp.eq.s32.totalorder %s9, 1
    %p75 = por %p73, %p74
    %p76 = scmp.ne.s32.totalorder %s68, %s71
    %p77 = scmp.eq.s32.totalorder %s9, 0
    %p78 = por %p76, %p77
    %p79 = scmp.ne.s32.totalorder %s68, %s71
    %p80 = scmp.eq.s32.totalorder %s14, 1
    %p81 = por %p79, %p80
    %p82 = scmp.ne.s32.totalorder %s71, %s72
    %p83 = scmp.eq.s32.totalorder %s14, 0
    %p84 = por %p82, %p83
    %p85 = scmp.ne.s32.totalorder %s71, %s72
    %p86 = scmp.eq.s32.totalorder %s15, 1
    %p87 = por %p85, %p86
    %p89 = scmp.ne.s32.totalorder %s72, %s88
    %p90 = scmp.eq.s32.totalorder %s15, 0
    %p91 = por %p89, %p90
    %s92 = ssub.s32 %s16, %s35
    %s93 = ssub.s32 %s18, %s27
    %s94 = sor.u32 %s92, %s93
    %p95 = scmp.eq.s32.totalorder %s94, 0
    %s97 = sadd.s32 %s96, 1
    %s98 = scalar_select %p95, %s96, %s97
    %p101 = pneg %p95
    %p102 = scmp.eq.s32.totalorder %s9, 1
    %p103 = por %p101, %p102
    %p104 = scmp.ne.s32.totalorder %s96, %s99
    %p105 = scmp.eq.s32.totalorder %s9, 0
    %p106 = por %p104, %p105
    %p107 = scmp.ne.s32.totalorder %s96, %s99
    %p108 = scmp.eq.s32.totalorder %s14, 1
    %p109 = por %p107, %p108
    %p110 = scmp.ne.s32.totalorder %s99, %s100
    %p111 = scmp.eq.s32.totalorder %s14, 0
    %p112 = por %p110, %p111
    %p113 = scmp.ne.s32.totalorder %s99, %s100
    %p114 = scmp.eq.s32.totalorder %s15, 1
    %p115 = por %p113, %p114
    %p117 = scmp.ne.s32.totalorder %s100, %s116
    %p118 = scmp.eq.s32.totalorder %s15, 0
    %p119 = por %p117, %p118
    %s120 = ssub.s32 %s16, %s35
    %s121 = ssub.s32 %s17, %s31
    %s122 = sor.u32 %s120, %s121
    %s123 = ssub.s32 %s18, %s27
    %s124 = sor.u32 %s122, %s123
    %p125 = scmp.eq.s32.totalorder %s124, 0
    %s127 = sadd.s32 %s126, 1
    %s128 = scalar_select %p125, %s126, %s127
    %p131 = pneg %p125
    %p132 = scmp.eq.s32.totalorder %s9, 1
    %p133 = por %p131, %p132
    %p134 = scmp.ne.s32.totalorder %s126, %s129
    %p135 = scmp.eq.s32.totalorder %s9, 0
    %p136 = por %p134, %p135
    %p137 = scmp.ne.s32.totalorder %s126, %s129
    %p138 = scmp.eq.s32.totalorder %s14, 1
    %p139 = por %p137, %p138
    %p140 = scmp.ne.s32.totalorder %s129, %s130
    %p141 = scmp.eq.s32.totalorder %s14, 0
    %p142 = por %p140, %p141
    %p143 = scmp.ne.s32.totalorder %s129, %s130
    %p144 = scmp.eq.s32.totalorder %s15, 1
    %p145 = por %p143, %p144
    %p147 = scmp.ne.s32.totalorder %s130, %s146
    %p148 = scmp.eq.s32.totalorder %s15, 0
    %p149 = por %p147, %p148
    %p150 = scmp.le.s32.totalorder 1, %s9
    %p151 = scmp.lt.s32.totalorder %s9, 3
    %p152 = pnand %p150, %p151
    %p153 = pneg %p152
    // Predicated region
    $region9: #{_lambda_.16} parent=5 // pred_check
      _
    $region10: #{_lambda_.16} parent=5 // pred_check_branch
      %155 = sbr.rel (%p152) target = $region12
    $region11: #{_lambda_.16} parent=5 // pred_region
      %s156 = ssub.s32 %s9, 1
    $region12: #{_lambda_.16} parent=5 // pred_fallthru
      _
    %p157 = scmp.lt.s32.totalorder %s9, 2
    // Predicated region
    $region13: #{_lambda_.16} parent=5 // pred_check
      %p158 = pneg %p157
    $region14: #{_lambda_.16} parent=5 // pred_check_branch
      %160 = sbr.rel (%p158) target = $region16
    $region15: #{_lambda_.16} parent=5 // pred_region
      // Predicated region
      $region17: #{_lambda_.16} parent=15 // pred_check
        %p161 = pneg %p50
      $region18: #{_lambda_.16} parent=15 // pred_check_branch
        %163 = sbr.rel (%p161) target = $region20
      $region19: #{_lambda_.16} parent=15 // pred_region
        %s164 = smul.u32 2, %s17
        %p165 = scmp.lt.s32.totalorder %s16, 1
        %s166 = scalar_select %p165, %s16, 1
        %p167 = scmp.lt.s32.totalorder %s164, 1
        %s168 = scalar_select %p167, %s164, 1
        %s169 = smul.addr %s168, 9
        %s170 = smul.addr %s166, 18
        %s171 = sadd.s32 %s169, %s170
        %s172 = smul.addr %s171, 4
        %s173 = scalar_lea.vmem %s0, %s172
        %s174 = smul.u32 2, %s17
      $region20: #{_lambda_.16} parent=15 // pred_fallthru
        _
      // Predicated region
      $region21: #{_lambda_.16} parent=15 // pred_check
        %p175 = pneg %p78
      $region22: #{_lambda_.16} parent=15 // pred_check_branch
        %177 = sbr.rel (%p175) target = $region24
      $region23: #{_lambda_.16} parent=15 // pred_region
        %p178 = scmp.lt.s32.totalorder %s16, 1
        %s179 = scalar_select %p178, %s16, 1
        %p180 = scmp.lt.s32.totalorder %s18, 0
        %s181 = scalar_select %p180, %s18, 0
        %s182 = smul.addr %s179, 144
        %s183 = sadd.s32 %s181, %s182
        %s184 = smul.addr %s183, 4
        %s185 = scalar_lea.vmem %s1, %s184
      $region24: #{_lambda_.16} parent=15 // pred_fallthru
        _
      // Predicated region
      $region25: #{_lambda_.16} parent=15 // pred_check
        %p186 = pneg %p106
      $region26: #{_lambda_.16} parent=15 // pred_check_branch
        %188 = sbr.rel (%p186) target = $region28
      $region27: #{_lambda_.16} parent=15 // pred_region
        %p189 = scmp.lt.s32.totalorder %s16, 1
        %s190 = scalar_select %p189, %s16, 1
        %p191 = scmp.lt.s32.totalorder %s18, 0
        %s192 = scalar_select %p191, %s18, 0
        %s193 = sadd.s32 %s192, %s190
        %s194 = scalar_lea.vmem %s2, %s193
      $region28: #{_lambda_.16} parent=15 // pred_fallthru
        _
    $region16: #{_lambda_.16} parent=5 // pred_fallthru
      _
    %p195 = scmp.le.s32.totalorder 1, %s9
    %p196 = scmp.lt.s32.totalorder %s9, 3
    %p197 = pnand %p195, %p196
    %p198 = pneg %p197
    // Predicated region
    $region29: #{_lambda_.16} parent=5 // pred_check
      _
    $region30: #{_lambda_.16} parent=5 // pred_check_branch
      %200 = sbr.rel (%p197) target = $region32
    $region31: #{_lambda_.16} parent=5 // pred_region
      %s201 = ssub.s32 %s9, 1
      %s202 = smul.u32 2, %s20
      %p203 = scmp.lt.s32.totalorder %s19, 1
      %s204 = scalar_select %p203, %s19, 1
      %p205 = scmp.lt.s32.totalorder %s202, 1
      %s206 = scalar_select %p205, %s202, 1
      %s207 = smul.addr %s206, 9
      %s208 = smul.addr %s204, 18
      %s209 = sadd.s32 %s207, %s208
      %s210 = smul.addr %s209, 4
      %s211 = scalar_lea.vmem %s0, %s210
      %p212 = pneg %p56
      %p213 = pneg %p53
      %p214 = scmp.lt.s32.totalorder %s19, 1
      %s215 = scalar_select %p214, %s19, 1
      %p216 = scmp.lt.s32.totalorder %s21, 0
      %s217 = scalar_select %p216, %s21, 0
      %s218 = smul.addr %s215, 144
      %s219 = sadd.s32 %s217, %s218
      %s220 = smul.addr %s219, 4
      %s221 = scalar_lea.vmem %s1, %s220
      %p222 = pneg %p84
      %p223 = pneg %p81
      %p224 = scmp.lt.s32.totalorder %s19, 1
      %s225 = scalar_select %p224, %s19, 1
      %p226 = scmp.lt.s32.totalorder %s21, 0
      %s227 = scalar_select %p226, %s21, 0
      %s228 = sadd.s32 %s227, %s225
      %s229 = scalar_lea.vmem %s2, %s228
      %p230 = pneg %p112
      %p231 = pneg %p109
      %p232 = pneg %p142
      %p233 = pneg %p139
      %s234 = smul.u32 2, %s20
      %p235 = scmp.lt.s32.totalorder %s19, 1
      %s236 = scalar_select %p235, %s19, 1
      %p237 = scmp.lt.s32.totalorder %s234, 1
      %s238 = scalar_select %p237, %s234, 1
      %p239 = scmp.lt.s32.totalorder %s21, 0
      %s240 = scalar_select %p239, %s21, 0
      %s241 = sadd.s32 %s240, %s238
      %s242 = smul.addr %s236, 2
      %s243 = sadd.s32 %s241, %s242
      %s244 = smul.addr %s243, 8
      %s245 = scalar_lea.vmem %s3, %s244
      %s246 = smul.u32 2, %s20
      %p247 = scmp.lt.s32.totalorder %s19, 1
      %s248 = scalar_select %p247, %s19, 1
      %p249 = scmp.lt.s32.totalorder %s246, 1
      %s250 = scalar_select %p249, %s246, 1
      %s251 = smul.addr %s250, 9
      %s252 = smul.addr %s248, 18
      %s253 = sadd.s32 %s251, %s252
      %s254 = smul.addr %s253, 4
      %s255 = scalar_lea.vmem %s0, %s254
      %s256 = smul.u32 2, %s20
      %p257 = scmp.lt.s32.totalorder %s19, 1
      %s258 = scalar_select %p257, %s19, 1
      %p259 = scmp.lt.s32.totalorder %s21, 0
      %s260 = scalar_select %p259, %s21, 0
      %s261 = smul.addr %s258, 144
      %s262 = sadd.s32 %s260, %s261
      %s263 = smul.addr %s262, 4
      %s264 = scalar_lea.vmem %s1, %s263
      %p265 = scmp.lt.s32.totalorder %s19, 1
      %s266 = scalar_select %p265, %s19, 1
      %p267 = scmp.lt.s32.totalorder %s21, 0
      %s268 = scalar_select %p267, %s21, 0
      %s269 = sadd.s32 %s268, %s266
      %s270 = scalar_lea.vmem %s2, %s269
      %s271 = smul.u32 2, %s20
      %p272 = scmp.lt.s32.totalorder %s19, 1
      %s273 = scalar_select %p272, %s19, 1
      %p274 = scmp.lt.s32.totalorder %s271, 1
      %s275 = scalar_select %p274, %s271, 1
      %p276 = scmp.lt.s32.totalorder %s21, 0
      %s277 = scalar_select %p276, %s21, 0
      %s278 = sadd.s32 %s277, %s275
      %s279 = smul.addr %s273, 2
      %s280 = sadd.s32 %s278, %s279
      %s281 = smul.addr %s280, 8
      %s282 = scalar_lea.vmem %s3, %s281
      %s283 = smul.u32 2, %s20
      %v285 = vld [vmem:[%s255] sm:$0xff]
      %v286 = vld [vmem:[%s255 + $0x8] sm:$0xff]
      %v287 = vld [vmem:[%s255 + $0x10] sm:$0xff]
      %v288 = vld [vmem:[%s255 + $0x18] sm:$0xff]
      %v289 = vld [vmem:[%s255 + $0x20] sm:$0xf]
      %v290 = vld [vmem:[%s255 + $0x24] sm:$0xff]
      %v291 = vld [vmem:[%s255 + $0x2c] sm:$0xff]
      %v292 = vld [vmem:[%s255 + $0x34] sm:$0xff]
      %v293 = vld [vmem:[%s255 + $0x3c] sm:$0xff]
      %v294 = vld [vmem:[%s255 + $0x44] sm:$0xf]
      %v295 = vld [vmem:[%s264] sm:$0xf]
      %v296 = vld [vmem:[%s264 + $0x4] sm:$0xf]
      %v297 = vld [vmem:[%s264 + $0x8] sm:$0xf]
      %v298 = vld [vmem:[%s264 + $0xc] sm:$0xf]
      %v299 = vld [vmem:[%s264 + $0x10] sm:$0xf]
      %v300 = vld [vmem:[%s264 + $0x14] sm:$0xf]
      %v301 = vld [vmem:[%s264 + $0x18] sm:$0xf]
      %v302 = vld [vmem:[%s264 + $0x1c] sm:$0xf]
      %v303 = vld [vmem:[%s264 + $0x20] sm:$0xf]
      %v304 = vld [vmem:[%s264 + $0x24] sm:$0xf]
      %v305 = vld [vmem:[%s264 + $0x28] sm:$0xf]
      %v306 = vld [vmem:[%s264 + $0x2c] sm:$0xf]
      %v307 = vld [vmem:[%s264 + $0x30] sm:$0xf]
      %v308 = vld [vmem:[%s264 + $0x34] sm:$0xf]
      %v309 = vld [vmem:[%s264 + $0x38] sm:$0xf]
      %v310 = vld [vmem:[%s264 + $0x3c] sm:$0xf]
      %v311 = vld [vmem:[%s264 + $0x40] sm:$0xf]
      %v312 = vld [vmem:[%s264 + $0x44] sm:$0xf]
      %v313 = vld [vmem:[%s264 + $0x48] sm:$0xf]
      %v314 = vld [vmem:[%s264 + $0x4c] sm:$0xf]
      %v315 = vld [vmem:[%s264 + $0x50] sm:$0xf]
      %v316 = vld [vmem:[%s264 + $0x54] sm:$0xf]
      %v317 = vld [vmem:[%s264 + $0x58] sm:$0xf]
      %v318 = vld [vmem:[%s264 + $0x5c] sm:$0xf]
      %v319 = vld [vmem:[%s264 + $0x60] sm:$0xf]
      %v320 = vld [vmem:[%s264 + $0x64] sm:$0xf]
      %v321 = vld [vmem:[%s264 + $0x68] sm:$0xf]
      %v322 = vld [vmem:[%s264 + $0x6c] sm:$0xf]
      %v323 = vld [vmem:[%s264 + $0x70] sm:$0xf]
      %v324 = vld [vmem:[%s264 + $0x74] sm:$0xf]
      %v325 = vld [vmem:[%s264 + $0x78] sm:$0xf]
      %v326 = vld [vmem:[%s264 + $0x7c] sm:$0xf]
      %v327 = vld [vmem:[%s264 + $0x80] sm:$0xf]
      %v328 = vld [vmem:[%s264 + $0x84] sm:$0xf]
      %v329 = vld [vmem:[%s264 + $0x88] sm:$0xf]
      %v330 = vld [vmem:[%s264 + $0x8c] sm:$0xf]
      %v331 = vld [vmem:[%s264 + $0x90] sm:$0xf]
      %v332 = vld [vmem:[%s264 + $0x94] sm:$0xf]
      %v333 = vld [vmem:[%s264 + $0x98] sm:$0xf]
      %v334 = vld [vmem:[%s264 + $0x9c] sm:$0xf]
      %v335 = vld [vmem:[%s264 + $0xa0] sm:$0xf]
      %v336 = vld [vmem:[%s264 + $0xa4] sm:$0xf]
      %v337 = vld [vmem:[%s264 + $0xa8] sm:$0xf]
      %v338 = vld [vmem:[%s264 + $0xac] sm:$0xf]
      %v339 = vld [vmem:[%s264 + $0xb0] sm:$0xf]
      %v340 = vld [vmem:[%s264 + $0xb4] sm:$0xf]
      %v341 = vld [vmem:[%s264 + $0xb8] sm:$0xf]
      %v342 = vld [vmem:[%s264 + $0xbc] sm:$0xf]
      %v343 = vld [vmem:[%s264 + $0xc0] sm:$0xf]
      %v344 = vld [vmem:[%s264 + $0xc4] sm:$0xf]
      %v345 = vld [vmem:[%s264 + $0xc8] sm:$0xf]
      %v346 = vld [vmem:[%s264 + $0xcc] sm:$0xf]
      %v347 = vld [vmem:[%s264 + $0xd0] sm:$0xf]
      %v348 = vld [vmem:[%s264 + $0xd4] sm:$0xf]
      %v349 = vld [vmem:[%s264 + $0xd8] sm:$0xf]
      %v350 = vld [vmem:[%s264 + $0xdc] sm:$0xf]
      %v351 = vld [vmem:[%s264 + $0xe0] sm:$0xf]
      %v352 = vld [vmem:[%s264 + $0xe4] sm:$0xf]
      %v353 = vld [vmem:[%s264 + $0xe8] sm:$0xf]
      %v354 = vld [vmem:[%s264 + $0xec] sm:$0xf]
      %v355 = vld [vmem:[%s264 + $0xf0] sm:$0xf]
      %v356 = vld [vmem:[%s264 + $0xf4] sm:$0xf]
      %v357 = vld [vmem:[%s264 + $0xf8] sm:$0xf]
      %v358 = vld [vmem:[%s264 + $0xfc] sm:$0xf]
      %v359 = vld [vmem:[%s264 + $0x100] sm:$0xf]
      %v360 = vld [vmem:[%s264 + $0x104] sm:$0xf]
      %v361 = vld [vmem:[%s264 + $0x108] sm:$0xf]
      %v362 = vld [vmem:[%s264 + $0x10c] sm:$0xf]
      %v363 = vld [vmem:[%s264 + $0x110] sm:$0xf]
      %v364 = vld [vmem:[%s264 + $0x114] sm:$0xf]
      %v365 = vld [vmem:[%s264 + $0x118] sm:$0xf]
      %v366 = vld [vmem:[%s264 + $0x11c] sm:$0xf]
      %v367 = vld [vmem:[%s264 + $0x120] sm:$0xf]
      %v368 = vld [vmem:[%s264 + $0x124] sm:$0xf]
      %v369 = vld [vmem:[%s264 + $0x128] sm:$0xf]
      %v370 = vld [vmem:[%s264 + $0x12c] sm:$0xf]
      %v371 = vld [vmem:[%s264 + $0x130] sm:$0xf]
      %v372 = vld [vmem:[%s264 + $0x134] sm:$0xf]
      %v373 = vld [vmem:[%s264 + $0x138] sm:$0xf]
      %v374 = vld [vmem:[%s264 + $0x13c] sm:$0xf]
      %v375 = vld [vmem:[%s264 + $0x140] sm:$0xf]
      %v376 = vld [vmem:[%s264 + $0x144] sm:$0xf]
      %v377 = vld [vmem:[%s264 + $0x148] sm:$0xf]
      %v378 = vld [vmem:[%s264 + $0x14c] sm:$0xf]
      %v379 = vld [vmem:[%s264 + $0x150] sm:$0xf]
      %v380 = vld [vmem:[%s264 + $0x154] sm:$0xf]
      %v381 = vld [vmem:[%s264 + $0x158] sm:$0xf]
      %v382 = vld [vmem:[%s264 + $0x15c] sm:$0xf]
      %v383 = vld [vmem:[%s264 + $0x160] sm:$0xf]
      %v384 = vld [vmem:[%s264 + $0x164] sm:$0xf]
      %v385 = vld [vmem:[%s264 + $0x168] sm:$0xf]
      %v386 = vld [vmem:[%s264 + $0x16c] sm:$0xf]
      %v387 = vld [vmem:[%s264 + $0x170] sm:$0xf]
      %v388 = vld [vmem:[%s264 + $0x174] sm:$0xf]
      %v389 = vld [vmem:[%s264 + $0x178] sm:$0xf]
      %v390 = vld [vmem:[%s264 + $0x17c] sm:$0xf]
      %v391 = vld [vmem:[%s264 + $0x180] sm:$0xf]
      %v392 = vld [vmem:[%s264 + $0x184] sm:$0xf]
      %v393 = vld [vmem:[%s264 + $0x188] sm:$0xf]
      %v394 = vld [vmem:[%s264 + $0x18c] sm:$0xf]
      %v395 = vld [vmem:[%s264 + $0x190] sm:$0xf]
      %v396 = vld [vmem:[%s264 + $0x194] sm:$0xf]
      %v397 = vld [vmem:[%s264 + $0x198] sm:$0xf]
      %v398 = vld [vmem:[%s264 + $0x19c] sm:$0xf]
      %v399 = vld [vmem:[%s264 + $0x1a0] sm:$0xf]
      %v400 = vld [vmem:[%s264 + $0x1a4] sm:$0xf]
      %v401 = vld [vmem:[%s264 + $0x1a8] sm:$0xf]
      %v402 = vld [vmem:[%s264 + $0x1ac] sm:$0xf]
      %v403 = vld [vmem:[%s264 + $0x1b0] sm:$0xf]
      %v404 = vld [vmem:[%s264 + $0x1b4] sm:$0xf]
      %v405 = vld [vmem:[%s264 + $0x1b8] sm:$0xf]
      %v406 = vld [vmem:[%s264 + $0x1bc] sm:$0xf]
      %v407 = vld [vmem:[%s264 + $0x1c0] sm:$0xf]
      %v408 = vld [vmem:[%s264 + $0x1c4] sm:$0xf]
      %v409 = vld [vmem:[%s264 + $0x1c8] sm:$0xf]
      %v410 = vld [vmem:[%s264 + $0x1cc] sm:$0xf]
      %v411 = vld [vmem:[%s264 + $0x1d0] sm:$0xf]
      %v412 = vld [vmem:[%s264 + $0x1d4] sm:$0xf]
      %v413 = vld [vmem:[%s264 + $0x1d8] sm:$0xf]
      %v414 = vld [vmem:[%s264 + $0x1dc] sm:$0xf]
      %v415 = vld [vmem:[%s264 + $0x1e0] sm:$0xf]
      %v416 = vld [vmem:[%s264 + $0x1e4] sm:$0xf]
      %v417 = vld [vmem:[%s264 + $0x1e8] sm:$0xf]
      %v418 = vld [vmem:[%s264 + $0x1ec] sm:$0xf]
      %v419 = vld [vmem:[%s264 + $0x1f0] sm:$0xf]
      %v420 = vld [vmem:[%s264 + $0x1f4] sm:$0xf]
      %v421 = vld [vmem:[%s264 + $0x1f8] sm:$0xf]
      %v422 = vld [vmem:[%s264 + $0x1fc] sm:$0xf]
      %v423 = vld [vmem:[%s264 + $0x200] sm:$0xf]
      %v424 = vld [vmem:[%s264 + $0x204] sm:$0xf]
      %v425 = vld [vmem:[%s264 + $0x208] sm:$0xf]
      %v426 = vld [vmem:[%s264 + $0x20c] sm:$0xf]
      %v427 = vld [vmem:[%s264 + $0x210] sm:$0xf]
      %v428 = vld [vmem:[%s264 + $0x214] sm:$0xf]
      %v429 = vld [vmem:[%s264 + $0x218] sm:$0xf]
      %v430 = vld [vmem:[%s264 + $0x21c] sm:$0xf]
      %v431 = vld [vmem:[%s264 + $0x220] sm:$0xf]
      %v432 = vld [vmem:[%s264 + $0x224] sm:$0xf]
      %v433 = vld [vmem:[%s264 + $0x228] sm:$0xf]
      %v434 = vld [vmem:[%s264 + $0x22c] sm:$0xf]
      %v435 = vld [vmem:[%s264 + $0x230] sm:$0xf]
      %v436 = vld [vmem:[%s264 + $0x234] sm:$0xf]
      %v437 = vld [vmem:[%s264 + $0x238] sm:$0xf]
      %v438 = vld [vmem:[%s264 + $0x23c] sm:$0xf]
      %v439 = vld [vmem:[%s270] sm:$0x1]
      %v441 = vlaneseq
      %v442 = vshrl.u32 %v441, 7
      %v443 = vsub.s32 0, %v442
      %v444 = vrot.slane %v439, %v443
      %v456 = vunpack.c.l.b16 %v285
      %v457 = vunpack.c.h.b16 %v285
      %v458 = vunpack.c.l.b16 %v286
      %v459 = vunpack.c.h.b16 %v286
      %v460 = vunpack.c.l.b16 %v287
      %v461 = vunpack.c.h.b16 %v287
      %v462 = vunpack.c.l.b16 %v288
      %v463 = vunpack.c.h.b16 %v288
      %v464 = vunpack.c.l.b16 %v289
      %v465 = vunpack.c.l.b16 %v290
      %v466 = vunpack.c.h.b16 %v290
      %v467 = vunpack.c.l.b16 %v291
      %v468 = vunpack.c.h.b16 %v291
      %v469 = vunpack.c.l.b16 %v292
      %v470 = vunpack.c.h.b16 %v292
      %v471 = vunpack.c.l.b16 %v293
      %v472 = vunpack.c.h.b16 %v293
      %v473 = vunpack.c.l.b16 %v294
      %v474 = vpack.c.b16 %v465, %v456
      %v475 = vpack.c.b16 %v466, %v457
      %v476 = vpack.c.b16 %v467, %v458
      %v477 = vpack.c.b16 %v468, %v459
      %v478 = vpack.c.b16 %v469, %v460
      %v479 = vpack.c.b16 %v470, %v461
      %v480 = vpack.c.b16 %v471, %v462
      %v481 = vpack.c.b16 %v472, %v463
      %v482 = vpack.c.b16 %v473, %v464
      %v636 = vunpack.c.l.b16 %v295
      %v637 = vunpack.c.l.b16 %v296
      %v638 = vunpack.c.l.b16 %v297
      %v639 = vunpack.c.l.b16 %v298
      %v640 = vunpack.c.l.b16 %v299
      %v641 = vunpack.c.l.b16 %v300
      %v642 = vunpack.c.l.b16 %v301
      %v643 = vunpack.c.l.b16 %v302
      %v644 = vunpack.c.l.b16 %v303
      %v645 = vunpack.c.l.b16 %v304
      %v646 = vunpack.c.l.b16 %v305
      %v647 = vunpack.c.l.b16 %v306
      %v648 = vunpack.c.l.b16 %v307
      %v649 = vunpack.c.l.b16 %v308
      %v650 = vunpack.c.l.b16 %v309
      %v651 = vunpack.c.l.b16 %v310
      %v652 = vunpack.c.l.b16 %v311
      %v653 = vunpack.c.l.b16 %v312
      %v654 = vunpack.c.l.b16 %v313
      %v655 = vunpack.c.l.b16 %v314
      %v656 = vunpack.c.l.b16 %v315
      %v657 = vunpack.c.l.b16 %v316
      %v658 = vunpack.c.l.b16 %v317
      %v659 = vunpack.c.l.b16 %v318
      %v660 = vunpack.c.l.b16 %v319
      %v661 = vunpack.c.l.b16 %v320
      %v662 = vunpack.c.l.b16 %v321
      %v663 = vunpack.c.l.b16 %v322
      %v664 = vunpack.c.l.b16 %v323
      %v665 = vunpack.c.l.b16 %v324
      %v666 = vunpack.c.l.b16 %v325
      %v667 = vunpack.c.l.b16 %v326
      %v668 = vunpack.c.l.b16 %v327
      %v669 = vunpack.c.l.b16 %v328
      %v670 = vunpack.c.l.b16 %v329
      %v671 = vunpack.c.l.b16 %v330
      %v672 = vunpack.c.l.b16 %v331
      %v673 = vunpack.c.l.b16 %v332
      %v674 = vunpack.c.l.b16 %v333
      %v675 = vunpack.c.l.b16 %v334
      %v676 = vunpack.c.l.b16 %v335
      %v677 = vunpack.c.l.b16 %v336
      %v678 = vunpack.c.l.b16 %v337
      %v679 = vunpack.c.l.b16 %v338
      %v680 = vunpack.c.l.b16 %v339
      %v681 = vunpack.c.l.b16 %v340
      %v682 = vunpack.c.l.b16 %v341
      %v683 = vunpack.c.l.b16 %v342
      %v684 = vunpack.c.l.b16 %v343
      %v685 = vunpack.c.l.b16 %v344
      %v686 = vunpack.c.l.b16 %v345
      %v687 = vunpack.c.l.b16 %v346
      %v688 = vunpack.c.l.b16 %v347
      %v689 = vunpack.c.l.b16 %v348
      %v690 = vunpack.c.l.b16 %v349
      %v691 = vunpack.c.l.b16 %v350
      %v692 = vunpack.c.l.b16 %v351
      %v693 = vunpack.c.l.b16 %v352
      %v694 = vunpack.c.l.b16 %v353
      %v695 = vunpack.c.l.b16 %v354
      %v696 = vunpack.c.l.b16 %v355
      %v697 = vunpack.c.l.b16 %v356
      %v698 = vunpack.c.l.b16 %v357
      %v699 = vunpack.c.l.b16 %v358
      %v700 = vunpack.c.l.b16 %v359
      %v701 = vunpack.c.l.b16 %v360
      %v702 = vunpack.c.l.b16 %v361
      %v703 = vunpack.c.l.b16 %v362
      %v704 = vunpack.c.l.b16 %v363
      %v705 = vunpack.c.l.b16 %v364
      %v706 = vunpack.c.l.b16 %v365
      %v707 = vunpack.c.l.b16 %v366
      %v708 = vunpack.c.l.b16 %v367
      %v709 = vunpack.c.l.b16 %v368
      %v710 = vunpack.c.l.b16 %v369
      %v711 = vunpack.c.l.b16 %v370
      %v712 = vunpack.c.l.b16 %v371
      %v713 = vunpack.c.l.b16 %v372
      %v714 = vunpack.c.l.b16 %v373
      %v715 = vunpack.c.l.b16 %v374
      %v716 = vunpack.c.l.b16 %v375
      %v717 = vunpack.c.l.b16 %v376
      %v718 = vunpack.c.l.b16 %v377
      %v719 = vunpack.c.l.b16 %v378
      %v720 = vunpack.c.l.b16 %v379
      %v721 = vunpack.c.l.b16 %v380
      %v722 = vunpack.c.l.b16 %v381
      %v723 = vunpack.c.l.b16 %v382
      %v724 = vunpack.c.l.b16 %v383
      %v725 = vunpack.c.l.b16 %v384
      %v726 = vunpack.c.l.b16 %v385
      %v727 = vunpack.c.l.b16 %v386
      %v728 = vunpack.c.l.b16 %v387
      %v729 = vunpack.c.l.b16 %v388
      %v730 = vunpack.c.l.b16 %v389
      %v731 = vunpack.c.l.b16 %v390
      %v732 = vunpack.c.l.b16 %v391
      %v733 = vunpack.c.l.b16 %v392
      %v734 = vunpack.c.l.b16 %v393
      %v735 = vunpack.c.l.b16 %v394
      %v736 = vunpack.c.l.b16 %v395
      %v737 = vunpack.c.l.b16 %v396
      %v738 = vunpack.c.l.b16 %v397
      %v739 = vunpack.c.l.b16 %v398
      %v740 = vunpack.c.l.b16 %v399
      %v741 = vunpack.c.l.b16 %v400
      %v742 = vunpack.c.l.b16 %v401
      %v743 = vunpack.c.l.b16 %v402
      %v744 = vunpack.c.l.b16 %v403
      %v745 = vunpack.c.l.b16 %v404
      %v746 = vunpack.c.l.b16 %v405
      %v747 = vunpack.c.l.b16 %v406
      %v748 = vunpack.c.l.b16 %v407
      %v749 = vunpack.c.l.b16 %v408
      %v750 = vunpack.c.l.b16 %v409
      %v751 = vunpack.c.l.b16 %v410
      %v752 = vunpack.c.l.b16 %v411
      %v753 = vunpack.c.l.b16 %v412
      %v754 = vunpack.c.l.b16 %v413
      %v755 = vunpack.c.l.b16 %v414
      %v756 = vunpack.c.l.b16 %v415
      %v757 = vunpack.c.l.b16 %v416
      %v758 = vunpack.c.l.b16 %v417
      %v759 = vunpack.c.l.b16 %v418
      %v760 = vunpack.c.l.b16 %v419
      %v761 = vunpack.c.l.b16 %v420
      %v762 = vunpack.c.l.b16 %v421
      %v763 = vunpack.c.l.b16 %v422
      %v764 = vunpack.c.l.b16 %v423
      %v765 = vunpack.c.l.b16 %v424
      %v766 = vunpack.c.l.b16 %v425
      %v767 = vunpack.c.l.b16 %v426
      %v768 = vunpack.c.l.b16 %v427
      %v769 = vunpack.c.l.b16 %v428
      %v770 = vunpack.c.l.b16 %v429
      %v771 = vunpack.c.l.b16 %v430
      %v772 = vunpack.c.l.b16 %v431
      %v773 = vunpack.c.l.b16 %v432
      %v774 = vunpack.c.l.b16 %v433
      %v775 = vunpack.c.l.b16 %v434
      %v776 = vunpack.c.l.b16 %v435
      %v777 = vunpack.c.l.b16 %v436
      %v778 = vunpack.c.l.b16 %v437
      %v779 = vunpack.c.l.b16 %v438
      %v780 = vpack.c.b16 %v637, %v636
      %v781 = vpack.c.b16 %v639, %v638
      %v782 = vpack.c.b16 %v641, %v640
      %v783 = vpack.c.b16 %v643, %v642
      %v784 = vpack.c.b16 %v645, %v644
      %v785 = vpack.c.b16 %v647, %v646
      %v786 = vpack.c.b16 %v649, %v648
      %v787 = vpack.c.b16 %v651, %v650
      %v788 = vpack.c.b16 %v653, %v652
      %v789 = vpack.c.b16 %v655, %v654
      %v790 = vpack.c.b16 %v657, %v656
      %v791 = vpack.c.b16 %v659, %v658
      %v792 = vpack.c.b16 %v661, %v660
      %v793 = vpack.c.b16 %v663, %v662
      %v794 = vpack.c.b16 %v665, %v664
      %v795 = vpack.c.b16 %v667, %v666
      %v796 = vpack.c.b16 %v669, %v668
      %v797 = vpack.c.b16 %v671, %v670
      %v798 = vpack.c.b16 %v673, %v672
      %v799 = vpack.c.b16 %v675, %v674
      %v800 = vpack.c.b16 %v677, %v676
      %v801 = vpack.c.b16 %v679, %v678
      %v802 = vpack.c.b16 %v681, %v680
      %v803 = vpack.c.b16 %v683, %v682
      %v804 = vpack.c.b16 %v685, %v684
      %v805 = vpack.c.b16 %v687, %v686
      %v806 = vpack.c.b16 %v689, %v688
      %v807 = vpack.c.b16 %v691, %v690
      %v808 = vpack.c.b16 %v693, %v692
      %v809 = vpack.c.b16 %v695, %v694
      %v810 = vpack.c.b16 %v697, %v696
      %v811 = vpack.c.b16 %v699, %v698
      %v812 = vpack.c.b16 %v701, %v700
      %v813 = vpack.c.b16 %v703, %v702
      %v814 = vpack.c.b16 %v705, %v704
      %v815 = vpack.c.b16 %v707, %v706
      %v816 = vpack.c.b16 %v709, %v708
      %v817 = vpack.c.b16 %v711, %v710
      %v818 = vpack.c.b16 %v713, %v712
      %v819 = vpack.c.b16 %v715, %v714
      %v820 = vpack.c.b16 %v717, %v716
      %v821 = vpack.c.b16 %v719, %v718
      %v822 = vpack.c.b16 %v721, %v720
      %v823 = vpack.c.b16 %v723, %v722
      %v824 = vpack.c.b16 %v725, %v724
      %v825 = vpack.c.b16 %v727, %v726
      %v826 = vpack.c.b16 %v729, %v728
      %v827 = vpack.c.b16 %v731, %v730
      %v828 = vpack.c.b16 %v733, %v732
      %v829 = vpack.c.b16 %v735, %v734
      %v830 = vpack.c.b16 %v737, %v736
      %v831 = vpack.c.b16 %v739, %v738
      %v832 = vpack.c.b16 %v741, %v740
      %v833 = vpack.c.b16 %v743, %v742
      %v834 = vpack.c.b16 %v745, %v744
      %v835 = vpack.c.b16 %v747, %v746
      %v836 = vpack.c.b16 %v749, %v748
      %v837 = vpack.c.b16 %v751, %v750
      %v838 = vpack.c.b16 %v753, %v752
      %v839 = vpack.c.b16 %v755, %v754
      %v840 = vpack.c.b16 %v757, %v756
      %v841 = vpack.c.b16 %v759, %v758
      %v842 = vpack.c.b16 %v761, %v760
      %v843 = vpack.c.b16 %v763, %v762
      %v844 = vpack.c.b16 %v765, %v764
      %v845 = vpack.c.b16 %v767, %v766
      %v846 = vpack.c.b16 %v769, %v768
      %v847 = vpack.c.b16 %v771, %v770
      %v848 = vpack.c.b16 %v773, %v772
      %v849 = vpack.c.b16 %v775, %v774
      %v850 = vpack.c.b16 %v777, %v776
      %v851 = vpack.c.b16 %v779, %v778
      %924 = vmatprep.subr.bf16.mxu0 0
      %925 = vmatpush1.bf16.msra.mxu0 %v780
      %926 = vmatprep.subr.bf16.mxu0 0
      %927 = vmatpush1.bf16.msra.mxu0 %v781
      %928 = vmatprep.subr.bf16.mxu0 0
      %929 = vmatpush1.bf16.msra.mxu0 %v782
      %930 = vmatprep.subr.bf16.mxu0 0
      %931 = vmatpush1.bf16.msra.mxu0 %v783
      %932 = vmatprep.subr.bf16.mxu0 0
      %933 = vmatpush1.bf16.msra.mxu0 %v784
      %934 = vmatprep.subr.bf16.mxu0 0
      %935 = vmatpush1.bf16.msra.mxu0 %v785
      %936 = vmatprep.subr.bf16.mxu0 0
      %937 = vmatpush1.bf16.msra.mxu0 %v786
      %938 = vmatprep.subr.bf16.mxu0 0
      %939 = vmatpush1.bf16.msra.mxu0 %v787
      %940 = vmatprep.subr.bf16.mxu0 0
      %941 = vmatpush1.bf16.msra.mxu0 %v788
      %942 = vmatprep.subr.bf16.mxu0 0
      %943 = vmatpush1.bf16.msra.mxu0 %v789
      %944 = vmatprep.subr.bf16.mxu0 0
      %945 = vmatpush1.bf16.msra.mxu0 %v790
      %946 = vmatprep.subr.bf16.mxu0 0
      %947 = vmatpush1.bf16.msra.mxu0 %v791
      %948 = vmatprep.subr.bf16.mxu0 0
      %949 = vmatpush1.bf16.msra.mxu0 %v792
      %950 = vmatprep.subr.bf16.mxu0 0
      %951 = vmatpush1.bf16.msra.mxu0 %v793
      %952 = vmatprep.subr.bf16.mxu0 0
      %953 = vmatpush1.bf16.msra.mxu0 %v794
      %954 = vmatprep.subr.bf16.mxu0 0
      %955 = vmatpush1.bf16.msra.mxu0 %v795
      %956 = vmatprep.mubr.bf16.mxu0 %v475
      %957 = vmatmul.mubr.bf16.gmra.mrb[0].mxu0 %v474
      %v958 = vpop.f32.mrb[0].mxu0
      %v959 = vadd.f32 %v444, %v958
      %v960 = vpop.f32.mrb[0].mxu0
      %v961 = vpop.f32.mrb[0].mxu0
      %v962 = vadd.f32 %v444, %v961
      %v963 = vpop.f32.mrb[0].mxu0
      %964 = vdwg.mxu0
      %965 = vmatprep.subr.bf16.mxu0 0
      %966 = vmatpush1.bf16.msra.mxu0 %v796
      %967 = vmatprep.subr.bf16.mxu0 0
      %968 = vmatpush1.bf16.msra.mxu0 %v797
      %969 = vmatprep.subr.bf16.mxu0 0
      %970 = vmatpush1.bf16.msra.mxu0 %v798
      %971 = vmatprep.subr.bf16.mxu0 0
      %972 = vmatpush1.bf16.msra.mxu0 %v799
      %973 = vmatprep.subr.bf16.mxu0 0
      %974 = vmatpush1.bf16.msra.mxu0 %v800
      %975 = vmatprep.subr.bf16.mxu0 0
      %976 = vmatpush1.bf16.msra.mxu0 %v801
      %977 = vmatprep.subr.bf16.mxu0 0
      %978 = vmatpush1.bf16.msra.mxu0 %v802
      %979 = vmatprep.subr.bf16.mxu0 0
      %980 = vmatpush1.bf16.msra.mxu0 %v803
      %981 = vmatprep.subr.bf16.mxu0 0
      %982 = vmatpush1.bf16.msra.mxu0 %v804
      %983 = vmatprep.subr.bf16.mxu0 0
      %984 = vmatpush1.bf16.msra.mxu0 %v805
      %985 = vmatprep.subr.bf16.mxu0 0
      %986 = vmatpush1.bf16.msra.mxu0 %v806
      %987 = vmatprep.subr.bf16.mxu0 0
      %988 = vmatpush1.bf16.msra.mxu0 %v807
      %989 = vmatprep.subr.bf16.mxu0 0
      %990 = vmatpush1.bf16.msra.mxu0 %v808
      %991 = vmatprep.subr.bf16.mxu0 0
      %992 = vmatpush1.bf16.msra.mxu0 %v809
      %993 = vmatprep.subr.bf16.mxu0 0
      %994 = vmatpush1.bf16.msra.mxu0 %v810
      %995 = vmatprep.subr.bf16.mxu0 0
      %996 = vmatpush1.bf16.msra.mxu0 %v811
      %997 = vmatprep.mubr.bf16.mxu0 %v477
      %998 = vmatmul.mubr.bf16.gmra.mrb[0].mxu0 %v476
      %v999 = vpop.f32.mrb[0].mxu0
      %v1000 = vadd.f32 %v959, %v999
      %v1001 = vpop.f32.mrb[0].mxu0
      %v1002 = vpop.f32.mrb[0].mxu0
      %v1003 = vadd.f32 %v962, %v1002
      %v1004 = vpop.f32.mrb[0].mxu0
      %1005 = vdwg.mxu0
      %1006 = vmatprep.subr.bf16.mxu0 0
      %1007 = vmatpush1.bf16.msra.mxu0 %v812
      %1008 = vmatprep.subr.bf16.mxu0 0
      %1009 = vmatpush1.bf16.msra.mxu0 %v813
      %1010 = vmatprep.subr.bf16.mxu0 0
      %1011 = vmatpush1.bf16.msra.mxu0 %v814
      %1012 = vmatprep.subr.bf16.mxu0 0
      %1013 = vmatpush1.bf16.msra.mxu0 %v815
      %1014 = vmatprep.subr.bf16.mxu0 0
      %1015 = vmatpush1.bf16.msra.mxu0 %v816
      %1016 = vmatprep.subr.bf16.mxu0 0
      %1017 = vmatpush1.bf16.msra.mxu0 %v817
      %1018 = vmatprep.subr.bf16.mxu0 0
      %1019 = vmatpush1.bf16.msra.mxu0 %v818
      %1020 = vmatprep.subr.bf16.mxu0 0
      %1021 = vmatpush1.bf16.msra.mxu0 %v819
      %1022 = vmatprep.subr.bf16.mxu0 0
      %1023 = vmatpush1.bf16.msra.mxu0 %v820
      %1024 = vmatprep.subr.bf16.mxu0 0
      %1025 = vmatpush1.bf16.msra.mxu0 %v821
      %1026 = vmatprep.subr.bf16.mxu0 0
      %1027 = vmatpush1.bf16.msra.mxu0 %v822
      %1028 = vmatprep.subr.bf16.mxu0 0
      %1029 = vmatpush1.bf16.msra.mxu0 %v823
      %1030 = vmatprep.subr.bf16.mxu0 0
      %1031 = vmatpush1.bf16.msra.mxu0 %v824
      %1032 = vmatprep.subr.bf16.mxu0 0
      %1033 = vmatpush1.bf16.msra.mxu0 %v825
      %1034 = vmatprep.subr.bf16.mxu0 0
      %1035 = vmatpush1.bf16.msra.mxu0 %v826
      %1036 = vmatprep.subr.bf16.mxu0 0
      %1037 = vmatpush1.bf16.msra.mxu0 %v827
      %1038 = vmatprep.mubr.bf16.mxu0 %v479
      %1039 = vmatmul.mubr.bf16.gmra.mrb[0].mxu0 %v478
      %v1040 = vpop.f32.mrb[0].mxu0
      %v1041 = vadd.f32 %v1000, %v1040
      %v1042 = vpop.f32.mrb[0].mxu0
      %v1043 = vpop.f32.mrb[0].mxu0
      %v1044 = vadd.f32 %v1003, %v1043
      %v1045 = vpop.f32.mrb[0].mxu0
      %1046 = vdwg.mxu0
      %1047 = vmatprep.subr.bf16.mxu0 0
      %1048 = vmatpush1.bf16.msra.mxu0 %v828
      %1049 = vmatprep.subr.bf16.mxu0 0
      %1050 = vmatpush1.bf16.msra.mxu0 %v829
      %1051 = vmatprep.subr.bf16.mxu0 0
      %1052 = vmatpush1.bf16.msra.mxu0 %v830
      %1053 = vmatprep.subr.bf16.mxu0 0
      %1054 = vmatpush1.bf16.msra.mxu0 %v831
      %1055 = vmatprep.subr.bf16.mxu0 0
      %1056 = vmatpush1.bf16.msra.mxu0 %v832
      %1057 = vmatprep.subr.bf16.mxu0 0
      %1058 = vmatpush1.bf16.msra.mxu0 %v833
      %1059 = vmatprep.subr.bf16.mxu0 0
      %1060 = vmatpush1.bf16.msra.mxu0 %v834
      %1061 = vmatprep.subr.bf16.mxu0 0
      %1062 = vmatpush1.bf16.msra.mxu0 %v835
      %1063 = vmatprep.subr.bf16.mxu0 0
      %1064 = vmatpush1.bf16.msra.mxu0 %v836
      %1065 = vmatprep.subr.bf16.mxu0 0
      %1066 = vmatpush1.bf16.msra.mxu0 %v837
      %1067 = vmatprep.subr.bf16.mxu0 0
      %1068 = vmatpush1.bf16.msra.mxu0 %v838
      %1069 = vmatprep.subr.bf16.mxu0 0
      %1070 = vmatpush1.bf16.msra.mxu0 %v839
      %1071 = vmatprep.subr.bf16.mxu0 0
      %1072 = vmatpush1.bf16.msra.mxu0 %v840
      %1073 = vmatprep.subr.bf16.mxu0 0
      %1074 = vmatpush1.bf16.msra.mxu0 %v841
      %1075 = vmatprep.subr.bf16.mxu0 0
      %1076 = vmatpush1.bf16.msra.mxu0 %v842
      %1077 = vmatprep.subr.bf16.mxu0 0
      %1078 = vmatpush1.bf16.msra.mxu0 %v843
      %1079 = vmatprep.mubr.bf16.mxu0 %v481
      %1080 = vmatmul.mubr.bf16.gmra.mrb[0].mxu0 %v480
      %v1081 = vpop.f32.mrb[0].mxu0
      %v1082 = vadd.f32 %v1041, %v1081
      %v1083 = vpop.f32.mrb[0].mxu0
      %v1084 = vpop.f32.mrb[0].mxu0
      %v1085 = vadd.f32 %v1044, %v1084
      %v1086 = vpop.f32.mrb[0].mxu0
      %1087 = vdwg.mxu0
      %1088 = vmatprep.subr.bf16.mxu0 0
      %1089 = vmatpush1.bf16.msra.mxu0 %v844
      %1090 = vmatprep.subr.bf16.mxu0 0
      %1091 = vmatpush1.bf16.msra.mxu0 %v845
      %1092 = vmatprep.subr.bf16.mxu0 0
      %1093 = vmatpush1.bf16.msra.mxu0 %v846
      %1094 = vmatprep.subr.bf16.mxu0 0
      %1095 = vmatpush1.bf16.msra.mxu0 %v847
      %1096 = vmatprep.subr.bf16.mxu0 0
      %1097 = vmatpush1.bf16.msra.mxu0 %v848
      %1098 = vmatprep.subr.bf16.mxu0 0
      %1099 = vmatpush1.bf16.msra.mxu0 %v849
      %1100 = vmatprep.subr.bf16.mxu0 0
      %1101 = vmatpush1.bf16.msra.mxu0 %v850
      %1102 = vmatprep.subr.bf16.mxu0 0
      %1103 = vmatpush1.bf16.msra.mxu0 %v851
      %1104 = vmatprep.subr.bf16.mxu0 0
      %1105 = vmatpush1.bf16.msra.mxu0 0
      %1106 = vmatprep.subr.bf16.mxu0 0
      %1107 = vmatpush1.bf16.msra.mxu0 0
      %1108 = vmatprep.subr.bf16.mxu0 0
      %1109 = vmatpush1.bf16.msra.mxu0 0
      %1110 = vmatprep.subr.bf16.mxu0 0
      %1111 = vmatpush1.bf16.msra.mxu0 0
      %1112 = vmatprep.subr.bf16.mxu0 0
      %1113 = vmatpush1.bf16.msra.mxu0 0
      %1114 = vmatprep.subr.bf16.mxu0 0
      %1115 = vmatpush1.bf16.msra.mxu0 0
      %1116 = vmatprep.subr.bf16.mxu0 0
      %1117 = vmatpush1.bf16.msra.mxu0 0
      %1118 = vmatprep.subr.bf16.mxu0 0
      %1119 = vmatpush1.bf16.msra.mxu0 0
      %1120 = vmatprep.mubr.bf16.mxu0 0
      %1121 = vmatmul.mubr.bf16.gmra.mrb[0].mxu0 %v482
      %v1122 = vpop.f32.mrb[0].mxu0
      %v1123 = vadd.f32 %v1082, %v1122
      %v1124 = vpop.f32.mrb[0].mxu0
      %v1125 = vpop.f32.mrb[0].mxu0
      %v1126 = vadd.f32 %v1085, %v1125
      %v1127 = vpop.f32.mrb[0].mxu0
      %1128 = vdwg.mxu0
      %1129 = vst [vmem:[%s282] sm:$0xff] %v1123
      %1130 = vst [vmem:[%s282 + $0x8] sm:$0xff] %v1126
      %s1131 = smul.u32 2, %s20
      %p1132 = scmp.lt.s32.totalorder %s19, 1
      %s1133 = scalar_select %p1132, %s19, 1
      %p1134 = scmp.lt.s32.totalorder %s1131, 1
      %s1135 = scalar_select %p1134, %s1131, 1
      %p1136 = scmp.lt.s32.totalorder %s21, 0
      %s1137 = scalar_select %p1136, %s21, 0
      %s1138 = sadd.s32 %s1137, %s1135
      %s1139 = smul.addr %s1133, 2
      %s1140 = sadd.s32 %s1138, %s1139
      %s1141 = smul.addr %s1140, 8
      %s1142 = scalar_lea.vmem %s3, %s1141
      // Predicated region
      $region33: #{_lambda_.16} parent=31 // pred_check
        %p1143 = pneg %p139
      $region34: #{_lambda_.16} parent=31 // pred_check_branch
        %1145 = sbr.rel (%p1143) target = $region36
      $region35: #{_lambda_.16} parent=31 // pred_region
        %s1146 = smul.u32 2, %s20
      $region36: #{_lambda_.16} parent=31 // pred_fallthru
        _
    $region32: #{_lambda_.16} parent=5 // pred_fallthru
      _
    %p1147 = scmp.le.s32.totalorder 2, %s9
    // Predicated region
    $region37: #{_lambda_.16} parent=5 // pred_check
      %p1148 = pneg %p1147
    $region38: #{_lambda_.16} parent=5 // pred_check_branch
      %1150 = sbr.rel (%p1148) target = $region40
    $region39: #{_lambda_.16} parent=5 // pred_region
      %s1151 = ssub.s32 %s9, 2
      // Predicated region
      $region41: #{_lambda_.16} parent=39 // pred_check
        %p1152 = pneg %p145
      $region42: #{_lambda_.16} parent=39 // pred_check_branch
        %1154 = sbr.rel (%p1152) target = $region44
      $region43: #{_lambda_.16} parent=39 // pred_region
        %s1155 = smul.u32 2, %s23
        %p1156 = scmp.lt.s32.totalorder %s22, 1
        %s1157 = scalar_select %p1156, %s22, 1
        %p1158 = scmp.lt.s32.totalorder %s1155, 1
        %s1159 = scalar_select %p1158, %s1155, 1
        %p1160 = scmp.lt.s32.totalorder %s24, 0
        %s1161 = scalar_select %p1160, %s24, 0
        %s1162 = sadd.s32 %s1161, %s1159
        %s1163 = smul.addr %s1157, 2
        %s1164 = sadd.s32 %s1162, %s1163
        %s1165 = smul.addr %s1164, 8
        %s1166 = scalar_lea.vmem %s3, %s1165
      $region44: #{_lambda_.16} parent=39 // pred_fallthru
        _
    $region40: #{_lambda_.16} parent=5 // pred_fallthru
      _
  $region6: #{_lambda_.16} parent=0 // loop_footer
    %s13 = sadd.s32 1, %s9
  $region7: #{_lambda_.16} parent=0 // loop_footer_branch
    %8 = sbr.rel target = $region3
  $region8: #{_lambda_.16} parent=0 // loop_exit
    _

// kernel: _lambda_.17
$region0: #{_lambda_.17}
  #allocation0 [shape = 'u32[]', space=smem, size = 0x4, offset = 0x4, fixed_abs, tag = 'smem constant byte address 0x4 - core index']
  #allocation1 [shape = 'u32[144,128]{1,0:T(1,128)}', space=vmem, size = 0x12000, scoped, tag = 'internal scratch']
  %s0 = inlined_call_operand.vmem [shape: bf16[2,32,640], index: 0, kind: input, shape index: {}]
  %s1 = inlined_call_operand.vmem [shape: bf16[2,640,128], index: 1, kind: input, shape index: {}]
  %s2 = inlined_call_operand.vmem [shape: f32[2,1,128], index: 2, kind: input, shape index: {}]
  %s3 = inlined_call_operand.vmem [shape: f32[2,32,128], index: 3, kind: output, shape index: {}]
  %s4 = sld [smem:[#allocation0]]
  $region45: #{_lambda_.17} parent=0
    _
  %s6 = ssub.s32 1, %s4
  %s7 = scalar_select 0, %s6, %s4
  loop: start=0, step=1, limit=4
  $region2: #{_lambda_.17} parent=0 // loop_pre_header
    _
  $region3: #{_lambda_.17} parent=0 // loop_header
    %s9 = sphi 0, %s13
    %p10 = scmp.ge.s32.totalorder %s9, 4
    %s16 = sphi 0, %s35
    %s17 = sphi 0, %s31
    %s18 = sphi 0, %s27
    %s19 = sphi 0, %s16
    %s20 = sphi 0, %s17
    %s21 = sphi 0, %s18
    %s22 = sphi 0, %s19
    %s23 = sphi 0, %s20
    %s24 = sphi 0, %s21
    %s40 = sphi 0, %s42
    %s43 = sphi 0, %s40
    %s44 = sphi 0, %s43
    %s60 = sphi 0, %s44
    %s68 = sphi 0, %s70
    %s71 = sphi 0, %s68
    %s72 = sphi 0, %s71
    %s88 = sphi 0, %s72
    %s96 = sphi 0, %s98
    %s99 = sphi 0, %s96
    %s100 = sphi 0, %s99
    %s116 = sphi 0, %s100
    %s126 = sphi 0, %s128
    %s129 = sphi 0, %s126
    %s130 = sphi 0, %s129
    %s146 = sphi 0, %s130
  $region4: #{_lambda_.17} parent=0 // loop_header_branch
    %12 = sbr.rel (%p10) target = $region8
  $region5: #{_lambda_.17} parent=0 // loop_body
    %s14 = ssub.s32 %s9, 1
    %s15 = ssub.s32 %s9, 2
    %s25 = sadd.s32 1, %s18
    %p26 = scmp.ge.s32.totalorder %s25, 1
    %s27 = scalar_select %p26, 0, %s25
    %s28 = sadd.s32 1, %s17
    %s29 = scalar_select %p26, %s28, %s17
    %p30 = scmp.ge.s32.totalorder %s29, 1
    %s31 = scalar_select %p30, 0, %s29
    %s32 = sadd.s32 1, %s16
    %s33 = scalar_select %p30, %s32, %s16
    %p34 = scmp.ge.s32.totalorder %s33, 2
    %s35 = scalar_select %p34, 0, %s33
    %s36 = ssub.s32 %s16, %s35
    %s37 = ssub.s32 %s17, %s31
    %s38 = sor.u32 %s36, %s37
    %p39 = scmp.eq.s32.totalorder %s38, 0
    %s41 = sadd.s32 %s40, 1
    %s42 = scalar_select %p39, %s40, %s41
    %p45 = pneg %p39
    %p46 = scmp.eq.s32.totalorder %s9, 1
    %p47 = por %p45, %p46
    %p48 = scmp.ne.s32.totalorder %s40, %s43
    %p49 = scmp.eq.s32.totalorder %s9, 0
    %p50 = por %p48, %p49
    %p51 = scmp.ne.s32.totalorder %s40, %s43
    %p52 = scmp.eq.s32.totalorder %s14, 1
    %p53 = por %p51, %p52
    %p54 = scmp.ne.s32.totalorder %s43, %s44
    %p55 = scmp.eq.s32.totalorder %s14, 0
    %p56 = por %p54, %p55
    %p57 = scmp.ne.s32.totalorder %s43, %s44
    %p58 = scmp.eq.s32.totalorder %s15, 1
    %p59 = por %p57, %p58
    %p61 = scmp.ne.s32.totalorder %s44, %s60
    %p62 = scmp.eq.s32.totalorder %s15, 0
    %p63 = por %p61, %p62
    %s64 = ssub.s32 %s16, %s35
    %s65 = ssub.s32 %s18, %s27
    %s66 = sor.u32 %s64, %s65
    %p67 = scmp.eq.s32.totalorder %s66, 0
    %s69 = sadd.s32 %s68, 1
    %s70 = scalar_select %p67, %s68, %s69
    %p73 = pneg %p67
    %p74 = scmp.eq.s32.totalorder %s9, 1
    %p75 = por %p73, %p74
    %p76 = scmp.ne.s32.totalorder %s68, %s71
    %p77 = scmp.eq.s32.totalorder %s9, 0
    %p78 = por %p76, %p77
    %p79 = scmp.ne.s32.totalorder %s68, %s71
    %p80 = scmp.eq.s32.totalorder %s14, 1
    %p81 = por %p79, %p80
    %p82 = scmp.ne.s32.totalorder %s71, %s72
    %p83 = scmp.eq.s32.totalorder %s14, 0
    %p84 = por %p82, %p83
    %p85 = scmp.ne.s32.totalorder %s71, %s72
    %p86 = scmp.eq.s32.totalorder %s15, 1
    %p87 = por %p85, %p86
    %p89 = scmp.ne.s32.totalorder %s72, %s88
    %p90 = scmp.eq.s32.totalorder %s15, 0
    %p91 = por %p89, %p90
    %s92 = ssub.s32 %s16, %s35
    %s93 = ssub.s32 %s18, %s27
    %s94 = sor.u32 %s92, %s93
    %p95 = scmp.eq.s32.totalorder %s94, 0
    %s97 = sadd.s32 %s96, 1
    %s98 = scalar_select %p95, %s96, %s97
    %p101 = pneg %p95
    %p102 = scmp.eq.s32.totalorder %s9, 1
    %p103 = por %p101, %p102
    %p104 = scmp.ne.s32.totalorder %s96, %s99
    %p105 = scmp.eq.s32.totalorder %s9, 0
    %p106 = por %p104, %p105
    %p107 = scmp.ne.s32.totalorder %s96, %s99
    %p108 = scmp.eq.s32.totalorder %s14, 1
    %p109 = por %p107, %p108
    %p110 = scmp.ne.s32.totalorder %s99, %s100
    %p111 = scmp.eq.s32.totalorder %s14, 0
    %p112 = por %p110, %p111
    %p113 = scmp.ne.s32.totalorder %s99, %s100
    %p114 = scmp.eq.s32.totalorder %s15, 1
    %p115 = por %p113, %p114
    %p117 = scmp.ne.s32.totalorder %s100, %s116
    %p118 = scmp.eq.s32.totalorder %s15, 0
    %p119 = por %p117, %p118
    %s120 = ssub.s32 %s16, %s35
    %s121 = ssub.s32 %s17, %s31
    %s122 = sor.u32 %s120, %s121
    %s123 = ssub.s32 %s18, %s27
    %s124 = sor.u32 %s122, %s123
    %p125 = scmp.eq.s32.totalorder %s124, 0
    %s127 = sadd.s32 %s126, 1
    %s128 = scalar_select %p125, %s126, %s127
    %p131 = pneg %p125
    %p132 = scmp.eq.s32.totalorder %s9, 1
    %p133 = por %p131, %p132
    %p134 = scmp.ne.s32.totalorder %s126, %s129
    %p135 = scmp.eq.s32.totalorder %s9, 0
    %p136 = por %p134, %p135
    %p137 = scmp.ne.s32.totalorder %s126, %s129
    %p138 = scmp.eq.s32.totalorder %s14, 1
    %p139 = por %p137, %p138
    %p140 = scmp.ne.s32.totalorder %s129, %s130
    %p141 = scmp.eq.s32.totalorder %s14, 0
    %p142 = por %p140, %p141
    %p143 = scmp.ne.s32.totalorder %s129, %s130
    %p144 = scmp.eq.s32.totalorder %s15, 1
    %p145 = por %p143, %p144
    %p147 = scmp.ne.s32.totalorder %s130, %s146
    %p148 = scmp.eq.s32.totalorder %s15, 0
    %p149 = por %p147, %p148
    %p150 = scmp.le.s32.totalorder 1, %s9
    %p151 = scmp.lt.s32.totalorder %s9, 3
    %p152 = pnand %p150, %p151
    %p153 = pneg %p152
    // Predicated region
    $region9: #{_lambda_.17} parent=5 // pred_check
      _
    $region10: #{_lambda_.17} parent=5 // pred_check_branch
      %155 = sbr.rel (%p152) target = $region12
    $region11: #{_lambda_.17} parent=5 // pred_region
      %s156 = ssub.s32 %s9, 1
    $region12: #{_lambda_.17} parent=5 // pred_fallthru
      _
    %p157 = scmp.lt.s32.totalorder %s9, 2
    // Predicated region
    $region13: #{_lambda_.17} parent=5 // pred_check
      %p158 = pneg %p157
    $region14: #{_lambda_.17} parent=5 // pred_check_branch
      %160 = sbr.rel (%p158) target = $region16
    $region15: #{_lambda_.17} parent=5 // pred_region
      // Predicated region
      $region17: #{_lambda_.17} parent=15 // pred_check
        %p161 = pneg %p50
      $region18: #{_lambda_.17} parent=15 // pred_check_branch
        %163 = sbr.rel (%p161) target = $region20
      $region19: #{_lambda_.17} parent=15 // pred_region
        %s164 = smul.u32 4, %s17
        %p165 = scmp.lt.s32.totalorder %s16, 1
        %s166 = scalar_select %p165, %s16, 1
        %p167 = scmp.lt.s32.totalorder %s164, 3
        %s168 = scalar_select %p167, %s164, 3
        %s169 = smul.addr %s168, 5
        %s170 = smul.addr %s166, 20
        %s171 = sadd.s32 %s169, %s170
        %s172 = smul.addr %s171, 4
        %s173 = scalar_lea.vmem %s0, %s172
        %s174 = smul.u32 4, %s17
      $region20: #{_lambda_.17} parent=15 // pred_fallthru
        _
      // Predicated region
      $region21: #{_lambda_.17} parent=15 // pred_check
        %p175 = pneg %p78
      $region22: #{_lambda_.17} parent=15 // pred_check_branch
        %177 = sbr.rel (%p175) target = $region24
      $region23: #{_lambda_.17} parent=15 // pred_region
        %p178 = scmp.lt.s32.totalorder %s16, 1
        %s179 = scalar_select %p178, %s16, 1
        %p180 = scmp.lt.s32.totalorder %s18, 0
        %s181 = scalar_select %p180, %s18, 0
        %s182 = smul.addr %s179, 80
        %s183 = sadd.s32 %s181, %s182
        %s184 = smul.addr %s183, 4
        %s185 = scalar_lea.vmem %s1, %s184
      $region24: #{_lambda_.17} parent=15 // pred_fallthru
        _
      // Predicated region
      $region25: #{_lambda_.17} parent=15 // pred_check
        %p186 = pneg %p106
      $region26: #{_lambda_.17} parent=15 // pred_check_branch
        %188 = sbr.rel (%p186) target = $region28
      $region27: #{_lambda_.17} parent=15 // pred_region
        %p189 = scmp.lt.s32.totalorder %s16, 1
        %s190 = scalar_select %p189, %s16, 1
        %p191 = scmp.lt.s32.totalorder %s18, 0
        %s192 = scalar_select %p191, %s18, 0
        %s193 = sadd.s32 %s192, %s190
        %s194 = scalar_lea.vmem %s2, %s193
      $region28: #{_lambda_.17} parent=15 // pred_fallthru
        _
    $region16: #{_lambda_.17} parent=5 // pred_fallthru
      _
    %p195 = scmp.le.s32.totalorder 1, %s9
    %p196 = scmp.lt.s32.totalorder %s9, 3
    %p197 = pnand %p195, %p196
    %p198 = pneg %p197
    // Predicated region
    $region29: #{_lambda_.17} parent=5 // pred_check
      _
    $region30: #{_lambda_.17} parent=5 // pred_check_branch
      %200 = sbr.rel (%p197) target = $region32
    $region31: #{_lambda_.17} parent=5 // pred_region
      %s201 = ssub.s32 %s9, 1
      %s202 = smul.u32 4, %s20
      %p203 = scmp.lt.s32.totalorder %s19, 1
      %s204 = scalar_select %p203, %s19, 1
      %p205 = scmp.lt.s32.totalorder %s202, 3
      %s206 = scalar_select %p205, %s202, 3
      %s207 = smul.addr %s206, 5
      %s208 = smul.addr %s204, 20
      %s209 = sadd.s32 %s207, %s208
      %s210 = smul.addr %s209, 4
      %s211 = scalar_lea.vmem %s0, %s210
      %p212 = pneg %p56
      %p213 = pneg %p53
      %p214 = scmp.lt.s32.totalorder %s19, 1
      %s215 = scalar_select %p214, %s19, 1
      %p216 = scmp.lt.s32.totalorder %s21, 0
      %s217 = scalar_select %p216, %s21, 0
      %s218 = smul.addr %s215, 80
      %s219 = sadd.s32 %s217, %s218
      %s220 = smul.addr %s219, 4
      %s221 = scalar_lea.vmem %s1, %s220
      %p222 = pneg %p84
      %p223 = pneg %p81
      %p224 = scmp.lt.s32.totalorder %s19, 1
      %s225 = scalar_select %p224, %s19, 1
      %p226 = scmp.lt.s32.totalorder %s21, 0
      %s227 = scalar_select %p226, %s21, 0
      %s228 = sadd.s32 %s227, %s225
      %s229 = scalar_lea.vmem %s2, %s228
      %p230 = pneg %p112
      %p231 = pneg %p109
      %p232 = pneg %p142
      %p233 = pneg %p139
      %s234 = smul.u32 4, %s20
      %p235 = scmp.lt.s32.totalorder %s19, 1
      %s236 = scalar_select %p235, %s19, 1
      %p237 = scmp.lt.s32.totalorder %s234, 3
      %s238 = scalar_select %p237, %s234, 3
      %p239 = scmp.lt.s32.totalorder %s21, 0
      %s240 = scalar_select %p239, %s21, 0
      %s241 = sadd.s32 %s240, %s238
      %s242 = smul.addr %s236, 4
      %s243 = sadd.s32 %s241, %s242
      %s244 = smul.addr %s243, 8
      %s245 = scalar_lea.vmem %s3, %s244
      %s246 = smul.u32 4, %s20
      %p247 = scmp.lt.s32.totalorder %s19, 1
      %s248 = scalar_select %p247, %s19, 1
      %p249 = scmp.lt.s32.totalorder %s246, 3
      %s250 = scalar_select %p249, %s246, 3
      %s251 = smul.addr %s250, 5
      %s252 = smul.addr %s248, 20
      %s253 = sadd.s32 %s251, %s252
      %s254 = smul.addr %s253, 4
      %s255 = scalar_lea.vmem %s0, %s254
      %s256 = smul.u32 4, %s20
      %p257 = scmp.lt.s32.totalorder %s19, 1
      %s258 = scalar_select %p257, %s19, 1
      %p259 = scmp.lt.s32.totalorder %s21, 0
      %s260 = scalar_select %p259, %s21, 0
      %s261 = smul.addr %s258, 80
      %s262 = sadd.s32 %s260, %s261
      %s263 = smul.addr %s262, 4
      %s264 = scalar_lea.vmem %s1, %s263
      %p265 = scmp.lt.s32.totalorder %s19, 1
      %s266 = scalar_select %p265, %s19, 1
      %p267 = scmp.lt.s32.totalorder %s21, 0
      %s268 = scalar_select %p267, %s21, 0
      %s269 = sadd.s32 %s268, %s266
      %s270 = scalar_lea.vmem %s2, %s269
      %s271 = smul.u32 4, %s20
      %p272 = scmp.lt.s32.totalorder %s19, 1
      %s273 = scalar_select %p272, %s19, 1
      %p274 = scmp.lt.s32.totalorder %s271, 3
      %s275 = scalar_select %p274, %s271, 3
      %p276 = scmp.lt.s32.totalorder %s21, 0
      %s277 = scalar_select %p276, %s21, 0
      %s278 = sadd.s32 %s277, %s275
      %s279 = smul.addr %s273, 4
      %s280 = sadd.s32 %s278, %s279
      %s281 = smul.addr %s280, 8
      %s282 = scalar_lea.vmem %s3, %s281
      %s283 = smul.u32 4, %s20
      %v285 = vld [vmem:[%s255] sm:$0xff]
      %v286 = vld [vmem:[%s255 + $0x8] sm:$0xff]
      %v287 = vld [vmem:[%s255 + $0x10] sm:$0xf]
      %v288 = vld [vmem:[%s255 + $0x14] sm:$0xff]
      %v289 = vld [vmem:[%s255 + $0x1c] sm:$0xff]
      %v290 = vld [vmem:[%s255 + $0x24] sm:$0xf]
      %v291 = vld [vmem:[%s255 + $0x28] sm:$0xff]
      %v292 = vld [vmem:[%s255 + $0x30] sm:$0xff]
      %v293 = vld [vmem:[%s255 + $0x38] sm:$0xf]
      %v294 = vld [vmem:[%s255 + $0x3c] sm:$0xff]
      %v295 = vld [vmem:[%s255 + $0x44] sm:$0xff]
      %v296 = vld [vmem:[%s255 + $0x4c] sm:$0xf]
      %v297 = vld [vmem:[%s264] sm:$0xf]
      %v298 = vld [vmem:[%s264 + $0x4] sm:$0xf]
      %v299 = vld [vmem:[%s264 + $0x8] sm:$0xf]
      %v300 = vld [vmem:[%s264 + $0xc] sm:$0xf]
      %v301 = vld [vmem:[%s264 + $0x10] sm:$0xf]
      %v302 = vld [vmem:[%s264 + $0x14] sm:$0xf]
      %v303 = vld [vmem:[%s264 + $0x18] sm:$0xf]
      %v304 = vld [vmem:[%s264 + $0x1c] sm:$0xf]
      %v305 = vld [vmem:[%s264 + $0x20] sm:$0xf]
      %v306 = vld [vmem:[%s264 + $0x24] sm:$0xf]
      %v307 = vld [vmem:[%s264 + $0x28] sm:$0xf]
      %v308 = vld [vmem:[%s264 + $0x2c] sm:$0xf]
      %v309 = vld [vmem:[%s264 + $0x30] sm:$0xf]
      %v310 = vld [vmem:[%s264 + $0x34] sm:$0xf]
      %v311 = vld [vmem:[%s264 + $0x38] sm:$0xf]
      %v312 = vld [vmem:[%s264 + $0x3c] sm:$0xf]
      %v313 = vld [vmem:[%s264 + $0x40] sm:$0xf]
      %v314 = vld [vmem:[%s264 + $0x44] sm:$0xf]
      %v315 = vld [vmem:[%s264 + $0x48] sm:$0xf]
      %v316 = vld [vmem:[%s264 + $0x4c] sm:$0xf]
      %v317 = vld [vmem:[%s264 + $0x50] sm:$0xf]
      %v318 = vld [vmem:[%s264 + $0x54] sm:$0xf]
      %v319 = vld [vmem:[%s264 + $0x58] sm:$0xf]
      %v320 = vld [vmem:[%s264 + $0x5c] sm:$0xf]
      %v321 = vld [vmem:[%s264 + $0x60] sm:$0xf]
      %v322 = vld [vmem:[%s264 + $0x64] sm:$0xf]
      %v323 = vld [vmem:[%s264 + $0x68] sm:$0xf]
      %v324 = vld [vmem:[%s264 + $0x6c] sm:$0xf]
      %v325 = vld [vmem:[%s264 + $0x70] sm:$0xf]
      %v326 = vld [vmem:[%s264 + $0x74] sm:$0xf]
      %v327 = vld [vmem:[%s264 + $0x78] sm:$0xf]
      %v328 = vld [vmem:[%s264 + $0x7c] sm:$0xf]
      %v329 = vld [vmem:[%s264 + $0x80] sm:$0xf]
      %v330 = vld [vmem:[%s264 + $0x84] sm:$0xf]
      %v331 = vld [vmem:[%s264 + $0x88] sm:$0xf]
      %v332 = vld [vmem:[%s264 + $0x8c] sm:$0xf]
      %v333 = vld [vmem:[%s264 + $0x90] sm:$0xf]
      %v334 = vld [vmem:[%s264 + $0x94] sm:$0xf]
      %v335 = vld [vmem:[%s264 + $0x98] sm:$0xf]
      %v336 = vld [vmem:[%s264 + $0x9c] sm:$0xf]
      %v337 = vld [vmem:[%s264 + $0xa0] sm:$0xf]
      %v338 = vld [vmem:[%s264 + $0xa4] sm:$0xf]
      %v339 = vld [vmem:[%s264 + $0xa8] sm:$0xf]
      %v340 = vld [vmem:[%s264 + $0xac] sm:$0xf]
      %v341 = vld [vmem:[%s264 + $0xb0] sm:$0xf]
      %v342 = vld [vmem:[%s264 + $0xb4] sm:$0xf]
      %v343 = vld [vmem:[%s264 + $0xb8] sm:$0xf]
      %v344 = vld [vmem:[%s264 + $0xbc] sm:$0xf]
      %v345 = vld [vmem:[%s264 + $0xc0] sm:$0xf]
      %v346 = vld [vmem:[%s264 + $0xc4] sm:$0xf]
      %v347 = vld [vmem:[%s264 + $0xc8] sm:$0xf]
      %v348 = vld [vmem:[%s264 + $0xcc] sm:$0xf]
      %v349 = vld [vmem:[%s264 + $0xd0] sm:$0xf]
      %v350 = vld [vmem:[%s264 + $0xd4] sm:$0xf]
      %v351 = vld [vmem:[%s264 + $0xd8] sm:$0xf]
      %v352 = vld [vmem:[%s264 + $0xdc] sm:$0xf]
      %v353 = vld [vmem:[%s264 + $0xe0] sm:$0xf]
      %v354 = vld [vmem:[%s264 + $0xe4] sm:$0xf]
      %v355 = vld [vmem:[%s264 + $0xe8] sm:$0xf]
      %v356 = vld [vmem:[%s264 + $0xec] sm:$0xf]
      %v357 = vld [vmem:[%s264 + $0xf0] sm:$0xf]
      %v358 = vld [vmem:[%s264 + $0xf4] sm:$0xf]
      %v359 = vld [vmem:[%s264 + $0xf8] sm:$0xf]
      %v360 = vld [vmem:[%s264 + $0xfc] sm:$0xf]
      %v361 = vld [vmem:[%s264 + $0x100] sm:$0xf]
      %v362 = vld [vmem:[%s264 + $0x104] sm:$0xf]
      %v363 = vld [vmem:[%s264 + $0x108] sm:$0xf]
      %v364 = vld [vmem:[%s264 + $0x10c] sm:$0xf]
      %v365 = vld [vmem:[%s264 + $0x110] sm:$0xf]
      %v366 = vld [vmem:[%s264 + $0x114] sm:$0xf]
      %v367 = vld [vmem:[%s264 + $0x118] sm:$0xf]
      %v368 = vld [vmem:[%s264 + $0x11c] sm:$0xf]
      %v369 = vld [vmem:[%s264 + $0x120] sm:$0xf]
      %v370 = vld [vmem:[%s264 + $0x124] sm:$0xf]
      %v371 = vld [vmem:[%s264 + $0x128] sm:$0xf]
      %v372 = vld [vmem:[%s264 + $0x12c] sm:$0xf]
      %v373 = vld [vmem:[%s264 + $0x130] sm:$0xf]
      %v374 = vld [vmem:[%s264 + $0x134] sm:$0xf]
      %v375 = vld [vmem:[%s264 + $0x138] sm:$0xf]
      %v376 = vld [vmem:[%s264 + $0x13c] sm:$0xf]
      %v377 = vld [vmem:[%s270] sm:$0x1]
      %v379 = vlaneseq
      %v380 = vshrl.u32 %v379, 7
      %v381 = vsub.s32 0, %v380
      %v382 = vrot.slane %v377, %v381
      %v396 = vunpack.c.l.b16 %v285
      %v397 = vunpack.c.h.b16 %v285
      %v398 = vunpack.c.l.b16 %v286
      %v399 = vunpack.c.h.b16 %v286
      %v400 = vunpack.c.l.b16 %v287
      %v401 = vunpack.c.l.b16 %v288
      %v402 = vunpack.c.h.b16 %v288
      %v403 = vunpack.c.l.b16 %v289
      %v404 = vunpack.c.h.b16 %v289
      %v405 = vunpack.c.l.b16 %v290
      %v406 = vunpack.c.l.b16 %v291
      %v407 = vunpack.c.h.b16 %v291
      %v408 = vunpack.c.l.b16 %v292
      %v409 = vunpack.c.h.b16 %v292
      %v410 = vunpack.c.l.b16 %v293
      %v411 = vunpack.c.l.b16 %v294
      %v412 = vunpack.c.h.b16 %v294
      %v413 = vunpack.c.l.b16 %v295
      %v414 = vunpack.c.h.b16 %v295
      %v415 = vunpack.c.l.b16 %v296
      %v416 = vpack.c.b16 %v401, %v396
      %v417 = vpack.c.b16 %v402, %v397
      %v418 = vpack.c.b16 %v403, %v398
      %v419 = vpack.c.b16 %v404, %v399
      %v420 = vpack.c.b16 %v405, %v400
      %v421 = vpack.c.b16 %v411, %v406
      %v422 = vpack.c.b16 %v412, %v407
      %v423 = vpack.c.b16 %v413, %v408
      %v424 = vpack.c.b16 %v414, %v409
      %v425 = vpack.c.b16 %v415, %v410
      %v516 = vunpack.c.l.b16 %v297
      %v517 = vunpack.c.l.b16 %v298
      %v518 = vunpack.c.l.b16 %v299
      %v519 = vunpack.c.l.b16 %v300
      %v520 = vunpack.c.l.b16 %v301
      %v521 = vunpack.c.l.b16 %v302
      %v522 = vunpack.c.l.b16 %v303
      %v523 = vunpack.c.l.b16 %v304
      %v524 = vunpack.c.l.b16 %v305
      %v525 = vunpack.c.l.b16 %v306
      %v526 = vunpack.c.l.b16 %v307
      %v527 = vunpack.c.l.b16 %v308
      %v528 = vunpack.c.l.b16 %v309
      %v529 = vunpack.c.l.b16 %v310
      %v530 = vunpack.c.l.b16 %v311
      %v531 = vunpack.c.l.b16 %v312
      %v532 = vunpack.c.l.b16 %v313
      %v533 = vunpack.c.l.b16 %v314
      %v534 = vunpack.c.l.b16 %v315
      %v535 = vunpack.c.l.b16 %v316
      %v536 = vunpack.c.l.b16 %v317
      %v537 = vunpack.c.l.b16 %v318
      %v538 = vunpack.c.l.b16 %v319
      %v539 = vunpack.c.l.b16 %v320
      %v540 = vunpack.c.l.b16 %v321
      %v541 = vunpack.c.l.b16 %v322
      %v542 = vunpack.c.l.b16 %v323
      %v543 = vunpack.c.l.b16 %v324
      %v544 = vunpack.c.l.b16 %v325
      %v545 = vunpack.c.l.b16 %v326
      %v546 = vunpack.c.l.b16 %v327
      %v547 = vunpack.c.l.b16 %v328
      %v548 = vunpack.c.l.b16 %v329
      %v549 = vunpack.c.l.b16 %v330
      %v550 = vunpack.c.l.b16 %v331
      %v551 = vunpack.c.l.b16 %v332
      %v552 = vunpack.c.l.b16 %v333
      %v553 = vunpack.c.l.b16 %v334
      %v554 = vunpack.c.l.b16 %v335
      %v555 = vunpack.c.l.b16 %v336
      %v556 = vunpack.c.l.b16 %v337
      %v557 = vunpack.c.l.b16 %v338
      %v558 = vunpack.c.l.b16 %v339
      %v559 = vunpack.c.l.b16 %v340
      %v560 = vunpack.c.l.b16 %v341
      %v561 = vunpack.c.l.b16 %v342
      %v562 = vunpack.c.l.b16 %v343
      %v563 = vunpack.c.l.b16 %v344
      %v564 = vunpack.c.l.b16 %v345
      %v565 = vunpack.c.l.b16 %v346
      %v566 = vunpack.c.l.b16 %v347
      %v567 = vunpack.c.l.b16 %v348
      %v568 = vunpack.c.l.b16 %v349
      %v569 = vunpack.c.l.b16 %v350
      %v570 = vunpack.c.l.b16 %v351
      %v571 = vunpack.c.l.b16 %v352
      %v572 = vunpack.c.l.b16 %v353
      %v573 = vunpack.c.l.b16 %v354
      %v574 = vunpack.c.l.b16 %v355
      %v575 = vunpack.c.l.b16 %v356
      %v576 = vunpack.c.l.b16 %v357
      %v577 = vunpack.c.l.b16 %v358
      %v578 = vunpack.c.l.b16 %v359
      %v579 = vunpack.c.l.b16 %v360
      %v580 = vunpack.c.l.b16 %v361
      %v581 = vunpack.c.l.b16 %v362
      %v582 = vunpack.c.l.b16 %v363
      %v583 = vunpack.c.l.b16 %v364
      %v584 = vunpack.c.l.b16 %v365
      %v585 = vunpack.c.l.b16 %v366
      %v586 = vunpack.c.l.b16 %v367
      %v587 = vunpack.c.l.b16 %v368
      %v588 = vunpack.c.l.b16 %v369
      %v589 = vunpack.c.l.b16 %v370
      %v590 = vunpack.c.l.b16 %v371
      %v591 = vunpack.c.l.b16 %v372
      %v592 = vunpack.c.l.b16 %v373
      %v593 = vunpack.c.l.b16 %v374
      %v594 = vunpack.c.l.b16 %v375
      %v595 = vunpack.c.l.b16 %v376
      %v596 = vpack.c.b16 %v517, %v516
      %v597 = vpack.c.b16 %v519, %v518
      %v598 = vpack.c.b16 %v521, %v520
      %v599 = vpack.c.b16 %v523, %v522
      %v600 = vpack.c.b16 %v525, %v524
      %v601 = vpack.c.b16 %v527, %v526
      %v602 = vpack.c.b16 %v529, %v528
      %v603 = vpack.c.b16 %v531, %v530
      %v604 = vpack.c.b16 %v533, %v532
      %v605 = vpack.c.b16 %v535, %v534
      %v606 = vpack.c.b16 %v537, %v536
      %v607 = vpack.c.b16 %v539, %v538
      %v608 = vpack.c.b16 %v541, %v540
      %v609 = vpack.c.b16 %v543, %v542
      %v610 = vpack.c.b16 %v545, %v544
      %v611 = vpack.c.b16 %v547, %v546
      %v612 = vpack.c.b16 %v549, %v548
      %v613 = vpack.c.b16 %v551, %v550
      %v614 = vpack.c.b16 %v553, %v552
      %v615 = vpack.c.b16 %v555, %v554
      %v616 = vpack.c.b16 %v557, %v556
      %v617 = vpack.c.b16 %v559, %v558
      %v618 = vpack.c.b16 %v561, %v560
      %v619 = vpack.c.b16 %v563, %v562
      %v620 = vpack.c.b16 %v565, %v564
      %v621 = vpack.c.b16 %v567, %v566
      %v622 = vpack.c.b16 %v569, %v568
      %v623 = vpack.c.b16 %v571, %v570
      %v624 = vpack.c.b16 %v573, %v572
      %v625 = vpack.c.b16 %v575, %v574
      %v626 = vpack.c.b16 %v577, %v576
      %v627 = vpack.c.b16 %v579, %v578
      %v628 = vpack.c.b16 %v581, %v580
      %v629 = vpack.c.b16 %v583, %v582
      %v630 = vpack.c.b16 %v585, %v584
      %v631 = vpack.c.b16 %v587, %v586
      %v632 = vpack.c.b16 %v589, %v588
      %v633 = vpack.c.b16 %v591, %v590
      %v634 = vpack.c.b16 %v593, %v592
      %v635 = vpack.c.b16 %v595, %v594
      %676 = vmatprep.subr.bf16.mxu0 0
      %677 = vmatpush1.bf16.msra.mxu0 %v596
      %678 = vmatprep.subr.bf16.mxu0 0
      %679 = vmatpush1.bf16.msra.mxu0 %v597
      %680 = vmatprep.subr.bf16.mxu0 0
      %681 = vmatpush1.bf16.msra.mxu0 %v598
      %682 = vmatprep.subr.bf16.mxu0 0
      %683 = vmatpush1.bf16.msra.mxu0 %v599
      %684 = vmatprep.subr.bf16.mxu0 0
      %685 = vmatpush1.bf16.msra.mxu0 %v600
      %686 = vmatprep.subr.bf16.mxu0 0
      %687 = vmatpush1.bf16.msra.mxu0 %v601
      %688 = vmatprep.subr.bf16.mxu0 0
      %689 = vmatpush1.bf16.msra.mxu0 %v602
      %690 = vmatprep.subr.bf16.mxu0 0
      %691 = vmatpush1.bf16.msra.mxu0 %v603
      %692 = vmatprep.subr.bf16.mxu0 0
      %693 = vmatpush1.bf16.msra.mxu0 %v604
      %694 = vmatprep.subr.bf16.mxu0 0
      %695 = vmatpush1.bf16.msra.mxu0 %v605
      %696 = vmatprep.subr.bf16.mxu0 0
      %697 = vmatpush1.bf16.msra.mxu0 %v606
      %698 = vmatprep.subr.bf16.mxu0 0
      %699 = vmatpush1.bf16.msra.mxu0 %v607
      %700 = vmatprep.subr.bf16.mxu0 0
      %701 = vmatpush1.bf16.msra.mxu0 %v608
      %702 = vmatprep.subr.bf16.mxu0 0
      %703 = vmatpush1.bf16.msra.mxu0 %v609
      %704 = vmatprep.subr.bf16.mxu0 0
      %705 = vmatpush1.bf16.msra.mxu0 %v610
      %706 = vmatprep.subr.bf16.mxu0 0
      %707 = vmatpush1.bf16.msra.mxu0 %v611
      %708 = vmatprep.mubr.bf16.mxu0 %v417
      %709 = vmatmul.mubr.bf16.gmra.mrb[0].mxu0 %v416
      %v710 = vpop.f32.mrb[0].mxu0
      %v711 = vadd.f32 %v382, %v710
      %v712 = vpop.f32.mrb[0].mxu0
      %v713 = vpop.f32.mrb[0].mxu0
      %v714 = vadd.f32 %v382, %v713
      %v715 = vpop.f32.mrb[0].mxu0
      %716 = vmatprep.mubr.bf16.mxu0 %v422
      %717 = vmatmul.mubr.bf16.gmra.mrb[0].mxu0 %v421
      %v718 = vpop.f32.mrb[0].mxu0
      %v719 = vadd.f32 %v382, %v718
      %v720 = vpop.f32.mrb[0].mxu0
      %v721 = vpop.f32.mrb[0].mxu0
      %v722 = vadd.f32 %v382, %v721
      %v723 = vpop.f32.mrb[0].mxu0
      %724 = vdwg.mxu0
      %725 = vmatprep.subr.bf16.mxu0 0
      %726 = vmatpush1.bf16.msra.mxu0 %v612
      %727 = vmatprep.subr.bf16.mxu0 0
      %728 = vmatpush1.bf16.msra.mxu0 %v613
      %729 = vmatprep.subr.bf16.mxu0 0
      %730 = vmatpush1.bf16.msra.mxu0 %v614
      %731 = vmatprep.subr.bf16.mxu0 0
      %732 = vmatpush1.bf16.msra.mxu0 %v615
      %733 = vmatprep.subr.bf16.mxu0 0
      %734 = vmatpush1.bf16.msra.mxu0 %v616
      %735 = vmatprep.subr.bf16.mxu0 0
      %736 = vmatpush1.bf16.msra.mxu0 %v617
      %737 = vmatprep.subr.bf16.mxu0 0
      %738 = vmatpush1.bf16.msra.mxu0 %v618
      %739 = vmatprep.subr.bf16.mxu0 0
      %740 = vmatpush1.bf16.msra.mxu0 %v619
      %741 = vmatprep.subr.bf16.mxu0 0
      %742 = vmatpush1.bf16.msra.mxu0 %v620
      %743 = vmatprep.subr.bf16.mxu0 0
      %744 = vmatpush1.bf16.msra.mxu0 %v621
      %745 = vmatprep.subr.bf16.mxu0 0
      %746 = vmatpush1.bf16.msra.mxu0 %v622
      %747 = vmatprep.subr.bf16.mxu0 0
      %748 = vmatpush1.bf16.msra.mxu0 %v623
      %749 = vmatprep.subr.bf16.mxu0 0
      %750 = vmatpush1.bf16.msra.mxu0 %v624
      %751 = vmatprep.subr.bf16.mxu0 0
      %752 = vmatpush1.bf16.msra.mxu0 %v625
      %753 = vmatprep.subr.bf16.mxu0 0
      %754 = vmatpush1.bf16.msra.mxu0 %v626
      %755 = vmatprep.subr.bf16.mxu0 0
      %756 = vmatpush1.bf16.msra.mxu0 %v627
      %757 = vmatprep.mubr.bf16.mxu0 %v419
      %758 = vmatmul.mubr.bf16.gmra.mrb[0].mxu0 %v418
      %v759 = vpop.f32.mrb[0].mxu0
      %v760 = vadd.f32 %v711, %v759
      %v761 = vpop.f32.mrb[0].mxu0
      %v762 = vpop.f32.mrb[0].mxu0
      %v763 = vadd.f32 %v714, %v762
      %v764 = vpop.f32.mrb[0].mxu0
      %765 = vmatprep.mubr.bf16.mxu0 %v424
      %766 = vmatmul.mubr.bf16.gmra.mrb[0].mxu0 %v423
      %v767 = vpop.f32.mrb[0].mxu0
      %v768 = vadd.f32 %v719, %v767
      %v769 = vpop.f32.mrb[0].mxu0
      %v770 = vpop.f32.mrb[0].mxu0
      %v771 = vadd.f32 %v722, %v770
      %v772 = vpop.f32.mrb[0].mxu0
      %773 = vdwg.mxu0
      %774 = vmatprep.subr.bf16.mxu0 0
      %775 = vmatpush1.bf16.msra.mxu0 %v628
      %776 = vmatprep.subr.bf16.mxu0 0
      %777 = vmatpush1.bf16.msra.mxu0 %v629
      %778 = vmatprep.subr.bf16.mxu0 0
      %779 = vmatpush1.bf16.msra.mxu0 %v630
      %780 = vmatprep.subr.bf16.mxu0 0
      %781 = vmatpush1.bf16.msra.mxu0 %v631
      %782 = vmatprep.subr.bf16.mxu0 0
      %783 = vmatpush1.bf16.msra.mxu0 %v632
      %784 = vmatprep.subr.bf16.mxu0 0
      %785 = vmatpush1.bf16.msra.mxu0 %v633
      %786 = vmatprep.subr.bf16.mxu0 0
      %787 = vmatpush1.bf16.msra.mxu0 %v634
      %788 = vmatprep.subr.bf16.mxu0 0
      %789 = vmatpush1.bf16.msra.mxu0 %v635
      %790 = vmatprep.subr.bf16.mxu0 0
      %791 = vmatpush1.bf16.msra.mxu0 0
      %792 = vmatprep.subr.bf16.mxu0 0
      %793 = vmatpush1.bf16.msra.mxu0 0
      %794 = vmatprep.subr.bf16.mxu0 0
      %795 = vmatpush1.bf16.msra.mxu0 0
      %796 = vmatprep.subr.bf16.mxu0 0
      %797 = vmatpush1.bf16.msra.mxu0 0
      %798 = vmatprep.subr.bf16.mxu0 0
      %799 = vmatpush1.bf16.msra.mxu0 0
      %800 = vmatprep.subr.bf16.mxu0 0
      %801 = vmatpush1.bf16.msra.mxu0 0
      %802 = vmatprep.subr.bf16.mxu0 0
      %803 = vmatpush1.bf16.msra.mxu0 0
      %804 = vmatprep.subr.bf16.mxu0 0
      %805 = vmatpush1.bf16.msra.mxu0 0
      %806 = vmatprep.mubr.bf16.mxu0 0
      %807 = vmatmul.mubr.bf16.gmra.mrb[0].mxu0 %v420
      %v808 = vpop.f32.mrb[0].mxu0
      %v809 = vadd.f32 %v760, %v808
      %v810 = vpop.f32.mrb[0].mxu0
      %v811 = vpop.f32.mrb[0].mxu0
      %v812 = vadd.f32 %v763, %v811
      %v813 = vpop.f32.mrb[0].mxu0
      %814 = vmatprep.mubr.bf16.mxu0 0
      %815 = vmatmul.mubr.bf16.gmra.mrb[0].mxu0 %v425
      %v816 = vpop.f32.mrb[0].mxu0
      %v817 = vadd.f32 %v768, %v816
      %v818 = vpop.f32.mrb[0].mxu0
      %v819 = vpop.f32.mrb[0].mxu0
      %v820 = vadd.f32 %v771, %v819
      %v821 = vpop.f32.mrb[0].mxu0
      %822 = vdwg.mxu0
      %823 = vst [vmem:[%s282] sm:$0xff] %v809
      %824 = vst [vmem:[%s282 + $0x8] sm:$0xff] %v812
      %825 = vst [vmem:[%s282 + $0x10] sm:$0xff] %v817
      %826 = vst [vmem:[%s282 + $0x18] sm:$0xff] %v820
      %s827 = smul.u32 4, %s20
      %p828 = scmp.lt.s32.totalorder %s19, 1
      %s829 = scalar_select %p828, %s19, 1
      %p830 = scmp.lt.s32.totalorder %s827, 3
      %s831 = scalar_select %p830, %s827, 3
      %p832 = scmp.lt.s32.totalorder %s21, 0
      %s833 = scalar_select %p832, %s21, 0
      %s834 = sadd.s32 %s833, %s831
      %s835 = smul.addr %s829, 4
      %s836 = sadd.s32 %s834, %s835
      %s837 = smul.addr %s836, 8
      %s838 = scalar_lea.vmem %s3, %s837
      // Predicated region
      $region33: #{_lambda_.17} parent=31 // pred_check
        %p839 = pneg %p139
      $region34: #{_lambda_.17} parent=31 // pred_check_branch
        %841 = sbr.rel (%p839) target = $region36
      $region35: #{_lambda_.17} parent=31 // pred_region
        %s842 = smul.u32 4, %s20
      $region36: #{_lambda_.17} parent=31 // pred_fallthru
        _
    $region32: #{_lambda_.17} parent=5 // pred_fallthru
      _
    %p843 = scmp.le.s32.totalorder 2, %s9
    // Predicated region
    $region37: #{_lambda_.17} parent=5 // pred_check
      %p844 = pneg %p843
    $region38: #{_lambda_.17} parent=5 // pred_check_branch
      %846 = sbr.rel (%p844) target = $region40
    $region39: #{_lambda_.17} parent=5 // pred_region
      %s847 = ssub.s32 %s9, 2
      // Predicated region
      $region41: #{_lambda_.17} parent=39 // pred_check
        %p848 = pneg %p145
      $region42: #{_lambda_.17} parent=39 // pred_check_branch
        %850 = sbr.rel (%p848) target = $region44
      $region43: #{_lambda_.17} parent=39 // pred_region
        %s851 = smul.u32 4, %s23
        %p852 = scmp.lt.s32.totalorder %s22, 1
        %s853 = scalar_select %p852, %s22, 1
        %p854 = scmp.lt.s32.totalorder %s851, 3
        %s855 = scalar_select %p854, %s851, 3
        %p856 = scmp.lt.s32.totalorder %s24, 0
        %s857 = scalar_select %p856, %s24, 0
        %s858 = sadd.s32 %s857, %s855
        %s859 = smul.addr %s853, 4
        %s860 = sadd.s32 %s858, %s859
        %s861 = smul.addr %s860, 8
        %s862 = scalar_lea.vmem %s3, %s861
      $region44: #{_lambda_.17} parent=39 // pred_fallthru
        _
    $region40: #{_lambda_.17} parent=5 // pred_fallthru
      _
  $region6: #{_lambda_.17} parent=0 // loop_footer
    %s13 = sadd.s32 1, %s9
  $region7: #{_lambda_.17} parent=0 // loop_footer_branch
    %8 = sbr.rel target = $region3
  $region8: #{_lambda_.17} parent=0 // loop_exit
    _

// kernel: _lambda_.18
$region0: #{_lambda_.18}
  #allocation0 [shape = 'u32[]', space=smem, size = 0x4, offset = 0x4, fixed_abs, tag = 'smem constant byte address 0x4 - core index']
  #allocation1 [shape = 'u32[144,128]{1,0:T(1,128)}', space=vmem, size = 0x12000, scoped, tag = 'internal scratch']
  %s0 = inlined_call_operand.vmem [shape: bf16[2,128,384], index: 0, kind: input, shape index: {}]
  %s1 = inlined_call_operand.vmem [shape: bf16[2,384,128], index: 1, kind: input, shape index: {}]
  %s2 = inlined_call_operand.vmem [shape: f32[2,1,128], index: 2, kind: input, shape index: {}]
  %s3 = inlined_call_operand.vmem [shape: f32[2,128,128], index: 3, kind: output, shape index: {}]
  %s4 = sld [smem:[#allocation0]]
  $region45: #{_lambda_.18} parent=0
    _
  %s6 = ssub.s32 1, %s4
  %s7 = scalar_select 0, %s6, %s4
  loop: start=0, step=1, limit=4
  $region2: #{_lambda_.18} parent=0 // loop_pre_header
    _
  $region3: #{_lambda_.18} parent=0 // loop_header
    %s9 = sphi 0, %s13
    %p10 = scmp.ge.s32.totalorder %s9, 4
    %s16 = sphi 0, %s35
    %s17 = sphi 0, %s31
    %s18 = sphi 0, %s27
    %s19 = sphi 0, %s16
    %s20 = sphi 0, %s17
    %s21 = sphi 0, %s18
    %s22 = sphi 0, %s19
    %s23 = sphi 0, %s20
    %s24 = sphi 0, %s21
    %s40 = sphi 0, %s42
    %s43 = sphi 0, %s40
    %s44 = sphi 0, %s43
    %s60 = sphi 0, %s44
    %s68 = sphi 0, %s70
    %s71 = sphi 0, %s68
    %s72 = sphi 0, %s71
    %s88 = sphi 0, %s72
    %s96 = sphi 0, %s98
    %s99 = sphi 0, %s96
    %s100 = sphi 0, %s99
    %s116 = sphi 0, %s100
    %s126 = sphi 0, %s128
    %s129 = sphi 0, %s126
    %s130 = sphi 0, %s129
    %s146 = sphi 0, %s130
  $region4: #{_lambda_.18} parent=0 // loop_header_branch
    %12 = sbr.rel (%p10) target = $region8
  $region5: #{_lambda_.18} parent=0 // loop_body
    %s14 = ssub.s32 %s9, 1
    %s15 = ssub.s32 %s9, 2
    %s25 = sadd.s32 1, %s18
    %p26 = scmp.ge.s32.totalorder %s25, 1
    %s27 = scalar_select %p26, 0, %s25
    %s28 = sadd.s32 1, %s17
    %s29 = scalar_select %p26, %s28, %s17
    %p30 = scmp.ge.s32.totalorder %s29, 1
    %s31 = scalar_select %p30, 0, %s29
    %s32 = sadd.s32 1, %s16
    %s33 = scalar_select %p30, %s32, %s16
    %p34 = scmp.ge.s32.totalorder %s33, 2
    %s35 = scalar_select %p34, 0, %s33
    %s36 = ssub.s32 %s16, %s35
    %s37 = ssub.s32 %s17, %s31
    %s38 = sor.u32 %s36, %s37
    %p39 = scmp.eq.s32.totalorder %s38, 0
    %s41 = sadd.s32 %s40, 1
    %s42 = scalar_select %p39, %s40, %s41
    %p45 = pneg %p39
    %p46 = scmp.eq.s32.totalorder %s9, 1
    %p47 = por %p45, %p46
    %p48 = scmp.ne.s32.totalorder %s40, %s43
    %p49 = scmp.eq.s32.totalorder %s9, 0
    %p50 = por %p48, %p49
    %p51 = scmp.ne.s32.totalorder %s40, %s43
    %p52 = scmp.eq.s32.totalorder %s14, 1
    %p53 = por %p51, %p52
    %p54 = scmp.ne.s32.totalorder %s43, %s44
    %p55 = scmp.eq.s32.totalorder %s14, 0
    %p56 = por %p54, %p55
    %p57 = scmp.ne.s32.totalorder %s43, %s44
    %p58 = scmp.eq.s32.totalorder %s15, 1
    %p59 = por %p57, %p58
    %p61 = scmp.ne.s32.totalorder %s44, %s60
    %p62 = scmp.eq.s32.totalorder %s15, 0
    %p63 = por %p61, %p62
    %s64 = ssub.s32 %s16, %s35
    %s65 = ssub.s32 %s18, %s27
    %s66 = sor.u32 %s64, %s65
    %p67 = scmp.eq.s32.totalorder %s66, 0
    %s69 = sadd.s32 %s68, 1
    %s70 = scalar_select %p67, %s68, %s69
    %p73 = pneg %p67
    %p74 = scmp.eq.s32.totalorder %s9, 1
    %p75 = por %p73, %p74
    %p76 = scmp.ne.s32.totalorder %s68, %s71
    %p77 = scmp.eq.s32.totalorder %s9, 0
    %p78 = por %p76, %p77
    %p79 = scmp.ne.s32.totalorder %s68, %s71
    %p80 = scmp.eq.s32.totalorder %s14, 1
    %p81 = por %p79, %p80
    %p82 = scmp.ne.s32.totalorder %s71, %s72
    %p83 = scmp.eq.s32.totalorder %s14, 0
    %p84 = por %p82, %p83
    %p85 = scmp.ne.s32.totalorder %s71, %s72
    %p86 = scmp.eq.s32.totalorder %s15, 1
    %p87 = por %p85, %p86
    %p89 = scmp.ne.s32.totalorder %s72, %s88
    %p90 = scmp.eq.s32.totalorder %s15, 0
    %p91 = por %p89, %p90
    %s92 = ssub.s32 %s16, %s35
    %s93 = ssub.s32 %s18, %s27
    %s94 = sor.u32 %s92, %s93
    %p95 = scmp.eq.s32.totalorder %s94, 0
    %s97 = sadd.s32 %s96, 1
    %s98 = scalar_select %p95, %s96, %s97
    %p101 = pneg %p95
    %p102 = scmp.eq.s32.totalorder %s9, 1
    %p103 = por %p101, %p102
    %p104 = scmp.ne.s32.totalorder %s96, %s99
    %p105 = scmp.eq.s32.totalorder %s9, 0
    %p106 = por %p104, %p105
    %p107 = scmp.ne.s32.totalorder %s96, %s99
    %p108 = scmp.eq.s32.totalorder %s14, 1
    %p109 = por %p107, %p108
    %p110 = scmp.ne.s32.totalorder %s99, %s100
    %p111 = scmp.eq.s32.totalorder %s14, 0
    %p112 = por %p110, %p111
    %p113 = scmp.ne.s32.totalorder %s99, %s100
    %p114 = scmp.eq.s32.totalorder %s15, 1
    %p115 = por %p113, %p114
    %p117 = scmp.ne.s32.totalorder %s100, %s116
    %p118 = scmp.eq.s32.totalorder %s15, 0
    %p119 = por %p117, %p118
    %s120 = ssub.s32 %s16, %s35
    %s121 = ssub.s32 %s17, %s31
    %s122 = sor.u32 %s120, %s121
    %s123 = ssub.s32 %s18, %s27
    %s124 = sor.u32 %s122, %s123
    %p125 = scmp.eq.s32.totalorder %s124, 0
    %s127 = sadd.s32 %s126, 1
    %s128 = scalar_select %p125, %s126, %s127
    %p131 = pneg %p125
    %p132 = scmp.eq.s32.totalorder %s9, 1
    %p133 = por %p131, %p132
    %p134 = scmp.ne.s32.totalorder %s126, %s129
    %p135 = scmp.eq.s32.totalorder %s9, 0
    %p136 = por %p134, %p135
    %p137 = scmp.ne.s32.totalorder %s126, %s129
    %p138 = scmp.eq.s32.totalorder %s14, 1
    %p139 = por %p137, %p138
    %p140 = scmp.ne.s32.totalorder %s129, %s130
    %p141 = scmp.eq.s32.totalorder %s14, 0
    %p142 = por %p140, %p141
    %p143 = scmp.ne.s32.totalorder %s129, %s130
    %p144 = scmp.eq.s32.totalorder %s15, 1
    %p145 = por %p143, %p144
    %p147 = scmp.ne.s32.totalorder %s130, %s146
    %p148 = scmp.eq.s32.totalorder %s15, 0
    %p149 = por %p147, %p148
    %p150 = scmp.le.s32.totalorder 1, %s9
    %p151 = scmp.lt.s32.totalorder %s9, 3
    %p152 = pnand %p150, %p151
    %p153 = pneg %p152
    // Predicated region
    $region9: #{_lambda_.18} parent=5 // pred_check
      _
    $region10: #{_lambda_.18} parent=5 // pred_check_branch
      %155 = sbr.rel (%p152) target = $region12
    $region11: #{_lambda_.18} parent=5 // pred_region
      %s156 = ssub.s32 %s9, 1
    $region12: #{_lambda_.18} parent=5 // pred_fallthru
      _
    %p157 = scmp.lt.s32.totalorder %s9, 2
    // Predicated region
    $region13: #{_lambda_.18} parent=5 // pred_check
      %p158 = pneg %p157
    $region14: #{_lambda_.18} parent=5 // pred_check_branch
      %160 = sbr.rel (%p158) target = $region16
    $region15: #{_lambda_.18} parent=5 // pred_region
      // Predicated region
      $region17: #{_lambda_.18} parent=15 // pred_check
        %p161 = pneg %p50
      $region18: #{_lambda_.18} parent=15 // pred_check_branch
        %163 = sbr.rel (%p161) target = $region20
      $region19: #{_lambda_.18} parent=15 // pred_region
        %s164 = smul.u32 16, %s17
        %p165 = scmp.lt.s32.totalorder %s16, 1
        %s166 = scalar_select %p165, %s16, 1
        %p167 = scmp.lt.s32.totalorder %s164, 15
        %s168 = scalar_select %p167, %s164, 15
        %s169 = smul.addr %s168, 3
        %s170 = smul.addr %s166, 48
        %s171 = sadd.s32 %s169, %s170
        %s172 = smul.addr %s171, 4
        %s173 = scalar_lea.vmem %s0, %s172
        %s174 = smul.u32 16, %s17
      $region20: #{_lambda_.18} parent=15 // pred_fallthru
        _
      // Predicated region
      $region21: #{_lambda_.18} parent=15 // pred_check
        %p175 = pneg %p78
      $region22: #{_lambda_.18} parent=15 // pred_check_branch
        %177 = sbr.rel (%p175) target = $region24
      $region23: #{_lambda_.18} parent=15 // pred_region
        %p178 = scmp.lt.s32.totalorder %s16, 1
        %s179 = scalar_select %p178, %s16, 1
        %p180 = scmp.lt.s32.totalorder %s18, 0
        %s181 = scalar_select %p180, %s18, 0
        %s182 = smul.addr %s179, 48
        %s183 = sadd.s32 %s181, %s182
        %s184 = smul.addr %s183, 4
        %s185 = scalar_lea.vmem %s1, %s184
      $region24: #{_lambda_.18} parent=15 // pred_fallthru
        _
      // Predicated region
      $region25: #{_lambda_.18} parent=15 // pred_check
        %p186 = pneg %p106
      $region26: #{_lambda_.18} parent=15 // pred_check_branch
        %188 = sbr.rel (%p186) target = $region28
      $region27: #{_lambda_.18} parent=15 // pred_region
        %p189 = scmp.lt.s32.totalorder %s16, 1
        %s190 = scalar_select %p189, %s16, 1
        %p191 = scmp.lt.s32.totalorder %s18, 0
        %s192 = scalar_select %p191, %s18, 0
        %s193 = sadd.s32 %s192, %s190
        %s194 = scalar_lea.vmem %s2, %s193
      $region28: #{_lambda_.18} parent=15 // pred_fallthru
        _
    $region16: #{_lambda_.18} parent=5 // pred_fallthru
      _
    %p195 = scmp.le.s32.totalorder 1, %s9
    %p196 = scmp.lt.s32.totalorder %s9, 3
    %p197 = pnand %p195, %p196
    %p198 = pneg %p197
    // Predicated region
    $region29: #{_lambda_.18} parent=5 // pred_check
      _
    $region30: #{_lambda_.18} parent=5 // pred_check_branch
      %200 = sbr.rel (%p197) target = $region32
    $region31: #{_lambda_.18} parent=5 // pred_region
      %s201 = ssub.s32 %s9, 1
      %s202 = smul.u32 16, %s20
      %p203 = scmp.lt.s32.totalorder %s19, 1
      %s204 = scalar_select %p203, %s19, 1
      %p205 = scmp.lt.s32.totalorder %s202, 15
      %s206 = scalar_select %p205, %s202, 15
      %s207 = smul.addr %s206, 3
      %s208 = smul.addr %s204, 48
      %s209 = sadd.s32 %s207, %s208
      %s210 = smul.addr %s209, 4
      %s211 = scalar_lea.vmem %s0, %s210
      %p212 = pneg %p56
      %p213 = pneg %p53
      %p214 = scmp.lt.s32.totalorder %s19, 1
      %s215 = scalar_select %p214, %s19, 1
      %p216 = scmp.lt.s32.totalorder %s21, 0
      %s217 = scalar_select %p216, %s21, 0
      %s218 = smul.addr %s215, 48
      %s219 = sadd.s32 %s217, %s218
      %s220 = smul.addr %s219, 4
      %s221 = scalar_lea.vmem %s1, %s220
      %p222 = pneg %p84
      %p223 = pneg %p81
      %p224 = scmp.lt.s32.totalorder %s19, 1
      %s225 = scalar_select %p224, %s19, 1
      %p226 = scmp.lt.s32.totalorder %s21, 0
      %s227 = scalar_select %p226, %s21, 0
      %s228 = sadd.s32 %s227, %s225
      %s229 = scalar_lea.vmem %s2, %s228
      %p230 = pneg %p112
      %p231 = pneg %p109
      %p232 = pneg %p142
      %p233 = pneg %p139
      %s234 = smul.u32 16, %s20
      %p235 = scmp.lt.s32.totalorder %s19, 1
      %s236 = scalar_select %p235, %s19, 1
      %p237 = scmp.lt.s32.totalorder %s234, 15
      %s238 = scalar_select %p237, %s234, 15
      %p239 = scmp.lt.s32.totalorder %s21, 0
      %s240 = scalar_select %p239, %s21, 0
      %s241 = sadd.s32 %s240, %s238
      %s242 = smul.addr %s236, 16
      %s243 = sadd.s32 %s241, %s242
      %s244 = smul.addr %s243, 8
      %s245 = scalar_lea.vmem %s3, %s244
      %s246 = smul.u32 16, %s20
      %p247 = scmp.lt.s32.totalorder %s19, 1
      %s248 = scalar_select %p247, %s19, 1
      %p249 = scmp.lt.s32.totalorder %s246, 15
      %s250 = scalar_select %p249, %s246, 15
      %s251 = smul.addr %s250, 3
      %s252 = smul.addr %s248, 48
      %s253 = sadd.s32 %s251, %s252
      %s254 = smul.addr %s253, 4
      %s255 = scalar_lea.vmem %s0, %s254
      %s256 = smul.u32 16, %s20
      %p257 = scmp.lt.s32.totalorder %s19, 1
      %s258 = scalar_select %p257, %s19, 1
      %p259 = scmp.lt.s32.totalorder %s21, 0
      %s260 = scalar_select %p259, %s21, 0
      %s261 = smul.addr %s258, 48
      %s262 = sadd.s32 %s260, %s261
      %s263 = smul.addr %s262, 4
      %s264 = scalar_lea.vmem %s1, %s263
      %p265 = scmp.lt.s32.totalorder %s19, 1
      %s266 = scalar_select %p265, %s19, 1
      %p267 = scmp.lt.s32.totalorder %s21, 0
      %s268 = scalar_select %p267, %s21, 0
      %s269 = sadd.s32 %s268, %s266
      %s270 = scalar_lea.vmem %s2, %s269
      %s271 = smul.u32 16, %s20
      %p272 = scmp.lt.s32.totalorder %s19, 1
      %s273 = scalar_select %p272, %s19, 1
      %p274 = scmp.lt.s32.totalorder %s271, 15
      %s275 = scalar_select %p274, %s271, 15
      %p276 = scmp.lt.s32.totalorder %s21, 0
      %s277 = scalar_select %p276, %s21, 0
      %s278 = sadd.s32 %s277, %s275
      %s279 = smul.addr %s273, 16
      %s280 = sadd.s32 %s278, %s279
      %s281 = smul.addr %s280, 8
      %s282 = scalar_lea.vmem %s3, %s281
      %s283 = smul.u32 16, %s20
      %v285 = vld [vmem:[%s255] sm:$0xff]
      %v286 = vld [vmem:[%s255 + $0x8] sm:$0xf]
      %v287 = vld [vmem:[%s255 + $0xc] sm:$0xff]
      %v288 = vld [vmem:[%s255 + $0x14] sm:$0xf]
      %v289 = vld [vmem:[%s255 + $0x18] sm:$0xff]
      %v290 = vld [vmem:[%s255 + $0x20] sm:$0xf]
      %v291 = vld [vmem:[%s255 + $0x24] sm:$0xff]
      %v292 = vld [vmem:[%s255 + $0x2c] sm:$0xf]
      %v293 = vld [vmem:[%s255 + $0x30] sm:$0xff]
      %v294 = vld [vmem:[%s255 + $0x38] sm:$0xf]
      %v295 = vld [vmem:[%s255 + $0x3c] sm:$0xff]
      %v296 = vld [vmem:[%s255 + $0x44] sm:$0xf]
      %v297 = vld [vmem:[%s255 + $0x48] sm:$0xff]
      %v298 = vld [vmem:[%s255 + $0x50] sm:$0xf]
      %v299 = vld [vmem:[%s255 + $0x54] sm:$0xff]
      %v300 = vld [vmem:[%s255 + $0x5c] sm:$0xf]
      %v301 = vld [vmem:[%s255 + $0x60] sm:$0xff]
      %v302 = vld [vmem:[%s255 + $0x68] sm:$0xf]
      %v303 = vld [vmem:[%s255 + $0x6c] sm:$0xff]
      %v304 = vld [vmem:[%s255 + $0x74] sm:$0xf]
      %v305 = vld [vmem:[%s255 + $0x78] sm:$0xff]
      %v306 = vld [vmem:[%s255 + $0x80] sm:$0xf]
      %v307 = vld [vmem:[%s255 + $0x84] sm:$0xff]
      %v308 = vld [vmem:[%s255 + $0x8c] sm:$0xf]
      %v309 = vld [vmem:[%s255 + $0x90] sm:$0xff]
      %v310 = vld [vmem:[%s255 + $0x98] sm:$0xf]
      %v311 = vld [vmem:[%s255 + $0x9c] sm:$0xff]
      %v312 = vld [vmem:[%s255 + $0xa4] sm:$0xf]
      %v313 = vld [vmem:[%s255 + $0xa8] sm:$0xff]
      %v314 = vld [vmem:[%s255 + $0xb0] sm:$0xf]
      %v315 = vld [vmem:[%s255 + $0xb4] sm:$0xff]
      %v316 = vld [vmem:[%s255 + $0xbc] sm:$0xf]
      %v317 = vld [vmem:[%s264] sm:$0xf]
      %v318 = vld [vmem:[%s264 + $0x4] sm:$0xf]
      %v319 = vld [vmem:[%s264 + $0x8] sm:$0xf]
      %v320 = vld [vmem:[%s264 + $0xc] sm:$0xf]
      %v321 = vld [vmem:[%s264 + $0x10] sm:$0xf]
      %v322 = vld [vmem:[%s264 + $0x14] sm:$0xf]
      %v323 = vld [vmem:[%s264 + $0x18] sm:$0xf]
      %v324 = vld [vmem:[%s264 + $0x1c] sm:$0xf]
      %v325 = vld [vmem:[%s264 + $0x20] sm:$0xf]
      %v326 = vld [vmem:[%s264 + $0x24] sm:$0xf]
      %v327 = vld [vmem:[%s264 + $0x28] sm:$0xf]
      %v328 = vld [vmem:[%s264 + $0x2c] sm:$0xf]
      %v329 = vld [vmem:[%s264 + $0x30] sm:$0xf]
      %v330 = vld [vmem:[%s264 + $0x34] sm:$0xf]
      %v331 = vld [vmem:[%s264 + $0x38] sm:$0xf]
      %v332 = vld [vmem:[%s264 + $0x3c] sm:$0xf]
      %v333 = vld [vmem:[%s264 + $0x40] sm:$0xf]
      %v334 = vld [vmem:[%s264 + $0x44] sm:$0xf]
      %v335 = vld [vmem:[%s264 + $0x48] sm:$0xf]
      %v336 = vld [vmem:[%s264 + $0x4c] sm:$0xf]
      %v337 = vld [vmem:[%s264 + $0x50] sm:$0xf]
      %v338 = vld [vmem:[%s264 + $0x54] sm:$0xf]
      %v339 = vld [vmem:[%s264 + $0x58] sm:$0xf]
      %v340 = vld [vmem:[%s264 + $0x5c] sm:$0xf]
      %v341 = vld [vmem:[%s264 + $0x60] sm:$0xf]
      %v342 = vld [vmem:[%s264 + $0x64] sm:$0xf]
      %v343 = vld [vmem:[%s264 + $0x68] sm:$0xf]
      %v344 = vld [vmem:[%s264 + $0x6c] sm:$0xf]
      %v345 = vld [vmem:[%s264 + $0x70] sm:$0xf]
      %v346 = vld [vmem:[%s264 + $0x74] sm:$0xf]
      %v347 = vld [vmem:[%s264 + $0x78] sm:$0xf]
      %v348 = vld [vmem:[%s264 + $0x7c] sm:$0xf]
      %v349 = vld [vmem:[%s264 + $0x80] sm:$0xf]
      %v350 = vld [vmem:[%s264 + $0x84] sm:$0xf]
      %v351 = vld [vmem:[%s264 + $0x88] sm:$0xf]
      %v352 = vld [vmem:[%s264 + $0x8c] sm:$0xf]
      %v353 = vld [vmem:[%s264 + $0x90] sm:$0xf]
      %v354 = vld [vmem:[%s264 + $0x94] sm:$0xf]
      %v355 = vld [vmem:[%s264 + $0x98] sm:$0xf]
      %v356 = vld [vmem:[%s264 + $0x9c] sm:$0xf]
      %v357 = vld [vmem:[%s264 + $0xa0] sm:$0xf]
      %v358 = vld [vmem:[%s264 + $0xa4] sm:$0xf]
      %v359 = vld [vmem:[%s264 + $0xa8] sm:$0xf]
      %v360 = vld [vmem:[%s264 + $0xac] sm:$0xf]
      %v361 = vld [vmem:[%s264 + $0xb0] sm:$0xf]
      %v362 = vld [vmem:[%s264 + $0xb4] sm:$0xf]
      %v363 = vld [vmem:[%s264 + $0xb8] sm:$0xf]
      %v364 = vld [vmem:[%s264 + $0xbc] sm:$0xf]
      %v365 = vld [vmem:[%s270] sm:$0x1]
      %v367 = vlaneseq
      %v368 = vshrl.u32 %v367, 7
      %v369 = vsub.s32 0, %v368
      %v370 = vrot.slane %v365, %v369
      %v404 = vunpack.c.l.b16 %v285
      %v405 = vunpack.c.h.b16 %v285
      %v406 = vunpack.c.l.b16 %v286
      %v407 = vunpack.c.l.b16 %v287
      %v408 = vunpack.c.h.b16 %v287
      %v409 = vunpack.c.l.b16 %v288
      %v410 = vunpack.c.l.b16 %v289
      %v411 = vunpack.c.h.b16 %v289
      %v412 = vunpack.c.l.b16 %v290
      %v413 = vunpack.c.l.b16 %v291
      %v414 = vunpack.c.h.b16 %v291
      %v415 = vunpack.c.l.b16 %v292
      %v416 = vunpack.c.l.b16 %v293
      %v417 = vunpack.c.h.b16 %v293
      %v418 = vunpack.c.l.b16 %v294
      %v419 = vunpack.c.l.b16 %v295
      %v420 = vunpack.c.h.b16 %v295
      %v421 = vunpack.c.l.b16 %v296
      %v422 = vunpack.c.l.b16 %v297
      %v423 = vunpack.c.h.b16 %v297
      %v424 = vunpack.c.l.b16 %v298
      %v425 = vunpack.c.l.b16 %v299
      %v426 = vunpack.c.h.b16 %v299
      %v427 = vunpack.c.l.b16 %v300
      %v428 = vunpack.c.l.b16 %v301
      %v429 = vunpack.c.h.b16 %v301
      %v430 = vunpack.c.l.b16 %v302
      %v431 = vunpack.c.l.b16 %v303
      %v432 = vunpack.c.h.b16 %v303
      %v433 = vunpack.c.l.b16 %v304
      %v434 = vunpack.c.l.b16 %v305
      %v435 = vunpack.c.h.b16 %v305
      %v436 = vunpack.c.l.b16 %v306
      %v437 = vunpack.c.l.b16 %v307
      %v438 = vunpack.c.h.b16 %v307
      %v439 = vunpack.c.l.b16 %v308
      %v440 = vunpack.c.l.b16 %v309
      %v441 = vunpack.c.h.b16 %v309
      %v442 = vunpack.c.l.b16 %v310
      %v443 = vunpack.c.l.b16 %v311
      %v444 = vunpack.c.h.b16 %v311
      %v445 = vunpack.c.l.b16 %v312
      %v446 = vunpack.c.l.b16 %v313
      %v447 = vunpack.c.h.b16 %v313
      %v448 = vunpack.c.l.b16 %v314
      %v449 = vunpack.c.l.b16 %v315
      %v450 = vunpack.c.h.b16 %v315
      %v451 = vunpack.c.l.b16 %v316
      %v452 = vpack.c.b16 %v407, %v404
      %v453 = vpack.c.b16 %v408, %v405
      %v454 = vpack.c.b16 %v409, %v406
      %v455 = vpack.c.b16 %v413, %v410
      %v456 = vpack.c.b16 %v414, %v411
      %v457 = vpack.c.b16 %v415, %v412
      %v458 = vpack.c.b16 %v419, %v416
      %v459 = vpack.c.b16 %v420, %v417
      %v460 = vpack.c.b16 %v421, %v418
      %v461 = vpack.c.b16 %v425, %v422
      %v462 = vpack.c.b16 %v426, %v423
      %v463 = vpack.c.b16 %v427, %v424
      %v464 = vpack.c.b16 %v431, %v428
      %v465 = vpack.c.b16 %v432, %v429
      %v466 = vpack.c.b16 %v433, %v430
      %v467 = vpack.c.b16 %v437, %v434
      %v468 = vpack.c.b16 %v438, %v435
      %v469 = vpack.c.b16 %v439, %v436
      %v470 = vpack.c.b16 %v443, %v440
      %v471 = vpack.c.b16 %v444, %v441
      %v472 = vpack.c.b16 %v445, %v442
      %v473 = vpack.c.b16 %v449, %v446
      %v474 = vpack.c.b16 %v450, %v447
      %v475 = vpack.c.b16 %v451, %v448
      %v548 = vunpack.c.l.b16 %v317
      %v549 = vunpack.c.l.b16 %v318
      %v550 = vunpack.c.l.b16 %v319
      %v551 = vunpack.c.l.b16 %v320
      %v552 = vunpack.c.l.b16 %v321
      %v553 = vunpack.c.l.b16 %v322
      %v554 = vunpack.c.l.b16 %v323
      %v555 = vunpack.c.l.b16 %v324
      %v556 = vunpack.c.l.b16 %v325
      %v557 = vunpack.c.l.b16 %v326
      %v558 = vunpack.c.l.b16 %v327
      %v559 = vunpack.c.l.b16 %v328
      %v560 = vunpack.c.l.b16 %v329
      %v561 = vunpack.c.l.b16 %v330
      %v562 = vunpack.c.l.b16 %v331
      %v563 = vunpack.c.l.b16 %v332
      %v564 = vunpack.c.l.b16 %v333
      %v565 = vunpack.c.l.b16 %v334
      %v566 = vunpack.c.l.b16 %v335
      %v567 = vunpack.c.l.b16 %v336
      %v568 = vunpack.c.l.b16 %v337
      %v569 = vunpack.c.l.b16 %v338
      %v570 = vunpack.c.l.b16 %v339
      %v571 = vunpack.c.l.b16 %v340
      %v572 = vunpack.c.l.b16 %v341
      %v573 = vunpack.c.l.b16 %v342
      %v574 = vunpack.c.l.b16 %v343
      %v575 = vunpack.c.l.b16 %v344
      %v576 = vunpack.c.l.b16 %v345
      %v577 = vunpack.c.l.b16 %v346
      %v578 = vunpack.c.l.b16 %v347
      %v579 = vunpack.c.l.b16 %v348
      %v580 = vunpack.c.l.b16 %v349
      %v581 = vunpack.c.l.b16 %v350
      %v582 = vunpack.c.l.b16 %v351
      %v583 = vunpack.c.l.b16 %v352
      %v584 = vunpack.c.l.b16 %v353
      %v585 = vunpack.c.l.b16 %v354
      %v586 = vunpack.c.l.b16 %v355
      %v587 = vunpack.c.l.b16 %v356
      %v588 = vunpack.c.l.b16 %v357
      %v589 = vunpack.c.l.b16 %v358
      %v590 = vunpack.c.l.b16 %v359
      %v591 = vunpack.c.l.b16 %v360
      %v592 = vunpack.c.l.b16 %v361
      %v593 = vunpack.c.l.b16 %v362
      %v594 = vunpack.c.l.b16 %v363
      %v595 = vunpack.c.l.b16 %v364
      %v596 = vpack.c.b16 %v549, %v548
      %v597 = vpack.c.b16 %v551, %v550
      %v598 = vpack.c.b16 %v553, %v552
      %v599 = vpack.c.b16 %v555, %v554
      %v600 = vpack.c.b16 %v557, %v556
      %v601 = vpack.c.b16 %v559, %v558
      %v602 = vpack.c.b16 %v561, %v560
      %v603 = vpack.c.b16 %v563, %v562
      %v604 = vpack.c.b16 %v565, %v564
      %v605 = vpack.c.b16 %v567, %v566
      %v606 = vpack.c.b16 %v569, %v568
      %v607 = vpack.c.b16 %v571, %v570
      %v608 = vpack.c.b16 %v573, %v572
      %v609 = vpack.c.b16 %v575, %v574
      %v610 = vpack.c.b16 %v577, %v576
      %v611 = vpack.c.b16 %v579, %v578
      %v612 = vpack.c.b16 %v581, %v580
      %v613 = vpack.c.b16 %v583, %v582
      %v614 = vpack.c.b16 %v585, %v584
      %v615 = vpack.c.b16 %v587, %v586
      %v616 = vpack.c.b16 %v589, %v588
      %v617 = vpack.c.b16 %v591, %v590
      %v618 = vpack.c.b16 %v593, %v592
      %v619 = vpack.c.b16 %v595, %v594
      %644 = vmatprep.subr.bf16.mxu0 0
      %645 = vmatpush1.bf16.msra.mxu0 %v596
      %646 = vmatprep.subr.bf16.mxu0 0
      %647 = vmatpush1.bf16.msra.mxu0 %v597
      %648 = vmatprep.subr.bf16.mxu0 0
      %649 = vmatpush1.bf16.msra.mxu0 %v598
      %650 = vmatprep.subr.bf16.mxu0 0
      %651 = vmatpush1.bf16.msra.mxu0 %v599
      %652 = vmatprep.subr.bf16.mxu0 0
      %653 = vmatpush1.bf16.msra.mxu0 %v600
      %654 = vmatprep.subr.bf16.mxu0 0
      %655 = vmatpush1.bf16.msra.mxu0 %v601
      %656 = vmatprep.subr.bf16.mxu0 0
      %657 = vmatpush1.bf16.msra.mxu0 %v602
      %658 = vmatprep.subr.bf16.mxu0 0
      %659 = vmatpush1.bf16.msra.mxu0 %v603
      %660 = vmatprep.subr.bf16.mxu0 0
      %661 = vmatpush1.bf16.msra.mxu0 %v604
      %662 = vmatprep.subr.bf16.mxu0 0
      %663 = vmatpush1.bf16.msra.mxu0 %v605
      %664 = vmatprep.subr.bf16.mxu0 0
      %665 = vmatpush1.bf16.msra.mxu0 %v606
      %666 = vmatprep.subr.bf16.mxu0 0
      %667 = vmatpush1.bf16.msra.mxu0 %v607
      %668 = vmatprep.subr.bf16.mxu0 0
      %669 = vmatpush1.bf16.msra.mxu0 %v608
      %670 = vmatprep.subr.bf16.mxu0 0
      %671 = vmatpush1.bf16.msra.mxu0 %v609
      %672 = vmatprep.subr.bf16.mxu0 0
      %673 = vmatpush1.bf16.msra.mxu0 %v610
      %674 = vmatprep.subr.bf16.mxu0 0
      %675 = vmatpush1.bf16.msra.mxu0 %v611
      %676 = vmatprep.mubr.bf16.mxu0 %v453
      %677 = vmatmul.mubr.bf16.gmra.mrb[0].mxu0 %v452
      %v678 = vpop.f32.mrb[0].mxu0
      %v679 = vadd.f32 %v370, %v678
      %v680 = vpop.f32.mrb[0].mxu0
      %v681 = vpop.f32.mrb[0].mxu0
      %v682 = vadd.f32 %v370, %v681
      %v683 = vpop.f32.mrb[0].mxu0
      %684 = vmatprep.mubr.bf16.mxu0 %v456
      %685 = vmatmul.mubr.bf16.gmra.mrb[0].mxu0 %v455
      %v686 = vpop.f32.mrb[0].mxu0
      %v687 = vadd.f32 %v370, %v686
      %v688 = vpop.f32.mrb[0].mxu0
      %v689 = vpop.f32.mrb[0].mxu0
      %v690 = vadd.f32 %v370, %v689
      %v691 = vpop.f32.mrb[0].mxu0
      %692 = vmatprep.mubr.bf16.mxu0 %v459
      %693 = vmatmul.mubr.bf16.gmra.mrb[0].mxu0 %v458
      %v694 = vpop.f32.mrb[0].mxu0
      %v695 = vadd.f32 %v370, %v694
      %v696 = vpop.f32.mrb[0].mxu0
      %v697 = vpop.f32.mrb[0].mxu0
      %v698 = vadd.f32 %v370, %v697
      %v699 = vpop.f32.mrb[0].mxu0
      %700 = vmatprep.mubr.bf16.mxu0 %v462
      %701 = vmatmul.mubr.bf16.gmra.mrb[0].mxu0 %v461
      %v702 = vpop.f32.mrb[0].mxu0
      %v703 = vadd.f32 %v370, %v702
      %v704 = vpop.f32.mrb[0].mxu0
      %v705 = vpop.f32.mrb[0].mxu0
      %v706 = vadd.f32 %v370, %v705
      %v707 = vpop.f32.mrb[0].mxu0
      %708 = vmatprep.mubr.bf16.mxu0 %v465
      %709 = vmatmul.mubr.bf16.gmra.mrb[0].mxu0 %v464
      %v710 = vpop.f32.mrb[0].mxu0
      %v711 = vadd.f32 %v370, %v710
      %v712 = vpop.f32.mrb[0].mxu0
      %v713 = vpop.f32.mrb[0].mxu0
      %v714 = vadd.f32 %v370, %v713
      %v715 = vpop.f32.mrb[0].mxu0
      %716 = vmatprep.mubr.bf16.mxu0 %v468
      %717 = vmatmul.mubr.bf16.gmra.mrb[0].mxu0 %v467
      %v718 = vpop.f32.mrb[0].mxu0
      %v719 = vadd.f32 %v370, %v718
      %v720 = vpop.f32.mrb[0].mxu0
      %v721 = vpop.f32.mrb[0].mxu0
      %v722 = vadd.f32 %v370, %v721
      %v723 = vpop.f32.mrb[0].mxu0
      %724 = vmatprep.mubr.bf16.mxu0 %v471
      %725 = vmatmul.mubr.bf16.gmra.mrb[0].mxu0 %v470
      %v726 = vpop.f32.mrb[0].mxu0
      %v727 = vadd.f32 %v370, %v726
      %v728 = vpop.f32.mrb[0].mxu0
      %v729 = vpop.f32.mrb[0].mxu0
      %v730 = vadd.f32 %v370, %v729
      %v731 = vpop.f32.mrb[0].mxu0
      %732 = vmatprep.mubr.bf16.mxu0 %v474
      %733 = vmatmul.mubr.bf16.gmra.mrb[0].mxu0 %v473
      %v734 = vpop.f32.mrb[0].mxu0
      %v735 = vadd.f32 %v370, %v734
      %v736 = vpop.f32.mrb[0].mxu0
      %v737 = vpop.f32.mrb[0].mxu0
      %v738 = vadd.f32 %v370, %v737
      %v739 = vpop.f32.mrb[0].mxu0
      %740 = vdwg.mxu0
      %741 = vmatprep.subr.bf16.mxu0 0
      %742 = vmatpush1.bf16.msra.mxu0 %v612
      %743 = vmatprep.subr.bf16.mxu0 0
      %744 = vmatpush1.bf16.msra.mxu0 %v613
      %745 = vmatprep.subr.bf16.mxu0 0
      %746 = vmatpush1.bf16.msra.mxu0 %v614
      %747 = vmatprep.subr.bf16.mxu0 0
      %748 = vmatpush1.bf16.msra.mxu0 %v615
      %749 = vmatprep.subr.bf16.mxu0 0
      %750 = vmatpush1.bf16.msra.mxu0 %v616
      %751 = vmatprep.subr.bf16.mxu0 0
      %752 = vmatpush1.bf16.msra.mxu0 %v617
      %753 = vmatprep.subr.bf16.mxu0 0
      %754 = vmatpush1.bf16.msra.mxu0 %v618
      %755 = vmatprep.subr.bf16.mxu0 0
      %756 = vmatpush1.bf16.msra.mxu0 %v619
      %757 = vmatprep.subr.bf16.mxu0 0
      %758 = vmatpush1.bf16.msra.mxu0 0
      %759 = vmatprep.subr.bf16.mxu0 0
      %760 = vmatpush1.bf16.msra.mxu0 0
      %761 = vmatprep.subr.bf16.mxu0 0
      %762 = vmatpush1.bf16.msra.mxu0 0
      %763 = vmatprep.subr.bf16.mxu0 0
      %764 = vmatpush1.bf16.msra.mxu0 0
      %765 = vmatprep.subr.bf16.mxu0 0
      %766 = vmatpush1.bf16.msra.mxu0 0
      %767 = vmatprep.subr.bf16.mxu0 0
      %768 = vmatpush1.bf16.msra.mxu0 0
      %769 = vmatprep.subr.bf16.mxu0 0
      %770 = vmatpush1.bf16.msra.mxu0 0
      %771 = vmatprep.subr.bf16.mxu0 0
      %772 = vmatpush1.bf16.msra.mxu0 0
      %773 = vmatprep.mubr.bf16.mxu0 0
      %774 = vmatmul.mubr.bf16.gmra.mrb[0].mxu0 %v454
      %v775 = vpop.f32.mrb[0].mxu0
      %v776 = vadd.f32 %v679, %v775
      %v777 = vpop.f32.mrb[0].mxu0
      %v778 = vpop.f32.mrb[0].mxu0
      %v779 = vadd.f32 %v682, %v778
      %v780 = vpop.f32.mrb[0].mxu0
      %781 = vmatprep.mubr.bf16.mxu0 0
      %782 = vmatmul.mubr.bf16.gmra.mrb[0].mxu0 %v457
      %v783 = vpop.f32.mrb[0].mxu0
      %v784 = vadd.f32 %v687, %v783
      %v785 = vpop.f32.mrb[0].mxu0
      %v786 = vpop.f32.mrb[0].mxu0
      %v787 = vadd.f32 %v690, %v786
      %v788 = vpop.f32.mrb[0].mxu0
      %789 = vmatprep.mubr.bf16.mxu0 0
      %790 = vmatmul.mubr.bf16.gmra.mrb[0].mxu0 %v460
      %v791 = vpop.f32.mrb[0].mxu0
      %v792 = vadd.f32 %v695, %v791
      %v793 = vpop.f32.mrb[0].mxu0
      %v794 = vpop.f32.mrb[0].mxu0
      %v795 = vadd.f32 %v698, %v794
      %v796 = vpop.f32.mrb[0].mxu0
      %797 = vmatprep.mubr.bf16.mxu0 0
      %798 = vmatmul.mubr.bf16.gmra.mrb[0].mxu0 %v463
      %v799 = vpop.f32.mrb[0].mxu0
      %v800 = vadd.f32 %v703, %v799
      %v801 = vpop.f32.mrb[0].mxu0
      %v802 = vpop.f32.mrb[0].mxu0
      %v803 = vadd.f32 %v706, %v802
      %v804 = vpop.f32.mrb[0].mxu0
      %805 = vmatprep.mubr.bf16.mxu0 0
      %806 = vmatmul.mubr.bf16.gmra.mrb[0].mxu0 %v466
      %v807 = vpop.f32.mrb[0].mxu0
      %v808 = vadd.f32 %v711, %v807
      %v809 = vpop.f32.mrb[0].mxu0
      %v810 = vpop.f32.mrb[0].mxu0
      %v811 = vadd.f32 %v714, %v810
      %v812 = vpop.f32.mrb[0].mxu0
      %813 = vmatprep.mubr.bf16.mxu0 0
      %814 = vmatmul.mubr.bf16.gmra.mrb[0].mxu0 %v469
      %v815 = vpop.f32.mrb[0].mxu0
      %v816 = vadd.f32 %v719, %v815
      %v817 = vpop.f32.mrb[0].mxu0
      %v818 = vpop.f32.mrb[0].mxu0
      %v819 = vadd.f32 %v722, %v818
      %v820 = vpop.f32.mrb[0].mxu0
      %821 = vmatprep.mubr.bf16.mxu0 0
      %822 = vmatmul.mubr.bf16.gmra.mrb[0].mxu0 %v472
      %v823 = vpop.f32.mrb[0].mxu0
      %v824 = vadd.f32 %v727, %v823
      %v825 = vpop.f32.mrb[0].mxu0
      %v826 = vpop.f32.mrb[0].mxu0
      %v827 = vadd.f32 %v730, %v826
      %v828 = vpop.f32.mrb[0].mxu0
      %829 = vmatprep.mubr.bf16.mxu0 0
      %830 = vmatmul.mubr.bf16.gmra.mrb[0].mxu0 %v475
      %v831 = vpop.f32.mrb[0].mxu0
      %v832 = vadd.f32 %v735, %v831
      %v833 = vpop.f32.mrb[0].mxu0
      %v834 = vpop.f32.mrb[0].mxu0
      %v835 = vadd.f32 %v738, %v834
      %v836 = vpop.f32.mrb[0].mxu0
      %837 = vdwg.mxu0
      %838 = vst [vmem:[%s282] sm:$0xff] %v776
      %839 = vst [vmem:[%s282 + $0x8] sm:$0xff] %v779
      %840 = vst [vmem:[%s282 + $0x10] sm:$0xff] %v784
      %841 = vst [vmem:[%s282 + $0x18] sm:$0xff] %v787
      %842 = vst [vmem:[%s282 + $0x20] sm:$0xff] %v792
      %843 = vst [vmem:[%s282 + $0x28] sm:$0xff] %v795
      %844 = vst [vmem:[%s282 + $0x30] sm:$0xff] %v800
      %845 = vst [vmem:[%s282 + $0x38] sm:$0xff] %v803
      %846 = vst [vmem:[%s282 + $0x40] sm:$0xff] %v808
      %847 = vst [vmem:[%s282 + $0x48] sm:$0xff] %v811
      %848 = vst [vmem:[%s282 + $0x50] sm:$0xff] %v816
      %849 = vst [vmem:[%s282 + $0x58] sm:$0xff] %v819
      %850 = vst [vmem:[%s282 + $0x60] sm:$0xff] %v824
      %851 = vst [vmem:[%s282 + $0x68] sm:$0xff] %v827
      %852 = vst [vmem:[%s282 + $0x70] sm:$0xff] %v832
      %853 = vst [vmem:[%s282 + $0x78] sm:$0xff] %v835
      %s854 = smul.u32 16, %s20
      %p855 = scmp.lt.s32.totalorder %s19, 1
      %s856 = scalar_select %p855, %s19, 1
      %p857 = scmp.lt.s32.totalorder %s854, 15
      %s858 = scalar_select %p857, %s854, 15
      %p859 = scmp.lt.s32.totalorder %s21, 0
      %s860 = scalar_select %p859, %s21, 0
      %s861 = sadd.s32 %s860, %s858
      %s862 = smul.addr %s856, 16
      %s863 = sadd.s32 %s861, %s862
      %s864 = smul.addr %s863, 8
      %s865 = scalar_lea.vmem %s3, %s864
      // Predicated region
      $region33: #{_lambda_.18} parent=31 // pred_check
        %p866 = pneg %p139
      $region34: #{_lambda_.18} parent=31 // pred_check_branch
        %868 = sbr.rel (%p866) target = $region36
      $region35: #{_lambda_.18} parent=31 // pred_region
        %s869 = smul.u32 16, %s20
      $region36: #{_lambda_.18} parent=31 // pred_fallthru
        _
    $region32: #{_lambda_.18} parent=5 // pred_fallthru
      _
    %p870 = scmp.le.s32.totalorder 2, %s9
    // Predicated region
    $region37: #{_lambda_.18} parent=5 // pred_check
      %p871 = pneg %p870
    $region38: #{_lambda_.18} parent=5 // pred_check_branch
      %873 = sbr.rel (%p871) target = $region40
    $region39: #{_lambda_.18} parent=5 // pred_region
      %s874 = ssub.s32 %s9, 2
      // Predicated region
      $region41: #{_lambda_.18} parent=39 // pred_check
        %p875 = pneg %p145
      $region42: #{_lambda_.18} parent=39 // pred_check_branch
        %877 = sbr.rel (%p875) target = $region44
      $region43: #{_lambda_.18} parent=39 // pred_region
        %s878 = smul.u32 16, %s23
        %p879 = scmp.lt.s32.totalorder %s22, 1
        %s880 = scalar_select %p879, %s22, 1
        %p881 = scmp.lt.s32.totalorder %s878, 15
        %s882 = scalar_select %p881, %s878, 15
        %p883 = scmp.lt.s32.totalorder %s24, 0
        %s884 = scalar_select %p883, %s24, 0
        %s885 = sadd.s32 %s884, %s882
        %s886 = smul.addr %s880, 16
        %s887 = sadd.s32 %s885, %s886
        %s888 = smul.addr %s887, 8
        %s889 = scalar_lea.vmem %s3, %s888
      $region44: #{_lambda_.18} parent=39 // pred_fallthru
        _
    $region40: #{_lambda_.18} parent=5 // pred_fallthru
      _
  $region6: #{_lambda_.18} parent=0 // loop_footer
    %s13 = sadd.s32 1, %s9
  $region7: #{_lambda_.18} parent=0 // loop_footer_branch
    %8 = sbr.rel target = $region3
  $region8: #{_lambda_.18} parent=0 // loop_exit
    _

// kernel: _lambda_.19
$region0: #{_lambda_.19}
  #allocation0 [shape = 'u32[]', space=smem, size = 0x4, offset = 0x4, fixed_abs, tag = 'smem constant byte address 0x4 - core index']
  #allocation1 [shape = 'u32[144,128]{1,0:T(1,128)}', space=vmem, size = 0x12000, scoped, tag = 'internal scratch']
  %s0 = inlined_call_operand.vmem [shape: bf16[2,512,256], index: 0, kind: input, shape index: {}]
  %s1 = inlined_call_operand.vmem [shape: bf16[2,256,128], index: 1, kind: input, shape index: {}]
  %s2 = inlined_call_operand.vmem [shape: f32[2,1,128], index: 2, kind: input, shape index: {}]
  %s3 = inlined_call_operand.vmem [shape: f32[2,512,128], index: 3, kind: output, shape index: {}]
  %s4 = sld [smem:[#allocation0]]
  $region45: #{_lambda_.19} parent=0
    _
  %s6 = ssub.s32 1, %s4
  %s7 = scalar_select 0, %s6, %s4
  loop: start=0, step=1, limit=6
  $region2: #{_lambda_.19} parent=0 // loop_pre_header
    _
  $region3: #{_lambda_.19} parent=0 // loop_header
    %s9 = sphi 0, %s13
    %p10 = scmp.ge.s32.totalorder %s9, 6
    %s16 = sphi 0, %s35
    %s17 = sphi 0, %s31
    %s18 = sphi 0, %s27
    %s19 = sphi 0, %s16
    %s20 = sphi 0, %s17
    %s21 = sphi 0, %s18
    %s22 = sphi 0, %s19
    %s23 = sphi 0, %s20
    %s24 = sphi 0, %s21
    %s40 = sphi 0, %s42
    %s43 = sphi 0, %s40
    %s44 = sphi 0, %s43
    %s60 = sphi 0, %s44
    %s68 = sphi 0, %s70
    %s71 = sphi 0, %s68
    %s72 = sphi 0, %s71
    %s88 = sphi 0, %s72
    %s96 = sphi 0, %s98
    %s99 = sphi 0, %s96
    %s100 = sphi 0, %s99
    %s116 = sphi 0, %s100
    %s126 = sphi 0, %s128
    %s129 = sphi 0, %s126
    %s130 = sphi 0, %s129
    %s146 = sphi 0, %s130
  $region4: #{_lambda_.19} parent=0 // loop_header_branch
    %12 = sbr.rel (%p10) target = $region8
  $region5: #{_lambda_.19} parent=0 // loop_body
    %s14 = ssub.s32 %s9, 1
    %s15 = ssub.s32 %s9, 2
    %s25 = sadd.s32 1, %s18
    %p26 = scmp.ge.s32.totalorder %s25, 1
    %s27 = scalar_select %p26, 0, %s25
    %s28 = sadd.s32 1, %s17
    %s29 = scalar_select %p26, %s28, %s17
    %p30 = scmp.ge.s32.totalorder %s29, 2
    %s31 = scalar_select %p30, 0, %s29
    %s32 = sadd.s32 1, %s16
    %s33 = scalar_select %p30, %s32, %s16
    %p34 = scmp.ge.s32.totalorder %s33, 2
    %s35 = scalar_select %p34, 0, %s33
    %s36 = ssub.s32 %s16, %s35
    %s37 = ssub.s32 %s17, %s31
    %s38 = sor.u32 %s36, %s37
    %p39 = scmp.eq.s32.totalorder %s38, 0
    %s41 = sadd.s32 %s40, 1
    %s42 = scalar_select %p39, %s40, %s41
    %p45 = pneg %p39
    %p46 = scmp.eq.s32.totalorder %s9, 3
    %p47 = por %p45, %p46
    %p48 = scmp.ne.s32.totalorder %s40, %s43
    %p49 = scmp.eq.s32.totalorder %s9, 0
    %p50 = por %p48, %p49
    %p51 = scmp.ne.s32.totalorder %s40, %s43
    %p52 = scmp.eq.s32.totalorder %s14, 3
    %p53 = por %p51, %p52
    %p54 = scmp.ne.s32.totalorder %s43, %s44
    %p55 = scmp.eq.s32.totalorder %s14, 0
    %p56 = por %p54, %p55
    %p57 = scmp.ne.s32.totalorder %s43, %s44
    %p58 = scmp.eq.s32.totalorder %s15, 3
    %p59 = por %p57, %p58
    %p61 = scmp.ne.s32.totalorder %s44, %s60
    %p62 = scmp.eq.s32.totalorder %s15, 0
    %p63 = por %p61, %p62
    %s64 = ssub.s32 %s16, %s35
    %s65 = ssub.s32 %s18, %s27
    %s66 = sor.u32 %s64, %s65
    %p67 = scmp.eq.s32.totalorder %s66, 0
    %s69 = sadd.s32 %s68, 1
    %s70 = scalar_select %p67, %s68, %s69
    %p73 = pneg %p67
    %p74 = scmp.eq.s32.totalorder %s9, 3
    %p75 = por %p73, %p74
    %p76 = scmp.ne.s32.totalorder %s68, %s71
    %p77 = scmp.eq.s32.totalorder %s9, 0
    %p78 = por %p76, %p77
    %p79 = scmp.ne.s32.totalorder %s68, %s71
    %p80 = scmp.eq.s32.totalorder %s14, 3
    %p81 = por %p79, %p80
    %p82 = scmp.ne.s32.totalorder %s71, %s72
    %p83 = scmp.eq.s32.totalorder %s14, 0
    %p84 = por %p82, %p83
    %p85 = scmp.ne.s32.totalorder %s71, %s72
    %p86 = scmp.eq.s32.totalorder %s15, 3
    %p87 = por %p85, %p86
    %p89 = scmp.ne.s32.totalorder %s72, %s88
    %p90 = scmp.eq.s32.totalorder %s15, 0
    %p91 = por %p89, %p90
    %s92 = ssub.s32 %s16, %s35
    %s93 = ssub.s32 %s18, %s27
    %s94 = sor.u32 %s92, %s93
    %p95 = scmp.eq.s32.totalorder %s94, 0
    %s97 = sadd.s32 %s96, 1
    %s98 = scalar_select %p95, %s96, %s97
    %p101 = pneg %p95
    %p102 = scmp.eq.s32.totalorder %s9, 3
    %p103 = por %p101, %p102
    %p104 = scmp.ne.s32.totalorder %s96, %s99
    %p105 = scmp.eq.s32.totalorder %s9, 0
    %p106 = por %p104, %p105
    %p107 = scmp.ne.s32.totalorder %s96, %s99
    %p108 = scmp.eq.s32.totalorder %s14, 3
    %p109 = por %p107, %p108
    %p110 = scmp.ne.s32.totalorder %s99, %s100
    %p111 = scmp.eq.s32.totalorder %s14, 0
    %p112 = por %p110, %p111
    %p113 = scmp.ne.s32.totalorder %s99, %s100
    %p114 = scmp.eq.s32.totalorder %s15, 3
    %p115 = por %p113, %p114
    %p117 = scmp.ne.s32.totalorder %s100, %s116
    %p118 = scmp.eq.s32.totalorder %s15, 0
    %p119 = por %p117, %p118
    %s120 = ssub.s32 %s16, %s35
    %s121 = ssub.s32 %s17, %s31
    %s122 = sor.u32 %s120, %s121
    %s123 = ssub.s32 %s18, %s27
    %s124 = sor.u32 %s122, %s123
    %p125 = scmp.eq.s32.totalorder %s124, 0
    %s127 = sadd.s32 %s126, 1
    %s128 = scalar_select %p125, %s126, %s127
    %p131 = pneg %p125
    %p132 = scmp.eq.s32.totalorder %s9, 3
    %p133 = por %p131, %p132
    %p134 = scmp.ne.s32.totalorder %s126, %s129
    %p135 = scmp.eq.s32.totalorder %s9, 0
    %p136 = por %p134, %p135
    %p137 = scmp.ne.s32.totalorder %s126, %s129
    %p138 = scmp.eq.s32.totalorder %s14, 3
    %p139 = por %p137, %p138
    %p140 = scmp.ne.s32.totalorder %s129, %s130
    %p141 = scmp.eq.s32.totalorder %s14, 0
    %p142 = por %p140, %p141
    %p143 = scmp.ne.s32.totalorder %s129, %s130
    %p144 = scmp.eq.s32.totalorder %s15, 3
    %p145 = por %p143, %p144
    %p147 = scmp.ne.s32.totalorder %s130, %s146
    %p148 = scmp.eq.s32.totalorder %s15, 0
    %p149 = por %p147, %p148
    %p150 = scmp.le.s32.totalorder 1, %s9
    %p151 = scmp.lt.s32.totalorder %s9, 5
    %p152 = pnand %p150, %p151
    %p153 = pneg %p152
    // Predicated region
    $region9: #{_lambda_.19} parent=5 // pred_check
      _
    $region10: #{_lambda_.19} parent=5 // pred_check_branch
      %155 = sbr.rel (%p152) target = $region12
    $region11: #{_lambda_.19} parent=5 // pred_region
      %s156 = ssub.s32 %s9, 1
    $region12: #{_lambda_.19} parent=5 // pred_fallthru
      _
    %p157 = scmp.lt.s32.totalorder %s9, 4
    // Predicated region
    $region13: #{_lambda_.19} parent=5 // pred_check
      %p158 = pneg %p157
    $region14: #{_lambda_.19} parent=5 // pred_check_branch
      %160 = sbr.rel (%p158) target = $region16
    $region15: #{_lambda_.19} parent=5 // pred_region
      // Predicated region
      $region17: #{_lambda_.19} parent=15 // pred_check
        %p161 = pneg %p50
      $region18: #{_lambda_.19} parent=15 // pred_check_branch
        %163 = sbr.rel (%p161) target = $region20
      $region19: #{_lambda_.19} parent=15 // pred_region
        %s164 = smul.u32 32, %s17
        %p165 = scmp.lt.s32.totalorder %s16, 1
        %s166 = scalar_select %p165, %s16, 1
        %p167 = scmp.lt.s32.totalorder %s164, 63
        %s168 = scalar_select %p167, %s164, 63
        %s169 = smul.addr %s168, 2
        %s170 = smul.addr %s166, 128
        %s171 = sadd.s32 %s169, %s170
        %s172 = smul.addr %s171, 4
        %s173 = scalar_lea.vmem %s0, %s172
        %s174 = smul.u32 32, %s17
      $region20: #{_lambda_.19} parent=15 // pred_fallthru
        _
      // Predicated region
      $region21: #{_lambda_.19} parent=15 // pred_check
        %p175 = pneg %p78
      $region22: #{_lambda_.19} parent=15 // pred_check_branch
        %177 = sbr.rel (%p175) target = $region24
      $region23: #{_lambda_.19} parent=15 // pred_region
        %p178 = scmp.lt.s32.totalorder %s16, 1
        %s179 = scalar_select %p178, %s16, 1
        %p180 = scmp.lt.s32.totalorder %s18, 0
        %s181 = scalar_select %p180, %s18, 0
        %s182 = smul.addr %s179, 32
        %s183 = sadd.s32 %s181, %s182
        %s184 = smul.addr %s183, 4
        %s185 = scalar_lea.vmem %s1, %s184
      $region24: #{_lambda_.19} parent=15 // pred_fallthru
        _
      // Predicated region
      $region25: #{_lambda_.19} parent=15 // pred_check
        %p186 = pneg %p106
      $region26: #{_lambda_.19} parent=15 // pred_check_branch
        %188 = sbr.rel (%p186) target = $region28
      $region27: #{_lambda_.19} parent=15 // pred_region
        %p189 = scmp.lt.s32.totalorder %s16, 1
        %s190 = scalar_select %p189, %s16, 1
        %p191 = scmp.lt.s32.totalorder %s18, 0
        %s192 = scalar_select %p191, %s18, 0
        %s193 = sadd.s32 %s192, %s190
        %s194 = scalar_lea.vmem %s2, %s193
      $region28: #{_lambda_.19} parent=15 // pred_fallthru
        _
    $region16: #{_lambda_.19} parent=5 // pred_fallthru
      _
    %p195 = scmp.le.s32.totalorder 1, %s9
    %p196 = scmp.lt.s32.totalorder %s9, 5
    %p197 = pnand %p195, %p196
    %p198 = pneg %p197
    // Predicated region
    $region29: #{_lambda_.19} parent=5 // pred_check
      _
    $region30: #{_lambda_.19} parent=5 // pred_check_branch
      %200 = sbr.rel (%p197) target = $region32
    $region31: #{_lambda_.19} parent=5 // pred_region
      %s201 = ssub.s32 %s9, 1
      %s202 = smul.u32 32, %s20
      %p203 = scmp.lt.s32.totalorder %s19, 1
      %s204 = scalar_select %p203, %s19, 1
      %p205 = scmp.lt.s32.totalorder %s202, 63
      %s206 = scalar_select %p205, %s202, 63
      %s207 = smul.addr %s206, 2
      %s208 = smul.addr %s204, 128
      %s209 = sadd.s32 %s207, %s208
      %s210 = smul.addr %s209, 4
      %s211 = scalar_lea.vmem %s0, %s210
      %p212 = pneg %p56
      %p213 = pneg %p53
      %p214 = scmp.lt.s32.totalorder %s19, 1
      %s215 = scalar_select %p214, %s19, 1
      %p216 = scmp.lt.s32.totalorder %s21, 0
      %s217 = scalar_select %p216, %s21, 0
      %s218 = smul.addr %s215, 32
      %s219 = sadd.s32 %s217, %s218
      %s220 = smul.addr %s219, 4
      %s221 = scalar_lea.vmem %s1, %s220
      %p222 = pneg %p84
      %p223 = pneg %p81
      %p224 = scmp.lt.s32.totalorder %s19, 1
      %s225 = scalar_select %p224, %s19, 1
      %p226 = scmp.lt.s32.totalorder %s21, 0
      %s227 = scalar_select %p226, %s21, 0
      %s228 = sadd.s32 %s227, %s225
      %s229 = scalar_lea.vmem %s2, %s228
      %p230 = pneg %p112
      %p231 = pneg %p109
      %p232 = pneg %p142
      %p233 = pneg %p139
      %s234 = smul.u32 32, %s20
      %p235 = scmp.lt.s32.totalorder %s19, 1
      %s236 = scalar_select %p235, %s19, 1
      %p237 = scmp.lt.s32.totalorder %s234, 63
      %s238 = scalar_select %p237, %s234, 63
      %p239 = scmp.lt.s32.totalorder %s21, 0
      %s240 = scalar_select %p239, %s21, 0
      %s241 = sadd.s32 %s240, %s238
      %s242 = smul.addr %s236, 64
      %s243 = sadd.s32 %s241, %s242
      %s244 = smul.addr %s243, 8
      %s245 = scalar_lea.vmem %s3, %s244
      %s246 = smul.u32 32, %s20
      %p247 = scmp.lt.s32.totalorder %s19, 1
      %s248 = scalar_select %p247, %s19, 1
      %p249 = scmp.lt.s32.totalorder %s246, 63
      %s250 = scalar_select %p249, %s246, 63
      %s251 = smul.addr %s250, 2
      %s252 = smul.addr %s248, 128
      %s253 = sadd.s32 %s251, %s252
      %s254 = smul.addr %s253, 4
      %s255 = scalar_lea.vmem %s0, %s254
      %s256 = smul.u32 32, %s20
      %p257 = scmp.lt.s32.totalorder %s19, 1
      %s258 = scalar_select %p257, %s19, 1
      %p259 = scmp.lt.s32.totalorder %s21, 0
      %s260 = scalar_select %p259, %s21, 0
      %s261 = smul.addr %s258, 32
      %s262 = sadd.s32 %s260, %s261
      %s263 = smul.addr %s262, 4
      %s264 = scalar_lea.vmem %s1, %s263
      %p265 = scmp.lt.s32.totalorder %s19, 1
      %s266 = scalar_select %p265, %s19, 1
      %p267 = scmp.lt.s32.totalorder %s21, 0
      %s268 = scalar_select %p267, %s21, 0
      %s269 = sadd.s32 %s268, %s266
      %s270 = scalar_lea.vmem %s2, %s269
      %s271 = smul.u32 32, %s20
      %p272 = scmp.lt.s32.totalorder %s19, 1
      %s273 = scalar_select %p272, %s19, 1
      %p274 = scmp.lt.s32.totalorder %s271, 63
      %s275 = scalar_select %p274, %s271, 63
      %p276 = scmp.lt.s32.totalorder %s21, 0
      %s277 = scalar_select %p276, %s21, 0
      %s278 = sadd.s32 %s277, %s275
      %s279 = smul.addr %s273, 64
      %s280 = sadd.s32 %s278, %s279
      %s281 = smul.addr %s280, 8
      %s282 = scalar_lea.vmem %s3, %s281
      %s283 = smul.u32 32, %s20
      %v285 = vld [vmem:[%s255] sm:$0xff]
      %v286 = vld [vmem:[%s255 + $0x8] sm:$0xff]
      %v287 = vld [vmem:[%s255 + $0x10] sm:$0xff]
      %v288 = vld [vmem:[%s255 + $0x18] sm:$0xff]
      %v289 = vld [vmem:[%s255 + $0x20] sm:$0xff]
      %v290 = vld [vmem:[%s255 + $0x28] sm:$0xff]
      %v291 = vld [vmem:[%s255 + $0x30] sm:$0xff]
      %v292 = vld [vmem:[%s255 + $0x38] sm:$0xff]
      %v293 = vld [vmem:[%s255 + $0x40] sm:$0xff]
      %v294 = vld [vmem:[%s255 + $0x48] sm:$0xff]
      %v295 = vld [vmem:[%s255 + $0x50] sm:$0xff]
      %v296 = vld [vmem:[%s255 + $0x58] sm:$0xff]
      %v297 = vld [vmem:[%s255 + $0x60] sm:$0xff]
      %v298 = vld [vmem:[%s255 + $0x68] sm:$0xff]
      %v299 = vld [vmem:[%s255 + $0x70] sm:$0xff]
      %v300 = vld [vmem:[%s255 + $0x78] sm:$0xff]
      %v301 = vld [vmem:[%s255 + $0x80] sm:$0xff]
      %v302 = vld [vmem:[%s255 + $0x88] sm:$0xff]
      %v303 = vld [vmem:[%s255 + $0x90] sm:$0xff]
      %v304 = vld [vmem:[%s255 + $0x98] sm:$0xff]
      %v305 = vld [vmem:[%s255 + $0xa0] sm:$0xff]
      %v306 = vld [vmem:[%s255 + $0xa8] sm:$0xff]
      %v307 = vld [vmem:[%s255 + $0xb0] sm:$0xff]
      %v308 = vld [vmem:[%s255 + $0xb8] sm:$0xff]
      %v309 = vld [vmem:[%s255 + $0xc0] sm:$0xff]
      %v310 = vld [vmem:[%s255 + $0xc8] sm:$0xff]
      %v311 = vld [vmem:[%s255 + $0xd0] sm:$0xff]
      %v312 = vld [vmem:[%s255 + $0xd8] sm:$0xff]
      %v313 = vld [vmem:[%s255 + $0xe0] sm:$0xff]
      %v314 = vld [vmem:[%s255 + $0xe8] sm:$0xff]
      %v315 = vld [vmem:[%s255 + $0xf0] sm:$0xff]
      %v316 = vld [vmem:[%s255 + $0xf8] sm:$0xff]
      %v317 = vld [vmem:[%s264] sm:$0xf]
      %v318 = vld [vmem:[%s264 + $0x4] sm:$0xf]
      %v319 = vld [vmem:[%s264 + $0x8] sm:$0xf]
      %v320 = vld [vmem:[%s264 + $0xc] sm:$0xf]
      %v321 = vld [vmem:[%s264 + $0x10] sm:$0xf]
      %v322 = vld [vmem:[%s264 + $0x14] sm:$0xf]
      %v323 = vld [vmem:[%s264 + $0x18] sm:$0xf]
      %v324 = vld [vmem:[%s264 + $0x1c] sm:$0xf]
      %v325 = vld [vmem:[%s264 + $0x20] sm:$0xf]
      %v326 = vld [vmem:[%s264 + $0x24] sm:$0xf]
      %v327 = vld [vmem:[%s264 + $0x28] sm:$0xf]
      %v328 = vld [vmem:[%s264 + $0x2c] sm:$0xf]
      %v329 = vld [vmem:[%s264 + $0x30] sm:$0xf]
      %v330 = vld [vmem:[%s264 + $0x34] sm:$0xf]
      %v331 = vld [vmem:[%s264 + $0x38] sm:$0xf]
      %v332 = vld [vmem:[%s264 + $0x3c] sm:$0xf]
      %v333 = vld [vmem:[%s264 + $0x40] sm:$0xf]
      %v334 = vld [vmem:[%s264 + $0x44] sm:$0xf]
      %v335 = vld [vmem:[%s264 + $0x48] sm:$0xf]
      %v336 = vld [vmem:[%s264 + $0x4c] sm:$0xf]
      %v337 = vld [vmem:[%s264 + $0x50] sm:$0xf]
      %v338 = vld [vmem:[%s264 + $0x54] sm:$0xf]
      %v339 = vld [vmem:[%s264 + $0x58] sm:$0xf]
      %v340 = vld [vmem:[%s264 + $0x5c] sm:$0xf]
      %v341 = vld [vmem:[%s264 + $0x60] sm:$0xf]
      %v342 = vld [vmem:[%s264 + $0x64] sm:$0xf]
      %v343 = vld [vmem:[%s264 + $0x68] sm:$0xf]
      %v344 = vld [vmem:[%s264 + $0x6c] sm:$0xf]
      %v345 = vld [vmem:[%s264 + $0x70] sm:$0xf]
      %v346 = vld [vmem:[%s264 + $0x74] sm:$0xf]
      %v347 = vld [vmem:[%s264 + $0x78] sm:$0xf]
      %v348 = vld [vmem:[%s264 + $0x7c] sm:$0xf]
      %v349 = vld [vmem:[%s270] sm:$0x1]
      %v351 = vlaneseq
      %v352 = vshrl.u32 %v351, 7
      %v353 = vsub.s32 0, %v352
      %v354 = vrot.slane %v349, %v353
      %v388 = vunpack.c.l.b16 %v285
      %v389 = vunpack.c.h.b16 %v285
      %v390 = vunpack.c.l.b16 %v286
      %v391 = vunpack.c.h.b16 %v286
      %v392 = vunpack.c.l.b16 %v287
      %v393 = vunpack.c.h.b16 %v287
      %v394 = vunpack.c.l.b16 %v288
      %v395 = vunpack.c.h.b16 %v288
      %v396 = vunpack.c.l.b16 %v289
      %v397 = vunpack.c.h.b16 %v289
      %v398 = vunpack.c.l.b16 %v290
      %v399 = vunpack.c.h.b16 %v290
      %v400 = vunpack.c.l.b16 %v291
      %v401 = vunpack.c.h.b16 %v291
      %v402 = vunpack.c.l.b16 %v292
      %v403 = vunpack.c.h.b16 %v292
      %v404 = vunpack.c.l.b16 %v293
      %v405 = vunpack.c.h.b16 %v293
      %v406 = vunpack.c.l.b16 %v294
      %v407 = vunpack.c.h.b16 %v294
      %v408 = vunpack.c.l.b16 %v295
      %v409 = vunpack.c.h.b16 %v295
      %v410 = vunpack.c.l.b16 %v296
      %v411 = vunpack.c.h.b16 %v296
      %v412 = vunpack.c.l.b16 %v297
      %v413 = vunpack.c.h.b16 %v297
      %v414 = vunpack.c.l.b16 %v298
      %v415 = vunpack.c.h.b16 %v298
      %v416 = vunpack.c.l.b16 %v299
      %v417 = vunpack.c.h.b16 %v299
      %v418 = vunpack.c.l.b16 %v300
      %v419 = vunpack.c.h.b16 %v300
      %v420 = vunpack.c.l.b16 %v301
      %v421 = vunpack.c.h.b16 %v301
      %v422 = vunpack.c.l.b16 %v302
      %v423 = vunpack.c.h.b16 %v302
      %v424 = vunpack.c.l.b16 %v303
      %v425 = vunpack.c.h.b16 %v303
      %v426 = vunpack.c.l.b16 %v304
      %v427 = vunpack.c.h.b16 %v304
      %v428 = vunpack.c.l.b16 %v305
      %v429 = vunpack.c.h.b16 %v305
      %v430 = vunpack.c.l.b16 %v306
      %v431 = vunpack.c.h.b16 %v306
      %v432 = vunpack.c.l.b16 %v307
      %v433 = vunpack.c.h.b16 %v307
      %v434 = vunpack.c.l.b16 %v308
      %v435 = vunpack.c.h.b16 %v308
      %v436 = vunpack.c.l.b16 %v309
      %v437 = vunpack.c.h.b16 %v309
      %v438 = vunpack.c.l.b16 %v310
      %v439 = vunpack.c.h.b16 %v310
      %v440 = vunpack.c.l.b16 %v311
      %v441 = vunpack.c.h.b16 %v311
      %v442 = vunpack.c.l.b16 %v312
      %v443 = vunpack.c.h.b16 %v312
      %v444 = vunpack.c.l.b16 %v313
      %v445 = vunpack.c.h.b16 %v313
      %v446 = vunpack.c.l.b16 %v314
      %v447 = vunpack.c.h.b16 %v314
      %v448 = vunpack.c.l.b16 %v315
      %v449 = vunpack.c.h.b16 %v315
      %v450 = vunpack.c.l.b16 %v316
      %v451 = vunpack.c.h.b16 %v316
      %v452 = vpack.c.b16 %v390, %v388
      %v453 = vpack.c.b16 %v391, %v389
      %v454 = vpack.c.b16 %v394, %v392
      %v455 = vpack.c.b16 %v395, %v393
      %v456 = vpack.c.b16 %v398, %v396
      %v457 = vpack.c.b16 %v399, %v397
      %v458 = vpack.c.b16 %v402, %v400
      %v459 = vpack.c.b16 %v403, %v401
      %v460 = vpack.c.b16 %v406, %v404
      %v461 = vpack.c.b16 %v407, %v405
      %v462 = vpack.c.b16 %v410, %v408
      %v463 = vpack.c.b16 %v411, %v409
      %v464 = vpack.c.b16 %v414, %v412
      %v465 = vpack.c.b16 %v415, %v413
      %v466 = vpack.c.b16 %v418, %v416
      %v467 = vpack.c.b16 %v419, %v417
      %v468 = vpack.c.b16 %v422, %v420
      %v469 = vpack.c.b16 %v423, %v421
      %v470 = vpack.c.b16 %v426, %v424
      %v471 = vpack.c.b16 %v427, %v425
      %v472 = vpack.c.b16 %v430, %v428
      %v473 = vpack.c.b16 %v431, %v429
      %v474 = vpack.c.b16 %v434, %v432
      %v475 = vpack.c.b16 %v435, %v433
      %v476 = vpack.c.b16 %v438, %v436
      %v477 = vpack.c.b16 %v439, %v437
      %v478 = vpack.c.b16 %v442, %v440
      %v479 = vpack.c.b16 %v443, %v441
      %v480 = vpack.c.b16 %v446, %v444
      %v481 = vpack.c.b16 %v447, %v445
      %v482 = vpack.c.b16 %v450, %v448
      %v483 = vpack.c.b16 %v451, %v449
      %v548 = vunpack.c.l.b16 %v317
      %v549 = vunpack.c.l.b16 %v318
      %v550 = vunpack.c.l.b16 %v319
      %v551 = vunpack.c.l.b16 %v320
      %v552 = vunpack.c.l.b16 %v321
      %v553 = vunpack.c.l.b16 %v322
      %v554 = vunpack.c.l.b16 %v323
      %v555 = vunpack.c.l.b16 %v324
      %v556 = vunpack.c.l.b16 %v325
      %v557 = vunpack.c.l.b16 %v326
      %v558 = vunpack.c.l.b16 %v327
      %v559 = vunpack.c.l.b16 %v328
      %v560 = vunpack.c.l.b16 %v329
      %v561 = vunpack.c.l.b16 %v330
      %v562 = vunpack.c.l.b16 %v331
      %v563 = vunpack.c.l.b16 %v332
      %v564 = vunpack.c.l.b16 %v333
      %v565 = vunpack.c.l.b16 %v334
      %v566 = vunpack.c.l.b16 %v335
      %v567 = vunpack.c.l.b16 %v336
      %v568 = vunpack.c.l.b16 %v337
      %v569 = vunpack.c.l.b16 %v338
      %v570 = vunpack.c.l.b16 %v339
      %v571 = vunpack.c.l.b16 %v340
      %v572 = vunpack.c.l.b16 %v341
      %v573 = vunpack.c.l.b16 %v342
      %v574 = vunpack.c.l.b16 %v343
      %v575 = vunpack.c.l.b16 %v344
      %v576 = vunpack.c.l.b16 %v345
      %v577 = vunpack.c.l.b16 %v346
      %v578 = vunpack.c.l.b16 %v347
      %v579 = vunpack.c.l.b16 %v348
      %v580 = vpack.c.b16 %v549, %v548
      %v581 = vpack.c.b16 %v551, %v550
      %v582 = vpack.c.b16 %v553, %v552
      %v583 = vpack.c.b16 %v555, %v554
      %v584 = vpack.c.b16 %v557, %v556
      %v585 = vpack.c.b16 %v559, %v558
      %v586 = vpack.c.b16 %v561, %v560
      %v587 = vpack.c.b16 %v563, %v562
      %v588 = vpack.c.b16 %v565, %v564
      %v589 = vpack.c.b16 %v567, %v566
      %v590 = vpack.c.b16 %v569, %v568
      %v591 = vpack.c.b16 %v571, %v570
      %v592 = vpack.c.b16 %v573, %v572
      %v593 = vpack.c.b16 %v575, %v574
      %v594 = vpack.c.b16 %v577, %v576
      %v595 = vpack.c.b16 %v579, %v578
      %612 = vmatprep.subr.bf16.mxu0 0
      %613 = vmatpush1.bf16.msra.mxu0 %v580
      %614 = vmatprep.subr.bf16.mxu0 0
      %615 = vmatpush1.bf16.msra.mxu0 %v581
      %616 = vmatprep.subr.bf16.mxu0 0
      %617 = vmatpush1.bf16.msra.mxu0 %v582
      %618 = vmatprep.subr.bf16.mxu0 0
      %619 = vmatpush1.bf16.msra.mxu0 %v583
      %620 = vmatprep.subr.bf16.mxu0 0
      %621 = vmatpush1.bf16.msra.mxu0 %v584
      %622 = vmatprep.subr.bf16.mxu0 0
      %623 = vmatpush1.bf16.msra.mxu0 %v585
      %624 = vmatprep.subr.bf16.mxu0 0
      %625 = vmatpush1.bf16.msra.mxu0 %v586
      %626 = vmatprep.subr.bf16.mxu0 0
      %627 = vmatpush1.bf16.msra.mxu0 %v587
      %628 = vmatprep.subr.bf16.mxu0 0
      %629 = vmatpush1.bf16.msra.mxu0 %v588
      %630 = vmatprep.subr.bf16.mxu0 0
      %631 = vmatpush1.bf16.msra.mxu0 %v589
      %632 = vmatprep.subr.bf16.mxu0 0
      %633 = vmatpush1.bf16.msra.mxu0 %v590
      %634 = vmatprep.subr.bf16.mxu0 0
      %635 = vmatpush1.bf16.msra.mxu0 %v591
      %636 = vmatprep.subr.bf16.mxu0 0
      %637 = vmatpush1.bf16.msra.mxu0 %v592
      %638 = vmatprep.subr.bf16.mxu0 0
      %639 = vmatpush1.bf16.msra.mxu0 %v593
      %640 = vmatprep.subr.bf16.mxu0 0
      %641 = vmatpush1.bf16.msra.mxu0 %v594
      %642 = vmatprep.subr.bf16.mxu0 0
      %643 = vmatpush1.bf16.msra.mxu0 %v595
      %644 = vmatprep.mubr.bf16.mxu0 %v453
      %645 = vmatmul.mubr.bf16.gmra.mrb[0].mxu0 %v452
      %v646 = vpop.f32.mrb[0].mxu0
      %v647 = vadd.f32 %v354, %v646
      %v648 = vpop.f32.mrb[0].mxu0
      %v649 = vpop.f32.mrb[0].mxu0
      %v650 = vadd.f32 %v354, %v649
      %v651 = vpop.f32.mrb[0].mxu0
      %652 = vmatprep.mubr.bf16.mxu0 %v455
      %653 = vmatmul.mubr.bf16.gmra.mrb[0].mxu0 %v454
      %v654 = vpop.f32.mrb[0].mxu0
      %v655 = vadd.f32 %v354, %v654
      %v656 = vpop.f32.mrb[0].mxu0
      %v657 = vpop.f32.mrb[0].mxu0
      %v658 = vadd.f32 %v354, %v657
      %v659 = vpop.f32.mrb[0].mxu0
      %660 = vmatprep.mubr.bf16.mxu0 %v457
      %661 = vmatmul.mubr.bf16.gmra.mrb[0].mxu0 %v456
      %v662 = vpop.f32.mrb[0].mxu0
      %v663 = vadd.f32 %v354, %v662
      %v664 = vpop.f32.mrb[0].mxu0
      %v665 = vpop.f32.mrb[0].mxu0
      %v666 = vadd.f32 %v354, %v665
      %v667 = vpop.f32.mrb[0].mxu0
      %668 = vmatprep.mubr.bf16.mxu0 %v459
      %669 = vmatmul.mubr.bf16.gmra.mrb[0].mxu0 %v458
      %v670 = vpop.f32.mrb[0].mxu0
      %v671 = vadd.f32 %v354, %v670
      %v672 = vpop.f32.mrb[0].mxu0
      %v673 = vpop.f32.mrb[0].mxu0
      %v674 = vadd.f32 %v354, %v673
      %v675 = vpop.f32.mrb[0].mxu0
      %676 = vmatprep.mubr.bf16.mxu0 %v461
      %677 = vmatmul.mubr.bf16.gmra.mrb[0].mxu0 %v460
      %v678 = vpop.f32.mrb[0].mxu0
      %v679 = vadd.f32 %v354, %v678
      %v680 = vpop.f32.mrb[0].mxu0
      %v681 = vpop.f32.mrb[0].mxu0
      %v682 = vadd.f32 %v354, %v681
      %v683 = vpop.f32.mrb[0].mxu0
      %684 = vmatprep.mubr.bf16.mxu0 %v463
      %685 = vmatmul.mubr.bf16.gmra.mrb[0].mxu0 %v462
      %v686 = vpop.f32.mrb[0].mxu0
      %v687 = vadd.f32 %v354, %v686
      %v688 = vpop.f32.mrb[0].mxu0
      %v689 = vpop.f32.mrb[0].mxu0
      %v690 = vadd.f32 %v354, %v689
      %v691 = vpop.f32.mrb[0].mxu0
      %692 = vmatprep.mubr.bf16.mxu0 %v465
      %693 = vmatmul.mubr.bf16.gmra.mrb[0].mxu0 %v464
      %v694 = vpop.f32.mrb[0].mxu0
      %v695 = vadd.f32 %v354, %v694
      %v696 = vpop.f32.mrb[0].mxu0
      %v697 = vpop.f32.mrb[0].mxu0
      %v698 = vadd.f32 %v354, %v697
      %v699 = vpop.f32.mrb[0].mxu0
      %700 = vmatprep.mubr.bf16.mxu0 %v467
      %701 = vmatmul.mubr.bf16.gmra.mrb[0].mxu0 %v466
      %v702 = vpop.f32.mrb[0].mxu0
      %v703 = vadd.f32 %v354, %v702
      %v704 = vpop.f32.mrb[0].mxu0
      %v705 = vpop.f32.mrb[0].mxu0
      %v706 = vadd.f32 %v354, %v705
      %v707 = vpop.f32.mrb[0].mxu0
      %708 = vmatprep.mubr.bf16.mxu0 %v469
      %709 = vmatmul.mubr.bf16.gmra.mrb[0].mxu0 %v468
      %v710 = vpop.f32.mrb[0].mxu0
      %v711 = vadd.f32 %v354, %v710
      %v712 = vpop.f32.mrb[0].mxu0
      %v713 = vpop.f32.mrb[0].mxu0
      %v714 = vadd.f32 %v354, %v713
      %v715 = vpop.f32.mrb[0].mxu0
      %716 = vmatprep.mubr.bf16.mxu0 %v471
      %717 = vmatmul.mubr.bf16.gmra.mrb[0].mxu0 %v470
      %v718 = vpop.f32.mrb[0].mxu0
      %v719 = vadd.f32 %v354, %v718
      %v720 = vpop.f32.mrb[0].mxu0
      %v721 = vpop.f32.mrb[0].mxu0
      %v722 = vadd.f32 %v354, %v721
      %v723 = vpop.f32.mrb[0].mxu0
      %724 = vmatprep.mubr.bf16.mxu0 %v473
      %725 = vmatmul.mubr.bf16.gmra.mrb[0].mxu0 %v472
      %v726 = vpop.f32.mrb[0].mxu0
      %v727 = vadd.f32 %v354, %v726
      %v728 = vpop.f32.mrb[0].mxu0
      %v729 = vpop.f32.mrb[0].mxu0
      %v730 = vadd.f32 %v354, %v729
      %v731 = vpop.f32.mrb[0].mxu0
      %732 = vmatprep.mubr.bf16.mxu0 %v475
      %733 = vmatmul.mubr.bf16.gmra.mrb[0].mxu0 %v474
      %v734 = vpop.f32.mrb[0].mxu0
      %v735 = vadd.f32 %v354, %v734
      %v736 = vpop.f32.mrb[0].mxu0
      %v737 = vpop.f32.mrb[0].mxu0
      %v738 = vadd.f32 %v354, %v737
      %v739 = vpop.f32.mrb[0].mxu0
      %740 = vmatprep.mubr.bf16.mxu0 %v477
      %741 = vmatmul.mubr.bf16.gmra.mrb[0].mxu0 %v476
      %v742 = vpop.f32.mrb[0].mxu0
      %v743 = vadd.f32 %v354, %v742
      %v744 = vpop.f32.mrb[0].mxu0
      %v745 = vpop.f32.mrb[0].mxu0
      %v746 = vadd.f32 %v354, %v745
      %v747 = vpop.f32.mrb[0].mxu0
      %748 = vmatprep.mubr.bf16.mxu0 %v479
      %749 = vmatmul.mubr.bf16.gmra.mrb[0].mxu0 %v478
      %v750 = vpop.f32.mrb[0].mxu0
      %v751 = vadd.f32 %v354, %v750
      %v752 = vpop.f32.mrb[0].mxu0
      %v753 = vpop.f32.mrb[0].mxu0
      %v754 = vadd.f32 %v354, %v753
      %v755 = vpop.f32.mrb[0].mxu0
      %756 = vmatprep.mubr.bf16.mxu0 %v481
      %757 = vmatmul.mubr.bf16.gmra.mrb[0].mxu0 %v480
      %v758 = vpop.f32.mrb[0].mxu0
      %v759 = vadd.f32 %v354, %v758
      %v760 = vpop.f32.mrb[0].mxu0
      %v761 = vpop.f32.mrb[0].mxu0
      %v762 = vadd.f32 %v354, %v761
      %v763 = vpop.f32.mrb[0].mxu0
      %764 = vmatprep.mubr.bf16.mxu0 %v483
      %765 = vmatmul.mubr.bf16.gmra.mrb[0].mxu0 %v482
      %v766 = vpop.f32.mrb[0].mxu0
      %v767 = vadd.f32 %v354, %v766
      %v768 = vpop.f32.mrb[0].mxu0
      %v769 = vpop.f32.mrb[0].mxu0
      %v770 = vadd.f32 %v354, %v769
      %v771 = vpop.f32.mrb[0].mxu0
      %772 = vdwg.mxu0
      %773 = vst [vmem:[%s282] sm:$0xff] %v647
      %774 = vst [vmem:[%s282 + $0x8] sm:$0xff] %v650
      %775 = vst [vmem:[%s282 + $0x10] sm:$0xff] %v655
      %776 = vst [vmem:[%s282 + $0x18] sm:$0xff] %v658
      %777 = vst [vmem:[%s282 + $0x20] sm:$0xff] %v663
      %778 = vst [vmem:[%s282 + $0x28] sm:$0xff] %v666
      %779 = vst [vmem:[%s282 + $0x30] sm:$0xff] %v671
      %780 = vst [vmem:[%s282 + $0x38] sm:$0xff] %v674
      %781 = vst [vmem:[%s282 + $0x40] sm:$0xff] %v679
      %782 = vst [vmem:[%s282 + $0x48] sm:$0xff] %v682
      %783 = vst [vmem:[%s282 + $0x50] sm:$0xff] %v687
      %784 = vst [vmem:[%s282 + $0x58] sm:$0xff] %v690
      %785 = vst [vmem:[%s282 + $0x60] sm:$0xff] %v695
      %786 = vst [vmem:[%s282 + $0x68] sm:$0xff] %v698
      %787 = vst [vmem:[%s282 + $0x70] sm:$0xff] %v703
      %788 = vst [vmem:[%s282 + $0x78] sm:$0xff] %v706
      %789 = vst [vmem:[%s282 + $0x80] sm:$0xff] %v711
      %790 = vst [vmem:[%s282 + $0x88] sm:$0xff] %v714
      %791 = vst [vmem:[%s282 + $0x90] sm:$0xff] %v719
      %792 = vst [vmem:[%s282 + $0x98] sm:$0xff] %v722
      %793 = vst [vmem:[%s282 + $0xa0] sm:$0xff] %v727
      %794 = vst [vmem:[%s282 + $0xa8] sm:$0xff] %v730
      %795 = vst [vmem:[%s282 + $0xb0] sm:$0xff] %v735
      %796 = vst [vmem:[%s282 + $0xb8] sm:$0xff] %v738
      %797 = vst [vmem:[%s282 + $0xc0] sm:$0xff] %v743
      %798 = vst [vmem:[%s282 + $0xc8] sm:$0xff] %v746
      %799 = vst [vmem:[%s282 + $0xd0] sm:$0xff] %v751
      %800 = vst [vmem:[%s282 + $0xd8] sm:$0xff] %v754
      %801 = vst [vmem:[%s282 + $0xe0] sm:$0xff] %v759
      %802 = vst [vmem:[%s282 + $0xe8] sm:$0xff] %v762
      %803 = vst [vmem:[%s282 + $0xf0] sm:$0xff] %v767
      %804 = vst [vmem:[%s282 + $0xf8] sm:$0xff] %v770
      %s805 = smul.u32 32, %s20
      %p806 = scmp.lt.s32.totalorder %s19, 1
      %s807 = scalar_select %p806, %s19, 1
      %p808 = scmp.lt.s32.totalorder %s805, 63
      %s809 = scalar_select %p808, %s805, 63
      %p810 = scmp.lt.s32.totalorder %s21, 0
      %s811 = scalar_select %p810, %s21, 0
      %s812 = sadd.s32 %s811, %s809
      %s813 = smul.addr %s807, 64
      %s814 = sadd.s32 %s812, %s813
      %s815 = smul.addr %s814, 8
      %s816 = scalar_lea.vmem %s3, %s815
      // Predicated region
      $region33: #{_lambda_.19} parent=31 // pred_check
        %p817 = pneg %p139
      $region34: #{_lambda_.19} parent=31 // pred_check_branch
        %819 = sbr.rel (%p817) target = $region36
      $region35: #{_lambda_.19} parent=31 // pred_region
        %s820 = smul.u32 32, %s20
      $region36: #{_lambda_.19} parent=31 // pred_fallthru
        _
    $region32: #{_lambda_.19} parent=5 // pred_fallthru
      _
    %p821 = scmp.le.s32.totalorder 2, %s9
    // Predicated region
    $region37: #{_lambda_.19} parent=5 // pred_check
      %p822 = pneg %p821
    $region38: #{_lambda_.19} parent=5 // pred_check_branch
      %824 = sbr.rel (%p822) target = $region40
    $region39: #{_lambda_.19} parent=5 // pred_region
      %s825 = ssub.s32 %s9, 2
      // Predicated region
      $region41: #{_lambda_.19} parent=39 // pred_check
        %p826 = pneg %p145
      $region42: #{_lambda_.19} parent=39 // pred_check_branch
        %828 = sbr.rel (%p826) target = $region44
      $region43: #{_lambda_.19} parent=39 // pred_region
        %s829 = smul.u32 32, %s23
        %p830 = scmp.lt.s32.totalorder %s22, 1
        %s831 = scalar_select %p830, %s22, 1
        %p832 = scmp.lt.s32.totalorder %s829, 63
        %s833 = scalar_select %p832, %s829, 63
        %p834 = scmp.lt.s32.totalorder %s24, 0
        %s835 = scalar_select %p834, %s24, 0
        %s836 = sadd.s32 %s835, %s833
        %s837 = smul.addr %s831, 64
        %s838 = sadd.s32 %s836, %s837
        %s839 = smul.addr %s838, 8
        %s840 = scalar_lea.vmem %s3, %s839
      $region44: #{_lambda_.19} parent=39 // pred_fallthru
        _
    $region40: #{_lambda_.19} parent=5 // pred_fallthru
      _
  $region6: #{_lambda_.19} parent=0 // loop_footer
    %s13 = sadd.s32 1, %s9
  $region7: #{_lambda_.19} parent=0 // loop_footer_branch
    %8 = sbr.rel target = $region3
  $region8: #{_lambda_.19} parent=0 // loop_exit
    _

</llo_original>
